<compile_context>
chip_gen: v5e
topology: v5e:2x2
jax: 0.10.0
libtpu: 0.0.40
codegen_flags: <defaults>
</compile_context>

<pallas_src>
import jax
import jax.numpy as jnp
from jax.experimental import pallas as pl
from jax.experimental.pallas import tpu as pltpu

DS_DIM = 3            # forward() concatenates state[:, :3]  =>  ds_dim == 3
FEAT = 10 * 13 * 13   # 1690


# ---------------------------------------------------------------------------
# Host-side weight re-packing (pure JAX, exact, cheap)
# ---------------------------------------------------------------------------
def _banded_stacked(w, h_in, h_stride=None):
    """Pack an OIHW KxK conv weight into a single stacked banded matmul LHS.

    Returns A of shape (O*h_out, K*C*h_stride) with
        A[o*h_out + i, kj*C*h_stride + c*h_stride + (i+ki)] = w[o, c, ki, kj]
    so that  conv[o*h_out+i, j] = (A @ S)[o*h_out+i, j]   where the stacked RHS is
        S[kj*C*h_stride + c*h_stride + r, j] = x[c, r, j + kj]   (rows r >= h_in unused).
    Built with gathers/compares only => packed values are bit-exact copies of w.
    """
    O, C, K, _ = w.shape
    if h_stride is None:
        h_stride = h_in
    h_out = h_in - K + 1
    i = jnp.arange(h_out)
    r = jnp.arange(h_stride)
    ki_idx = r[None, :] - i[:, None]                         # (h_out, h_stride)
    valid = (ki_idx >= 0) & (ki_idx < K)
    ki_c = jnp.clip(ki_idx, 0, K - 1)
    A = w[:, :, ki_c, :]                                     # (O, C, h_out, h_stride, Kj)
    A = jnp.where(valid[None, None, :, :, None], A, 0.0)
    A = A.transpose(0, 2, 4, 1, 3)                           # (O, h_out, Kj, C, h_stride)
    return A.reshape(O * h_out, K * C * h_stride)


def _row_pool_selectors(C, h, stride):
    """0/1 even/odd row pickers (C*stride, C*h): even[c*stride+p, c*h+2p] = 1 for p < h//2."""
    rows = jnp.arange(C * stride)
    cols = jnp.arange(C * h)
    c_r, p = rows // stride, rows % stride
    c_c, q = cols // h, cols % h
    live = (c_r[:, None] == c_c[None, :]) & (p[:, None] < (h // 2))
    even = (live & (q[None, :] == 2 * p[:, None])).astype(jnp.float32)
    odd = (live & (q[None, :] == 2 * p[:, None] + 1)).astype(jnp.float32)
    return even, odd


def _col_pool_selectors(w):
    """0/1 even/odd column pickers (w, w//2): even[2t, t] = 1, odd[2t+1, t] = 1."""
    rows = jnp.arange(w)
    cols = jnp.arange(w // 2)
    even = (rows[:, None] == 2 * cols[None, :]).astype(jnp.float32)
    odd = (rows[:, None] == 2 * cols[None, :] + 1).astype(jnp.float32)
    return even, odd


# ---------------------------------------------------------------------------
# Kernel 1: conv1 + relu + pool1 + conv2 + relu + pool2   (one image per grid step)
# ---------------------------------------------------------------------------
def _conv_feat_kernel(x_ref, a1_ref, b1_ref, a2_ref, b2_ref,
                      re1_ref, ro1_ref, ce1_ref, co1_ref,
                      re2_ref, ro2_ref, ce2_ref, co2_ref, out_ref):
    def mm(a, b):
        return jnp.dot(a, b, preferred_element_type=jnp.float32)

    x = x_ref[0]                                                        # (64, 64)

    # ---- conv1 (1 -> 5, 5x5, valid) as one matmul: rows = chan*60 + i, lanes = j ----
    xs = jnp.concatenate([x[:, kj:kj + 60] for kj in range(5)], axis=0)   # (320, 60)
    h1 = jnp.maximum(mm(a1_ref[...], xs) + b1_ref[...], 0.0)              # (300, 60)

    # ---- maxpool1 2x2/2: even/odd selection matmuls + elementwise max (rows padded to 32) ----
    r1 = jnp.maximum(mm(re1_ref[...], h1), mm(ro1_ref[...], h1))          # (160, 60)
    p1 = jnp.maximum(mm(r1, ce1_ref[...]), mm(r1, co1_ref[...]))          # (160, 30)

    # ---- conv2 (5 -> 10, 5x5, valid) as one matmul: rows = chan*26 + i ----
    ps = jnp.concatenate([p1[:, kj:kj + 26] for kj in range(5)], axis=0)  # (800, 26)
    h2 = jnp.maximum(mm(a2_ref[...], ps) + b2_ref[...], 0.0)              # (260, 26)

    # ---- maxpool2 2x2/2, single dense store; rows = chan*13 + i, lanes = j ----
    r2 = jnp.maximum(mm(re2_ref[...], h2), mm(ro2_ref[...], h2))          # (130, 26)
    out_ref[0] = jnp.maximum(mm(r2, ce2_ref[...]), mm(r2, co2_ref[...]))  # (130, 13)


def conv_features(x_img, params):
    B = x_img.shape[0]
    a1s = _banded_stacked(params["conv1_w"], h_in=64)                # (300, 320)
    a2s = _banded_stacked(params["conv2_w"], h_in=30, h_stride=32)   # (260, 800)
    b1r = jnp.repeat(params["conv1_b"], 60).reshape(300, 1)
    b2r = jnp.repeat(params["conv2_b"], 26).reshape(260, 1)
    re1, ro1 = _row_pool_selectors(5, 60, 32)                        # (160, 300)
    ce1, co1 = _col_pool_selectors(60)                               # (60, 30)
    re2, ro2 = _row_pool_selectors(10, 26, 13)                       # (130, 260)
    ce2, co2 = _col_pool_selectors(26)                               # (26, 13)

    c2 = lambda shape: pl.BlockSpec(shape, lambda b: (0, 0))         # grid-constant operand

    return pl.pallas_call(
        _conv_feat_kernel,
        out_shape=jax.ShapeDtypeStruct((B, 130, 13), jnp.float32),
        grid=(B,),
        in_specs=[
            pl.BlockSpec((1, 64, 64), lambda b: (b, 0, 0)),          # image
            c2((300, 320)),                                          # stacked banded conv1 W
            c2((300, 1)),                                            # conv1 bias (per row)
            c2((260, 800)),                                          # stacked banded conv2 W
            c2((260, 1)),                                            # conv2 bias (per row)
            c2((160, 300)), c2((160, 300)),                          # pool1 row selectors
            c2((60, 30)), c2((60, 30)),                              # pool1 col selectors
            c2((130, 260)), c2((130, 260)),                          # pool2 row selectors
            c2((26, 13)), c2((26, 13)),                              # pool2 col selectors
        ],
        out_specs=pl.BlockSpec((1, 130, 13), lambda b: (b, 0, 0)),
        compiler_params=pltpu.CompilerParams(dimension_semantics=("parallel",)),
    )(x_img, a1s, b1r, a2s, b2r, re1, ro1, ce1, co1, re2, ro2, ce2, co2)


# ---------------------------------------------------------------------------
# Kernel 2: fc1..fc4 (+ReLU), fc6, softmax(dim=1)  — concat fused via split w1
# ---------------------------------------------------------------------------
def _mlp_kernel(feat_ref, ds_ref, w1a, w1b, b1, w2, b2, w3, b3, w4, b4, w6, b6, o_ref):
    def dense(h, w_ref, b_ref):
        return jnp.dot(h, w_ref[...], preferred_element_type=jnp.float32) + b_ref[...]

    h = jnp.dot(feat_ref[...], w1a[...], preferred_element_type=jnp.float32)
    h = h + jnp.dot(ds_ref[...], w1b[...], preferred_element_type=jnp.float32) + b1[...]
    h = jnp.maximum(h, 0.0)
    h = jnp.maximum(dense(h, w2, b2), 0.0)
    h = jnp.maximum(dense(h, w3, b3), 0.0)
    h = jnp.maximum(dense(h, w4, b4), 0.0)
    logits = dense(h, w6, b6)
    m = jnp.max(logits, axis=1, keepdims=True)
    e = jnp.exp(logits - m)
    denom = jnp.sum(e, axis=1, keepdims=True)
    o_ref[...] = e * pl.reciprocal(denom, approx=True)


def mlp_head(feat, ds, p):
    B = feat.shape[0]
    N = p["w6"].shape[1]
    w1a = p["w1"][:FEAT]       # (1690, 512)
    w1b = p["w1"][FEAT:]       # (3, 512)
    vmem = pl.BlockSpec(memory_space=pltpu.MemorySpace.VMEM)
    args = (feat, ds, w1a, w1b, p["b1"], p["w2"], p["b2"], p["w3"], p["b3"],
            p["w4"], p["b4"], p["w6"], p["b6"])
    return pl.pallas_call(
        _mlp_kernel,
        out_shape=jax.ShapeDtypeStruct((B, N), jnp.float32),
        in_specs=[vmem] * len(args),
        out_specs=vmem,
    )(*args)


# ---------------------------------------------------------------------------
# Full forward
# ---------------------------------------------------------------------------
def cnn_weight_forward(state, params):
    B = state.shape[0]
    x_img = state[:, 3:].reshape(B, 64, 64)
    feat = conv_features(x_img, params)        # (B, 130, 13), rows = chan*13 + i
    feat = feat.reshape(B, FEAT)               # row-major == torch.flatten(x, 1) order
    return mlp_head(feat, state[:, :3], params)


# ---------------------------------------------------------------------------
# Deterministic parameter init (shapes from __init__; synthetic values)
# ---------------------------------------------------------------------------
def init_params(key, N):
    ks = jax.random.split(key, 14)

    def u(k, shape, fan_in):
        bound = 1.0 / float(fan_in) ** 0.5
        return jax.random.uniform(k, shape, jnp.float32, -bound, bound)

    return {
        "conv1_w": u(ks[0], (5, 1, 5, 5), 25),
        "conv1_b": u(ks[1], (5,), 25),
        "conv2_w": u(ks[2], (10, 5, 5, 5), 125),
        "conv2_b": u(ks[3], (10,), 125),
        "w1": u(ks[4], (FEAT + DS_DIM, 512), FEAT + DS_DIM),
        "b1": u(ks[5], (1, 512), FEAT + DS_DIM),
        "w2": u(ks[6], (512, 256), 512),
        "b2": u(ks[7], (1, 256), 512),
        "w3": u(ks[8], (256, 128), 256),
        "b3": u(ks[9], (1, 128), 256),
        "w4": u(ks[10], (128, 64), 128),
        "b4": u(ks[11], (1, 64), 128),
        # fc5 (64 -> 3) exists in the module but is unused in forward(); omitted.
        "w6": u(ks[12], (64, 8), 64),     # N = 8
        "b6": u(ks[13], (1, 8), 64),
    }


# ---------------------------------------------------------------------------
# Pure-JAX reference (for verification only)
# ---------------------------------------------------------------------------
def reference_forward(state, p):
    B = state.shape[0]
    dn = ("NCHW", "OIHW", "NCHW")
    x = state[:, 3:].reshape(B, 1, 64, 64)
    y = jax.lax.conv_general_dilated(x, p["conv1_w"], (1, 1), "VALID",
                                     dimension_numbers=dn,
                                     precision=jax.lax.Precision.HIGHEST)
    y = jnp.maximum(y + p["conv1_b"][None, :, None, None], 0.0)
    y = jax.lax.reduce_window(y, -jnp.inf, jax.lax.max, (1, 1, 2, 2), (1, 1, 2, 2), "VALID")
    y = jax.lax.conv_general_dilated(y, p["conv2_w"], (1, 1), "VALID",
                                     dimension_numbers=dn,
                                     precision=jax.lax.Precision.HIGHEST)
    y = jnp.maximum(y + p["conv2_b"][None, :, None, None], 0.0)
    y = jax.lax.reduce_window(y, -jnp.inf, jax.lax.max, (1, 1, 2, 2), (1, 1, 2, 2), "VALID")
    y = y.reshape(B, -1)
    y = jnp.concatenate([y, state[:, :3]], axis=1)
    y = jnp.maximum(y @ p["w1"] + p["b1"], 0.0)
    y = jnp.maximum(y @ p["w2"] + p["b2"], 0.0)
    y = jnp.maximum(y @ p["w3"] + p["b3"], 0.0)
    y = jnp.maximum(y @ p["w4"] + p["b4"], 0.0)
    return jax.nn.softmax(y @ p["w6"] + p["b6"], axis=1)


if __name__ == "__main__":
    key = jax.random.PRNGKey(0)
    k_param, k_state = jax.random.split(key)
    B, N = 2, 8
    params = init_params(k_param, N)
    # state: first 3 columns = ds features, remaining 4096 = flattened 64x64 image
    state = jax.random.normal(k_state, (B, 3 + 64 * 64), jnp.float32)

    fwd = jax.jit(cnn_weight_forward)
    out = jax.block_until_ready(fwd(state, params))
    assert out.shape == (B, N), out.shape

    ref = jax.block_until_ready(reference_forward(state, params))
    max_err = float(jnp.max(jnp.abs(out - ref)))
    if max_err > 1e-2:
        raise AssertionError(f"kernel/reference mismatch: max abs err = {max_err}")

    print("KERNEL_OK")
</pallas_src>

<mosaic_0001>
module attributes {stable_mosaic.version = 11 : i64} {
  func.func @_conv_feat_kernel(%arg0: i32, %arg1: memref<1x64x64xf32, #tpu.memory_space<vmem>>, %arg2: memref<300x320xf32, #tpu.memory_space<vmem>>, %arg3: memref<300x1xf32, #tpu.memory_space<vmem>>, %arg4: memref<260x800xf32, #tpu.memory_space<vmem>>, %arg5: memref<260x1xf32, #tpu.memory_space<vmem>>, %arg6: memref<160x300xf32, #tpu.memory_space<vmem>>, %arg7: memref<160x300xf32, #tpu.memory_space<vmem>>, %arg8: memref<60x30xf32, #tpu.memory_space<vmem>>, %arg9: memref<60x30xf32, #tpu.memory_space<vmem>>, %arg10: memref<130x260xf32, #tpu.memory_space<vmem>>, %arg11: memref<130x260xf32, #tpu.memory_space<vmem>>, %arg12: memref<26x13xf32, #tpu.memory_space<vmem>>, %arg13: memref<26x13xf32, #tpu.memory_space<vmem>>, %arg14: memref<1x130x13xf32, #tpu.memory_space<vmem>>) attributes {dimension_semantics = [#tpu.dimension_semantics<parallel>], iteration_bounds = array<i64: 2>, scalar_prefetch = 0 : i64, scratch_operands = 0 : i64, tpu.core_type = #tpu.core_type<tc>, window_params = [{transform_indices = @transform_0, window_bounds = array<i64: 1, 64, 64>}, {pipeline_mode = #tpu.pipeline_mode<synchronous>, transform_indices = @transform_1, window_bounds = array<i64: 300, 320>}, {pipeline_mode = #tpu.pipeline_mode<synchronous>, transform_indices = @transform_2, window_bounds = array<i64: 300, 1>}, {pipeline_mode = #tpu.pipeline_mode<synchronous>, transform_indices = @transform_3, window_bounds = array<i64: 260, 800>}, {pipeline_mode = #tpu.pipeline_mode<synchronous>, transform_indices = @transform_4, window_bounds = array<i64: 260, 1>}, {pipeline_mode = #tpu.pipeline_mode<synchronous>, transform_indices = @transform_5, window_bounds = array<i64: 160, 300>}, {pipeline_mode = #tpu.pipeline_mode<synchronous>, transform_indices = @transform_6, window_bounds = array<i64: 160, 300>}, {pipeline_mode = #tpu.pipeline_mode<synchronous>, transform_indices = @transform_7, window_bounds = array<i64: 60, 30>}, {pipeline_mode = #tpu.pipeline_mode<synchronous>, transform_indices = @transform_8, window_bounds = array<i64: 60, 30>}, {pipeline_mode = #tpu.pipeline_mode<synchronous>, transform_indices = @transform_9, window_bounds = array<i64: 130, 260>}, {pipeline_mode = #tpu.pipeline_mode<synchronous>, transform_indices = @transform_10, window_bounds = array<i64: 130, 260>}, {pipeline_mode = #tpu.pipeline_mode<synchronous>, transform_indices = @transform_11, window_bounds = array<i64: 26, 13>}, {pipeline_mode = #tpu.pipeline_mode<synchronous>, transform_indices = @transform_12, window_bounds = array<i64: 26, 13>}, {transform_indices = @transform_13, window_bounds = array<i64: 1, 130, 13>}]} {
    %c0 = arith.constant 0 : index
    %c0_0 = arith.constant 0 : index
    %c0_1 = arith.constant 0 : index
    %0 = vector.load %arg1[%c0, %c0_0, %c0_1] : memref<1x64x64xf32, #tpu.memory_space<vmem>>, vector<1x64x64xf32>
    %1 = vector.shape_cast %0 : vector<1x64x64xf32> to vector<64x64xf32>
    %2 = vector.extract_strided_slice %1 {offsets = [0, 0], sizes = [64, 60], strides = [1, 1]} : vector<64x64xf32> to vector<64x60xf32>
    %3 = vector.extract_strided_slice %1 {offsets = [0, 1], sizes = [64, 60], strides = [1, 1]} : vector<64x64xf32> to vector<64x60xf32>
    %4 = vector.extract_strided_slice %1 {offsets = [0, 2], sizes = [64, 60], strides = [1, 1]} : vector<64x64xf32> to vector<64x60xf32>
    %5 = vector.extract_strided_slice %1 {offsets = [0, 3], sizes = [64, 60], strides = [1, 1]} : vector<64x64xf32> to vector<64x60xf32>
    %6 = vector.extract_strided_slice %1 {offsets = [0, 4], sizes = [64, 60], strides = [1, 1]} : vector<64x64xf32> to vector<64x60xf32>
    %7 = tpu.concatenate %2, %3, %4, %5, %6 in 0 : vector<64x60xf32>, vector<64x60xf32>, vector<64x60xf32>, vector<64x60xf32>, vector<64x60xf32> -> vector<320x60xf32>
    %c0_2 = arith.constant 0 : index
    %c0_3 = arith.constant 0 : index
    %8 = vector.load %arg2[%c0_2, %c0_3] : memref<300x320xf32, #tpu.memory_space<vmem>>, vector<300x320xf32>
    %cst = arith.constant dense<0.000000e+00> : vector<300x60xf32>
    %9 = tpu.matmul %8, %7, %cst {dimension_numbers = #tpu.dot_dimension_numbers<[1], [0], [0], [1], [0, 0, 1, 1], [], []>} : vector<300x320xf32>, vector<320x60xf32>, vector<300x60xf32> -> vector<300x60xf32>
    %c0_4 = arith.constant 0 : index
    %c0_5 = arith.constant 0 : index
    %10 = vector.load %arg3[%c0_4, %c0_5] : memref<300x1xf32, #tpu.memory_space<vmem>>, vector<300x1xf32>
    %11 = vector.broadcast %10 : vector<300x1xf32> to vector<300x60xf32>
    %12 = arith.addf %9, %11 : vector<300x60xf32>
    %cst_6 = arith.constant 0.000000e+00 : f32
    %13 = vector.broadcast %cst_6 : f32 to vector<300x60xf32>
    %14 = arith.maximumf %12, %13 : vector<300x60xf32>
    %c0_7 = arith.constant 0 : index
    %c0_8 = arith.constant 0 : index
    %15 = vector.load %arg6[%c0_7, %c0_8] : memref<160x300xf32, #tpu.memory_space<vmem>>, vector<160x300xf32>
    %cst_9 = arith.constant dense<0.000000e+00> : vector<160x60xf32>
    %16 = tpu.matmul %15, %14, %cst_9 {dimension_numbers = #tpu.dot_dimension_numbers<[1], [0], [0], [1], [0, 0, 1, 1], [], []>} : vector<160x300xf32>, vector<300x60xf32>, vector<160x60xf32> -> vector<160x60xf32>
    %c0_10 = arith.constant 0 : index
    %c0_11 = arith.constant 0 : index
    %17 = vector.load %arg7[%c0_10, %c0_11] : memref<160x300xf32, #tpu.memory_space<vmem>>, vector<160x300xf32>
    %cst_12 = arith.constant dense<0.000000e+00> : vector<160x60xf32>
    %18 = tpu.matmul %17, %14, %cst_12 {dimension_numbers = #tpu.dot_dimension_numbers<[1], [0], [0], [1], [0, 0, 1, 1], [], []>} : vector<160x300xf32>, vector<300x60xf32>, vector<160x60xf32> -> vector<160x60xf32>
    %19 = arith.maximumf %16, %18 : vector<160x60xf32>
    %c0_13 = arith.constant 0 : index
    %c0_14 = arith.constant 0 : index
    %20 = vector.load %arg8[%c0_13, %c0_14] : memref<60x30xf32, #tpu.memory_space<vmem>>, vector<60x30xf32>
    %cst_15 = arith.constant dense<0.000000e+00> : vector<160x30xf32>
    %21 = tpu.matmul %19, %20, %cst_15 {dimension_numbers = #tpu.dot_dimension_numbers<[1], [0], [0], [1], [0, 0, 1, 1], [], []>} : vector<160x60xf32>, vector<60x30xf32>, vector<160x30xf32> -> vector<160x30xf32>
    %c0_16 = arith.constant 0 : index
    %c0_17 = arith.constant 0 : index
    %22 = vector.load %arg9[%c0_16, %c0_17] : memref<60x30xf32, #tpu.memory_space<vmem>>, vector<60x30xf32>
    %cst_18 = arith.constant dense<0.000000e+00> : vector<160x30xf32>
    %23 = tpu.matmul %19, %22, %cst_18 {dimension_numbers = #tpu.dot_dimension_numbers<[1], [0], [0], [1], [0, 0, 1, 1], [], []>} : vector<160x60xf32>, vector<60x30xf32>, vector<160x30xf32> -> vector<160x30xf32>
    %24 = arith.maximumf %21, %23 : vector<160x30xf32>
    %25 = vector.extract_strided_slice %24 {offsets = [0, 0], sizes = [160, 26], strides = [1, 1]} : vector<160x30xf32> to vector<160x26xf32>
    %26 = vector.extract_strided_slice %24 {offsets = [0, 1], sizes = [160, 26], strides = [1, 1]} : vector<160x30xf32> to vector<160x26xf32>
    %27 = vector.extract_strided_slice %24 {offsets = [0, 2], sizes = [160, 26], strides = [1, 1]} : vector<160x30xf32> to vector<160x26xf32>
    %28 = vector.extract_strided_slice %24 {offsets = [0, 3], sizes = [160, 26], strides = [1, 1]} : vector<160x30xf32> to vector<160x26xf32>
    %29 = vector.extract_strided_slice %24 {offsets = [0, 4], sizes = [160, 26], strides = [1, 1]} : vector<160x30xf32> to vector<160x26xf32>
    %30 = tpu.concatenate %25, %26, %27, %28, %29 in 0 : vector<160x26xf32>, vector<160x26xf32>, vector<160x26xf32>, vector<160x26xf32>, vector<160x26xf32> -> vector<800x26xf32>
    %c0_19 = arith.constant 0 : index
    %c0_20 = arith.constant 0 : index
    %31 = vector.load %arg4[%c0_19, %c0_20] : memref<260x800xf32, #tpu.memory_space<vmem>>, vector<260x800xf32>
    %cst_21 = arith.constant dense<0.000000e+00> : vector<260x26xf32>
    %32 = tpu.matmul %31, %30, %cst_21 {dimension_numbers = #tpu.dot_dimension_numbers<[1], [0], [0], [1], [0, 0, 1, 1], [], []>} : vector<260x800xf32>, vector<800x26xf32>, vector<260x26xf32> -> vector<260x26xf32>
    %c0_22 = arith.constant 0 : index
    %c0_23 = arith.constant 0 : index
    %33 = vector.load %arg5[%c0_22, %c0_23] : memref<260x1xf32, #tpu.memory_space<vmem>>, vector<260x1xf32>
    %34 = vector.broadcast %33 : vector<260x1xf32> to vector<260x26xf32>
    %35 = arith.addf %32, %34 : vector<260x26xf32>
    %cst_24 = arith.constant 0.000000e+00 : f32
    %36 = vector.broadcast %cst_24 : f32 to vector<260x26xf32>
    %37 = arith.maximumf %35, %36 : vector<260x26xf32>
    %c0_25 = arith.constant 0 : index
    %c0_26 = arith.constant 0 : index
    %38 = vector.load %arg10[%c0_25, %c0_26] : memref<130x260xf32, #tpu.memory_space<vmem>>, vector<130x260xf32>
    %cst_27 = arith.constant dense<0.000000e+00> : vector<130x26xf32>
    %39 = tpu.matmul %38, %37, %cst_27 {dimension_numbers = #tpu.dot_dimension_numbers<[1], [0], [0], [1], [0, 0, 1, 1], [], []>} : vector<130x260xf32>, vector<260x26xf32>, vector<130x26xf32> -> vector<130x26xf32>
    %c0_28 = arith.constant 0 : index
    %c0_29 = arith.constant 0 : index
    %40 = vector.load %arg11[%c0_28, %c0_29] : memref<130x260xf32, #tpu.memory_space<vmem>>, vector<130x260xf32>
    %cst_30 = arith.constant dense<0.000000e+00> : vector<130x26xf32>
    %41 = tpu.matmul %40, %37, %cst_30 {dimension_numbers = #tpu.dot_dimension_numbers<[1], [0], [0], [1], [0, 0, 1, 1], [], []>} : vector<130x260xf32>, vector<260x26xf32>, vector<130x26xf32> -> vector<130x26xf32>
    %42 = arith.maximumf %39, %41 : vector<130x26xf32>
    %c0_31 = arith.constant 0 : index
    %c0_32 = arith.constant 0 : index
    %43 = vector.load %arg12[%c0_31, %c0_32] : memref<26x13xf32, #tpu.memory_space<vmem>>, vector<26x13xf32>
    %cst_33 = arith.constant dense<0.000000e+00> : vector<130x13xf32>
    %44 = tpu.matmul %42, %43, %cst_33 {dimension_numbers = #tpu.dot_dimension_numbers<[1], [0], [0], [1], [0, 0, 1, 1], [], []>} : vector<130x26xf32>, vector<26x13xf32>, vector<130x13xf32> -> vector<130x13xf32>
    %c0_34 = arith.constant 0 : index
    %c0_35 = arith.constant 0 : index
    %45 = vector.load %arg13[%c0_34, %c0_35] : memref<26x13xf32, #tpu.memory_space<vmem>>, vector<26x13xf32>
    %cst_36 = arith.constant dense<0.000000e+00> : vector<130x13xf32>
    %46 = tpu.matmul %42, %45, %cst_36 {dimension_numbers = #tpu.dot_dimension_numbers<[1], [0], [0], [1], [0, 0, 1, 1], [], []>} : vector<130x26xf32>, vector<26x13xf32>, vector<130x13xf32> -> vector<130x13xf32>
    %47 = arith.maximumf %44, %46 : vector<130x13xf32>
    %c0_37 = arith.constant 0 : index
    %c0_38 = arith.constant 0 : index
    %c0_39 = arith.constant 0 : index
    %48 = vector.load %arg14[%c0_37, %c0_38, %c0_39] : memref<1x130x13xf32, #tpu.memory_space<vmem>>, vector<1x130x13xf32>
    %49 = vector.shape_cast %48 : vector<1x130x13xf32> to vector<130x13xf32>
    %50 = vector.shape_cast %47 : vector<130x13xf32> to vector<1x130x13xf32>
    tpu.vector_store %arg14[%c0_37, %c0_38, %c0_39], %50 {strides = array<i32>} : memref<1x130x13xf32, #tpu.memory_space<vmem>>, vector<1x130x13xf32>,
    return
  }
  func.func @transform_0(%arg0: i32) -> (i32, i32, i32) {
    %c0_i32 = arith.constant 0 : i32
    %c0_i32_0 = arith.constant 0 : i32
    %c0_i32_1 = arith.constant 0 : i32
    return %arg0, %c0_i32, %c0_i32_0 : i32, i32, i32
  }
  func.func @transform_1(%arg0: i32) -> (i32, i32) {
    %c0_i32 = arith.constant 0 : i32
    %c0_i32_0 = arith.constant 0 : i32
    %c0_i32_1 = arith.constant 0 : i32
    return %c0_i32, %c0_i32_0 : i32, i32
  }
  func.func @transform_2(%arg0: i32) -> (i32, i32) {
    %c0_i32 = arith.constant 0 : i32
    %c0_i32_0 = arith.constant 0 : i32
    %c0_i32_1 = arith.constant 0 : i32
    return %c0_i32, %c0_i32_0 : i32, i32
  }
  func.func @transform_3(%arg0: i32) -> (i32, i32) {
    %c0_i32 = arith.constant 0 : i32
    %c0_i32_0 = arith.constant 0 : i32
    %c0_i32_1 = arith.constant 0 : i32
    return %c0_i32, %c0_i32_0 : i32, i32
  }
  func.func @transform_4(%arg0: i32) -> (i32, i32) {
    %c0_i32 = arith.constant 0 : i32
    %c0_i32_0 = arith.constant 0 : i32
    %c0_i32_1 = arith.constant 0 : i32
    return %c0_i32, %c0_i32_0 : i32, i32
  }
  func.func @transform_5(%arg0: i32) -> (i32, i32) {
    %c0_i32 = arith.constant 0 : i32
    %c0_i32_0 = arith.constant 0 : i32
    %c0_i32_1 = arith.constant 0 : i32
    return %c0_i32, %c0_i32_0 : i32, i32
  }
  func.func @transform_6(%arg0: i32) -> (i32, i32) {
    %c0_i32 = arith.constant 0 : i32
    %c0_i32_0 = arith.constant 0 : i32
    %c0_i32_1 = arith.constant 0 : i32
    return %c0_i32, %c0_i32_0 : i32, i32
  }
  func.func @transform_7(%arg0: i32) -> (i32, i32) {
    %c0_i32 = arith.constant 0 : i32
    %c0_i32_0 = arith.constant 0 : i32
    %c0_i32_1 = arith.constant 0 : i32
    return %c0_i32, %c0_i32_0 : i32, i32
  }
  func.func @transform_8(%arg0: i32) -> (i32, i32) {
    %c0_i32 = arith.constant 0 : i32
    %c0_i32_0 = arith.constant 0 : i32
    %c0_i32_1 = arith.constant 0 : i32
    return %c0_i32, %c0_i32_0 : i32, i32
  }
  func.func @transform_9(%arg0: i32) -> (i32, i32) {
    %c0_i32 = arith.constant 0 : i32
    %c0_i32_0 = arith.constant 0 : i32
    %c0_i32_1 = arith.constant 0 : i32
    return %c0_i32, %c0_i32_0 : i32, i32
  }
  func.func @transform_10(%arg0: i32) -> (i32, i32) {
    %c0_i32 = arith.constant 0 : i32
    %c0_i32_0 = arith.constant 0 : i32
    %c0_i32_1 = arith.constant 0 : i32
    return %c0_i32, %c0_i32_0 : i32, i32
  }
  func.func @transform_11(%arg0: i32) -> (i32, i32) {
    %c0_i32 = arith.constant 0 : i32
    %c0_i32_0 = arith.constant 0 : i32
    %c0_i32_1 = arith.constant 0 : i32
    return %c0_i32, %c0_i32_0 : i32, i32
  }
  func.func @transform_12(%arg0: i32) -> (i32, i32) {
    %c0_i32 = arith.constant 0 : i32
    %c0_i32_0 = arith.constant 0 : i32
    %c0_i32_1 = arith.constant 0 : i32
    return %c0_i32, %c0_i32_0 : i32, i32
  }
  func.func @transform_13(%arg0: i32) -> (i32, i32, i32) {
    %c0_i32 = arith.constant 0 : i32
    %c0_i32_0 = arith.constant 0 : i32
    %c0_i32_1 = arith.constant 0 : i32
    return %arg0, %c0_i32, %c0_i32_0 : i32, i32, i32
  }
}

module attributes {stable_mosaic.version = 11 : i64} {
  func.func @_mlp_kernel(%arg0: memref<2x1690xf32, #tpu.memory_space<vmem>>, %arg1: memref<2x3xf32, #tpu.memory_space<vmem>>, %arg2: memref<1690x512xf32, #tpu.memory_space<vmem>>, %arg3: memref<3x512xf32, #tpu.memory_space<vmem>>, %arg4: memref<1x512xf32, #tpu.memory_space<vmem>>, %arg5: memref<512x256xf32, #tpu.memory_space<vmem>>, %arg6: memref<1x256xf32, #tpu.memory_space<vmem>>, %arg7: memref<256x128xf32, #tpu.memory_space<vmem>>, %arg8: memref<1x128xf32, #tpu.memory_space<vmem>>, %arg9: memref<128x64xf32, #tpu.memory_space<vmem>>, %arg10: memref<1x64xf32, #tpu.memory_space<vmem>>, %arg11: memref<64x8xf32, #tpu.memory_space<vmem>>, %arg12: memref<1x8xf32, #tpu.memory_space<vmem>>, %arg13: memref<2x8xf32, #tpu.memory_space<vmem>>) attributes {dimension_semantics = [], scalar_prefetch = 0 : i64, scratch_operands = 0 : i64, tpu.core_type = #tpu.core_type<tc>} {
    %c0 = arith.constant 0 : index
    %c0_0 = arith.constant 0 : index
    %0 = vector.load %arg0[%c0, %c0_0] : memref<2x1690xf32, #tpu.memory_space<vmem>>, vector<2x1690xf32>
    %c0_1 = arith.constant 0 : index
    %c0_2 = arith.constant 0 : index
    %1 = vector.load %arg2[%c0_1, %c0_2] : memref<1690x512xf32, #tpu.memory_space<vmem>>, vector<1690x512xf32>
    %cst = arith.constant dense<0.000000e+00> : vector<2x512xf32>
    %2 = tpu.matmul %0, %1, %cst {dimension_numbers = #tpu.dot_dimension_numbers<[1], [0], [0], [1], [0, 0, 1, 1], [], []>} : vector<2x1690xf32>, vector<1690x512xf32>, vector<2x512xf32> -> vector<2x512xf32>
    %c0_3 = arith.constant 0 : index
    %c0_4 = arith.constant 0 : index
    %3 = vector.load %arg1[%c0_3, %c0_4] : memref<2x3xf32, #tpu.memory_space<vmem>>, vector<2x3xf32>
    %c0_5 = arith.constant 0 : index
    %c0_6 = arith.constant 0 : index
    %4 = vector.load %arg3[%c0_5, %c0_6] : memref<3x512xf32, #tpu.memory_space<vmem>>, vector<3x512xf32>
    %cst_7 = arith.constant dense<0.000000e+00> : vector<2x512xf32>
    %5 = tpu.matmul %3, %4, %cst_7 {dimension_numbers = #tpu.dot_dimension_numbers<[1], [0], [0], [1], [0, 0, 1, 1], [], []>} : vector<2x3xf32>, vector<3x512xf32>, vector<2x512xf32> -> vector<2x512xf32>
    %6 = arith.addf %2, %5 : vector<2x512xf32>
    %c0_8 = arith.constant 0 : index
    %c0_9 = arith.constant 0 : index
    %7 = vector.load %arg4[%c0_8, %c0_9] : memref<1x512xf32, #tpu.memory_space<vmem>>, vector<1x512xf32>
    %8 = vector.broadcast %7 : vector<1x512xf32> to vector<2x512xf32>
    %9 = arith.addf %6, %8 : vector<2x512xf32>
    %cst_10 = arith.constant 0.000000e+00 : f32
    %10 = vector.broadcast %cst_10 : f32 to vector<2x512xf32>
    %11 = arith.maximumf %9, %10 : vector<2x512xf32>
    %c0_11 = arith.constant 0 : index
    %c0_12 = arith.constant 0 : index
    %12 = vector.load %arg5[%c0_11, %c0_12] : memref<512x256xf32, #tpu.memory_space<vmem>>, vector<512x256xf32>
    %cst_13 = arith.constant dense<0.000000e+00> : vector<2x256xf32>
    %13 = tpu.matmul %11, %12, %cst_13 {dimension_numbers = #tpu.dot_dimension_numbers<[1], [0], [0], [1], [0, 0, 1, 1], [], []>} : vector<2x512xf32>, vector<512x256xf32>, vector<2x256xf32> -> vector<2x256xf32>
    %c0_14 = arith.constant 0 : index
    %c0_15 = arith.constant 0 : index
    %14 = vector.load %arg6[%c0_14, %c0_15] : memref<1x256xf32, #tpu.memory_space<vmem>>, vector<1x256xf32>
    %15 = vector.broadcast %14 : vector<1x256xf32> to vector<2x256xf32>
    %16 = arith.addf %13, %15 : vector<2x256xf32>
    %cst_16 = arith.constant 0.000000e+00 : f32
    %17 = vector.broadcast %cst_16 : f32 to vector<2x256xf32>
    %18 = arith.maximumf %16, %17 : vector<2x256xf32>
    %c0_17 = arith.constant 0 : index
    %c0_18 = arith.constant 0 : index
    %19 = vector.load %arg7[%c0_17, %c0_18] : memref<256x128xf32, #tpu.memory_space<vmem>>, vector<256x128xf32>
    %cst_19 = arith.constant dense<0.000000e+00> : vector<2x128xf32>
    %20 = tpu.matmul %18, %19, %cst_19 {dimension_numbers = #tpu.dot_dimension_numbers<[1], [0], [0], [1], [0, 0, 1, 1], [], []>} : vector<2x256xf32>, vector<256x128xf32>, vector<2x128xf32> -> vector<2x128xf32>
    %c0_20 = arith.constant 0 : index
    %c0_21 = arith.constant 0 : index
    %21 = vector.load %arg8[%c0_20, %c0_21] : memref<1x128xf32, #tpu.memory_space<vmem>>, vector<1x128xf32>
    %22 = vector.broadcast %21 : vector<1x128xf32> to vector<2x128xf32>
    %23 = arith.addf %20, %22 : vector<2x128xf32>
    %cst_22 = arith.constant 0.000000e+00 : f32
    %24 = vector.broadcast %cst_22 : f32 to vector<2x128xf32>
    %25 = arith.maximumf %23, %24 : vector<2x128xf32>
    %c0_23 = arith.constant 0 : index
    %c0_24 = arith.constant 0 : index
    %26 = vector.load %arg9[%c0_23, %c0_24] : memref<128x64xf32, #tpu.memory_space<vmem>>, vector<128x64xf32>
    %cst_25 = arith.constant dense<0.000000e+00> : vector<2x64xf32>
    %27 = tpu.matmul %25, %26, %cst_25 {dimension_numbers = #tpu.dot_dimension_numbers<[1], [0], [0], [1], [0, 0, 1, 1], [], []>} : vector<2x128xf32>, vector<128x64xf32>, vector<2x64xf32> -> vector<2x64xf32>
    %c0_26 = arith.constant 0 : index
    %c0_27 = arith.constant 0 : index
    %28 = vector.load %arg10[%c0_26, %c0_27] : memref<1x64xf32, #tpu.memory_space<vmem>>, vector<1x64xf32>
    %29 = vector.broadcast %28 : vector<1x64xf32> to vector<2x64xf32>
    %30 = arith.addf %27, %29 : vector<2x64xf32>
    %cst_28 = arith.constant 0.000000e+00 : f32
    %31 = vector.broadcast %cst_28 : f32 to vector<2x64xf32>
    %32 = arith.maximumf %30, %31 : vector<2x64xf32>
    %c0_29 = arith.constant 0 : index
    %c0_30 = arith.constant 0 : index
    %33 = vector.load %arg11[%c0_29, %c0_30] : memref<64x8xf32, #tpu.memory_space<vmem>>, vector<64x8xf32>
    %cst_31 = arith.constant dense<0.000000e+00> : vector<2x8xf32>
    %34 = tpu.matmul %32, %33, %cst_31 {dimension_numbers = #tpu.dot_dimension_numbers<[1], [0], [0], [1], [0, 0, 1, 1], [], []>} : vector<2x64xf32>, vector<64x8xf32>, vector<2x8xf32> -> vector<2x8xf32>
    %c0_32 = arith.constant 0 : index
    %c0_33 = arith.constant 0 : index
    %35 = vector.load %arg12[%c0_32, %c0_33] : memref<1x8xf32, #tpu.memory_space<vmem>>, vector<1x8xf32>
    %36 = vector.broadcast %35 : vector<1x8xf32> to vector<2x8xf32>
    %37 = arith.addf %34, %36 : vector<2x8xf32>
    %cst_34 = arith.constant dense<0xFF800000> : vector<2xf32>
    %38 = vector.multi_reduction <maximumf>, %37, %cst_34 [1] : vector<2x8xf32> to vector<2xf32>
    %39 = vector.shape_cast %38 : vector<2xf32> to vector<2x1xf32>
    %40 = vector.broadcast %39 : vector<2x1xf32> to vector<2x8xf32>
    %41 = arith.subf %37, %40 : vector<2x8xf32>
    %42 = math.exp %41 : vector<2x8xf32>
    %cst_35 = arith.constant dense<0.000000e+00> : vector<2xf32>
    %43 = vector.multi_reduction <add>, %42, %cst_35 [1] : vector<2x8xf32> to vector<2xf32>
    %44 = vector.shape_cast %43 : vector<2xf32> to vector<2x1xf32>
    %45 = tpu.reciprocal %44 {approx = true} : vector<2x1xf32> -> vector<2x1xf32>
    %46 = vector.broadcast %45 : vector<2x1xf32> to vector<2x8xf32>
    %47 = arith.mulf %42, %46 : vector<2x8xf32>
    %c0_36 = arith.constant 0 : index
    %c0_37 = arith.constant 0 : index
    %48 = vector.load %arg13[%c0_36, %c0_37] : memref<2x8xf32, #tpu.memory_space<vmem>>, vector<2x8xf32>
    tpu.vector_store %arg13[%c0_36, %c0_37], %47 {strides = array<i32>} : memref<2x8xf32, #tpu.memory_space<vmem>>, vector<2x8xf32>,
    return
  }
}

</mosaic_0001>

<llo_original>
// kernel: cnn_weight_forward.2
$region0: #{cnn_weight_forward.2}
  #allocation0 [shape = 'u32[]', space=smem, size = 0x4, offset = 0x4, fixed_abs, tag = 'smem constant byte address 0x4 - core index']
  #allocation1 [shape = 'u32[72,128]{1,0:T(1,128)}', space=vmem, size = 0x9000, scoped, tag = 'internal scratch']
  %s0 = inlined_call_operand.vmem [shape: f32[2,64,64], index: 0, kind: input, shape index: {}]
  %s1 = inlined_call_operand.vmem [shape: f32[300,320], index: 1, kind: input, shape index: {}]
  %s2 = inlined_call_operand.vmem [shape: f32[300,1], index: 2, kind: input, shape index: {}]
  %s3 = inlined_call_operand.vmem [shape: f32[260,800], index: 3, kind: input, shape index: {}]
  %s4 = inlined_call_operand.vmem [shape: f32[260,1], index: 4, kind: input, shape index: {}]
  %s5 = inlined_call_operand.vmem [shape: f32[160,300], index: 5, kind: input, shape index: {}]
  %s6 = inlined_call_operand.vmem [shape: f32[160,300], index: 6, kind: input, shape index: {}]
  %s7 = inlined_call_operand.vmem [shape: f32[60,30], index: 7, kind: input, shape index: {}]
  %s8 = inlined_call_operand.vmem [shape: f32[60,30], index: 8, kind: input, shape index: {}]
  %s9 = inlined_call_operand.vmem [shape: f32[130,260], index: 9, kind: input, shape index: {}]
  %s10 = inlined_call_operand.vmem [shape: f32[130,260], index: 10, kind: input, shape index: {}]
  %s11 = inlined_call_operand.vmem [shape: f32[26,13], index: 11, kind: input, shape index: {}]
  %s12 = inlined_call_operand.vmem [shape: f32[26,13], index: 12, kind: input, shape index: {}]
  %s13 = inlined_call_operand.vmem [shape: f32[2,130,13], index: 13, kind: output, shape index: {}]
  %s14 = sld [smem:[#allocation0]]
  $region85: #{cnn_weight_forward.2} parent=0
    _
  %s16 = ssub.s32 1, %s14
  %s17 = scalar_select 0, %s16, %s14
  loop: start=0, step=1, limit=4
  $region2: #{cnn_weight_forward.2} parent=0 // loop_pre_header
    _
  $region3: #{cnn_weight_forward.2} parent=0 // loop_header
    %s19 = sphi 0, %s23
    %p20 = scmp.ge.s32.totalorder %s19, 4
    %s29 = sphi 0, %s31
    %s32 = sphi 0, %s29
    %s33 = sphi 0, %s32
    %s49 = sphi 0, %s33
    %s53 = sphi 0, %s53
    %s55 = sphi 0, %s53
    %s56 = sphi 0, %s55
    %s70 = sphi 0, %s56
    %s74 = sphi 0, %s74
    %s76 = sphi 0, %s74
    %s77 = sphi 0, %s76
    %s91 = sphi 0, %s77
    %s95 = sphi 0, %s95
    %s97 = sphi 0, %s95
    %s98 = sphi 0, %s97
    %s112 = sphi 0, %s98
    %s116 = sphi 0, %s116
    %s118 = sphi 0, %s116
    %s119 = sphi 0, %s118
    %s133 = sphi 0, %s119
    %s137 = sphi 0, %s137
    %s139 = sphi 0, %s137
    %s140 = sphi 0, %s139
    %s154 = sphi 0, %s140
    %s158 = sphi 0, %s158
    %s160 = sphi 0, %s158
    %s161 = sphi 0, %s160
    %s175 = sphi 0, %s161
    %s179 = sphi 0, %s179
    %s181 = sphi 0, %s179
    %s182 = sphi 0, %s181
    %s196 = sphi 0, %s182
    %s200 = sphi 0, %s200
    %s202 = sphi 0, %s200
    %s203 = sphi 0, %s202
    %s217 = sphi 0, %s203
    %s221 = sphi 0, %s221
    %s223 = sphi 0, %s221
    %s224 = sphi 0, %s223
    %s238 = sphi 0, %s224
    %s242 = sphi 0, %s242
    %s244 = sphi 0, %s242
    %s245 = sphi 0, %s244
    %s259 = sphi 0, %s245
    %s263 = sphi 0, %s263
    %s265 = sphi 0, %s263
    %s266 = sphi 0, %s265
    %s280 = sphi 0, %s266
    %s284 = sphi 0, %s284
    %s286 = sphi 0, %s284
    %s287 = sphi 0, %s286
    %s301 = sphi 0, %s287
    %s307 = sphi 0, %s309
    %s310 = sphi 0, %s307
    %s311 = sphi 0, %s310
    %s327 = sphi 0, %s311
  $region4: #{cnn_weight_forward.2} parent=0 // loop_header_branch
    %22 = sbr.rel (%p20) target = $region8
  $region5: #{cnn_weight_forward.2} parent=0 // loop_body
    %s24 = ssub.s32 %s19, 1
    %s25 = ssub.s32 %s19, 2
    %s26 = sadd.s32 %s19, 1
    %s27 = ssub.s32 %s19, %s26
    %p28 = scmp.eq.s32.totalorder %s27, 0
    %s30 = sadd.s32 %s29, 1
    %s31 = scalar_select %p28, %s29, %s30
    %p34 = pneg %p28
    %p35 = scmp.eq.s32.totalorder %s19, 1
    %p36 = por %p34, %p35
    %p37 = scmp.ne.s32.totalorder %s29, %s32
    %p38 = scmp.eq.s32.totalorder %s19, 0
    %p39 = por %p37, %p38
    %p40 = scmp.ne.s32.totalorder %s29, %s32
    %p41 = scmp.eq.s32.totalorder %s24, 1
    %p42 = por %p40, %p41
    %p43 = scmp.ne.s32.totalorder %s32, %s33
    %p44 = scmp.eq.s32.totalorder %s24, 0
    %p45 = por %p43, %p44
    %p46 = scmp.ne.s32.totalorder %s32, %s33
    %p47 = scmp.eq.s32.totalorder %s25, 1
    %p48 = por %p46, %p47
    %p50 = scmp.ne.s32.totalorder %s33, %s49
    %p51 = scmp.eq.s32.totalorder %s25, 0
    %p52 = por %p50, %p51
    %s54 = sadd.s32 %s53, 1
    %p57 = scmp.eq.s32.totalorder %s19, 1
    %p58 = scmp.ne.s32.totalorder %s53, %s55
    %p59 = scmp.eq.s32.totalorder %s19, 0
    %p60 = por %p58, %p59
    %p61 = scmp.ne.s32.totalorder %s53, %s55
    %p62 = scmp.eq.s32.totalorder %s24, 1
    %p63 = por %p61, %p62
    %p64 = scmp.ne.s32.totalorder %s55, %s56
    %p65 = scmp.eq.s32.totalorder %s24, 0
    %p66 = por %p64, %p65
    %p67 = scmp.ne.s32.totalorder %s55, %s56
    %p68 = scmp.eq.s32.totalorder %s25, 1
    %p69 = por %p67, %p68
    %p71 = scmp.ne.s32.totalorder %s56, %s70
    %p72 = scmp.eq.s32.totalorder %s25, 0
    %p73 = por %p71, %p72
    %s75 = sadd.s32 %s74, 1
    %p78 = scmp.eq.s32.totalorder %s19, 1
    %p79 = scmp.ne.s32.totalorder %s74, %s76
    %p80 = scmp.eq.s32.totalorder %s19, 0
    %p81 = por %p79, %p80
    %p82 = scmp.ne.s32.totalorder %s74, %s76
    %p83 = scmp.eq.s32.totalorder %s24, 1
    %p84 = por %p82, %p83
    %p85 = scmp.ne.s32.totalorder %s76, %s77
    %p86 = scmp.eq.s32.totalorder %s24, 0
    %p87 = por %p85, %p86
    %p88 = scmp.ne.s32.totalorder %s76, %s77
    %p89 = scmp.eq.s32.totalorder %s25, 1
    %p90 = por %p88, %p89
    %p92 = scmp.ne.s32.totalorder %s77, %s91
    %p93 = scmp.eq.s32.totalorder %s25, 0
    %p94 = por %p92, %p93
    %s96 = sadd.s32 %s95, 1
    %p99 = scmp.eq.s32.totalorder %s19, 1
    %p100 = scmp.ne.s32.totalorder %s95, %s97
    %p101 = scmp.eq.s32.totalorder %s19, 0
    %p102 = por %p100, %p101
    %p103 = scmp.ne.s32.totalorder %s95, %s97
    %p104 = scmp.eq.s32.totalorder %s24, 1
    %p105 = por %p103, %p104
    %p106 = scmp.ne.s32.totalorder %s97, %s98
    %p107 = scmp.eq.s32.totalorder %s24, 0
    %p108 = por %p106, %p107
    %p109 = scmp.ne.s32.totalorder %s97, %s98
    %p110 = scmp.eq.s32.totalorder %s25, 1
    %p111 = por %p109, %p110
    %p113 = scmp.ne.s32.totalorder %s98, %s112
    %p114 = scmp.eq.s32.totalorder %s25, 0
    %p115 = por %p113, %p114
    %s117 = sadd.s32 %s116, 1
    %p120 = scmp.eq.s32.totalorder %s19, 1
    %p121 = scmp.ne.s32.totalorder %s116, %s118
    %p122 = scmp.eq.s32.totalorder %s19, 0
    %p123 = por %p121, %p122
    %p124 = scmp.ne.s32.totalorder %s116, %s118
    %p125 = scmp.eq.s32.totalorder %s24, 1
    %p126 = por %p124, %p125
    %p127 = scmp.ne.s32.totalorder %s118, %s119
    %p128 = scmp.eq.s32.totalorder %s24, 0
    %p129 = por %p127, %p128
    %p130 = scmp.ne.s32.totalorder %s118, %s119
    %p131 = scmp.eq.s32.totalorder %s25, 1
    %p132 = por %p130, %p131
    %p134 = scmp.ne.s32.totalorder %s119, %s133
    %p135 = scmp.eq.s32.totalorder %s25, 0
    %p136 = por %p134, %p135
    %s138 = sadd.s32 %s137, 1
    %p141 = scmp.eq.s32.totalorder %s19, 1
    %p142 = scmp.ne.s32.totalorder %s137, %s139
    %p143 = scmp.eq.s32.totalorder %s19, 0
    %p144 = por %p142, %p143
    %p145 = scmp.ne.s32.totalorder %s137, %s139
    %p146 = scmp.eq.s32.totalorder %s24, 1
    %p147 = por %p145, %p146
    %p148 = scmp.ne.s32.totalorder %s139, %s140
    %p149 = scmp.eq.s32.totalorder %s24, 0
    %p150 = por %p148, %p149
    %p151 = scmp.ne.s32.totalorder %s139, %s140
    %p152 = scmp.eq.s32.totalorder %s25, 1
    %p153 = por %p151, %p152
    %p155 = scmp.ne.s32.totalorder %s140, %s154
    %p156 = scmp.eq.s32.totalorder %s25, 0
    %p157 = por %p155, %p156
    %s159 = sadd.s32 %s158, 1
    %p162 = scmp.eq.s32.totalorder %s19, 1
    %p163 = scmp.ne.s32.totalorder %s158, %s160
    %p164 = scmp.eq.s32.totalorder %s19, 0
    %p165 = por %p163, %p164
    %p166 = scmp.ne.s32.totalorder %s158, %s160
    %p167 = scmp.eq.s32.totalorder %s24, 1
    %p168 = por %p166, %p167
    %p169 = scmp.ne.s32.totalorder %s160, %s161
    %p170 = scmp.eq.s32.totalorder %s24, 0
    %p171 = por %p169, %p170
    %p172 = scmp.ne.s32.totalorder %s160, %s161
    %p173 = scmp.eq.s32.totalorder %s25, 1
    %p174 = por %p172, %p173
    %p176 = scmp.ne.s32.totalorder %s161, %s175
    %p177 = scmp.eq.s32.totalorder %s25, 0
    %p178 = por %p176, %p177
    %s180 = sadd.s32 %s179, 1
    %p183 = scmp.eq.s32.totalorder %s19, 1
    %p184 = scmp.ne.s32.totalorder %s179, %s181
    %p185 = scmp.eq.s32.totalorder %s19, 0
    %p186 = por %p184, %p185
    %p187 = scmp.ne.s32.totalorder %s179, %s181
    %p188 = scmp.eq.s32.totalorder %s24, 1
    %p189 = por %p187, %p188
    %p190 = scmp.ne.s32.totalorder %s181, %s182
    %p191 = scmp.eq.s32.totalorder %s24, 0
    %p192 = por %p190, %p191
    %p193 = scmp.ne.s32.totalorder %s181, %s182
    %p194 = scmp.eq.s32.totalorder %s25, 1
    %p195 = por %p193, %p194
    %p197 = scmp.ne.s32.totalorder %s182, %s196
    %p198 = scmp.eq.s32.totalorder %s25, 0
    %p199 = por %p197, %p198
    %s201 = sadd.s32 %s200, 1
    %p204 = scmp.eq.s32.totalorder %s19, 1
    %p205 = scmp.ne.s32.totalorder %s200, %s202
    %p206 = scmp.eq.s32.totalorder %s19, 0
    %p207 = por %p205, %p206
    %p208 = scmp.ne.s32.totalorder %s200, %s202
    %p209 = scmp.eq.s32.totalorder %s24, 1
    %p210 = por %p208, %p209
    %p211 = scmp.ne.s32.totalorder %s202, %s203
    %p212 = scmp.eq.s32.totalorder %s24, 0
    %p213 = por %p211, %p212
    %p214 = scmp.ne.s32.totalorder %s202, %s203
    %p215 = scmp.eq.s32.totalorder %s25, 1
    %p216 = por %p214, %p215
    %p218 = scmp.ne.s32.totalorder %s203, %s217
    %p219 = scmp.eq.s32.totalorder %s25, 0
    %p220 = por %p218, %p219
    %s222 = sadd.s32 %s221, 1
    %p225 = scmp.eq.s32.totalorder %s19, 1
    %p226 = scmp.ne.s32.totalorder %s221, %s223
    %p227 = scmp.eq.s32.totalorder %s19, 0
    %p228 = por %p226, %p227
    %p229 = scmp.ne.s32.totalorder %s221, %s223
    %p230 = scmp.eq.s32.totalorder %s24, 1
    %p231 = por %p229, %p230
    %p232 = scmp.ne.s32.totalorder %s223, %s224
    %p233 = scmp.eq.s32.totalorder %s24, 0
    %p234 = por %p232, %p233
    %p235 = scmp.ne.s32.totalorder %s223, %s224
    %p236 = scmp.eq.s32.totalorder %s25, 1
    %p237 = por %p235, %p236
    %p239 = scmp.ne.s32.totalorder %s224, %s238
    %p240 = scmp.eq.s32.totalorder %s25, 0
    %p241 = por %p239, %p240
    %s243 = sadd.s32 %s242, 1
    %p246 = scmp.eq.s32.totalorder %s19, 1
    %p247 = scmp.ne.s32.totalorder %s242, %s244
    %p248 = scmp.eq.s32.totalorder %s19, 0
    %p249 = por %p247, %p248
    %p250 = scmp.ne.s32.totalorder %s242, %s244
    %p251 = scmp.eq.s32.totalorder %s24, 1
    %p252 = por %p250, %p251
    %p253 = scmp.ne.s32.totalorder %s244, %s245
    %p254 = scmp.eq.s32.totalorder %s24, 0
    %p255 = por %p253, %p254
    %p256 = scmp.ne.s32.totalorder %s244, %s245
    %p257 = scmp.eq.s32.totalorder %s25, 1
    %p258 = por %p256, %p257
    %p260 = scmp.ne.s32.totalorder %s245, %s259
    %p261 = scmp.eq.s32.totalorder %s25, 0
    %p262 = por %p260, %p261
    %s264 = sadd.s32 %s263, 1
    %p267 = scmp.eq.s32.totalorder %s19, 1
    %p268 = scmp.ne.s32.totalorder %s263, %s265
    %p269 = scmp.eq.s32.totalorder %s19, 0
    %p270 = por %p268, %p269
    %p271 = scmp.ne.s32.totalorder %s263, %s265
    %p272 = scmp.eq.s32.totalorder %s24, 1
    %p273 = por %p271, %p272
    %p274 = scmp.ne.s32.totalorder %s265, %s266
    %p275 = scmp.eq.s32.totalorder %s24, 0
    %p276 = por %p274, %p275
    %p277 = scmp.ne.s32.totalorder %s265, %s266
    %p278 = scmp.eq.s32.totalorder %s25, 1
    %p279 = por %p277, %p278
    %p281 = scmp.ne.s32.totalorder %s266, %s280
    %p282 = scmp.eq.s32.totalorder %s25, 0
    %p283 = por %p281, %p282
    %s285 = sadd.s32 %s284, 1
    %p288 = scmp.eq.s32.totalorder %s19, 1
    %p289 = scmp.ne.s32.totalorder %s284, %s286
    %p290 = scmp.eq.s32.totalorder %s19, 0
    %p291 = por %p289, %p290
    %p292 = scmp.ne.s32.totalorder %s284, %s286
    %p293 = scmp.eq.s32.totalorder %s24, 1
    %p294 = por %p292, %p293
    %p295 = scmp.ne.s32.totalorder %s286, %s287
    %p296 = scmp.eq.s32.totalorder %s24, 0
    %p297 = por %p295, %p296
    %p298 = scmp.ne.s32.totalorder %s286, %s287
    %p299 = scmp.eq.s32.totalorder %s25, 1
    %p300 = por %p298, %p299
    %p302 = scmp.ne.s32.totalorder %s287, %s301
    %p303 = scmp.eq.s32.totalorder %s25, 0
    %p304 = por %p302, %p303
    %s305 = ssub.s32 %s19, %s26
    %p306 = scmp.eq.s32.totalorder %s305, 0
    %s308 = sadd.s32 %s307, 1
    %s309 = scalar_select %p306, %s307, %s308
    %p312 = pneg %p306
    %p313 = scmp.eq.s32.totalorder %s19, 1
    %p314 = por %p312, %p313
    %p315 = scmp.ne.s32.totalorder %s307, %s310
    %p316 = scmp.eq.s32.totalorder %s19, 0
    %p317 = por %p315, %p316
    %p318 = scmp.ne.s32.totalorder %s307, %s310
    %p319 = scmp.eq.s32.totalorder %s24, 1
    %p320 = por %p318, %p319
    %p321 = scmp.ne.s32.totalorder %s310, %s311
    %p322 = scmp.eq.s32.totalorder %s24, 0
    %p323 = por %p321, %p322
    %p324 = scmp.ne.s32.totalorder %s310, %s311
    %p325 = scmp.eq.s32.totalorder %s25, 1
    %p326 = por %p324, %p325
    %p328 = scmp.ne.s32.totalorder %s311, %s327
    %p329 = scmp.eq.s32.totalorder %s25, 0
    %p330 = por %p328, %p329
    %p331 = scmp.le.s32.totalorder 1, %s19
    %p332 = scmp.lt.s32.totalorder %s19, 3
    %p333 = pnand %p331, %p332
    %p334 = pneg %p333
    // Predicated region
    $region9: #{cnn_weight_forward.2} parent=5 // pred_check
      _
    $region10: #{cnn_weight_forward.2} parent=5 // pred_check_branch
      %336 = sbr.rel (%p333) target = $region12
    $region11: #{cnn_weight_forward.2} parent=5 // pred_region
      %s337 = ssub.s32 %s19, 1
      // Predicated region
      $region13: #{cnn_weight_forward.2} parent=11 // pred_check
        %p338 = pneg %p66
      $region14: #{cnn_weight_forward.2} parent=11 // pred_check_branch
        %340 = sbr.rel (%p338) target = $region16
      $region15: #{cnn_weight_forward.2} parent=11 // pred_region
        _
      $region16: #{cnn_weight_forward.2} parent=11 // pred_fallthru
        _
      // Predicated region
      $region17: #{cnn_weight_forward.2} parent=11 // pred_check
        %p341 = pneg %p87
      $region18: #{cnn_weight_forward.2} parent=11 // pred_check_branch
        %343 = sbr.rel (%p341) target = $region20
      $region19: #{cnn_weight_forward.2} parent=11 // pred_region
        _
      $region20: #{cnn_weight_forward.2} parent=11 // pred_fallthru
        _
      // Predicated region
      $region21: #{cnn_weight_forward.2} parent=11 // pred_check
        %p344 = pneg %p108
      $region22: #{cnn_weight_forward.2} parent=11 // pred_check_branch
        %346 = sbr.rel (%p344) target = $region24
      $region23: #{cnn_weight_forward.2} parent=11 // pred_region
        _
      $region24: #{cnn_weight_forward.2} parent=11 // pred_fallthru
        _
      // Predicated region
      $region25: #{cnn_weight_forward.2} parent=11 // pred_check
        %p347 = pneg %p129
      $region26: #{cnn_weight_forward.2} parent=11 // pred_check_branch
        %349 = sbr.rel (%p347) target = $region28
      $region27: #{cnn_weight_forward.2} parent=11 // pred_region
        _
      $region28: #{cnn_weight_forward.2} parent=11 // pred_fallthru
        _
      // Predicated region
      $region29: #{cnn_weight_forward.2} parent=11 // pred_check
        %p350 = pneg %p150
      $region30: #{cnn_weight_forward.2} parent=11 // pred_check_branch
        %352 = sbr.rel (%p350) target = $region32
      $region31: #{cnn_weight_forward.2} parent=11 // pred_region
        _
      $region32: #{cnn_weight_forward.2} parent=11 // pred_fallthru
        _
      // Predicated region
      $region33: #{cnn_weight_forward.2} parent=11 // pred_check
        %p353 = pneg %p171
      $region34: #{cnn_weight_forward.2} parent=11 // pred_check_branch
        %355 = sbr.rel (%p353) target = $region36
      $region35: #{cnn_weight_forward.2} parent=11 // pred_region
        _
      $region36: #{cnn_weight_forward.2} parent=11 // pred_fallthru
        _
      // Predicated region
      $region37: #{cnn_weight_forward.2} parent=11 // pred_check
        %p356 = pneg %p192
      $region38: #{cnn_weight_forward.2} parent=11 // pred_check_branch
        %358 = sbr.rel (%p356) target = $region40
      $region39: #{cnn_weight_forward.2} parent=11 // pred_region
        _
      $region40: #{cnn_weight_forward.2} parent=11 // pred_fallthru
        _
      // Predicated region
      $region41: #{cnn_weight_forward.2} parent=11 // pred_check
        %p359 = pneg %p213
      $region42: #{cnn_weight_forward.2} parent=11 // pred_check_branch
        %361 = sbr.rel (%p359) target = $region44
      $region43: #{cnn_weight_forward.2} parent=11 // pred_region
        _
      $region44: #{cnn_weight_forward.2} parent=11 // pred_fallthru
        _
      // Predicated region
      $region45: #{cnn_weight_forward.2} parent=11 // pred_check
        %p362 = pneg %p234
      $region46: #{cnn_weight_forward.2} parent=11 // pred_check_branch
        %364 = sbr.rel (%p362) target = $region48
      $region47: #{cnn_weight_forward.2} parent=11 // pred_region
        _
      $region48: #{cnn_weight_forward.2} parent=11 // pred_fallthru
        _
      // Predicated region
      $region49: #{cnn_weight_forward.2} parent=11 // pred_check
        %p365 = pneg %p255
      $region50: #{cnn_weight_forward.2} parent=11 // pred_check_branch
        %367 = sbr.rel (%p365) target = $region52
      $region51: #{cnn_weight_forward.2} parent=11 // pred_region
        _
      $region52: #{cnn_weight_forward.2} parent=11 // pred_fallthru
        _
      // Predicated region
      $region53: #{cnn_weight_forward.2} parent=11 // pred_check
        %p368 = pneg %p276
      $region54: #{cnn_weight_forward.2} parent=11 // pred_check_branch
        %370 = sbr.rel (%p368) target = $region56
      $region55: #{cnn_weight_forward.2} parent=11 // pred_region
        _
      $region56: #{cnn_weight_forward.2} parent=11 // pred_fallthru
        _
      // Predicated region
      $region57: #{cnn_weight_forward.2} parent=11 // pred_check
        %p371 = pneg %p297
      $region58: #{cnn_weight_forward.2} parent=11 // pred_check_branch
        %373 = sbr.rel (%p371) target = $region60
      $region59: #{cnn_weight_forward.2} parent=11 // pred_region
        _
      $region60: #{cnn_weight_forward.2} parent=11 // pred_fallthru
        _
    $region12: #{cnn_weight_forward.2} parent=5 // pred_fallthru
      _
    %p374 = scmp.lt.s32.totalorder %s19, 2
    // Predicated region
    $region61: #{cnn_weight_forward.2} parent=5 // pred_check
      %p375 = pneg %p374
    $region62: #{cnn_weight_forward.2} parent=5 // pred_check_branch
      %377 = sbr.rel (%p375) target = $region64
    $region63: #{cnn_weight_forward.2} parent=5 // pred_region
      // Predicated region
      $region65: #{cnn_weight_forward.2} parent=63 // pred_check
        %p378 = pneg %p39
      $region66: #{cnn_weight_forward.2} parent=63 // pred_check_branch
        %380 = sbr.rel (%p378) target = $region68
      $region67: #{cnn_weight_forward.2} parent=63 // pred_region
        %p381 = scmp.lt.s32.totalorder %s19, 1
        %s382 = scalar_select %p381, %s19, 1
        %s383 = smul.addr %s382, 8
        %s384 = smul.addr %s383, 8
        %s385 = scalar_lea.vmem %s0, %s384
      $region68: #{cnn_weight_forward.2} parent=63 // pred_fallthru
        _
    $region64: #{cnn_weight_forward.2} parent=5 // pred_fallthru
      _
    %p386 = scmp.le.s32.totalorder 1, %s19
    %p387 = scmp.lt.s32.totalorder %s19, 3
    %p388 = pnand %p386, %p387
    %p389 = pneg %p388
    // Predicated region
    $region69: #{cnn_weight_forward.2} parent=5 // pred_check
      _
    $region70: #{cnn_weight_forward.2} parent=5 // pred_check_branch
      %391 = sbr.rel (%p388) target = $region72
    $region71: #{cnn_weight_forward.2} parent=5 // pred_region
      %s392 = ssub.s32 %s19, 1
      %p393 = scmp.lt.s32.totalorder %s24, 1
      %s394 = scalar_select %p393, %s24, 1
      %s395 = smul.addr %s394, 8
      %s396 = smul.addr %s395, 8
      %s397 = scalar_lea.vmem %s0, %s396
      %p398 = pneg %p45
      %p399 = pneg %p42
      %p400 = pneg %p66
      %p401 = pneg %p63
      %p402 = pneg %p87
      %p403 = pneg %p84
      %p404 = pneg %p108
      %p405 = pneg %p105
      %p406 = pneg %p129
      %p407 = pneg %p126
      %p408 = pneg %p150
      %p409 = pneg %p147
      %p410 = pneg %p171
      %p411 = pneg %p168
      %p412 = pneg %p192
      %p413 = pneg %p189
      %p414 = pneg %p213
      %p415 = pneg %p210
      %p416 = pneg %p234
      %p417 = pneg %p231
      %p418 = pneg %p255
      %p419 = pneg %p252
      %p420 = pneg %p276
      %p421 = pneg %p273
      %p422 = pneg %p297
      %p423 = pneg %p294
      %p424 = pneg %p323
      %p425 = pneg %p320
      %p426 = scmp.lt.s32.totalorder %s24, 1
      %s427 = scalar_select %p426, %s24, 1
      %s428 = smul.addr %s427, 17
      %s429 = smul.addr %s428, 8
      %s430 = scalar_lea.vmem %s13, %s429
      %p431 = scmp.lt.s32.totalorder %s24, 1
      %s432 = scalar_select %p431, %s24, 1
      %s433 = smul.addr %s432, 8
      %s434 = smul.addr %s433, 8
      %s435 = scalar_lea.vmem %s0, %s434
      %p436 = scmp.lt.s32.totalorder %s24, 1
      %s437 = scalar_select %p436, %s24, 1
      %s438 = smul.addr %s437, 17
      %s439 = smul.addr %s438, 8
      %s440 = scalar_lea.vmem %s13, %s439
      %v441 = vld [vmem:[%s435] sm:$0xff]
      %v442 = vld [vmem:[%s435 + $0x8] sm:$0xff]
      %v443 = vld [vmem:[%s435 + $0x10] sm:$0xff]
      %v444 = vld [vmem:[%s435 + $0x18] sm:$0xff]
      %v445 = vld [vmem:[%s435 + $0x20] sm:$0xff]
      %v446 = vld [vmem:[%s435 + $0x28] sm:$0xff]
      %v447 = vld [vmem:[%s435 + $0x30] sm:$0xff]
      %v448 = vld [vmem:[%s435 + $0x38] sm:$0xff]
      %457 = vrot.lane.b32.xlu0 %v441, 127
      %v458 = vpop.permute.xlu0 %457
      %459 = vrot.lane.b32.xlu0 %v442, 127
      %v460 = vpop.permute.xlu0 %459
      %461 = vrot.lane.b32.xlu0 %v443, 127
      %v462 = vpop.permute.xlu0 %461
      %463 = vrot.lane.b32.xlu0 %v444, 127
      %v464 = vpop.permute.xlu0 %463
      %465 = vrot.lane.b32.xlu0 %v445, 127
      %v466 = vpop.permute.xlu0 %465
      %467 = vrot.lane.b32.xlu0 %v446, 127
      %v468 = vpop.permute.xlu0 %467
      %469 = vrot.lane.b32.xlu0 %v447, 127
      %v470 = vpop.permute.xlu0 %469
      %471 = vrot.lane.b32.xlu0 %v448, 127
      %v472 = vpop.permute.xlu0 %471
      %481 = vrot.lane.b32.xlu0 %v441, 126
      %v482 = vpop.permute.xlu0 %481
      %483 = vrot.lane.b32.xlu0 %v442, 126
      %v484 = vpop.permute.xlu0 %483
      %485 = vrot.lane.b32.xlu0 %v443, 126
      %v486 = vpop.permute.xlu0 %485
      %487 = vrot.lane.b32.xlu0 %v444, 126
      %v488 = vpop.permute.xlu0 %487
      %489 = vrot.lane.b32.xlu0 %v445, 126
      %v490 = vpop.permute.xlu0 %489
      %491 = vrot.lane.b32.xlu0 %v446, 126
      %v492 = vpop.permute.xlu0 %491
      %493 = vrot.lane.b32.xlu0 %v447, 126
      %v494 = vpop.permute.xlu0 %493
      %495 = vrot.lane.b32.xlu0 %v448, 126
      %v496 = vpop.permute.xlu0 %495
      %505 = vrot.lane.b32.xlu0 %v441, 125
      %v506 = vpop.permute.xlu0 %505
      %507 = vrot.lane.b32.xlu0 %v442, 125
      %v508 = vpop.permute.xlu0 %507
      %509 = vrot.lane.b32.xlu0 %v443, 125
      %v510 = vpop.permute.xlu0 %509
      %511 = vrot.lane.b32.xlu0 %v444, 125
      %v512 = vpop.permute.xlu0 %511
      %513 = vrot.lane.b32.xlu0 %v445, 125
      %v514 = vpop.permute.xlu0 %513
      %515 = vrot.lane.b32.xlu0 %v446, 125
      %v516 = vpop.permute.xlu0 %515
      %517 = vrot.lane.b32.xlu0 %v447, 125
      %v518 = vpop.permute.xlu0 %517
      %519 = vrot.lane.b32.xlu0 %v448, 125
      %v520 = vpop.permute.xlu0 %519
      %529 = vrot.lane.b32.xlu0 %v441, 124
      %v530 = vpop.permute.xlu0 %529
      %531 = vrot.lane.b32.xlu0 %v442, 124
      %v532 = vpop.permute.xlu0 %531
      %533 = vrot.lane.b32.xlu0 %v443, 124
      %v534 = vpop.permute.xlu0 %533
      %535 = vrot.lane.b32.xlu0 %v444, 124
      %v536 = vpop.permute.xlu0 %535
      %537 = vrot.lane.b32.xlu0 %v445, 124
      %v538 = vpop.permute.xlu0 %537
      %539 = vrot.lane.b32.xlu0 %v446, 124
      %v540 = vpop.permute.xlu0 %539
      %541 = vrot.lane.b32.xlu0 %v447, 124
      %v542 = vpop.permute.xlu0 %541
      %543 = vrot.lane.b32.xlu0 %v448, 124
      %v544 = vpop.permute.xlu0 %543
      %v553 = vld [vmem:[%s1] sm:$0xff]
      %v554 = vld [vmem:[%s1 + $0x8] sm:$0xff]
      %v555 = vld [vmem:[%s1 + $0x10] sm:$0xff]
      %v556 = vld [vmem:[%s1 + $0x18] sm:$0xff]
      %v557 = vld [vmem:[%s1 + $0x20] sm:$0xff]
      %v558 = vld [vmem:[%s1 + $0x28] sm:$0xff]
      %v559 = vld [vmem:[%s1 + $0x30] sm:$0xff]
      %v560 = vld [vmem:[%s1 + $0x38] sm:$0xff]
      %v561 = vld [vmem:[%s1 + $0x40] sm:$0xff]
      %v562 = vld [vmem:[%s1 + $0x48] sm:$0xff]
      %v563 = vld [vmem:[%s1 + $0x50] sm:$0xff]
      %v564 = vld [vmem:[%s1 + $0x58] sm:$0xff]
      %v565 = vld [vmem:[%s1 + $0x60] sm:$0xff]
      %v566 = vld [vmem:[%s1 + $0x68] sm:$0xff]
      %v567 = vld [vmem:[%s1 + $0x70] sm:$0xff]
      %v568 = vld [vmem:[%s1 + $0x78] sm:$0xff]
      %v569 = vld [vmem:[%s1 + $0x80] sm:$0xff]
      %v570 = vld [vmem:[%s1 + $0x88] sm:$0xff]
      %v571 = vld [vmem:[%s1 + $0x90] sm:$0xff]
      %v572 = vld [vmem:[%s1 + $0x98] sm:$0xff]
      %v573 = vld [vmem:[%s1 + $0xa0] sm:$0xff]
      %v574 = vld [vmem:[%s1 + $0xa8] sm:$0xff]
      %v575 = vld [vmem:[%s1 + $0xb0] sm:$0xff]
      %v576 = vld [vmem:[%s1 + $0xb8] sm:$0xff]
      %v577 = vld [vmem:[%s1 + $0xc0] sm:$0xff]
      %v578 = vld [vmem:[%s1 + $0xc8] sm:$0xff]
      %v579 = vld [vmem:[%s1 + $0xd0] sm:$0xff]
      %v580 = vld [vmem:[%s1 + $0xd8] sm:$0xff]
      %v581 = vld [vmem:[%s1 + $0xe0] sm:$0xff]
      %v582 = vld [vmem:[%s1 + $0xe8] sm:$0xff]
      %v583 = vld [vmem:[%s1 + $0xf0] sm:$0xff]
      %v584 = vld [vmem:[%s1 + $0xf8] sm:$0xff]
      %v585 = vld [vmem:[%s1 + $0x100] sm:$0xff]
      %v586 = vld [vmem:[%s1 + $0x108] sm:$0xff]
      %v587 = vld [vmem:[%s1 + $0x110] sm:$0xff]
      %v588 = vld [vmem:[%s1 + $0x118] sm:$0xff]
      %v589 = vld [vmem:[%s1 + $0x120] sm:$0xff]
      %v590 = vld [vmem:[%s1 + $0x128] sm:$0xff]
      %v591 = vld [vmem:[%s1 + $0x130] sm:$0xff]
      %v592 = vld [vmem:[%s1 + $0x138] sm:$0xff]
      %v593 = vld [vmem:[%s1 + $0x140] sm:$0xff]
      %v594 = vld [vmem:[%s1 + $0x148] sm:$0xff]
      %v595 = vld [vmem:[%s1 + $0x150] sm:$0xff]
      %v596 = vld [vmem:[%s1 + $0x158] sm:$0xff]
      %v597 = vld [vmem:[%s1 + $0x160] sm:$0xff]
      %v598 = vld [vmem:[%s1 + $0x168] sm:$0xff]
      %v599 = vld [vmem:[%s1 + $0x170] sm:$0xff]
      %v600 = vld [vmem:[%s1 + $0x178] sm:$0xff]
      %v601 = vld [vmem:[%s1 + $0x180] sm:$0xff]
      %v602 = vld [vmem:[%s1 + $0x188] sm:$0xff]
      %v603 = vld [vmem:[%s1 + $0x190] sm:$0xff]
      %v604 = vld [vmem:[%s1 + $0x198] sm:$0xff]
      %v605 = vld [vmem:[%s1 + $0x1a0] sm:$0xff]
      %v606 = vld [vmem:[%s1 + $0x1a8] sm:$0xff]
      %v607 = vld [vmem:[%s1 + $0x1b0] sm:$0xff]
      %v608 = vld [vmem:[%s1 + $0x1b8] sm:$0xff]
      %v609 = vld [vmem:[%s1 + $0x1c0] sm:$0xff]
      %v610 = vld [vmem:[%s1 + $0x1c8] sm:$0xff]
      %v611 = vld [vmem:[%s1 + $0x1d0] sm:$0xff]
      %v612 = vld [vmem:[%s1 + $0x1d8] sm:$0xff]
      %v613 = vld [vmem:[%s1 + $0x1e0] sm:$0xff]
      %v614 = vld [vmem:[%s1 + $0x1e8] sm:$0xff]
      %v615 = vld [vmem:[%s1 + $0x1f0] sm:$0xff]
      %v616 = vld [vmem:[%s1 + $0x1f8] sm:$0xff]
      %v617 = vld [vmem:[%s1 + $0x200] sm:$0xff]
      %v618 = vld [vmem:[%s1 + $0x208] sm:$0xff]
      %v619 = vld [vmem:[%s1 + $0x210] sm:$0xff]
      %v620 = vld [vmem:[%s1 + $0x218] sm:$0xff]
      %v621 = vld [vmem:[%s1 + $0x220] sm:$0xff]
      %v622 = vld [vmem:[%s1 + $0x228] sm:$0xff]
      %v623 = vld [vmem:[%s1 + $0x230] sm:$0xff]
      %v624 = vld [vmem:[%s1 + $0x238] sm:$0xff]
      %v625 = vld [vmem:[%s1 + $0x240] sm:$0xff]
      %v626 = vld [vmem:[%s1 + $0x248] sm:$0xff]
      %v627 = vld [vmem:[%s1 + $0x250] sm:$0xff]
      %v628 = vld [vmem:[%s1 + $0x258] sm:$0xff]
      %v629 = vld [vmem:[%s1 + $0x260] sm:$0xff]
      %v630 = vld [vmem:[%s1 + $0x268] sm:$0xff]
      %v631 = vld [vmem:[%s1 + $0x270] sm:$0xff]
      %v632 = vld [vmem:[%s1 + $0x278] sm:$0xff]
      %v633 = vld [vmem:[%s1 + $0x280] sm:$0xff]
      %v634 = vld [vmem:[%s1 + $0x288] sm:$0xff]
      %v635 = vld [vmem:[%s1 + $0x290] sm:$0xff]
      %v636 = vld [vmem:[%s1 + $0x298] sm:$0xff]
      %v637 = vld [vmem:[%s1 + $0x2a0] sm:$0xff]
      %v638 = vld [vmem:[%s1 + $0x2a8] sm:$0xff]
      %v639 = vld [vmem:[%s1 + $0x2b0] sm:$0xff]
      %v640 = vld [vmem:[%s1 + $0x2b8] sm:$0xff]
      %v641 = vld [vmem:[%s1 + $0x2c0] sm:$0xff]
      %v642 = vld [vmem:[%s1 + $0x2c8] sm:$0xff]
      %v643 = vld [vmem:[%s1 + $0x2d0] sm:$0xff]
      %v644 = vld [vmem:[%s1 + $0x2d8] sm:$0xff]
      %v645 = vld [vmem:[%s1 + $0x2e0] sm:$0xff]
      %v646 = vld [vmem:[%s1 + $0x2e8] sm:$0xff]
      %v647 = vld [vmem:[%s1 + $0x2f0] sm:$0xff]
      %v648 = vld [vmem:[%s1 + $0x2f8] sm:$0xff]
      %v649 = vld [vmem:[%s1 + $0x300] sm:$0xff]
      %v650 = vld [vmem:[%s1 + $0x308] sm:$0xff]
      %v651 = vld [vmem:[%s1 + $0x310] sm:$0xff]
      %v652 = vld [vmem:[%s1 + $0x318] sm:$0xff]
      %v653 = vld [vmem:[%s1 + $0x320] sm:$0xff]
      %v654 = vld [vmem:[%s1 + $0x328] sm:$0xff]
      %v655 = vld [vmem:[%s1 + $0x330] sm:$0xff]
      %v656 = vld [vmem:[%s1 + $0x338] sm:$0xff]
      %v657 = vld [vmem:[%s1 + $0x340] sm:$0xff]
      %v658 = vld [vmem:[%s1 + $0x348] sm:$0xff]
      %v659 = vld [vmem:[%s1 + $0x350] sm:$0xff]
      %v660 = vld [vmem:[%s1 + $0x358] sm:$0xff]
      %v661 = vld [vmem:[%s1 + $0x360] sm:$0xff]
      %v662 = vld [vmem:[%s1 + $0x368] sm:$0xff]
      %v663 = vld [vmem:[%s1 + $0x370] sm:$0xff]
      %v664 = vld [vmem:[%s1 + $0x378] sm:$0xf]
      %v665 = vld [vmem:[%s1 + $0x380] sm:$0xf]
      %v666 = vld [vmem:[%s1 + $0x388] sm:$0xf]
      %v667 = vld [vmem:[%s2] sm:$0xff]
      %v668 = vld [vmem:[%s2 + $0x8] sm:$0xff]
      %v669 = vld [vmem:[%s2 + $0x10] sm:$0xff]
      %v670 = vld [vmem:[%s2 + $0x18] sm:$0xff]
      %v671 = vld [vmem:[%s2 + $0x20] sm:$0xff]
      %v672 = vld [vmem:[%s2 + $0x28] sm:$0xff]
      %v673 = vld [vmem:[%s2 + $0x30] sm:$0xff]
      %v674 = vld [vmem:[%s2 + $0x38] sm:$0xff]
      %v675 = vld [vmem:[%s2 + $0x40] sm:$0xff]
      %v676 = vld [vmem:[%s2 + $0x48] sm:$0xff]
      %v677 = vld [vmem:[%s2 + $0x50] sm:$0xff]
      %v678 = vld [vmem:[%s2 + $0x58] sm:$0xff]
      %v679 = vld [vmem:[%s2 + $0x60] sm:$0xff]
      %v680 = vld [vmem:[%s2 + $0x68] sm:$0xff]
      %v681 = vld [vmem:[%s2 + $0x70] sm:$0xff]
      %v682 = vld [vmem:[%s2 + $0x78] sm:$0xff]
      %v683 = vld [vmem:[%s2 + $0x80] sm:$0xff]
      %v684 = vld [vmem:[%s2 + $0x88] sm:$0xff]
      %v685 = vld [vmem:[%s2 + $0x90] sm:$0xff]
      %v686 = vld [vmem:[%s2 + $0x98] sm:$0xff]
      %v687 = vld [vmem:[%s2 + $0xa0] sm:$0xff]
      %v688 = vld [vmem:[%s2 + $0xa8] sm:$0xff]
      %v689 = vld [vmem:[%s2 + $0xb0] sm:$0xff]
      %v690 = vld [vmem:[%s2 + $0xb8] sm:$0xff]
      %v691 = vld [vmem:[%s2 + $0xc0] sm:$0xff]
      %v692 = vld [vmem:[%s2 + $0xc8] sm:$0xff]
      %v693 = vld [vmem:[%s2 + $0xd0] sm:$0xff]
      %v694 = vld [vmem:[%s2 + $0xd8] sm:$0xff]
      %v695 = vld [vmem:[%s2 + $0xe0] sm:$0xff]
      %v696 = vld [vmem:[%s2 + $0xe8] sm:$0xff]
      %v697 = vld [vmem:[%s2 + $0xf0] sm:$0xff]
      %v698 = vld [vmem:[%s2 + $0xf8] sm:$0xff]
      %v699 = vld [vmem:[%s2 + $0x100] sm:$0xff]
      %v700 = vld [vmem:[%s2 + $0x108] sm:$0xff]
      %v701 = vld [vmem:[%s2 + $0x110] sm:$0xff]
      %v702 = vld [vmem:[%s2 + $0x118] sm:$0xff]
      %v703 = vld [vmem:[%s2 + $0x120] sm:$0xff]
      %v704 = vld [vmem:[%s2 + $0x128] sm:$0xf]
      %706 = vset.pattern.permute.xlu0 0
      %707 = vperm.xlu0 %706, %v667
      %v708 = vpop.permute.xlu0 %707
      %711 = vset.pattern.permute.xlu0 0
      %712 = vperm.xlu0 %711, %v668
      %v713 = vpop.permute.xlu0 %712
      %716 = vset.pattern.permute.xlu0 0
      %717 = vperm.xlu0 %716, %v669
      %v718 = vpop.permute.xlu0 %717
      %721 = vset.pattern.permute.xlu0 0
      %722 = vperm.xlu0 %721, %v670
      %v723 = vpop.permute.xlu0 %722
      %726 = vset.pattern.permute.xlu0 0
      %727 = vperm.xlu0 %726, %v671
      %v728 = vpop.permute.xlu0 %727
      %731 = vset.pattern.permute.xlu0 0
      %732 = vperm.xlu0 %731, %v672
      %v733 = vpop.permute.xlu0 %732
      %736 = vset.pattern.permute.xlu0 0
      %737 = vperm.xlu0 %736, %v673
      %v738 = vpop.permute.xlu0 %737
      %741 = vset.pattern.permute.xlu0 0
      %742 = vperm.xlu0 %741, %v674
      %v743 = vpop.permute.xlu0 %742
      %746 = vset.pattern.permute.xlu0 0
      %747 = vperm.xlu0 %746, %v675
      %v748 = vpop.permute.xlu0 %747
      %751 = vset.pattern.permute.xlu0 0
      %752 = vperm.xlu0 %751, %v676
      %v753 = vpop.permute.xlu0 %752
      %756 = vset.pattern.permute.xlu0 0
      %757 = vperm.xlu0 %756, %v677
      %v758 = vpop.permute.xlu0 %757
      %761 = vset.pattern.permute.xlu0 0
      %762 = vperm.xlu0 %761, %v678
      %v763 = vpop.permute.xlu0 %762
      %766 = vset.pattern.permute.xlu0 0
      %767 = vperm.xlu0 %766, %v679
      %v768 = vpop.permute.xlu0 %767
      %771 = vset.pattern.permute.xlu0 0
      %772 = vperm.xlu0 %771, %v680
      %v773 = vpop.permute.xlu0 %772
      %776 = vset.pattern.permute.xlu0 0
      %777 = vperm.xlu0 %776, %v681
      %v778 = vpop.permute.xlu0 %777
      %781 = vset.pattern.permute.xlu0 0
      %782 = vperm.xlu0 %781, %v682
      %v783 = vpop.permute.xlu0 %782
      %786 = vset.pattern.permute.xlu0 0
      %787 = vperm.xlu0 %786, %v683
      %v788 = vpop.permute.xlu0 %787
      %791 = vset.pattern.permute.xlu0 0
      %792 = vperm.xlu0 %791, %v684
      %v793 = vpop.permute.xlu0 %792
      %796 = vset.pattern.permute.xlu0 0
      %797 = vperm.xlu0 %796, %v685
      %v798 = vpop.permute.xlu0 %797
      %801 = vset.pattern.permute.xlu0 0
      %802 = vperm.xlu0 %801, %v686
      %v803 = vpop.permute.xlu0 %802
      %806 = vset.pattern.permute.xlu0 0
      %807 = vperm.xlu0 %806, %v687
      %v808 = vpop.permute.xlu0 %807
      %811 = vset.pattern.permute.xlu0 0
      %812 = vperm.xlu0 %811, %v688
      %v813 = vpop.permute.xlu0 %812
      %816 = vset.pattern.permute.xlu0 0
      %817 = vperm.xlu0 %816, %v689
      %v818 = vpop.permute.xlu0 %817
      %821 = vset.pattern.permute.xlu0 0
      %822 = vperm.xlu0 %821, %v690
      %v823 = vpop.permute.xlu0 %822
      %826 = vset.pattern.permute.xlu0 0
      %827 = vperm.xlu0 %826, %v691
      %v828 = vpop.permute.xlu0 %827
      %831 = vset.pattern.permute.xlu0 0
      %832 = vperm.xlu0 %831, %v692
      %v833 = vpop.permute.xlu0 %832
      %836 = vset.pattern.permute.xlu0 0
      %837 = vperm.xlu0 %836, %v693
      %v838 = vpop.permute.xlu0 %837
      %841 = vset.pattern.permute.xlu0 0
      %842 = vperm.xlu0 %841, %v694
      %v843 = vpop.permute.xlu0 %842
      %846 = vset.pattern.permute.xlu0 0
      %847 = vperm.xlu0 %846, %v695
      %v848 = vpop.permute.xlu0 %847
      %851 = vset.pattern.permute.xlu0 0
      %852 = vperm.xlu0 %851, %v696
      %v853 = vpop.permute.xlu0 %852
      %856 = vset.pattern.permute.xlu0 0
      %857 = vperm.xlu0 %856, %v697
      %v858 = vpop.permute.xlu0 %857
      %861 = vset.pattern.permute.xlu0 0
      %862 = vperm.xlu0 %861, %v698
      %v863 = vpop.permute.xlu0 %862
      %866 = vset.pattern.permute.xlu0 0
      %867 = vperm.xlu0 %866, %v699
      %v868 = vpop.permute.xlu0 %867
      %871 = vset.pattern.permute.xlu0 0
      %872 = vperm.xlu0 %871, %v700
      %v873 = vpop.permute.xlu0 %872
      %876 = vset.pattern.permute.xlu0 0
      %877 = vperm.xlu0 %876, %v701
      %v878 = vpop.permute.xlu0 %877
      %881 = vset.pattern.permute.xlu0 0
      %882 = vperm.xlu0 %881, %v702
      %v883 = vpop.permute.xlu0 %882
      %886 = vset.pattern.permute.xlu0 0
      %887 = vperm.xlu0 %886, %v703
      %v888 = vpop.permute.xlu0 %887
      %891 = vset.pattern.permute.xlu0 0
      %892 = vperm.xlu0 %891, %v704
      %v893 = vpop.permute.xlu0 %892
      %vm895 = vcmask 523264
      %v897 = vsel %vm895, %v555, 0
      %v900 = vsel %vm895, %v558, 0
      %v903 = vsel %vm895, %v561, 0
      %v906 = vsel %vm895, %v564, 0
      %v909 = vsel %vm895, %v567, 0
      %v912 = vsel %vm895, %v570, 0
      %v915 = vsel %vm895, %v573, 0
      %v918 = vsel %vm895, %v576, 0
      %v921 = vsel %vm895, %v579, 0
      %v924 = vsel %vm895, %v582, 0
      %v927 = vsel %vm895, %v585, 0
      %v930 = vsel %vm895, %v588, 0
      %v933 = vsel %vm895, %v591, 0
      %v936 = vsel %vm895, %v594, 0
      %v939 = vsel %vm895, %v597, 0
      %v942 = vsel %vm895, %v600, 0
      %v945 = vsel %vm895, %v603, 0
      %v948 = vsel %vm895, %v606, 0
      %v951 = vsel %vm895, %v609, 0
      %v954 = vsel %vm895, %v612, 0
      %v957 = vsel %vm895, %v615, 0
      %v960 = vsel %vm895, %v618, 0
      %v963 = vsel %vm895, %v621, 0
      %v966 = vsel %vm895, %v624, 0
      %v969 = vsel %vm895, %v627, 0
      %v972 = vsel %vm895, %v630, 0
      %v975 = vsel %vm895, %v633, 0
      %v978 = vsel %vm895, %v636, 0
      %v981 = vsel %vm895, %v639, 0
      %v984 = vsel %vm895, %v642, 0
      %v987 = vsel %vm895, %v645, 0
      %v990 = vsel %vm895, %v648, 0
      %v993 = vsel %vm895, %v651, 0
      %v996 = vsel %vm895, %v654, 0
      %v999 = vsel %vm895, %v657, 0
      %v1002 = vsel %vm895, %v660, 0
      %v1005 = vsel %vm895, %v663, 0
      %v1008 = vsel %vm895, %v666, 0
      %1010 = vmatpush.msra.mxu0 %v472
      %1011 = vmatpush.msra.mxu0 %v470
      %1012 = vmatpush.msra.mxu0 %v468
      %1013 = vmatpush.msra.mxu0 %v466
      %1014 = vmatpush.msra.mxu0 %v464
      %1015 = vmatpush.msra.mxu0 %v462
      %1016 = vmatpush.msra.mxu0 %v460
      %1017 = vmatpush.msra.mxu0 %v458
      %1018 = vmatpush.msra.mxu0 %v448
      %1019 = vmatpush.msra.mxu0 %v447
      %1020 = vmatpush.msra.mxu0 %v446
      %1021 = vmatpush.msra.mxu0 %v445
      %1022 = vmatpush.msra.mxu0 %v444
      %1023 = vmatpush.msra.mxu0 %v443
      %1024 = vmatpush.msra.mxu0 %v442
      %1025 = vmatpush.msra.mxu0 %v441
      %1026 = vmatmul.f32.gmra.mxu0 %v553
      %v1027 = vpop.f32.mrf.mxu0
      %v1028 = vadd.f32 %v708, %v1027
      %1029 = vmatmul.f32.gmra.mxu0 %v556
      %v1030 = vpop.f32.mrf.mxu0
      %v1031 = vadd.f32 %v713, %v1030
      %1032 = vmatmul.f32.gmra.mxu0 %v559
      %v1033 = vpop.f32.mrf.mxu0
      %v1034 = vadd.f32 %v718, %v1033
      %1035 = vmatmul.f32.gmra.mxu0 %v562
      %v1036 = vpop.f32.mrf.mxu0
      %v1037 = vadd.f32 %v723, %v1036
      %1038 = vmatmul.f32.gmra.mxu0 %v565
      %v1039 = vpop.f32.mrf.mxu0
      %v1040 = vadd.f32 %v728, %v1039
      %1041 = vmatmul.f32.gmra.mxu0 %v568
      %v1042 = vpop.f32.mrf.mxu0
      %v1043 = vadd.f32 %v733, %v1042
      %1044 = vmatmul.f32.gmra.mxu0 %v571
      %v1045 = vpop.f32.mrf.mxu0
      %v1046 = vadd.f32 %v738, %v1045
      %1047 = vmatmul.f32.gmra.mxu0 %v574
      %v1048 = vpop.f32.mrf.mxu0
      %v1049 = vadd.f32 %v743, %v1048
      %1050 = vmatmul.f32.gmra.mxu0 %v577
      %v1051 = vpop.f32.mrf.mxu0
      %v1052 = vadd.f32 %v748, %v1051
      %1053 = vmatmul.f32.gmra.mxu0 %v580
      %v1054 = vpop.f32.mrf.mxu0
      %v1055 = vadd.f32 %v753, %v1054
      %1056 = vmatmul.f32.gmra.mxu0 %v583
      %v1057 = vpop.f32.mrf.mxu0
      %v1058 = vadd.f32 %v758, %v1057
      %1059 = vmatmul.f32.gmra.mxu0 %v586
      %v1060 = vpop.f32.mrf.mxu0
      %v1061 = vadd.f32 %v763, %v1060
      %1062 = vmatmul.f32.gmra.mxu0 %v589
      %v1063 = vpop.f32.mrf.mxu0
      %v1064 = vadd.f32 %v768, %v1063
      %1065 = vmatmul.f32.gmra.mxu0 %v592
      %v1066 = vpop.f32.mrf.mxu0
      %v1067 = vadd.f32 %v773, %v1066
      %1068 = vmatmul.f32.gmra.mxu0 %v595
      %v1069 = vpop.f32.mrf.mxu0
      %v1070 = vadd.f32 %v778, %v1069
      %1071 = vmatmul.f32.gmra.mxu0 %v598
      %v1072 = vpop.f32.mrf.mxu0
      %v1073 = vadd.f32 %v783, %v1072
      %1074 = vmatmul.f32.gmra.mxu0 %v601
      %v1075 = vpop.f32.mrf.mxu0
      %v1076 = vadd.f32 %v788, %v1075
      %1077 = vmatmul.f32.gmra.mxu0 %v604
      %v1078 = vpop.f32.mrf.mxu0
      %v1079 = vadd.f32 %v793, %v1078
      %1080 = vmatmul.f32.gmra.mxu0 %v607
      %v1081 = vpop.f32.mrf.mxu0
      %v1082 = vadd.f32 %v798, %v1081
      %1083 = vmatmul.f32.gmra.mxu0 %v610
      %v1084 = vpop.f32.mrf.mxu0
      %v1085 = vadd.f32 %v803, %v1084
      %1086 = vmatmul.f32.gmra.mxu0 %v613
      %v1087 = vpop.f32.mrf.mxu0
      %v1088 = vadd.f32 %v808, %v1087
      %1089 = vmatmul.f32.gmra.mxu0 %v616
      %v1090 = vpop.f32.mrf.mxu0
      %v1091 = vadd.f32 %v813, %v1090
      %1092 = vmatmul.f32.gmra.mxu0 %v619
      %v1093 = vpop.f32.mrf.mxu0
      %v1094 = vadd.f32 %v818, %v1093
      %1095 = vmatmul.f32.gmra.mxu0 %v622
      %v1096 = vpop.f32.mrf.mxu0
      %v1097 = vadd.f32 %v823, %v1096
      %1098 = vmatmul.f32.gmra.mxu0 %v625
      %v1099 = vpop.f32.mrf.mxu0
      %v1100 = vadd.f32 %v828, %v1099
      %1101 = vmatmul.f32.gmra.mxu0 %v628
      %v1102 = vpop.f32.mrf.mxu0
      %v1103 = vadd.f32 %v833, %v1102
      %1104 = vmatmul.f32.gmra.mxu0 %v631
      %v1105 = vpop.f32.mrf.mxu0
      %v1106 = vadd.f32 %v838, %v1105
      %1107 = vmatmul.f32.gmra.mxu0 %v634
      %v1108 = vpop.f32.mrf.mxu0
      %v1109 = vadd.f32 %v843, %v1108
      %1110 = vmatmul.f32.gmra.mxu0 %v637
      %v1111 = vpop.f32.mrf.mxu0
      %v1112 = vadd.f32 %v848, %v1111
      %1113 = vmatmul.f32.gmra.mxu0 %v640
      %v1114 = vpop.f32.mrf.mxu0
      %v1115 = vadd.f32 %v853, %v1114
      %1116 = vmatmul.f32.gmra.mxu0 %v643
      %v1117 = vpop.f32.mrf.mxu0
      %v1118 = vadd.f32 %v858, %v1117
      %1119 = vmatmul.f32.gmra.mxu0 %v646
      %v1120 = vpop.f32.mrf.mxu0
      %v1121 = vadd.f32 %v863, %v1120
      %1122 = vmatmul.f32.gmra.mxu0 %v649
      %v1123 = vpop.f32.mrf.mxu0
      %v1124 = vadd.f32 %v868, %v1123
      %1125 = vmatmul.f32.gmra.mxu0 %v652
      %v1126 = vpop.f32.mrf.mxu0
      %v1127 = vadd.f32 %v873, %v1126
      %1128 = vmatmul.f32.gmra.mxu0 %v655
      %v1129 = vpop.f32.mrf.mxu0
      %v1130 = vadd.f32 %v878, %v1129
      %1131 = vmatmul.f32.gmra.mxu0 %v658
      %v1132 = vpop.f32.mrf.mxu0
      %v1133 = vadd.f32 %v883, %v1132
      %1134 = vmatmul.f32.gmra.mxu0 %v661
      %v1135 = vpop.f32.mrf.mxu0
      %v1136 = vadd.f32 %v888, %v1135
      %1137 = vmatmul.f32.gmra.mxu0 %v664
      %v1138 = vpop.f32.mrf.mxu0
      %v1139 = vadd.f32 %v893, %v1138
      %1140 = vdwg.mxu0
      %1141 = vmatpush.msra.mxu0 %v520
      %1142 = vmatpush.msra.mxu0 %v518
      %1143 = vmatpush.msra.mxu0 %v516
      %1144 = vmatpush.msra.mxu0 %v514
      %1145 = vmatpush.msra.mxu0 %v512
      %1146 = vmatpush.msra.mxu0 %v510
      %1147 = vmatpush.msra.mxu0 %v508
      %1148 = vmatpush.msra.mxu0 %v506
      %1149 = vmatpush.msra.mxu0 %v496
      %1150 = vmatpush.msra.mxu0 %v494
      %1151 = vmatpush.msra.mxu0 %v492
      %1152 = vmatpush.msra.mxu0 %v490
      %1153 = vmatpush.msra.mxu0 %v488
      %1154 = vmatpush.msra.mxu0 %v486
      %1155 = vmatpush.msra.mxu0 %v484
      %1156 = vmatpush.msra.mxu0 %v482
      %1157 = vmatmul.f32.gmra.mxu0 %v554
      %v1158 = vpop.f32.mrf.mxu0
      %v1159 = vadd.f32 %v1028, %v1158
      %1160 = vmatmul.f32.gmra.mxu0 %v557
      %v1161 = vpop.f32.mrf.mxu0
      %v1162 = vadd.f32 %v1031, %v1161
      %1163 = vmatmul.f32.gmra.mxu0 %v560
      %v1164 = vpop.f32.mrf.mxu0
      %v1165 = vadd.f32 %v1034, %v1164
      %1166 = vmatmul.f32.gmra.mxu0 %v563
      %v1167 = vpop.f32.mrf.mxu0
      %v1168 = vadd.f32 %v1037, %v1167
      %1169 = vmatmul.f32.gmra.mxu0 %v566
      %v1170 = vpop.f32.mrf.mxu0
      %v1171 = vadd.f32 %v1040, %v1170
      %1172 = vmatmul.f32.gmra.mxu0 %v569
      %v1173 = vpop.f32.mrf.mxu0
      %v1174 = vadd.f32 %v1043, %v1173
      %1175 = vmatmul.f32.gmra.mxu0 %v572
      %v1176 = vpop.f32.mrf.mxu0
      %v1177 = vadd.f32 %v1046, %v1176
      %1178 = vmatmul.f32.gmra.mxu0 %v575
      %v1179 = vpop.f32.mrf.mxu0
      %v1180 = vadd.f32 %v1049, %v1179
      %1181 = vmatmul.f32.gmra.mxu0 %v578
      %v1182 = vpop.f32.mrf.mxu0
      %v1183 = vadd.f32 %v1052, %v1182
      %1184 = vmatmul.f32.gmra.mxu0 %v581
      %v1185 = vpop.f32.mrf.mxu0
      %v1186 = vadd.f32 %v1055, %v1185
      %1187 = vmatmul.f32.gmra.mxu0 %v584
      %v1188 = vpop.f32.mrf.mxu0
      %v1189 = vadd.f32 %v1058, %v1188
      %1190 = vmatmul.f32.gmra.mxu0 %v587
      %v1191 = vpop.f32.mrf.mxu0
      %v1192 = vadd.f32 %v1061, %v1191
      %1193 = vmatmul.f32.gmra.mxu0 %v590
      %v1194 = vpop.f32.mrf.mxu0
      %v1195 = vadd.f32 %v1064, %v1194
      %1196 = vmatmul.f32.gmra.mxu0 %v593
      %v1197 = vpop.f32.mrf.mxu0
      %v1198 = vadd.f32 %v1067, %v1197
      %1199 = vmatmul.f32.gmra.mxu0 %v596
      %v1200 = vpop.f32.mrf.mxu0
      %v1201 = vadd.f32 %v1070, %v1200
      %1202 = vmatmul.f32.gmra.mxu0 %v599
      %v1203 = vpop.f32.mrf.mxu0
      %v1204 = vadd.f32 %v1073, %v1203
      %1205 = vmatmul.f32.gmra.mxu0 %v602
      %v1206 = vpop.f32.mrf.mxu0
      %v1207 = vadd.f32 %v1076, %v1206
      %1208 = vmatmul.f32.gmra.mxu0 %v605
      %v1209 = vpop.f32.mrf.mxu0
      %v1210 = vadd.f32 %v1079, %v1209
      %1211 = vmatmul.f32.gmra.mxu0 %v608
      %v1212 = vpop.f32.mrf.mxu0
      %v1213 = vadd.f32 %v1082, %v1212
      %1214 = vmatmul.f32.gmra.mxu0 %v611
      %v1215 = vpop.f32.mrf.mxu0
      %v1216 = vadd.f32 %v1085, %v1215
      %1217 = vmatmul.f32.gmra.mxu0 %v614
      %v1218 = vpop.f32.mrf.mxu0
      %v1219 = vadd.f32 %v1088, %v1218
      %1220 = vmatmul.f32.gmra.mxu0 %v617
      %v1221 = vpop.f32.mrf.mxu0
      %v1222 = vadd.f32 %v1091, %v1221
      %1223 = vmatmul.f32.gmra.mxu0 %v620
      %v1224 = vpop.f32.mrf.mxu0
      %v1225 = vadd.f32 %v1094, %v1224
      %1226 = vmatmul.f32.gmra.mxu0 %v623
      %v1227 = vpop.f32.mrf.mxu0
      %v1228 = vadd.f32 %v1097, %v1227
      %1229 = vmatmul.f32.gmra.mxu0 %v626
      %v1230 = vpop.f32.mrf.mxu0
      %v1231 = vadd.f32 %v1100, %v1230
      %1232 = vmatmul.f32.gmra.mxu0 %v629
      %v1233 = vpop.f32.mrf.mxu0
      %v1234 = vadd.f32 %v1103, %v1233
      %1235 = vmatmul.f32.gmra.mxu0 %v632
      %v1236 = vpop.f32.mrf.mxu0
      %v1237 = vadd.f32 %v1106, %v1236
      %1238 = vmatmul.f32.gmra.mxu0 %v635
      %v1239 = vpop.f32.mrf.mxu0
      %v1240 = vadd.f32 %v1109, %v1239
      %1241 = vmatmul.f32.gmra.mxu0 %v638
      %v1242 = vpop.f32.mrf.mxu0
      %v1243 = vadd.f32 %v1112, %v1242
      %1244 = vmatmul.f32.gmra.mxu0 %v641
      %v1245 = vpop.f32.mrf.mxu0
      %v1246 = vadd.f32 %v1115, %v1245
      %1247 = vmatmul.f32.gmra.mxu0 %v644
      %v1248 = vpop.f32.mrf.mxu0
      %v1249 = vadd.f32 %v1118, %v1248
      %1250 = vmatmul.f32.gmra.mxu0 %v647
      %v1251 = vpop.f32.mrf.mxu0
      %v1252 = vadd.f32 %v1121, %v1251
      %1253 = vmatmul.f32.gmra.mxu0 %v650
      %v1254 = vpop.f32.mrf.mxu0
      %v1255 = vadd.f32 %v1124, %v1254
      %1256 = vmatmul.f32.gmra.mxu0 %v653
      %v1257 = vpop.f32.mrf.mxu0
      %v1258 = vadd.f32 %v1127, %v1257
      %1259 = vmatmul.f32.gmra.mxu0 %v656
      %v1260 = vpop.f32.mrf.mxu0
      %v1261 = vadd.f32 %v1130, %v1260
      %1262 = vmatmul.f32.gmra.mxu0 %v659
      %v1263 = vpop.f32.mrf.mxu0
      %v1264 = vadd.f32 %v1133, %v1263
      %1265 = vmatmul.f32.gmra.mxu0 %v662
      %v1266 = vpop.f32.mrf.mxu0
      %v1267 = vadd.f32 %v1136, %v1266
      %1268 = vmatmul.f32.gmra.mxu0 %v665
      %v1269 = vpop.f32.mrf.mxu0
      %v1270 = vadd.f32 %v1139, %v1269
      %1271 = vdwg.mxu0
      %1272 = vmatpush.msra.mxu0 0.0
      %1273 = vmatpush.msra.mxu0 0.0
      %1274 = vmatpush.msra.mxu0 0.0
      %1275 = vmatpush.msra.mxu0 0.0
      %1276 = vmatpush.msra.mxu0 0.0
      %1277 = vmatpush.msra.mxu0 0.0
      %1278 = vmatpush.msra.mxu0 0.0
      %1279 = vmatpush.msra.mxu0 0.0
      %1280 = vmatpush.msra.mxu0 %v544
      %1281 = vmatpush.msra.mxu0 %v542
      %1282 = vmatpush.msra.mxu0 %v540
      %1283 = vmatpush.msra.mxu0 %v538
      %1284 = vmatpush.msra.mxu0 %v536
      %1285 = vmatpush.msra.mxu0 %v534
      %1286 = vmatpush.msra.mxu0 %v532
      %1287 = vmatpush.msra.mxu0 %v530
      %1288 = vmatmul.f32.gmra.mxu0 %v897
      %v1289 = vpop.f32.mrf.mxu0
      %v1290 = vadd.f32 %v1159, %v1289
      %1291 = vmatmul.f32.gmra.mxu0 %v900
      %v1292 = vpop.f32.mrf.mxu0
      %v1293 = vadd.f32 %v1162, %v1292
      %1294 = vmatmul.f32.gmra.mxu0 %v903
      %v1295 = vpop.f32.mrf.mxu0
      %v1296 = vadd.f32 %v1165, %v1295
      %1297 = vmatmul.f32.gmra.mxu0 %v906
      %v1298 = vpop.f32.mrf.mxu0
      %v1299 = vadd.f32 %v1168, %v1298
      %1300 = vmatmul.f32.gmra.mxu0 %v909
      %v1301 = vpop.f32.mrf.mxu0
      %v1302 = vadd.f32 %v1171, %v1301
      %1303 = vmatmul.f32.gmra.mxu0 %v912
      %v1304 = vpop.f32.mrf.mxu0
      %v1305 = vadd.f32 %v1174, %v1304
      %1306 = vmatmul.f32.gmra.mxu0 %v915
      %v1307 = vpop.f32.mrf.mxu0
      %v1308 = vadd.f32 %v1177, %v1307
      %1309 = vmatmul.f32.gmra.mxu0 %v918
      %v1310 = vpop.f32.mrf.mxu0
      %v1311 = vadd.f32 %v1180, %v1310
      %1312 = vmatmul.f32.gmra.mxu0 %v921
      %v1313 = vpop.f32.mrf.mxu0
      %v1314 = vadd.f32 %v1183, %v1313
      %1315 = vmatmul.f32.gmra.mxu0 %v924
      %v1316 = vpop.f32.mrf.mxu0
      %v1317 = vadd.f32 %v1186, %v1316
      %1318 = vmatmul.f32.gmra.mxu0 %v927
      %v1319 = vpop.f32.mrf.mxu0
      %v1320 = vadd.f32 %v1189, %v1319
      %1321 = vmatmul.f32.gmra.mxu0 %v930
      %v1322 = vpop.f32.mrf.mxu0
      %v1323 = vadd.f32 %v1192, %v1322
      %1324 = vmatmul.f32.gmra.mxu0 %v933
      %v1325 = vpop.f32.mrf.mxu0
      %v1326 = vadd.f32 %v1195, %v1325
      %1327 = vmatmul.f32.gmra.mxu0 %v936
      %v1328 = vpop.f32.mrf.mxu0
      %v1329 = vadd.f32 %v1198, %v1328
      %1330 = vmatmul.f32.gmra.mxu0 %v939
      %v1331 = vpop.f32.mrf.mxu0
      %v1332 = vadd.f32 %v1201, %v1331
      %1333 = vmatmul.f32.gmra.mxu0 %v942
      %v1334 = vpop.f32.mrf.mxu0
      %v1335 = vadd.f32 %v1204, %v1334
      %1336 = vmatmul.f32.gmra.mxu0 %v945
      %v1337 = vpop.f32.mrf.mxu0
      %v1338 = vadd.f32 %v1207, %v1337
      %1339 = vmatmul.f32.gmra.mxu0 %v948
      %v1340 = vpop.f32.mrf.mxu0
      %v1341 = vadd.f32 %v1210, %v1340
      %1342 = vmatmul.f32.gmra.mxu0 %v951
      %v1343 = vpop.f32.mrf.mxu0
      %v1344 = vadd.f32 %v1213, %v1343
      %1345 = vmatmul.f32.gmra.mxu0 %v954
      %v1346 = vpop.f32.mrf.mxu0
      %v1347 = vadd.f32 %v1216, %v1346
      %1348 = vmatmul.f32.gmra.mxu0 %v957
      %v1349 = vpop.f32.mrf.mxu0
      %v1350 = vadd.f32 %v1219, %v1349
      %1351 = vmatmul.f32.gmra.mxu0 %v960
      %v1352 = vpop.f32.mrf.mxu0
      %v1353 = vadd.f32 %v1222, %v1352
      %1354 = vmatmul.f32.gmra.mxu0 %v963
      %v1355 = vpop.f32.mrf.mxu0
      %v1356 = vadd.f32 %v1225, %v1355
      %1357 = vmatmul.f32.gmra.mxu0 %v966
      %v1358 = vpop.f32.mrf.mxu0
      %v1359 = vadd.f32 %v1228, %v1358
      %1360 = vmatmul.f32.gmra.mxu0 %v969
      %v1361 = vpop.f32.mrf.mxu0
      %v1362 = vadd.f32 %v1231, %v1361
      %1363 = vmatmul.f32.gmra.mxu0 %v972
      %v1364 = vpop.f32.mrf.mxu0
      %v1365 = vadd.f32 %v1234, %v1364
      %1366 = vmatmul.f32.gmra.mxu0 %v975
      %v1367 = vpop.f32.mrf.mxu0
      %v1368 = vadd.f32 %v1237, %v1367
      %1369 = vmatmul.f32.gmra.mxu0 %v978
      %v1370 = vpop.f32.mrf.mxu0
      %v1371 = vadd.f32 %v1240, %v1370
      %1372 = vmatmul.f32.gmra.mxu0 %v981
      %v1373 = vpop.f32.mrf.mxu0
      %v1374 = vadd.f32 %v1243, %v1373
      %1375 = vmatmul.f32.gmra.mxu0 %v984
      %v1376 = vpop.f32.mrf.mxu0
      %v1377 = vadd.f32 %v1246, %v1376
      %1378 = vmatmul.f32.gmra.mxu0 %v987
      %v1379 = vpop.f32.mrf.mxu0
      %v1380 = vadd.f32 %v1249, %v1379
      %1381 = vmatmul.f32.gmra.mxu0 %v990
      %v1382 = vpop.f32.mrf.mxu0
      %v1383 = vadd.f32 %v1252, %v1382
      %1384 = vmatmul.f32.gmra.mxu0 %v993
      %v1385 = vpop.f32.mrf.mxu0
      %v1386 = vadd.f32 %v1255, %v1385
      %1387 = vmatmul.f32.gmra.mxu0 %v996
      %v1388 = vpop.f32.mrf.mxu0
      %v1389 = vadd.f32 %v1258, %v1388
      %1390 = vmatmul.f32.gmra.mxu0 %v999
      %v1391 = vpop.f32.mrf.mxu0
      %v1392 = vadd.f32 %v1261, %v1391
      %1393 = vmatmul.f32.gmra.mxu0 %v1002
      %v1394 = vpop.f32.mrf.mxu0
      %v1395 = vadd.f32 %v1264, %v1394
      %1396 = vmatmul.f32.gmra.mxu0 %v1005
      %v1397 = vpop.f32.mrf.mxu0
      %v1398 = vadd.f32 %v1267, %v1397
      %1399 = vmatmul.f32.gmra.mxu0 %v1008
      %v1400 = vpop.f32.mrf.mxu0
      %v1401 = vadd.f32 %v1270, %v1400
      %1402 = vdwg.mxu0
      %v1403 = vmax.f32 %v1290, 0.0
      %v1404 = vmax.f32 %v1293, 0.0
      %v1405 = vmax.f32 %v1296, 0.0
      %v1406 = vmax.f32 %v1299, 0.0
      %v1407 = vmax.f32 %v1302, 0.0
      %v1408 = vmax.f32 %v1305, 0.0
      %v1409 = vmax.f32 %v1308, 0.0
      %v1410 = vmax.f32 %v1311, 0.0
      %v1411 = vmax.f32 %v1314, 0.0
      %v1412 = vmax.f32 %v1317, 0.0
      %v1413 = vmax.f32 %v1320, 0.0
      %v1414 = vmax.f32 %v1323, 0.0
      %v1415 = vmax.f32 %v1326, 0.0
      %v1416 = vmax.f32 %v1329, 0.0
      %v1417 = vmax.f32 %v1332, 0.0
      %v1418 = vmax.f32 %v1335, 0.0
      %v1419 = vmax.f32 %v1338, 0.0
      %v1420 = vmax.f32 %v1341, 0.0
      %v1421 = vmax.f32 %v1344, 0.0
      %v1422 = vmax.f32 %v1347, 0.0
      %v1423 = vmax.f32 %v1350, 0.0
      %v1424 = vmax.f32 %v1353, 0.0
      %v1425 = vmax.f32 %v1356, 0.0
      %v1426 = vmax.f32 %v1359, 0.0
      %v1427 = vmax.f32 %v1362, 0.0
      %v1428 = vmax.f32 %v1365, 0.0
      %v1429 = vmax.f32 %v1368, 0.0
      %v1430 = vmax.f32 %v1371, 0.0
      %v1431 = vmax.f32 %v1374, 0.0
      %v1432 = vmax.f32 %v1377, 0.0
      %v1433 = vmax.f32 %v1380, 0.0
      %v1434 = vmax.f32 %v1383, 0.0
      %v1435 = vmax.f32 %v1386, 0.0
      %v1436 = vmax.f32 %v1389, 0.0
      %v1437 = vmax.f32 %v1392, 0.0
      %v1438 = vmax.f32 %v1395, 0.0
      %v1439 = vmax.f32 %v1398, 0.0
      %v1440 = vmax.f32 %v1401, 0.0
      %v1441 = vld [vmem:[%s5] sm:$0xff]
      %v1442 = vld [vmem:[%s5 + $0x8] sm:$0xff]
      %v1443 = vld [vmem:[%s5 + $0x10] sm:$0xff]
      %v1444 = vld [vmem:[%s5 + $0x18] sm:$0xff]
      %v1445 = vld [vmem:[%s5 + $0x20] sm:$0xff]
      %v1446 = vld [vmem:[%s5 + $0x28] sm:$0xff]
      %v1447 = vld [vmem:[%s5 + $0x30] sm:$0xff]
      %v1448 = vld [vmem:[%s5 + $0x38] sm:$0xff]
      %v1449 = vld [vmem:[%s5 + $0x40] sm:$0xff]
      %v1450 = vld [vmem:[%s5 + $0x48] sm:$0xff]
      %v1451 = vld [vmem:[%s5 + $0x50] sm:$0xff]
      %v1452 = vld [vmem:[%s5 + $0x58] sm:$0xff]
      %v1453 = vld [vmem:[%s5 + $0x60] sm:$0xff]
      %v1454 = vld [vmem:[%s5 + $0x68] sm:$0xff]
      %v1455 = vld [vmem:[%s5 + $0x70] sm:$0xff]
      %v1456 = vld [vmem:[%s5 + $0x78] sm:$0xff]
      %v1457 = vld [vmem:[%s5 + $0x80] sm:$0xff]
      %v1458 = vld [vmem:[%s5 + $0x88] sm:$0xff]
      %v1459 = vld [vmem:[%s5 + $0x90] sm:$0xff]
      %v1460 = vld [vmem:[%s5 + $0x98] sm:$0xff]
      %v1461 = vld [vmem:[%s5 + $0xa0] sm:$0xff]
      %v1462 = vld [vmem:[%s5 + $0xa8] sm:$0xff]
      %v1463 = vld [vmem:[%s5 + $0xb0] sm:$0xff]
      %v1464 = vld [vmem:[%s5 + $0xb8] sm:$0xff]
      %v1465 = vld [vmem:[%s5 + $0xc0] sm:$0xff]
      %v1466 = vld [vmem:[%s5 + $0xc8] sm:$0xff]
      %v1467 = vld [vmem:[%s5 + $0xd0] sm:$0xff]
      %v1468 = vld [vmem:[%s5 + $0xd8] sm:$0xff]
      %v1469 = vld [vmem:[%s5 + $0xe0] sm:$0xff]
      %v1470 = vld [vmem:[%s5 + $0xe8] sm:$0xff]
      %v1471 = vld [vmem:[%s5 + $0xf0] sm:$0xff]
      %v1472 = vld [vmem:[%s5 + $0xf8] sm:$0xff]
      %v1473 = vld [vmem:[%s5 + $0x100] sm:$0xff]
      %v1474 = vld [vmem:[%s5 + $0x108] sm:$0xff]
      %v1475 = vld [vmem:[%s5 + $0x110] sm:$0xff]
      %v1476 = vld [vmem:[%s5 + $0x118] sm:$0xff]
      %v1477 = vld [vmem:[%s5 + $0x120] sm:$0xff]
      %v1478 = vld [vmem:[%s5 + $0x128] sm:$0xff]
      %v1479 = vld [vmem:[%s5 + $0x130] sm:$0xff]
      %v1480 = vld [vmem:[%s5 + $0x138] sm:$0xff]
      %v1481 = vld [vmem:[%s5 + $0x140] sm:$0xff]
      %v1482 = vld [vmem:[%s5 + $0x148] sm:$0xff]
      %v1483 = vld [vmem:[%s5 + $0x150] sm:$0xff]
      %v1484 = vld [vmem:[%s5 + $0x158] sm:$0xff]
      %v1485 = vld [vmem:[%s5 + $0x160] sm:$0xff]
      %v1486 = vld [vmem:[%s5 + $0x168] sm:$0xff]
      %v1487 = vld [vmem:[%s5 + $0x170] sm:$0xff]
      %v1488 = vld [vmem:[%s5 + $0x178] sm:$0xff]
      %v1489 = vld [vmem:[%s5 + $0x180] sm:$0xff]
      %v1490 = vld [vmem:[%s5 + $0x188] sm:$0xff]
      %v1491 = vld [vmem:[%s5 + $0x190] sm:$0xff]
      %v1492 = vld [vmem:[%s5 + $0x198] sm:$0xff]
      %v1493 = vld [vmem:[%s5 + $0x1a0] sm:$0xff]
      %v1494 = vld [vmem:[%s5 + $0x1a8] sm:$0xff]
      %v1495 = vld [vmem:[%s5 + $0x1b0] sm:$0xff]
      %v1496 = vld [vmem:[%s5 + $0x1b8] sm:$0xff]
      %v1497 = vld [vmem:[%s5 + $0x1c0] sm:$0xff]
      %v1498 = vld [vmem:[%s5 + $0x1c8] sm:$0xff]
      %v1499 = vld [vmem:[%s5 + $0x1d0] sm:$0xff]
      %v1500 = vld [vmem:[%s5 + $0x1d8] sm:$0xff]
      %vm1501 = vcmask 359424
      %v1503 = vsel %vm1501, %v1443, 0
      %v1506 = vsel %vm1501, %v1446, 0
      %v1509 = vsel %vm1501, %v1449, 0
      %v1512 = vsel %vm1501, %v1452, 0
      %v1515 = vsel %vm1501, %v1455, 0
      %v1518 = vsel %vm1501, %v1458, 0
      %v1521 = vsel %vm1501, %v1461, 0
      %v1524 = vsel %vm1501, %v1464, 0
      %v1527 = vsel %vm1501, %v1467, 0
      %v1530 = vsel %vm1501, %v1470, 0
      %v1533 = vsel %vm1501, %v1473, 0
      %v1536 = vsel %vm1501, %v1476, 0
      %v1539 = vsel %vm1501, %v1479, 0
      %v1542 = vsel %vm1501, %v1482, 0
      %v1545 = vsel %vm1501, %v1485, 0
      %v1548 = vsel %vm1501, %v1488, 0
      %v1551 = vsel %vm1501, %v1491, 0
      %v1554 = vsel %vm1501, %v1494, 0
      %v1557 = vsel %vm1501, %v1497, 0
      %v1560 = vsel %vm1501, %v1500, 0
      %vm1562 = vcmask 1043456
      %v1564 = vsel %vm1562, %v1440, 0
      %1566 = vmatpush.msra.mxu0 %v1418
      %1567 = vmatpush.msra.mxu0 %v1417
      %1568 = vmatpush.msra.mxu0 %v1416
      %1569 = vmatpush.msra.mxu0 %v1415
      %1570 = vmatpush.msra.mxu0 %v1414
      %1571 = vmatpush.msra.mxu0 %v1413
      %1572 = vmatpush.msra.mxu0 %v1412
      %1573 = vmatpush.msra.mxu0 %v1411
      %1574 = vmatpush.msra.mxu0 %v1410
      %1575 = vmatpush.msra.mxu0 %v1409
      %1576 = vmatpush.msra.mxu0 %v1408
      %1577 = vmatpush.msra.mxu0 %v1407
      %1578 = vmatpush.msra.mxu0 %v1406
      %1579 = vmatpush.msra.mxu0 %v1405
      %1580 = vmatpush.msra.mxu0 %v1404
      %1581 = vmatpush.msra.mxu0 %v1403
      %1582 = vmatmul.f32.gmra.mxu0 %v1441
      %v1583 = vpop.f32.mrf.mxu0
      %v1584 = vadd.f32 0.0, %v1583
      %1585 = vmatmul.f32.gmra.mxu0 %v1444
      %v1586 = vpop.f32.mrf.mxu0
      %v1587 = vadd.f32 0.0, %v1586
      %1588 = vmatmul.f32.gmra.mxu0 %v1447
      %v1589 = vpop.f32.mrf.mxu0
      %v1590 = vadd.f32 0.0, %v1589
      %1591 = vmatmul.f32.gmra.mxu0 %v1450
      %v1592 = vpop.f32.mrf.mxu0
      %v1593 = vadd.f32 0.0, %v1592
      %1594 = vmatmul.f32.gmra.mxu0 %v1453
      %v1595 = vpop.f32.mrf.mxu0
      %v1596 = vadd.f32 0.0, %v1595
      %1597 = vmatmul.f32.gmra.mxu0 %v1456
      %v1598 = vpop.f32.mrf.mxu0
      %v1599 = vadd.f32 0.0, %v1598
      %1600 = vmatmul.f32.gmra.mxu0 %v1459
      %v1601 = vpop.f32.mrf.mxu0
      %v1602 = vadd.f32 0.0, %v1601
      %1603 = vmatmul.f32.gmra.mxu0 %v1462
      %v1604 = vpop.f32.mrf.mxu0
      %v1605 = vadd.f32 0.0, %v1604
      %1606 = vmatmul.f32.gmra.mxu0 %v1465
      %v1607 = vpop.f32.mrf.mxu0
      %v1608 = vadd.f32 0.0, %v1607
      %1609 = vmatmul.f32.gmra.mxu0 %v1468
      %v1610 = vpop.f32.mrf.mxu0
      %v1611 = vadd.f32 0.0, %v1610
      %1612 = vmatmul.f32.gmra.mxu0 %v1471
      %v1613 = vpop.f32.mrf.mxu0
      %v1614 = vadd.f32 0.0, %v1613
      %1615 = vmatmul.f32.gmra.mxu0 %v1474
      %v1616 = vpop.f32.mrf.mxu0
      %v1617 = vadd.f32 0.0, %v1616
      %1618 = vmatmul.f32.gmra.mxu0 %v1477
      %v1619 = vpop.f32.mrf.mxu0
      %v1620 = vadd.f32 0.0, %v1619
      %1621 = vmatmul.f32.gmra.mxu0 %v1480
      %v1622 = vpop.f32.mrf.mxu0
      %v1623 = vadd.f32 0.0, %v1622
      %1624 = vmatmul.f32.gmra.mxu0 %v1483
      %v1625 = vpop.f32.mrf.mxu0
      %v1626 = vadd.f32 0.0, %v1625
      %1627 = vmatmul.f32.gmra.mxu0 %v1486
      %v1628 = vpop.f32.mrf.mxu0
      %v1629 = vadd.f32 0.0, %v1628
      %1630 = vmatmul.f32.gmra.mxu0 %v1489
      %v1631 = vpop.f32.mrf.mxu0
      %v1632 = vadd.f32 0.0, %v1631
      %1633 = vmatmul.f32.gmra.mxu0 %v1492
      %v1634 = vpop.f32.mrf.mxu0
      %v1635 = vadd.f32 0.0, %v1634
      %1636 = vmatmul.f32.gmra.mxu0 %v1495
      %v1637 = vpop.f32.mrf.mxu0
      %v1638 = vadd.f32 0.0, %v1637
      %1639 = vmatmul.f32.gmra.mxu0 %v1498
      %v1640 = vpop.f32.mrf.mxu0
      %v1641 = vadd.f32 0.0, %v1640
      %1642 = vdwg.mxu0
      %1643 = vmatpush.msra.mxu0 %v1434
      %1644 = vmatpush.msra.mxu0 %v1433
      %1645 = vmatpush.msra.mxu0 %v1432
      %1646 = vmatpush.msra.mxu0 %v1431
      %1647 = vmatpush.msra.mxu0 %v1430
      %1648 = vmatpush.msra.mxu0 %v1429
      %1649 = vmatpush.msra.mxu0 %v1428
      %1650 = vmatpush.msra.mxu0 %v1427
      %1651 = vmatpush.msra.mxu0 %v1426
      %1652 = vmatpush.msra.mxu0 %v1425
      %1653 = vmatpush.msra.mxu0 %v1424
      %1654 = vmatpush.msra.mxu0 %v1423
      %1655 = vmatpush.msra.mxu0 %v1422
      %1656 = vmatpush.msra.mxu0 %v1421
      %1657 = vmatpush.msra.mxu0 %v1420
      %1658 = vmatpush.msra.mxu0 %v1419
      %1659 = vmatmul.f32.gmra.mxu0 %v1442
      %v1660 = vpop.f32.mrf.mxu0
      %v1661 = vadd.f32 %v1584, %v1660
      %1662 = vmatmul.f32.gmra.mxu0 %v1445
      %v1663 = vpop.f32.mrf.mxu0
      %v1664 = vadd.f32 %v1587, %v1663
      %1665 = vmatmul.f32.gmra.mxu0 %v1448
      %v1666 = vpop.f32.mrf.mxu0
      %v1667 = vadd.f32 %v1590, %v1666
      %1668 = vmatmul.f32.gmra.mxu0 %v1451
      %v1669 = vpop.f32.mrf.mxu0
      %v1670 = vadd.f32 %v1593, %v1669
      %1671 = vmatmul.f32.gmra.mxu0 %v1454
      %v1672 = vpop.f32.mrf.mxu0
      %v1673 = vadd.f32 %v1596, %v1672
      %1674 = vmatmul.f32.gmra.mxu0 %v1457
      %v1675 = vpop.f32.mrf.mxu0
      %v1676 = vadd.f32 %v1599, %v1675
      %1677 = vmatmul.f32.gmra.mxu0 %v1460
      %v1678 = vpop.f32.mrf.mxu0
      %v1679 = vadd.f32 %v1602, %v1678
      %1680 = vmatmul.f32.gmra.mxu0 %v1463
      %v1681 = vpop.f32.mrf.mxu0
      %v1682 = vadd.f32 %v1605, %v1681
      %1683 = vmatmul.f32.gmra.mxu0 %v1466
      %v1684 = vpop.f32.mrf.mxu0
      %v1685 = vadd.f32 %v1608, %v1684
      %1686 = vmatmul.f32.gmra.mxu0 %v1469
      %v1687 = vpop.f32.mrf.mxu0
      %v1688 = vadd.f32 %v1611, %v1687
      %1689 = vmatmul.f32.gmra.mxu0 %v1472
      %v1690 = vpop.f32.mrf.mxu0
      %v1691 = vadd.f32 %v1614, %v1690
      %1692 = vmatmul.f32.gmra.mxu0 %v1475
      %v1693 = vpop.f32.mrf.mxu0
      %v1694 = vadd.f32 %v1617, %v1693
      %1695 = vmatmul.f32.gmra.mxu0 %v1478
      %v1696 = vpop.f32.mrf.mxu0
      %v1697 = vadd.f32 %v1620, %v1696
      %1698 = vmatmul.f32.gmra.mxu0 %v1481
      %v1699 = vpop.f32.mrf.mxu0
      %v1700 = vadd.f32 %v1623, %v1699
      %1701 = vmatmul.f32.gmra.mxu0 %v1484
      %v1702 = vpop.f32.mrf.mxu0
      %v1703 = vadd.f32 %v1626, %v1702
      %1704 = vmatmul.f32.gmra.mxu0 %v1487
      %v1705 = vpop.f32.mrf.mxu0
      %v1706 = vadd.f32 %v1629, %v1705
      %1707 = vmatmul.f32.gmra.mxu0 %v1490
      %v1708 = vpop.f32.mrf.mxu0
      %v1709 = vadd.f32 %v1632, %v1708
      %1710 = vmatmul.f32.gmra.mxu0 %v1493
      %v1711 = vpop.f32.mrf.mxu0
      %v1712 = vadd.f32 %v1635, %v1711
      %1713 = vmatmul.f32.gmra.mxu0 %v1496
      %v1714 = vpop.f32.mrf.mxu0
      %v1715 = vadd.f32 %v1638, %v1714
      %1716 = vmatmul.f32.gmra.mxu0 %v1499
      %v1717 = vpop.f32.mrf.mxu0
      %v1718 = vadd.f32 %v1641, %v1717
      %1719 = vdwg.mxu0
      %1720 = vmatpush.msra.mxu0 0.0
      %1721 = vmatpush.msra.mxu0 0.0
      %1722 = vmatpush.msra.mxu0 0.0
      %1723 = vmatpush.msra.mxu0 0.0
      %1724 = vmatpush.msra.mxu0 0.0
      %1725 = vmatpush.msra.mxu0 0.0
      %1726 = vmatpush.msra.mxu0 0.0
      %1727 = vmatpush.msra.mxu0 0.0
      %1728 = vmatpush.msra.mxu0 0.0
      %1729 = vmatpush.msra.mxu0 0.0
      %1730 = vmatpush.msra.mxu0 %v1564
      %1731 = vmatpush.msra.mxu0 %v1439
      %1732 = vmatpush.msra.mxu0 %v1438
      %1733 = vmatpush.msra.mxu0 %v1437
      %1734 = vmatpush.msra.mxu0 %v1436
      %1735 = vmatpush.msra.mxu0 %v1435
      %1736 = vmatmul.f32.gmra.mxu0 %v1503
      %v1737 = vpop.f32.mrf.mxu0
      %v1738 = vadd.f32 %v1661, %v1737
      %1739 = vmatmul.f32.gmra.mxu0 %v1506
      %v1740 = vpop.f32.mrf.mxu0
      %v1741 = vadd.f32 %v1664, %v1740
      %1742 = vmatmul.f32.gmra.mxu0 %v1509
      %v1743 = vpop.f32.mrf.mxu0
      %v1744 = vadd.f32 %v1667, %v1743
      %1745 = vmatmul.f32.gmra.mxu0 %v1512
      %v1746 = vpop.f32.mrf.mxu0
      %v1747 = vadd.f32 %v1670, %v1746
      %1748 = vmatmul.f32.gmra.mxu0 %v1515
      %v1749 = vpop.f32.mrf.mxu0
      %v1750 = vadd.f32 %v1673, %v1749
      %1751 = vmatmul.f32.gmra.mxu0 %v1518
      %v1752 = vpop.f32.mrf.mxu0
      %v1753 = vadd.f32 %v1676, %v1752
      %1754 = vmatmul.f32.gmra.mxu0 %v1521
      %v1755 = vpop.f32.mrf.mxu0
      %v1756 = vadd.f32 %v1679, %v1755
      %1757 = vmatmul.f32.gmra.mxu0 %v1524
      %v1758 = vpop.f32.mrf.mxu0
      %v1759 = vadd.f32 %v1682, %v1758
      %1760 = vmatmul.f32.gmra.mxu0 %v1527
      %v1761 = vpop.f32.mrf.mxu0
      %v1762 = vadd.f32 %v1685, %v1761
      %1763 = vmatmul.f32.gmra.mxu0 %v1530
      %v1764 = vpop.f32.mrf.mxu0
      %v1765 = vadd.f32 %v1688, %v1764
      %1766 = vmatmul.f32.gmra.mxu0 %v1533
      %v1767 = vpop.f32.mrf.mxu0
      %v1768 = vadd.f32 %v1691, %v1767
      %1769 = vmatmul.f32.gmra.mxu0 %v1536
      %v1770 = vpop.f32.mrf.mxu0
      %v1771 = vadd.f32 %v1694, %v1770
      %1772 = vmatmul.f32.gmra.mxu0 %v1539
      %v1773 = vpop.f32.mrf.mxu0
      %v1774 = vadd.f32 %v1697, %v1773
      %1775 = vmatmul.f32.gmra.mxu0 %v1542
      %v1776 = vpop.f32.mrf.mxu0
      %v1777 = vadd.f32 %v1700, %v1776
      %1778 = vmatmul.f32.gmra.mxu0 %v1545
      %v1779 = vpop.f32.mrf.mxu0
      %v1780 = vadd.f32 %v1703, %v1779
      %1781 = vmatmul.f32.gmra.mxu0 %v1548
      %v1782 = vpop.f32.mrf.mxu0
      %v1783 = vadd.f32 %v1706, %v1782
      %1784 = vmatmul.f32.gmra.mxu0 %v1551
      %v1785 = vpop.f32.mrf.mxu0
      %v1786 = vadd.f32 %v1709, %v1785
      %1787 = vmatmul.f32.gmra.mxu0 %v1554
      %v1788 = vpop.f32.mrf.mxu0
      %v1789 = vadd.f32 %v1712, %v1788
      %1790 = vmatmul.f32.gmra.mxu0 %v1557
      %v1791 = vpop.f32.mrf.mxu0
      %v1792 = vadd.f32 %v1715, %v1791
      %1793 = vmatmul.f32.gmra.mxu0 %v1560
      %v1794 = vpop.f32.mrf.mxu0
      %v1795 = vadd.f32 %v1718, %v1794
      %1796 = vdwg.mxu0
      %v1797 = vld [vmem:[%s6] sm:$0xff]
      %v1798 = vld [vmem:[%s6 + $0x8] sm:$0xff]
      %v1799 = vld [vmem:[%s6 + $0x10] sm:$0xff]
      %v1800 = vld [vmem:[%s6 + $0x18] sm:$0xff]
      %v1801 = vld [vmem:[%s6 + $0x20] sm:$0xff]
      %v1802 = vld [vmem:[%s6 + $0x28] sm:$0xff]
      %v1803 = vld [vmem:[%s6 + $0x30] sm:$0xff]
      %v1804 = vld [vmem:[%s6 + $0x38] sm:$0xff]
      %v1805 = vld [vmem:[%s6 + $0x40] sm:$0xff]
      %v1806 = vld [vmem:[%s6 + $0x48] sm:$0xff]
      %v1807 = vld [vmem:[%s6 + $0x50] sm:$0xff]
      %v1808 = vld [vmem:[%s6 + $0x58] sm:$0xff]
      %v1809 = vld [vmem:[%s6 + $0x60] sm:$0xff]
      %v1810 = vld [vmem:[%s6 + $0x68] sm:$0xff]
      %v1811 = vld [vmem:[%s6 + $0x70] sm:$0xff]
      %v1812 = vld [vmem:[%s6 + $0x78] sm:$0xff]
      %v1813 = vld [vmem:[%s6 + $0x80] sm:$0xff]
      %v1814 = vld [vmem:[%s6 + $0x88] sm:$0xff]
      %v1815 = vld [vmem:[%s6 + $0x90] sm:$0xff]
      %v1816 = vld [vmem:[%s6 + $0x98] sm:$0xff]
      %v1817 = vld [vmem:[%s6 + $0xa0] sm:$0xff]
      %v1818 = vld [vmem:[%s6 + $0xa8] sm:$0xff]
      %v1819 = vld [vmem:[%s6 + $0xb0] sm:$0xff]
      %v1820 = vld [vmem:[%s6 + $0xb8] sm:$0xff]
      %v1821 = vld [vmem:[%s6 + $0xc0] sm:$0xff]
      %v1822 = vld [vmem:[%s6 + $0xc8] sm:$0xff]
      %v1823 = vld [vmem:[%s6 + $0xd0] sm:$0xff]
      %v1824 = vld [vmem:[%s6 + $0xd8] sm:$0xff]
      %v1825 = vld [vmem:[%s6 + $0xe0] sm:$0xff]
      %v1826 = vld [vmem:[%s6 + $0xe8] sm:$0xff]
      %v1827 = vld [vmem:[%s6 + $0xf0] sm:$0xff]
      %v1828 = vld [vmem:[%s6 + $0xf8] sm:$0xff]
      %v1829 = vld [vmem:[%s6 + $0x100] sm:$0xff]
      %v1830 = vld [vmem:[%s6 + $0x108] sm:$0xff]
      %v1831 = vld [vmem:[%s6 + $0x110] sm:$0xff]
      %v1832 = vld [vmem:[%s6 + $0x118] sm:$0xff]
      %v1833 = vld [vmem:[%s6 + $0x120] sm:$0xff]
      %v1834 = vld [vmem:[%s6 + $0x128] sm:$0xff]
      %v1835 = vld [vmem:[%s6 + $0x130] sm:$0xff]
      %v1836 = vld [vmem:[%s6 + $0x138] sm:$0xff]
      %v1837 = vld [vmem:[%s6 + $0x140] sm:$0xff]
      %v1838 = vld [vmem:[%s6 + $0x148] sm:$0xff]
      %v1839 = vld [vmem:[%s6 + $0x150] sm:$0xff]
      %v1840 = vld [vmem:[%s6 + $0x158] sm:$0xff]
      %v1841 = vld [vmem:[%s6 + $0x160] sm:$0xff]
      %v1842 = vld [vmem:[%s6 + $0x168] sm:$0xff]
      %v1843 = vld [vmem:[%s6 + $0x170] sm:$0xff]
      %v1844 = vld [vmem:[%s6 + $0x178] sm:$0xff]
      %v1845 = vld [vmem:[%s6 + $0x180] sm:$0xff]
      %v1846 = vld [vmem:[%s6 + $0x188] sm:$0xff]
      %v1847 = vld [vmem:[%s6 + $0x190] sm:$0xff]
      %v1848 = vld [vmem:[%s6 + $0x198] sm:$0xff]
      %v1849 = vld [vmem:[%s6 + $0x1a0] sm:$0xff]
      %v1850 = vld [vmem:[%s6 + $0x1a8] sm:$0xff]
      %v1851 = vld [vmem:[%s6 + $0x1b0] sm:$0xff]
      %v1852 = vld [vmem:[%s6 + $0x1b8] sm:$0xff]
      %v1853 = vld [vmem:[%s6 + $0x1c0] sm:$0xff]
      %v1854 = vld [vmem:[%s6 + $0x1c8] sm:$0xff]
      %v1855 = vld [vmem:[%s6 + $0x1d0] sm:$0xff]
      %v1856 = vld [vmem:[%s6 + $0x1d8] sm:$0xff]
      %v1858 = vsel %vm1501, %v1799, 0
      %v1861 = vsel %vm1501, %v1802, 0
      %v1864 = vsel %vm1501, %v1805, 0
      %v1867 = vsel %vm1501, %v1808, 0
      %v1870 = vsel %vm1501, %v1811, 0
      %v1873 = vsel %vm1501, %v1814, 0
      %v1876 = vsel %vm1501, %v1817, 0
      %v1879 = vsel %vm1501, %v1820, 0
      %v1882 = vsel %vm1501, %v1823, 0
      %v1885 = vsel %vm1501, %v1826, 0
      %v1888 = vsel %vm1501, %v1829, 0
      %v1891 = vsel %vm1501, %v1832, 0
      %v1894 = vsel %vm1501, %v1835, 0
      %v1897 = vsel %vm1501, %v1838, 0
      %v1900 = vsel %vm1501, %v1841, 0
      %v1903 = vsel %vm1501, %v1844, 0
      %v1906 = vsel %vm1501, %v1847, 0
      %v1909 = vsel %vm1501, %v1850, 0
      %v1912 = vsel %vm1501, %v1853, 0
      %v1915 = vsel %vm1501, %v1856, 0
      %1917 = vmatpush.msra.mxu0 %v1418
      %1918 = vmatpush.msra.mxu0 %v1417
      %1919 = vmatpush.msra.mxu0 %v1416
      %1920 = vmatpush.msra.mxu0 %v1415
      %1921 = vmatpush.msra.mxu0 %v1414
      %1922 = vmatpush.msra.mxu0 %v1413
      %1923 = vmatpush.msra.mxu0 %v1412
      %1924 = vmatpush.msra.mxu0 %v1411
      %1925 = vmatpush.msra.mxu0 %v1410
      %1926 = vmatpush.msra.mxu0 %v1409
      %1927 = vmatpush.msra.mxu0 %v1408
      %1928 = vmatpush.msra.mxu0 %v1407
      %1929 = vmatpush.msra.mxu0 %v1406
      %1930 = vmatpush.msra.mxu0 %v1405
      %1931 = vmatpush.msra.mxu0 %v1404
      %1932 = vmatpush.msra.mxu0 %v1403
      %1933 = vmatmul.f32.gmra.mxu0 %v1797
      %v1934 = vpop.f32.mrf.mxu0
      %v1935 = vadd.f32 0.0, %v1934
      %1936 = vmatmul.f32.gmra.mxu0 %v1800
      %v1937 = vpop.f32.mrf.mxu0
      %v1938 = vadd.f32 0.0, %v1937
      %1939 = vmatmul.f32.gmra.mxu0 %v1803
      %v1940 = vpop.f32.mrf.mxu0
      %v1941 = vadd.f32 0.0, %v1940
      %1942 = vmatmul.f32.gmra.mxu0 %v1806
      %v1943 = vpop.f32.mrf.mxu0
      %v1944 = vadd.f32 0.0, %v1943
      %1945 = vmatmul.f32.gmra.mxu0 %v1809
      %v1946 = vpop.f32.mrf.mxu0
      %v1947 = vadd.f32 0.0, %v1946
      %1948 = vmatmul.f32.gmra.mxu0 %v1812
      %v1949 = vpop.f32.mrf.mxu0
      %v1950 = vadd.f32 0.0, %v1949
      %1951 = vmatmul.f32.gmra.mxu0 %v1815
      %v1952 = vpop.f32.mrf.mxu0
      %v1953 = vadd.f32 0.0, %v1952
      %1954 = vmatmul.f32.gmra.mxu0 %v1818
      %v1955 = vpop.f32.mrf.mxu0
      %v1956 = vadd.f32 0.0, %v1955
      %1957 = vmatmul.f32.gmra.mxu0 %v1821
      %v1958 = vpop.f32.mrf.mxu0
      %v1959 = vadd.f32 0.0, %v1958
      %1960 = vmatmul.f32.gmra.mxu0 %v1824
      %v1961 = vpop.f32.mrf.mxu0
      %v1962 = vadd.f32 0.0, %v1961
      %1963 = vmatmul.f32.gmra.mxu0 %v1827
      %v1964 = vpop.f32.mrf.mxu0
      %v1965 = vadd.f32 0.0, %v1964
      %1966 = vmatmul.f32.gmra.mxu0 %v1830
      %v1967 = vpop.f32.mrf.mxu0
      %v1968 = vadd.f32 0.0, %v1967
      %1969 = vmatmul.f32.gmra.mxu0 %v1833
      %v1970 = vpop.f32.mrf.mxu0
      %v1971 = vadd.f32 0.0, %v1970
      %1972 = vmatmul.f32.gmra.mxu0 %v1836
      %v1973 = vpop.f32.mrf.mxu0
      %v1974 = vadd.f32 0.0, %v1973
      %1975 = vmatmul.f32.gmra.mxu0 %v1839
      %v1976 = vpop.f32.mrf.mxu0
      %v1977 = vadd.f32 0.0, %v1976
      %1978 = vmatmul.f32.gmra.mxu0 %v1842
      %v1979 = vpop.f32.mrf.mxu0
      %v1980 = vadd.f32 0.0, %v1979
      %1981 = vmatmul.f32.gmra.mxu0 %v1845
      %v1982 = vpop.f32.mrf.mxu0
      %v1983 = vadd.f32 0.0, %v1982
      %1984 = vmatmul.f32.gmra.mxu0 %v1848
      %v1985 = vpop.f32.mrf.mxu0
      %v1986 = vadd.f32 0.0, %v1985
      %1987 = vmatmul.f32.gmra.mxu0 %v1851
      %v1988 = vpop.f32.mrf.mxu0
      %v1989 = vadd.f32 0.0, %v1988
      %1990 = vmatmul.f32.gmra.mxu0 %v1854
      %v1991 = vpop.f32.mrf.mxu0
      %v1992 = vadd.f32 0.0, %v1991
      %1993 = vdwg.mxu0
      %1994 = vmatpush.msra.mxu0 %v1434
      %1995 = vmatpush.msra.mxu0 %v1433
      %1996 = vmatpush.msra.mxu0 %v1432
      %1997 = vmatpush.msra.mxu0 %v1431
      %1998 = vmatpush.msra.mxu0 %v1430
      %1999 = vmatpush.msra.mxu0 %v1429
      %2000 = vmatpush.msra.mxu0 %v1428
      %2001 = vmatpush.msra.mxu0 %v1427
      %2002 = vmatpush.msra.mxu0 %v1426
      %2003 = vmatpush.msra.mxu0 %v1425
      %2004 = vmatpush.msra.mxu0 %v1424
      %2005 = vmatpush.msra.mxu0 %v1423
      %2006 = vmatpush.msra.mxu0 %v1422
      %2007 = vmatpush.msra.mxu0 %v1421
      %2008 = vmatpush.msra.mxu0 %v1420
      %2009 = vmatpush.msra.mxu0 %v1419
      %2010 = vmatmul.f32.gmra.mxu0 %v1798
      %v2011 = vpop.f32.mrf.mxu0
      %v2012 = vadd.f32 %v1935, %v2011
      %2013 = vmatmul.f32.gmra.mxu0 %v1801
      %v2014 = vpop.f32.mrf.mxu0
      %v2015 = vadd.f32 %v1938, %v2014
      %2016 = vmatmul.f32.gmra.mxu0 %v1804
      %v2017 = vpop.f32.mrf.mxu0
      %v2018 = vadd.f32 %v1941, %v2017
      %2019 = vmatmul.f32.gmra.mxu0 %v1807
      %v2020 = vpop.f32.mrf.mxu0
      %v2021 = vadd.f32 %v1944, %v2020
      %2022 = vmatmul.f32.gmra.mxu0 %v1810
      %v2023 = vpop.f32.mrf.mxu0
      %v2024 = vadd.f32 %v1947, %v2023
      %2025 = vmatmul.f32.gmra.mxu0 %v1813
      %v2026 = vpop.f32.mrf.mxu0
      %v2027 = vadd.f32 %v1950, %v2026
      %2028 = vmatmul.f32.gmra.mxu0 %v1816
      %v2029 = vpop.f32.mrf.mxu0
      %v2030 = vadd.f32 %v1953, %v2029
      %2031 = vmatmul.f32.gmra.mxu0 %v1819
      %v2032 = vpop.f32.mrf.mxu0
      %v2033 = vadd.f32 %v1956, %v2032
      %2034 = vmatmul.f32.gmra.mxu0 %v1822
      %v2035 = vpop.f32.mrf.mxu0
      %v2036 = vadd.f32 %v1959, %v2035
      %2037 = vmatmul.f32.gmra.mxu0 %v1825
      %v2038 = vpop.f32.mrf.mxu0
      %v2039 = vadd.f32 %v1962, %v2038
      %2040 = vmatmul.f32.gmra.mxu0 %v1828
      %v2041 = vpop.f32.mrf.mxu0
      %v2042 = vadd.f32 %v1965, %v2041
      %2043 = vmatmul.f32.gmra.mxu0 %v1831
      %v2044 = vpop.f32.mrf.mxu0
      %v2045 = vadd.f32 %v1968, %v2044
      %2046 = vmatmul.f32.gmra.mxu0 %v1834
      %v2047 = vpop.f32.mrf.mxu0
      %v2048 = vadd.f32 %v1971, %v2047
      %2049 = vmatmul.f32.gmra.mxu0 %v1837
      %v2050 = vpop.f32.mrf.mxu0
      %v2051 = vadd.f32 %v1974, %v2050
      %2052 = vmatmul.f32.gmra.mxu0 %v1840
      %v2053 = vpop.f32.mrf.mxu0
      %v2054 = vadd.f32 %v1977, %v2053
      %2055 = vmatmul.f32.gmra.mxu0 %v1843
      %v2056 = vpop.f32.mrf.mxu0
      %v2057 = vadd.f32 %v1980, %v2056
      %2058 = vmatmul.f32.gmra.mxu0 %v1846
      %v2059 = vpop.f32.mrf.mxu0
      %v2060 = vadd.f32 %v1983, %v2059
      %2061 = vmatmul.f32.gmra.mxu0 %v1849
      %v2062 = vpop.f32.mrf.mxu0
      %v2063 = vadd.f32 %v1986, %v2062
      %2064 = vmatmul.f32.gmra.mxu0 %v1852
      %v2065 = vpop.f32.mrf.mxu0
      %v2066 = vadd.f32 %v1989, %v2065
      %2067 = vmatmul.f32.gmra.mxu0 %v1855
      %v2068 = vpop.f32.mrf.mxu0
      %v2069 = vadd.f32 %v1992, %v2068
      %2070 = vdwg.mxu0
      %2071 = vmatpush.msra.mxu0 0.0
      %2072 = vmatpush.msra.mxu0 0.0
      %2073 = vmatpush.msra.mxu0 0.0
      %2074 = vmatpush.msra.mxu0 0.0
      %2075 = vmatpush.msra.mxu0 0.0
      %2076 = vmatpush.msra.mxu0 0.0
      %2077 = vmatpush.msra.mxu0 0.0
      %2078 = vmatpush.msra.mxu0 0.0
      %2079 = vmatpush.msra.mxu0 0.0
      %2080 = vmatpush.msra.mxu0 0.0
      %2081 = vmatpush.msra.mxu0 %v1564
      %2082 = vmatpush.msra.mxu0 %v1439
      %2083 = vmatpush.msra.mxu0 %v1438
      %2084 = vmatpush.msra.mxu0 %v1437
      %2085 = vmatpush.msra.mxu0 %v1436
      %2086 = vmatpush.msra.mxu0 %v1435
      %2087 = vmatmul.f32.gmra.mxu0 %v1858
      %v2088 = vpop.f32.mrf.mxu0
      %v2089 = vadd.f32 %v2012, %v2088
      %2090 = vmatmul.f32.gmra.mxu0 %v1861
      %v2091 = vpop.f32.mrf.mxu0
      %v2092 = vadd.f32 %v2015, %v2091
      %2093 = vmatmul.f32.gmra.mxu0 %v1864
      %v2094 = vpop.f32.mrf.mxu0
      %v2095 = vadd.f32 %v2018, %v2094
      %2096 = vmatmul.f32.gmra.mxu0 %v1867
      %v2097 = vpop.f32.mrf.mxu0
      %v2098 = vadd.f32 %v2021, %v2097
      %2099 = vmatmul.f32.gmra.mxu0 %v1870
      %v2100 = vpop.f32.mrf.mxu0
      %v2101 = vadd.f32 %v2024, %v2100
      %2102 = vmatmul.f32.gmra.mxu0 %v1873
      %v2103 = vpop.f32.mrf.mxu0
      %v2104 = vadd.f32 %v2027, %v2103
      %2105 = vmatmul.f32.gmra.mxu0 %v1876
      %v2106 = vpop.f32.mrf.mxu0
      %v2107 = vadd.f32 %v2030, %v2106
      %2108 = vmatmul.f32.gmra.mxu0 %v1879
      %v2109 = vpop.f32.mrf.mxu0
      %v2110 = vadd.f32 %v2033, %v2109
      %2111 = vmatmul.f32.gmra.mxu0 %v1882
      %v2112 = vpop.f32.mrf.mxu0
      %v2113 = vadd.f32 %v2036, %v2112
      %2114 = vmatmul.f32.gmra.mxu0 %v1885
      %v2115 = vpop.f32.mrf.mxu0
      %v2116 = vadd.f32 %v2039, %v2115
      %2117 = vmatmul.f32.gmra.mxu0 %v1888
      %v2118 = vpop.f32.mrf.mxu0
      %v2119 = vadd.f32 %v2042, %v2118
      %2120 = vmatmul.f32.gmra.mxu0 %v1891
      %v2121 = vpop.f32.mrf.mxu0
      %v2122 = vadd.f32 %v2045, %v2121
      %2123 = vmatmul.f32.gmra.mxu0 %v1894
      %v2124 = vpop.f32.mrf.mxu0
      %v2125 = vadd.f32 %v2048, %v2124
      %2126 = vmatmul.f32.gmra.mxu0 %v1897
      %v2127 = vpop.f32.mrf.mxu0
      %v2128 = vadd.f32 %v2051, %v2127
      %2129 = vmatmul.f32.gmra.mxu0 %v1900
      %v2130 = vpop.f32.mrf.mxu0
      %v2131 = vadd.f32 %v2054, %v2130
      %2132 = vmatmul.f32.gmra.mxu0 %v1903
      %v2133 = vpop.f32.mrf.mxu0
      %v2134 = vadd.f32 %v2057, %v2133
      %2135 = vmatmul.f32.gmra.mxu0 %v1906
      %v2136 = vpop.f32.mrf.mxu0
      %v2137 = vadd.f32 %v2060, %v2136
      %2138 = vmatmul.f32.gmra.mxu0 %v1909
      %v2139 = vpop.f32.mrf.mxu0
      %v2140 = vadd.f32 %v2063, %v2139
      %2141 = vmatmul.f32.gmra.mxu0 %v1912
      %v2142 = vpop.f32.mrf.mxu0
      %v2143 = vadd.f32 %v2066, %v2142
      %2144 = vmatmul.f32.gmra.mxu0 %v1915
      %v2145 = vpop.f32.mrf.mxu0
      %v2146 = vadd.f32 %v2069, %v2145
      %2147 = vdwg.mxu0
      %v2148 = vmax.f32 %v1738, %v2089
      %v2149 = vmax.f32 %v1741, %v2092
      %v2150 = vmax.f32 %v1744, %v2095
      %v2151 = vmax.f32 %v1747, %v2098
      %v2152 = vmax.f32 %v1750, %v2101
      %v2153 = vmax.f32 %v1753, %v2104
      %v2154 = vmax.f32 %v1756, %v2107
      %v2155 = vmax.f32 %v1759, %v2110
      %v2156 = vmax.f32 %v1762, %v2113
      %v2157 = vmax.f32 %v1765, %v2116
      %v2158 = vmax.f32 %v1768, %v2119
      %v2159 = vmax.f32 %v1771, %v2122
      %v2160 = vmax.f32 %v1774, %v2125
      %v2161 = vmax.f32 %v1777, %v2128
      %v2162 = vmax.f32 %v1780, %v2131
      %v2163 = vmax.f32 %v1783, %v2134
      %v2164 = vmax.f32 %v1786, %v2137
      %v2165 = vmax.f32 %v1789, %v2140
      %v2166 = vmax.f32 %v1792, %v2143
      %v2167 = vmax.f32 %v1795, %v2146
      %v2168 = vld [vmem:[%s7] sm:$0xff]
      %v2169 = vld [vmem:[%s7 + $0x8] sm:$0xff]
      %v2170 = vld [vmem:[%s7 + $0x10] sm:$0xff]
      %v2171 = vld [vmem:[%s7 + $0x18] sm:$0xff]
      %v2172 = vld [vmem:[%s7 + $0x20] sm:$0xff]
      %v2173 = vld [vmem:[%s7 + $0x28] sm:$0xff]
      %v2174 = vld [vmem:[%s7 + $0x30] sm:$0xff]
      %v2175 = vld [vmem:[%s7 + $0x38] sm:$0xf]
      %vm2176 = vcmask 490496
      %v2178 = vsel %vm2176, %v2148, 0
      %v2181 = vsel %vm2176, %v2149, 0
      %v2184 = vsel %vm2176, %v2150, 0
      %v2187 = vsel %vm2176, %v2151, 0
      %v2190 = vsel %vm2176, %v2152, 0
      %v2193 = vsel %vm2176, %v2153, 0
      %v2196 = vsel %vm2176, %v2154, 0
      %v2199 = vsel %vm2176, %v2155, 0
      %v2202 = vsel %vm2176, %v2156, 0
      %v2205 = vsel %vm2176, %v2157, 0
      %v2208 = vsel %vm2176, %v2158, 0
      %v2211 = vsel %vm2176, %v2159, 0
      %v2214 = vsel %vm2176, %v2160, 0
      %v2217 = vsel %vm2176, %v2161, 0
      %v2220 = vsel %vm2176, %v2162, 0
      %v2223 = vsel %vm2176, %v2163, 0
      %v2226 = vsel %vm2176, %v2164, 0
      %v2229 = vsel %vm2176, %v2165, 0
      %v2232 = vsel %vm2176, %v2166, 0
      %v2235 = vsel %vm2176, %v2167, 0
      %v2238 = vsel %vm1562, %v2175, 0
      %2240 = vmatpush.msra.mxu0 0.0
      %2241 = vmatpush.msra.mxu0 0.0
      %2242 = vmatpush.msra.mxu0 0.0
      %2243 = vmatpush.msra.mxu0 0.0
      %2244 = vmatpush.msra.mxu0 0.0
      %2245 = vmatpush.msra.mxu0 0.0
      %2246 = vmatpush.msra.mxu0 0.0
      %2247 = vmatpush.msra.mxu0 0.0
      %2248 = vmatpush.msra.mxu0 %v2238
      %2249 = vmatpush.msra.mxu0 %v2174
      %2250 = vmatpush.msra.mxu0 %v2173
      %2251 = vmatpush.msra.mxu0 %v2172
      %2252 = vmatpush.msra.mxu0 %v2171
      %2253 = vmatpush.msra.mxu0 %v2170
      %2254 = vmatpush.msra.mxu0 %v2169
      %2255 = vmatpush.msra.mxu0 %v2168
      %2256 = vmatmul.f32.gmra.mxu0 %v2178
      %v2257 = vpop.f32.mrf.mxu0
      %v2258 = vadd.f32 0.0, %v2257
      %2259 = vmatmul.f32.gmra.mxu0 %v2181
      %v2260 = vpop.f32.mrf.mxu0
      %v2261 = vadd.f32 0.0, %v2260
      %2262 = vmatmul.f32.gmra.mxu0 %v2184
      %v2263 = vpop.f32.mrf.mxu0
      %v2264 = vadd.f32 0.0, %v2263
      %2265 = vmatmul.f32.gmra.mxu0 %v2187
      %v2266 = vpop.f32.mrf.mxu0
      %v2267 = vadd.f32 0.0, %v2266
      %2268 = vmatmul.f32.gmra.mxu0 %v2190
      %v2269 = vpop.f32.mrf.mxu0
      %v2270 = vadd.f32 0.0, %v2269
      %2271 = vmatmul.f32.gmra.mxu0 %v2193
      %v2272 = vpop.f32.mrf.mxu0
      %v2273 = vadd.f32 0.0, %v2272
      %2274 = vmatmul.f32.gmra.mxu0 %v2196
      %v2275 = vpop.f32.mrf.mxu0
      %v2276 = vadd.f32 0.0, %v2275
      %2277 = vmatmul.f32.gmra.mxu0 %v2199
      %v2278 = vpop.f32.mrf.mxu0
      %v2279 = vadd.f32 0.0, %v2278
      %2280 = vmatmul.f32.gmra.mxu0 %v2202
      %v2281 = vpop.f32.mrf.mxu0
      %v2282 = vadd.f32 0.0, %v2281
      %2283 = vmatmul.f32.gmra.mxu0 %v2205
      %v2284 = vpop.f32.mrf.mxu0
      %v2285 = vadd.f32 0.0, %v2284
      %2286 = vmatmul.f32.gmra.mxu0 %v2208
      %v2287 = vpop.f32.mrf.mxu0
      %v2288 = vadd.f32 0.0, %v2287
      %2289 = vmatmul.f32.gmra.mxu0 %v2211
      %v2290 = vpop.f32.mrf.mxu0
      %v2291 = vadd.f32 0.0, %v2290
      %2292 = vmatmul.f32.gmra.mxu0 %v2214
      %v2293 = vpop.f32.mrf.mxu0
      %v2294 = vadd.f32 0.0, %v2293
      %2295 = vmatmul.f32.gmra.mxu0 %v2217
      %v2296 = vpop.f32.mrf.mxu0
      %v2297 = vadd.f32 0.0, %v2296
      %2298 = vmatmul.f32.gmra.mxu0 %v2220
      %v2299 = vpop.f32.mrf.mxu0
      %v2300 = vadd.f32 0.0, %v2299
      %2301 = vmatmul.f32.gmra.mxu0 %v2223
      %v2302 = vpop.f32.mrf.mxu0
      %v2303 = vadd.f32 0.0, %v2302
      %2304 = vmatmul.f32.gmra.mxu0 %v2226
      %v2305 = vpop.f32.mrf.mxu0
      %v2306 = vadd.f32 0.0, %v2305
      %2307 = vmatmul.f32.gmra.mxu0 %v2229
      %v2308 = vpop.f32.mrf.mxu0
      %v2309 = vadd.f32 0.0, %v2308
      %2310 = vmatmul.f32.gmra.mxu0 %v2232
      %v2311 = vpop.f32.mrf.mxu0
      %v2312 = vadd.f32 0.0, %v2311
      %2313 = vmatmul.f32.gmra.mxu0 %v2235
      %v2314 = vpop.f32.mrf.mxu0
      %v2315 = vadd.f32 0.0, %v2314
      %2316 = vdwg.mxu0
      %v2317 = vld [vmem:[%s8] sm:$0xff]
      %v2318 = vld [vmem:[%s8 + $0x8] sm:$0xff]
      %v2319 = vld [vmem:[%s8 + $0x10] sm:$0xff]
      %v2320 = vld [vmem:[%s8 + $0x18] sm:$0xff]
      %v2321 = vld [vmem:[%s8 + $0x20] sm:$0xff]
      %v2322 = vld [vmem:[%s8 + $0x28] sm:$0xff]
      %v2323 = vld [vmem:[%s8 + $0x30] sm:$0xff]
      %v2324 = vld [vmem:[%s8 + $0x38] sm:$0xf]
      %v2326 = vsel %vm1562, %v2324, 0
      %2328 = vmatpush.msra.mxu0 0.0
      %2329 = vmatpush.msra.mxu0 0.0
      %2330 = vmatpush.msra.mxu0 0.0
      %2331 = vmatpush.msra.mxu0 0.0
      %2332 = vmatpush.msra.mxu0 0.0
      %2333 = vmatpush.msra.mxu0 0.0
      %2334 = vmatpush.msra.mxu0 0.0
      %2335 = vmatpush.msra.mxu0 0.0
      %2336 = vmatpush.msra.mxu0 %v2326
      %2337 = vmatpush.msra.mxu0 %v2323
      %2338 = vmatpush.msra.mxu0 %v2322
      %2339 = vmatpush.msra.mxu0 %v2321
      %2340 = vmatpush.msra.mxu0 %v2320
      %2341 = vmatpush.msra.mxu0 %v2319
      %2342 = vmatpush.msra.mxu0 %v2318
      %2343 = vmatpush.msra.mxu0 %v2317
      %2344 = vmatmul.f32.gmra.mxu0 %v2178
      %v2345 = vpop.f32.mrf.mxu0
      %v2346 = vadd.f32 0.0, %v2345
      %2347 = vmatmul.f32.gmra.mxu0 %v2181
      %v2348 = vpop.f32.mrf.mxu0
      %v2349 = vadd.f32 0.0, %v2348
      %2350 = vmatmul.f32.gmra.mxu0 %v2184
      %v2351 = vpop.f32.mrf.mxu0
      %v2352 = vadd.f32 0.0, %v2351
      %2353 = vmatmul.f32.gmra.mxu0 %v2187
      %v2354 = vpop.f32.mrf.mxu0
      %v2355 = vadd.f32 0.0, %v2354
      %2356 = vmatmul.f32.gmra.mxu0 %v2190
      %v2357 = vpop.f32.mrf.mxu0
      %v2358 = vadd.f32 0.0, %v2357
      %2359 = vmatmul.f32.gmra.mxu0 %v2193
      %v2360 = vpop.f32.mrf.mxu0
      %v2361 = vadd.f32 0.0, %v2360
      %2362 = vmatmul.f32.gmra.mxu0 %v2196
      %v2363 = vpop.f32.mrf.mxu0
      %v2364 = vadd.f32 0.0, %v2363
      %2365 = vmatmul.f32.gmra.mxu0 %v2199
      %v2366 = vpop.f32.mrf.mxu0
      %v2367 = vadd.f32 0.0, %v2366
      %2368 = vmatmul.f32.gmra.mxu0 %v2202
      %v2369 = vpop.f32.mrf.mxu0
      %v2370 = vadd.f32 0.0, %v2369
      %2371 = vmatmul.f32.gmra.mxu0 %v2205
      %v2372 = vpop.f32.mrf.mxu0
      %v2373 = vadd.f32 0.0, %v2372
      %2374 = vmatmul.f32.gmra.mxu0 %v2208
      %v2375 = vpop.f32.mrf.mxu0
      %v2376 = vadd.f32 0.0, %v2375
      %2377 = vmatmul.f32.gmra.mxu0 %v2211
      %v2378 = vpop.f32.mrf.mxu0
      %v2379 = vadd.f32 0.0, %v2378
      %2380 = vmatmul.f32.gmra.mxu0 %v2214
      %v2381 = vpop.f32.mrf.mxu0
      %v2382 = vadd.f32 0.0, %v2381
      %2383 = vmatmul.f32.gmra.mxu0 %v2217
      %v2384 = vpop.f32.mrf.mxu0
      %v2385 = vadd.f32 0.0, %v2384
      %2386 = vmatmul.f32.gmra.mxu0 %v2220
      %v2387 = vpop.f32.mrf.mxu0
      %v2388 = vadd.f32 0.0, %v2387
      %2389 = vmatmul.f32.gmra.mxu0 %v2223
      %v2390 = vpop.f32.mrf.mxu0
      %v2391 = vadd.f32 0.0, %v2390
      %2392 = vmatmul.f32.gmra.mxu0 %v2226
      %v2393 = vpop.f32.mrf.mxu0
      %v2394 = vadd.f32 0.0, %v2393
      %2395 = vmatmul.f32.gmra.mxu0 %v2229
      %v2396 = vpop.f32.mrf.mxu0
      %v2397 = vadd.f32 0.0, %v2396
      %2398 = vmatmul.f32.gmra.mxu0 %v2232
      %v2399 = vpop.f32.mrf.mxu0
      %v2400 = vadd.f32 0.0, %v2399
      %2401 = vmatmul.f32.gmra.mxu0 %v2235
      %v2402 = vpop.f32.mrf.mxu0
      %v2403 = vadd.f32 0.0, %v2402
      %2404 = vdwg.mxu0
      %v2405 = vmax.f32 %v2258, %v2346
      %v2406 = vmax.f32 %v2261, %v2349
      %v2407 = vmax.f32 %v2264, %v2352
      %v2408 = vmax.f32 %v2267, %v2355
      %v2409 = vmax.f32 %v2270, %v2358
      %v2410 = vmax.f32 %v2273, %v2361
      %v2411 = vmax.f32 %v2276, %v2364
      %v2412 = vmax.f32 %v2279, %v2367
      %v2413 = vmax.f32 %v2282, %v2370
      %v2414 = vmax.f32 %v2285, %v2373
      %v2415 = vmax.f32 %v2288, %v2376
      %v2416 = vmax.f32 %v2291, %v2379
      %v2417 = vmax.f32 %v2294, %v2382
      %v2418 = vmax.f32 %v2297, %v2385
      %v2419 = vmax.f32 %v2300, %v2388
      %v2420 = vmax.f32 %v2303, %v2391
      %v2421 = vmax.f32 %v2306, %v2394
      %v2422 = vmax.f32 %v2309, %v2397
      %v2423 = vmax.f32 %v2312, %v2400
      %v2424 = vmax.f32 %v2315, %v2403
      %2445 = vrot.lane.b32.xlu0 %v2405, 127
      %v2446 = vpop.permute.xlu0 %2445
      %2447 = vrot.lane.b32.xlu0 %v2406, 127
      %v2448 = vpop.permute.xlu0 %2447
      %2449 = vrot.lane.b32.xlu0 %v2407, 127
      %v2450 = vpop.permute.xlu0 %2449
      %2451 = vrot.lane.b32.xlu0 %v2408, 127
      %v2452 = vpop.permute.xlu0 %2451
      %2453 = vrot.lane.b32.xlu0 %v2409, 127
      %v2454 = vpop.permute.xlu0 %2453
      %2455 = vrot.lane.b32.xlu0 %v2410, 127
      %v2456 = vpop.permute.xlu0 %2455
      %2457 = vrot.lane.b32.xlu0 %v2411, 127
      %v2458 = vpop.permute.xlu0 %2457
      %2459 = vrot.lane.b32.xlu0 %v2412, 127
      %v2460 = vpop.permute.xlu0 %2459
      %2461 = vrot.lane.b32.xlu0 %v2413, 127
      %v2462 = vpop.permute.xlu0 %2461
      %2463 = vrot.lane.b32.xlu0 %v2414, 127
      %v2464 = vpop.permute.xlu0 %2463
      %2465 = vrot.lane.b32.xlu0 %v2415, 127
      %v2466 = vpop.permute.xlu0 %2465
      %2467 = vrot.lane.b32.xlu0 %v2416, 127
      %v2468 = vpop.permute.xlu0 %2467
      %2469 = vrot.lane.b32.xlu0 %v2417, 127
      %v2470 = vpop.permute.xlu0 %2469
      %2471 = vrot.lane.b32.xlu0 %v2418, 127
      %v2472 = vpop.permute.xlu0 %2471
      %2473 = vrot.lane.b32.xlu0 %v2419, 127
      %v2474 = vpop.permute.xlu0 %2473
      %2475 = vrot.lane.b32.xlu0 %v2420, 127
      %v2476 = vpop.permute.xlu0 %2475
      %2477 = vrot.lane.b32.xlu0 %v2421, 127
      %v2478 = vpop.permute.xlu0 %2477
      %2479 = vrot.lane.b32.xlu0 %v2422, 127
      %v2480 = vpop.permute.xlu0 %2479
      %2481 = vrot.lane.b32.xlu0 %v2423, 127
      %v2482 = vpop.permute.xlu0 %2481
      %2483 = vrot.lane.b32.xlu0 %v2424, 127
      %v2484 = vpop.permute.xlu0 %2483
      %2505 = vrot.lane.b32.xlu0 %v2405, 126
      %v2506 = vpop.permute.xlu0 %2505
      %2507 = vrot.lane.b32.xlu0 %v2406, 126
      %v2508 = vpop.permute.xlu0 %2507
      %2509 = vrot.lane.b32.xlu0 %v2407, 126
      %v2510 = vpop.permute.xlu0 %2509
      %2511 = vrot.lane.b32.xlu0 %v2408, 126
      %v2512 = vpop.permute.xlu0 %2511
      %2513 = vrot.lane.b32.xlu0 %v2409, 126
      %v2514 = vpop.permute.xlu0 %2513
      %2515 = vrot.lane.b32.xlu0 %v2410, 126
      %v2516 = vpop.permute.xlu0 %2515
      %2517 = vrot.lane.b32.xlu0 %v2411, 126
      %v2518 = vpop.permute.xlu0 %2517
      %2519 = vrot.lane.b32.xlu0 %v2412, 126
      %v2520 = vpop.permute.xlu0 %2519
      %2521 = vrot.lane.b32.xlu0 %v2413, 126
      %v2522 = vpop.permute.xlu0 %2521
      %2523 = vrot.lane.b32.xlu0 %v2414, 126
      %v2524 = vpop.permute.xlu0 %2523
      %2525 = vrot.lane.b32.xlu0 %v2415, 126
      %v2526 = vpop.permute.xlu0 %2525
      %2527 = vrot.lane.b32.xlu0 %v2416, 126
      %v2528 = vpop.permute.xlu0 %2527
      %2529 = vrot.lane.b32.xlu0 %v2417, 126
      %v2530 = vpop.permute.xlu0 %2529
      %2531 = vrot.lane.b32.xlu0 %v2418, 126
      %v2532 = vpop.permute.xlu0 %2531
      %2533 = vrot.lane.b32.xlu0 %v2419, 126
      %v2534 = vpop.permute.xlu0 %2533
      %2535 = vrot.lane.b32.xlu0 %v2420, 126
      %v2536 = vpop.permute.xlu0 %2535
      %2537 = vrot.lane.b32.xlu0 %v2421, 126
      %v2538 = vpop.permute.xlu0 %2537
      %2539 = vrot.lane.b32.xlu0 %v2422, 126
      %v2540 = vpop.permute.xlu0 %2539
      %2541 = vrot.lane.b32.xlu0 %v2423, 126
      %v2542 = vpop.permute.xlu0 %2541
      %2543 = vrot.lane.b32.xlu0 %v2424, 126
      %v2544 = vpop.permute.xlu0 %2543
      %2565 = vrot.lane.b32.xlu0 %v2405, 125
      %v2566 = vpop.permute.xlu0 %2565
      %2567 = vrot.lane.b32.xlu0 %v2406, 125
      %v2568 = vpop.permute.xlu0 %2567
      %2569 = vrot.lane.b32.xlu0 %v2407, 125
      %v2570 = vpop.permute.xlu0 %2569
      %2571 = vrot.lane.b32.xlu0 %v2408, 125
      %v2572 = vpop.permute.xlu0 %2571
      %2573 = vrot.lane.b32.xlu0 %v2409, 125
      %v2574 = vpop.permute.xlu0 %2573
      %2575 = vrot.lane.b32.xlu0 %v2410, 125
      %v2576 = vpop.permute.xlu0 %2575
      %2577 = vrot.lane.b32.xlu0 %v2411, 125
      %v2578 = vpop.permute.xlu0 %2577
      %2579 = vrot.lane.b32.xlu0 %v2412, 125
      %v2580 = vpop.permute.xlu0 %2579
      %2581 = vrot.lane.b32.xlu0 %v2413, 125
      %v2582 = vpop.permute.xlu0 %2581
      %2583 = vrot.lane.b32.xlu0 %v2414, 125
      %v2584 = vpop.permute.xlu0 %2583
      %2585 = vrot.lane.b32.xlu0 %v2415, 125
      %v2586 = vpop.permute.xlu0 %2585
      %2587 = vrot.lane.b32.xlu0 %v2416, 125
      %v2588 = vpop.permute.xlu0 %2587
      %2589 = vrot.lane.b32.xlu0 %v2417, 125
      %v2590 = vpop.permute.xlu0 %2589
      %2591 = vrot.lane.b32.xlu0 %v2418, 125
      %v2592 = vpop.permute.xlu0 %2591
      %2593 = vrot.lane.b32.xlu0 %v2419, 125
      %v2594 = vpop.permute.xlu0 %2593
      %2595 = vrot.lane.b32.xlu0 %v2420, 125
      %v2596 = vpop.permute.xlu0 %2595
      %2597 = vrot.lane.b32.xlu0 %v2421, 125
      %v2598 = vpop.permute.xlu0 %2597
      %2599 = vrot.lane.b32.xlu0 %v2422, 125
      %v2600 = vpop.permute.xlu0 %2599
      %2601 = vrot.lane.b32.xlu0 %v2423, 125
      %v2602 = vpop.permute.xlu0 %2601
      %2603 = vrot.lane.b32.xlu0 %v2424, 125
      %v2604 = vpop.permute.xlu0 %2603
      %2625 = vrot.lane.b32.xlu0 %v2405, 124
      %v2626 = vpop.permute.xlu0 %2625
      %2627 = vrot.lane.b32.xlu0 %v2406, 124
      %v2628 = vpop.permute.xlu0 %2627
      %2629 = vrot.lane.b32.xlu0 %v2407, 124
      %v2630 = vpop.permute.xlu0 %2629
      %2631 = vrot.lane.b32.xlu0 %v2408, 124
      %v2632 = vpop.permute.xlu0 %2631
      %2633 = vrot.lane.b32.xlu0 %v2409, 124
      %v2634 = vpop.permute.xlu0 %2633
      %2635 = vrot.lane.b32.xlu0 %v2410, 124
      %v2636 = vpop.permute.xlu0 %2635
      %2637 = vrot.lane.b32.xlu0 %v2411, 124
      %v2638 = vpop.permute.xlu0 %2637
      %2639 = vrot.lane.b32.xlu0 %v2412, 124
      %v2640 = vpop.permute.xlu0 %2639
      %2641 = vrot.lane.b32.xlu0 %v2413, 124
      %v2642 = vpop.permute.xlu0 %2641
      %2643 = vrot.lane.b32.xlu0 %v2414, 124
      %v2644 = vpop.permute.xlu0 %2643
      %2645 = vrot.lane.b32.xlu0 %v2415, 124
      %v2646 = vpop.permute.xlu0 %2645
      %2647 = vrot.lane.b32.xlu0 %v2416, 124
      %v2648 = vpop.permute.xlu0 %2647
      %2649 = vrot.lane.b32.xlu0 %v2417, 124
      %v2650 = vpop.permute.xlu0 %2649
      %2651 = vrot.lane.b32.xlu0 %v2418, 124
      %v2652 = vpop.permute.xlu0 %2651
      %2653 = vrot.lane.b32.xlu0 %v2419, 124
      %v2654 = vpop.permute.xlu0 %2653
      %2655 = vrot.lane.b32.xlu0 %v2420, 124
      %v2656 = vpop.permute.xlu0 %2655
      %2657 = vrot.lane.b32.xlu0 %v2421, 124
      %v2658 = vpop.permute.xlu0 %2657
      %2659 = vrot.lane.b32.xlu0 %v2422, 124
      %v2660 = vpop.permute.xlu0 %2659
      %2661 = vrot.lane.b32.xlu0 %v2423, 124
      %v2662 = vpop.permute.xlu0 %2661
      %2663 = vrot.lane.b32.xlu0 %v2424, 124
      %v2664 = vpop.permute.xlu0 %2663
      %v2685 = vld [vmem:[%s3] sm:$0xff]
      %v2686 = vld [vmem:[%s3 + $0x8] sm:$0xff]
      %v2687 = vld [vmem:[%s3 + $0x10] sm:$0xff]
      %v2688 = vld [vmem:[%s3 + $0x18] sm:$0xff]
      %v2689 = vld [vmem:[%s3 + $0x20] sm:$0xff]
      %v2690 = vld [vmem:[%s3 + $0x28] sm:$0xff]
      %v2691 = vld [vmem:[%s3 + $0x30] sm:$0xff]
      %v2692 = vld [vmem:[%s3 + $0x38] sm:$0xff]
      %v2693 = vld [vmem:[%s3 + $0x40] sm:$0xff]
      %v2694 = vld [vmem:[%s3 + $0x48] sm:$0xff]
      %v2695 = vld [vmem:[%s3 + $0x50] sm:$0xff]
      %v2696 = vld [vmem:[%s3 + $0x58] sm:$0xff]
      %v2697 = vld [vmem:[%s3 + $0x60] sm:$0xff]
      %v2698 = vld [vmem:[%s3 + $0x68] sm:$0xff]
      %v2699 = vld [vmem:[%s3 + $0x70] sm:$0xff]
      %v2700 = vld [vmem:[%s3 + $0x78] sm:$0xff]
      %v2701 = vld [vmem:[%s3 + $0x80] sm:$0xff]
      %v2702 = vld [vmem:[%s3 + $0x88] sm:$0xff]
      %v2703 = vld [vmem:[%s3 + $0x90] sm:$0xff]
      %v2704 = vld [vmem:[%s3 + $0x98] sm:$0xff]
      %v2705 = vld [vmem:[%s3 + $0xa0] sm:$0xff]
      %v2706 = vld [vmem:[%s3 + $0xa8] sm:$0xff]
      %v2707 = vld [vmem:[%s3 + $0xb0] sm:$0xff]
      %v2708 = vld [vmem:[%s3 + $0xb8] sm:$0xff]
      %v2709 = vld [vmem:[%s3 + $0xc0] sm:$0xff]
      %v2710 = vld [vmem:[%s3 + $0xc8] sm:$0xff]
      %v2711 = vld [vmem:[%s3 + $0xd0] sm:$0xff]
      %v2712 = vld [vmem:[%s3 + $0xd8] sm:$0xff]
      %v2713 = vld [vmem:[%s3 + $0xe0] sm:$0xff]
      %v2714 = vld [vmem:[%s3 + $0xe8] sm:$0xff]
      %v2715 = vld [vmem:[%s3 + $0xf0] sm:$0xff]
      %v2716 = vld [vmem:[%s3 + $0xf8] sm:$0xff]
      %v2717 = vld [vmem:[%s3 + $0x100] sm:$0xff]
      %v2718 = vld [vmem:[%s3 + $0x108] sm:$0xff]
      %v2719 = vld [vmem:[%s3 + $0x110] sm:$0xff]
      %v2720 = vld [vmem:[%s3 + $0x118] sm:$0xff]
      %v2721 = vld [vmem:[%s3 + $0x120] sm:$0xff]
      %v2722 = vld [vmem:[%s3 + $0x128] sm:$0xff]
      %v2723 = vld [vmem:[%s3 + $0x130] sm:$0xff]
      %v2724 = vld [vmem:[%s3 + $0x138] sm:$0xff]
      %v2725 = vld [vmem:[%s3 + $0x140] sm:$0xff]
      %v2726 = vld [vmem:[%s3 + $0x148] sm:$0xff]
      %v2727 = vld [vmem:[%s3 + $0x150] sm:$0xff]
      %v2728 = vld [vmem:[%s3 + $0x158] sm:$0xff]
      %v2729 = vld [vmem:[%s3 + $0x160] sm:$0xff]
      %v2730 = vld [vmem:[%s3 + $0x168] sm:$0xff]
      %v2731 = vld [vmem:[%s3 + $0x170] sm:$0xff]
      %v2732 = vld [vmem:[%s3 + $0x178] sm:$0xff]
      %v2733 = vld [vmem:[%s3 + $0x180] sm:$0xff]
      %v2734 = vld [vmem:[%s3 + $0x188] sm:$0xff]
      %v2735 = vld [vmem:[%s3 + $0x190] sm:$0xff]
      %v2736 = vld [vmem:[%s3 + $0x198] sm:$0xff]
      %v2737 = vld [vmem:[%s3 + $0x1a0] sm:$0xff]
      %v2738 = vld [vmem:[%s3 + $0x1a8] sm:$0xff]
      %v2739 = vld [vmem:[%s3 + $0x1b0] sm:$0xff]
      %v2740 = vld [vmem:[%s3 + $0x1b8] sm:$0xff]
      %v2741 = vld [vmem:[%s3 + $0x1c0] sm:$0xff]
      %v2742 = vld [vmem:[%s3 + $0x1c8] sm:$0xff]
      %v2743 = vld [vmem:[%s3 + $0x1d0] sm:$0xff]
      %v2744 = vld [vmem:[%s3 + $0x1d8] sm:$0xff]
      %v2745 = vld [vmem:[%s3 + $0x1e0] sm:$0xff]
      %v2746 = vld [vmem:[%s3 + $0x1e8] sm:$0xff]
      %v2747 = vld [vmem:[%s3 + $0x1f0] sm:$0xff]
      %v2748 = vld [vmem:[%s3 + $0x1f8] sm:$0xff]
      %v2749 = vld [vmem:[%s3 + $0x200] sm:$0xff]
      %v2750 = vld [vmem:[%s3 + $0x208] sm:$0xff]
      %v2751 = vld [vmem:[%s3 + $0x210] sm:$0xff]
      %v2752 = vld [vmem:[%s3 + $0x218] sm:$0xff]
      %v2753 = vld [vmem:[%s3 + $0x220] sm:$0xff]
      %v2754 = vld [vmem:[%s3 + $0x228] sm:$0xff]
      %v2755 = vld [vmem:[%s3 + $0x230] sm:$0xff]
      %v2756 = vld [vmem:[%s3 + $0x238] sm:$0xff]
      %v2757 = vld [vmem:[%s3 + $0x240] sm:$0xff]
      %v2758 = vld [vmem:[%s3 + $0x248] sm:$0xff]
      %v2759 = vld [vmem:[%s3 + $0x250] sm:$0xff]
      %v2760 = vld [vmem:[%s3 + $0x258] sm:$0xff]
      %v2761 = vld [vmem:[%s3 + $0x260] sm:$0xff]
      %v2762 = vld [vmem:[%s3 + $0x268] sm:$0xff]
      %v2763 = vld [vmem:[%s3 + $0x270] sm:$0xff]
      %v2764 = vld [vmem:[%s3 + $0x278] sm:$0xff]
      %v2765 = vld [vmem:[%s3 + $0x280] sm:$0xff]
      %v2766 = vld [vmem:[%s3 + $0x288] sm:$0xff]
      %v2767 = vld [vmem:[%s3 + $0x290] sm:$0xff]
      %v2768 = vld [vmem:[%s3 + $0x298] sm:$0xff]
      %v2769 = vld [vmem:[%s3 + $0x2a0] sm:$0xff]
      %v2770 = vld [vmem:[%s3 + $0x2a8] sm:$0xff]
      %v2771 = vld [vmem:[%s3 + $0x2b0] sm:$0xff]
      %v2772 = vld [vmem:[%s3 + $0x2b8] sm:$0xff]
      %v2773 = vld [vmem:[%s3 + $0x2c0] sm:$0xff]
      %v2774 = vld [vmem:[%s3 + $0x2c8] sm:$0xff]
      %v2775 = vld [vmem:[%s3 + $0x2d0] sm:$0xff]
      %v2776 = vld [vmem:[%s3 + $0x2d8] sm:$0xff]
      %v2777 = vld [vmem:[%s3 + $0x2e0] sm:$0xff]
      %v2778 = vld [vmem:[%s3 + $0x2e8] sm:$0xff]
      %v2779 = vld [vmem:[%s3 + $0x2f0] sm:$0xff]
      %v2780 = vld [vmem:[%s3 + $0x2f8] sm:$0xff]
      %v2781 = vld [vmem:[%s3 + $0x300] sm:$0xff]
      %v2782 = vld [vmem:[%s3 + $0x308] sm:$0xff]
      %v2783 = vld [vmem:[%s3 + $0x310] sm:$0xff]
      %v2784 = vld [vmem:[%s3 + $0x318] sm:$0xff]
      %v2785 = vld [vmem:[%s3 + $0x320] sm:$0xff]
      %v2786 = vld [vmem:[%s3 + $0x328] sm:$0xff]
      %v2787 = vld [vmem:[%s3 + $0x330] sm:$0xff]
      %v2788 = vld [vmem:[%s3 + $0x338] sm:$0xff]
      %v2789 = vld [vmem:[%s3 + $0x340] sm:$0xff]
      %v2790 = vld [vmem:[%s3 + $0x348] sm:$0xff]
      %v2791 = vld [vmem:[%s3 + $0x350] sm:$0xff]
      %v2792 = vld [vmem:[%s3 + $0x358] sm:$0xff]
      %v2793 = vld [vmem:[%s3 + $0x360] sm:$0xff]
      %v2794 = vld [vmem:[%s3 + $0x368] sm:$0xff]
      %v2795 = vld [vmem:[%s3 + $0x370] sm:$0xff]
      %v2796 = vld [vmem:[%s3 + $0x378] sm:$0xff]
      %v2797 = vld [vmem:[%s3 + $0x380] sm:$0xff]
      %v2798 = vld [vmem:[%s3 + $0x388] sm:$0xff]
      %v2799 = vld [vmem:[%s3 + $0x390] sm:$0xff]
      %v2800 = vld [vmem:[%s3 + $0x398] sm:$0xff]
      %v2801 = vld [vmem:[%s3 + $0x3a0] sm:$0xff]
      %v2802 = vld [vmem:[%s3 + $0x3a8] sm:$0xff]
      %v2803 = vld [vmem:[%s3 + $0x3b0] sm:$0xff]
      %v2804 = vld [vmem:[%s3 + $0x3b8] sm:$0xff]
      %v2805 = vld [vmem:[%s3 + $0x3c0] sm:$0xff]
      %v2806 = vld [vmem:[%s3 + $0x3c8] sm:$0xff]
      %v2807 = vld [vmem:[%s3 + $0x3d0] sm:$0xff]
      %v2808 = vld [vmem:[%s3 + $0x3d8] sm:$0xff]
      %v2809 = vld [vmem:[%s3 + $0x3e0] sm:$0xff]
      %v2810 = vld [vmem:[%s3 + $0x3e8] sm:$0xff]
      %v2811 = vld [vmem:[%s3 + $0x3f0] sm:$0xff]
      %v2812 = vld [vmem:[%s3 + $0x3f8] sm:$0xff]
      %v2813 = vld [vmem:[%s3 + $0x400] sm:$0xff]
      %v2814 = vld [vmem:[%s3 + $0x408] sm:$0xff]
      %v2815 = vld [vmem:[%s3 + $0x410] sm:$0xff]
      %v2816 = vld [vmem:[%s3 + $0x418] sm:$0xff]
      %v2817 = vld [vmem:[%s3 + $0x420] sm:$0xff]
      %v2818 = vld [vmem:[%s3 + $0x428] sm:$0xff]
      %v2819 = vld [vmem:[%s3 + $0x430] sm:$0xff]
      %v2820 = vld [vmem:[%s3 + $0x438] sm:$0xff]
      %v2821 = vld [vmem:[%s3 + $0x440] sm:$0xff]
      %v2822 = vld [vmem:[%s3 + $0x448] sm:$0xff]
      %v2823 = vld [vmem:[%s3 + $0x450] sm:$0xff]
      %v2824 = vld [vmem:[%s3 + $0x458] sm:$0xff]
      %v2825 = vld [vmem:[%s3 + $0x460] sm:$0xff]
      %v2826 = vld [vmem:[%s3 + $0x468] sm:$0xff]
      %v2827 = vld [vmem:[%s3 + $0x470] sm:$0xff]
      %v2828 = vld [vmem:[%s3 + $0x478] sm:$0xff]
      %v2829 = vld [vmem:[%s3 + $0x480] sm:$0xff]
      %v2830 = vld [vmem:[%s3 + $0x488] sm:$0xff]
      %v2831 = vld [vmem:[%s3 + $0x490] sm:$0xff]
      %v2832 = vld [vmem:[%s3 + $0x498] sm:$0xff]
      %v2833 = vld [vmem:[%s3 + $0x4a0] sm:$0xff]
      %v2834 = vld [vmem:[%s3 + $0x4a8] sm:$0xff]
      %v2835 = vld [vmem:[%s3 + $0x4b0] sm:$0xff]
      %v2836 = vld [vmem:[%s3 + $0x4b8] sm:$0xff]
      %v2837 = vld [vmem:[%s3 + $0x4c0] sm:$0xff]
      %v2838 = vld [vmem:[%s3 + $0x4c8] sm:$0xff]
      %v2839 = vld [vmem:[%s3 + $0x4d0] sm:$0xff]
      %v2840 = vld [vmem:[%s3 + $0x4d8] sm:$0xff]
      %v2841 = vld [vmem:[%s3 + $0x4e0] sm:$0xff]
      %v2842 = vld [vmem:[%s3 + $0x4e8] sm:$0xff]
      %v2843 = vld [vmem:[%s3 + $0x4f0] sm:$0xff]
      %v2844 = vld [vmem:[%s3 + $0x4f8] sm:$0xff]
      %v2845 = vld [vmem:[%s3 + $0x500] sm:$0xff]
      %v2846 = vld [vmem:[%s3 + $0x508] sm:$0xff]
      %v2847 = vld [vmem:[%s3 + $0x510] sm:$0xff]
      %v2848 = vld [vmem:[%s3 + $0x518] sm:$0xff]
      %v2849 = vld [vmem:[%s3 + $0x520] sm:$0xff]
      %v2850 = vld [vmem:[%s3 + $0x528] sm:$0xff]
      %v2851 = vld [vmem:[%s3 + $0x530] sm:$0xff]
      %v2852 = vld [vmem:[%s3 + $0x538] sm:$0xff]
      %v2853 = vld [vmem:[%s3 + $0x540] sm:$0xff]
      %v2854 = vld [vmem:[%s3 + $0x548] sm:$0xff]
      %v2855 = vld [vmem:[%s3 + $0x550] sm:$0xff]
      %v2856 = vld [vmem:[%s3 + $0x558] sm:$0xff]
      %v2857 = vld [vmem:[%s3 + $0x560] sm:$0xff]
      %v2858 = vld [vmem:[%s3 + $0x568] sm:$0xff]
      %v2859 = vld [vmem:[%s3 + $0x570] sm:$0xff]
      %v2860 = vld [vmem:[%s3 + $0x578] sm:$0xff]
      %v2861 = vld [vmem:[%s3 + $0x580] sm:$0xff]
      %v2862 = vld [vmem:[%s3 + $0x588] sm:$0xff]
      %v2863 = vld [vmem:[%s3 + $0x590] sm:$0xff]
      %v2864 = vld [vmem:[%s3 + $0x598] sm:$0xff]
      %v2865 = vld [vmem:[%s3 + $0x5a0] sm:$0xff]
      %v2866 = vld [vmem:[%s3 + $0x5a8] sm:$0xff]
      %v2867 = vld [vmem:[%s3 + $0x5b0] sm:$0xff]
      %v2868 = vld [vmem:[%s3 + $0x5b8] sm:$0xff]
      %v2869 = vld [vmem:[%s3 + $0x5c0] sm:$0xff]
      %v2870 = vld [vmem:[%s3 + $0x5c8] sm:$0xff]
      %v2871 = vld [vmem:[%s3 + $0x5d0] sm:$0xff]
      %v2872 = vld [vmem:[%s3 + $0x5d8] sm:$0xff]
      %v2873 = vld [vmem:[%s3 + $0x5e0] sm:$0xff]
      %v2874 = vld [vmem:[%s3 + $0x5e8] sm:$0xff]
      %v2875 = vld [vmem:[%s3 + $0x5f0] sm:$0xff]
      %v2876 = vld [vmem:[%s3 + $0x5f8] sm:$0xff]
      %v2877 = vld [vmem:[%s3 + $0x600] sm:$0xff]
      %v2878 = vld [vmem:[%s3 + $0x608] sm:$0xff]
      %v2879 = vld [vmem:[%s3 + $0x610] sm:$0xff]
      %v2880 = vld [vmem:[%s3 + $0x618] sm:$0xff]
      %v2881 = vld [vmem:[%s3 + $0x620] sm:$0xff]
      %v2882 = vld [vmem:[%s3 + $0x628] sm:$0xff]
      %v2883 = vld [vmem:[%s3 + $0x630] sm:$0xff]
      %v2884 = vld [vmem:[%s3 + $0x638] sm:$0xff]
      %v2885 = vld [vmem:[%s3 + $0x640] sm:$0xff]
      %v2886 = vld [vmem:[%s3 + $0x648] sm:$0xff]
      %v2887 = vld [vmem:[%s3 + $0x650] sm:$0xff]
      %v2888 = vld [vmem:[%s3 + $0x658] sm:$0xff]
      %v2889 = vld [vmem:[%s3 + $0x660] sm:$0xff]
      %v2890 = vld [vmem:[%s3 + $0x668] sm:$0xff]
      %v2891 = vld [vmem:[%s3 + $0x670] sm:$0xff]
      %v2892 = vld [vmem:[%s3 + $0x678] sm:$0xff]
      %v2893 = vld [vmem:[%s3 + $0x680] sm:$0xff]
      %v2894 = vld [vmem:[%s3 + $0x688] sm:$0xff]
      %v2895 = vld [vmem:[%s3 + $0x690] sm:$0xff]
      %v2896 = vld [vmem:[%s3 + $0x698] sm:$0xff]
      %v2897 = vld [vmem:[%s3 + $0x6a0] sm:$0xff]
      %v2898 = vld [vmem:[%s3 + $0x6a8] sm:$0xff]
      %v2899 = vld [vmem:[%s3 + $0x6b0] sm:$0xff]
      %v2900 = vld [vmem:[%s3 + $0x6b8] sm:$0xff]
      %v2901 = vld [vmem:[%s3 + $0x6c0] sm:$0xff]
      %v2902 = vld [vmem:[%s3 + $0x6c8] sm:$0xff]
      %v2903 = vld [vmem:[%s3 + $0x6d0] sm:$0xff]
      %v2904 = vld [vmem:[%s3 + $0x6d8] sm:$0xff]
      %v2905 = vld [vmem:[%s3 + $0x6e0] sm:$0xff]
      %v2906 = vld [vmem:[%s3 + $0x6e8] sm:$0xff]
      %v2907 = vld [vmem:[%s3 + $0x6f0] sm:$0xff]
      %v2908 = vld [vmem:[%s3 + $0x6f8] sm:$0xff]
      %v2909 = vld [vmem:[%s3 + $0x700] sm:$0xf]
      %v2910 = vld [vmem:[%s3 + $0x708] sm:$0xf]
      %v2911 = vld [vmem:[%s3 + $0x710] sm:$0xf]
      %v2912 = vld [vmem:[%s3 + $0x718] sm:$0xf]
      %v2913 = vld [vmem:[%s3 + $0x720] sm:$0xf]
      %v2914 = vld [vmem:[%s3 + $0x728] sm:$0xf]
      %v2915 = vld [vmem:[%s3 + $0x730] sm:$0xf]
      %v2916 = vld [vmem:[%s4] sm:$0xff]
      %v2917 = vld [vmem:[%s4 + $0x8] sm:$0xff]
      %v2918 = vld [vmem:[%s4 + $0x10] sm:$0xff]
      %v2919 = vld [vmem:[%s4 + $0x18] sm:$0xff]
      %v2920 = vld [vmem:[%s4 + $0x20] sm:$0xff]
      %v2921 = vld [vmem:[%s4 + $0x28] sm:$0xff]
      %v2922 = vld [vmem:[%s4 + $0x30] sm:$0xff]
      %v2923 = vld [vmem:[%s4 + $0x38] sm:$0xff]
      %v2924 = vld [vmem:[%s4 + $0x40] sm:$0xff]
      %v2925 = vld [vmem:[%s4 + $0x48] sm:$0xff]
      %v2926 = vld [vmem:[%s4 + $0x50] sm:$0xff]
      %v2927 = vld [vmem:[%s4 + $0x58] sm:$0xff]
      %v2928 = vld [vmem:[%s4 + $0x60] sm:$0xff]
      %v2929 = vld [vmem:[%s4 + $0x68] sm:$0xff]
      %v2930 = vld [vmem:[%s4 + $0x70] sm:$0xff]
      %v2931 = vld [vmem:[%s4 + $0x78] sm:$0xff]
      %v2932 = vld [vmem:[%s4 + $0x80] sm:$0xff]
      %v2933 = vld [vmem:[%s4 + $0x88] sm:$0xff]
      %v2934 = vld [vmem:[%s4 + $0x90] sm:$0xff]
      %v2935 = vld [vmem:[%s4 + $0x98] sm:$0xff]
      %v2936 = vld [vmem:[%s4 + $0xa0] sm:$0xff]
      %v2937 = vld [vmem:[%s4 + $0xa8] sm:$0xff]
      %v2938 = vld [vmem:[%s4 + $0xb0] sm:$0xff]
      %v2939 = vld [vmem:[%s4 + $0xb8] sm:$0xff]
      %v2940 = vld [vmem:[%s4 + $0xc0] sm:$0xff]
      %v2941 = vld [vmem:[%s4 + $0xc8] sm:$0xff]
      %v2942 = vld [vmem:[%s4 + $0xd0] sm:$0xff]
      %v2943 = vld [vmem:[%s4 + $0xd8] sm:$0xff]
      %v2944 = vld [vmem:[%s4 + $0xe0] sm:$0xff]
      %v2945 = vld [vmem:[%s4 + $0xe8] sm:$0xff]
      %v2946 = vld [vmem:[%s4 + $0xf0] sm:$0xff]
      %v2947 = vld [vmem:[%s4 + $0xf8] sm:$0xff]
      %v2948 = vld [vmem:[%s4 + $0x100] sm:$0xf]
      %2950 = vset.pattern.permute.xlu0 0
      %2951 = vperm.xlu0 %2950, %v2916
      %v2952 = vpop.permute.xlu0 %2951
      %2955 = vset.pattern.permute.xlu0 0
      %2956 = vperm.xlu0 %2955, %v2917
      %v2957 = vpop.permute.xlu0 %2956
      %2960 = vset.pattern.permute.xlu0 0
      %2961 = vperm.xlu0 %2960, %v2918
      %v2962 = vpop.permute.xlu0 %2961
      %2965 = vset.pattern.permute.xlu0 0
      %2966 = vperm.xlu0 %2965, %v2919
      %v2967 = vpop.permute.xlu0 %2966
      %2970 = vset.pattern.permute.xlu0 0
      %2971 = vperm.xlu0 %2970, %v2920
      %v2972 = vpop.permute.xlu0 %2971
      %2975 = vset.pattern.permute.xlu0 0
      %2976 = vperm.xlu0 %2975, %v2921
      %v2977 = vpop.permute.xlu0 %2976
      %2980 = vset.pattern.permute.xlu0 0
      %2981 = vperm.xlu0 %2980, %v2922
      %v2982 = vpop.permute.xlu0 %2981
      %2985 = vset.pattern.permute.xlu0 0
      %2986 = vperm.xlu0 %2985, %v2923
      %v2987 = vpop.permute.xlu0 %2986
      %2990 = vset.pattern.permute.xlu0 0
      %2991 = vperm.xlu0 %2990, %v2924
      %v2992 = vpop.permute.xlu0 %2991
      %2995 = vset.pattern.permute.xlu0 0
      %2996 = vperm.xlu0 %2995, %v2925
      %v2997 = vpop.permute.xlu0 %2996
      %3000 = vset.pattern.permute.xlu0 0
      %3001 = vperm.xlu0 %3000, %v2926
      %v3002 = vpop.permute.xlu0 %3001
      %3005 = vset.pattern.permute.xlu0 0
      %3006 = vperm.xlu0 %3005, %v2927
      %v3007 = vpop.permute.xlu0 %3006
      %3010 = vset.pattern.permute.xlu0 0
      %3011 = vperm.xlu0 %3010, %v2928
      %v3012 = vpop.permute.xlu0 %3011
      %3015 = vset.pattern.permute.xlu0 0
      %3016 = vperm.xlu0 %3015, %v2929
      %v3017 = vpop.permute.xlu0 %3016
      %3020 = vset.pattern.permute.xlu0 0
      %3021 = vperm.xlu0 %3020, %v2930
      %v3022 = vpop.permute.xlu0 %3021
      %3025 = vset.pattern.permute.xlu0 0
      %3026 = vperm.xlu0 %3025, %v2931
      %v3027 = vpop.permute.xlu0 %3026
      %3030 = vset.pattern.permute.xlu0 0
      %3031 = vperm.xlu0 %3030, %v2932
      %v3032 = vpop.permute.xlu0 %3031
      %3035 = vset.pattern.permute.xlu0 0
      %3036 = vperm.xlu0 %3035, %v2933
      %v3037 = vpop.permute.xlu0 %3036
      %3040 = vset.pattern.permute.xlu0 0
      %3041 = vperm.xlu0 %3040, %v2934
      %v3042 = vpop.permute.xlu0 %3041
      %3045 = vset.pattern.permute.xlu0 0
      %3046 = vperm.xlu0 %3045, %v2935
      %v3047 = vpop.permute.xlu0 %3046
      %3050 = vset.pattern.permute.xlu0 0
      %3051 = vperm.xlu0 %3050, %v2936
      %v3052 = vpop.permute.xlu0 %3051
      %3055 = vset.pattern.permute.xlu0 0
      %3056 = vperm.xlu0 %3055, %v2937
      %v3057 = vpop.permute.xlu0 %3056
      %3060 = vset.pattern.permute.xlu0 0
      %3061 = vperm.xlu0 %3060, %v2938
      %v3062 = vpop.permute.xlu0 %3061
      %3065 = vset.pattern.permute.xlu0 0
      %3066 = vperm.xlu0 %3065, %v2939
      %v3067 = vpop.permute.xlu0 %3066
      %3070 = vset.pattern.permute.xlu0 0
      %3071 = vperm.xlu0 %3070, %v2940
      %v3072 = vpop.permute.xlu0 %3071
      %3075 = vset.pattern.permute.xlu0 0
      %3076 = vperm.xlu0 %3075, %v2941
      %v3077 = vpop.permute.xlu0 %3076
      %3080 = vset.pattern.permute.xlu0 0
      %3081 = vperm.xlu0 %3080, %v2942
      %v3082 = vpop.permute.xlu0 %3081
      %3085 = vset.pattern.permute.xlu0 0
      %3086 = vperm.xlu0 %3085, %v2943
      %v3087 = vpop.permute.xlu0 %3086
      %3090 = vset.pattern.permute.xlu0 0
      %3091 = vperm.xlu0 %3090, %v2944
      %v3092 = vpop.permute.xlu0 %3091
      %3095 = vset.pattern.permute.xlu0 0
      %3096 = vperm.xlu0 %3095, %v2945
      %v3097 = vpop.permute.xlu0 %3096
      %3100 = vset.pattern.permute.xlu0 0
      %3101 = vperm.xlu0 %3100, %v2946
      %v3102 = vpop.permute.xlu0 %3101
      %3105 = vset.pattern.permute.xlu0 0
      %3106 = vperm.xlu0 %3105, %v2947
      %v3107 = vpop.permute.xlu0 %3106
      %3110 = vset.pattern.permute.xlu0 0
      %3111 = vperm.xlu0 %3110, %v2948
      %v3112 = vpop.permute.xlu0 %3111
      %vm3114 = vcmask 261120
      %v3116 = vsel %vm3114, %v2691, 0
      %v3119 = vsel %vm3114, %v2698, 0
      %v3122 = vsel %vm3114, %v2705, 0
      %v3125 = vsel %vm3114, %v2712, 0
      %v3128 = vsel %vm3114, %v2719, 0
      %v3131 = vsel %vm3114, %v2726, 0
      %v3134 = vsel %vm3114, %v2733, 0
      %v3137 = vsel %vm3114, %v2740, 0
      %v3140 = vsel %vm3114, %v2747, 0
      %v3143 = vsel %vm3114, %v2754, 0
      %v3146 = vsel %vm3114, %v2761, 0
      %v3149 = vsel %vm3114, %v2768, 0
      %v3152 = vsel %vm3114, %v2775, 0
      %v3155 = vsel %vm3114, %v2782, 0
      %v3158 = vsel %vm3114, %v2789, 0
      %v3161 = vsel %vm3114, %v2796, 0
      %v3164 = vsel %vm3114, %v2803, 0
      %v3167 = vsel %vm3114, %v2810, 0
      %v3170 = vsel %vm3114, %v2817, 0
      %v3173 = vsel %vm3114, %v2824, 0
      %v3176 = vsel %vm3114, %v2831, 0
      %v3179 = vsel %vm3114, %v2838, 0
      %v3182 = vsel %vm3114, %v2845, 0
      %v3185 = vsel %vm3114, %v2852, 0
      %v3188 = vsel %vm3114, %v2859, 0
      %v3191 = vsel %vm3114, %v2866, 0
      %v3194 = vsel %vm3114, %v2873, 0
      %v3197 = vsel %vm3114, %v2880, 0
      %v3200 = vsel %vm3114, %v2887, 0
      %v3203 = vsel %vm3114, %v2894, 0
      %v3206 = vsel %vm3114, %v2901, 0
      %v3209 = vsel %vm3114, %v2908, 0
      %v3212 = vsel %vm3114, %v2915, 0
      %3214 = vmatpush.msra.mxu0 %v2420
      %3215 = vmatpush.msra.mxu0 %v2419
      %3216 = vmatpush.msra.mxu0 %v2418
      %3217 = vmatpush.msra.mxu0 %v2417
      %3218 = vmatpush.msra.mxu0 %v2416
      %3219 = vmatpush.msra.mxu0 %v2415
      %3220 = vmatpush.msra.mxu0 %v2414
      %3221 = vmatpush.msra.mxu0 %v2413
      %3222 = vmatpush.msra.mxu0 %v2412
      %3223 = vmatpush.msra.mxu0 %v2411
      %3224 = vmatpush.msra.mxu0 %v2410
      %3225 = vmatpush.msra.mxu0 %v2409
      %3226 = vmatpush.msra.mxu0 %v2408
      %3227 = vmatpush.msra.mxu0 %v2407
      %3228 = vmatpush.msra.mxu0 %v2406
      %3229 = vmatpush.msra.mxu0 %v2405
      %3230 = vmatmul.f32.gmra.mxu0 %v2685
      %v3231 = vpop.f32.mrf.mxu0
      %v3232 = vadd.f32 %v2952, %v3231
      %3233 = vmatmul.f32.gmra.mxu0 %v2692
      %v3234 = vpop.f32.mrf.mxu0
      %v3235 = vadd.f32 %v2957, %v3234
      %3236 = vmatmul.f32.gmra.mxu0 %v2699
      %v3237 = vpop.f32.mrf.mxu0
      %v3238 = vadd.f32 %v2962, %v3237
      %3239 = vmatmul.f32.gmra.mxu0 %v2706
      %v3240 = vpop.f32.mrf.mxu0
      %v3241 = vadd.f32 %v2967, %v3240
      %3242 = vmatmul.f32.gmra.mxu0 %v2713
      %v3243 = vpop.f32.mrf.mxu0
      %v3244 = vadd.f32 %v2972, %v3243
      %3245 = vmatmul.f32.gmra.mxu0 %v2720
      %v3246 = vpop.f32.mrf.mxu0
      %v3247 = vadd.f32 %v2977, %v3246
      %3248 = vmatmul.f32.gmra.mxu0 %v2727
      %v3249 = vpop.f32.mrf.mxu0
      %v3250 = vadd.f32 %v2982, %v3249
      %3251 = vmatmul.f32.gmra.mxu0 %v2734
      %v3252 = vpop.f32.mrf.mxu0
      %v3253 = vadd.f32 %v2987, %v3252
      %3254 = vmatmul.f32.gmra.mxu0 %v2741
      %v3255 = vpop.f32.mrf.mxu0
      %v3256 = vadd.f32 %v2992, %v3255
      %3257 = vmatmul.f32.gmra.mxu0 %v2748
      %v3258 = vpop.f32.mrf.mxu0
      %v3259 = vadd.f32 %v2997, %v3258
      %3260 = vmatmul.f32.gmra.mxu0 %v2755
      %v3261 = vpop.f32.mrf.mxu0
      %v3262 = vadd.f32 %v3002, %v3261
      %3263 = vmatmul.f32.gmra.mxu0 %v2762
      %v3264 = vpop.f32.mrf.mxu0
      %v3265 = vadd.f32 %v3007, %v3264
      %3266 = vmatmul.f32.gmra.mxu0 %v2769
      %v3267 = vpop.f32.mrf.mxu0
      %v3268 = vadd.f32 %v3012, %v3267
      %3269 = vmatmul.f32.gmra.mxu0 %v2776
      %v3270 = vpop.f32.mrf.mxu0
      %v3271 = vadd.f32 %v3017, %v3270
      %3272 = vmatmul.f32.gmra.mxu0 %v2783
      %v3273 = vpop.f32.mrf.mxu0
      %v3274 = vadd.f32 %v3022, %v3273
      %3275 = vmatmul.f32.gmra.mxu0 %v2790
      %v3276 = vpop.f32.mrf.mxu0
      %v3277 = vadd.f32 %v3027, %v3276
      %3278 = vmatmul.f32.gmra.mxu0 %v2797
      %v3279 = vpop.f32.mrf.mxu0
      %v3280 = vadd.f32 %v3032, %v3279
      %3281 = vmatmul.f32.gmra.mxu0 %v2804
      %v3282 = vpop.f32.mrf.mxu0
      %v3283 = vadd.f32 %v3037, %v3282
      %3284 = vmatmul.f32.gmra.mxu0 %v2811
      %v3285 = vpop.f32.mrf.mxu0
      %v3286 = vadd.f32 %v3042, %v3285
      %3287 = vmatmul.f32.gmra.mxu0 %v2818
      %v3288 = vpop.f32.mrf.mxu0
      %v3289 = vadd.f32 %v3047, %v3288
      %3290 = vmatmul.f32.gmra.mxu0 %v2825
      %v3291 = vpop.f32.mrf.mxu0
      %v3292 = vadd.f32 %v3052, %v3291
      %3293 = vmatmul.f32.gmra.mxu0 %v2832
      %v3294 = vpop.f32.mrf.mxu0
      %v3295 = vadd.f32 %v3057, %v3294
      %3296 = vmatmul.f32.gmra.mxu0 %v2839
      %v3297 = vpop.f32.mrf.mxu0
      %v3298 = vadd.f32 %v3062, %v3297
      %3299 = vmatmul.f32.gmra.mxu0 %v2846
      %v3300 = vpop.f32.mrf.mxu0
      %v3301 = vadd.f32 %v3067, %v3300
      %3302 = vmatmul.f32.gmra.mxu0 %v2853
      %v3303 = vpop.f32.mrf.mxu0
      %v3304 = vadd.f32 %v3072, %v3303
      %3305 = vmatmul.f32.gmra.mxu0 %v2860
      %v3306 = vpop.f32.mrf.mxu0
      %v3307 = vadd.f32 %v3077, %v3306
      %3308 = vmatmul.f32.gmra.mxu0 %v2867
      %v3309 = vpop.f32.mrf.mxu0
      %v3310 = vadd.f32 %v3082, %v3309
      %3311 = vmatmul.f32.gmra.mxu0 %v2874
      %v3312 = vpop.f32.mrf.mxu0
      %v3313 = vadd.f32 %v3087, %v3312
      %3314 = vmatmul.f32.gmra.mxu0 %v2881
      %v3315 = vpop.f32.mrf.mxu0
      %v3316 = vadd.f32 %v3092, %v3315
      %3317 = vmatmul.f32.gmra.mxu0 %v2888
      %v3318 = vpop.f32.mrf.mxu0
      %v3319 = vadd.f32 %v3097, %v3318
      %3320 = vmatmul.f32.gmra.mxu0 %v2895
      %v3321 = vpop.f32.mrf.mxu0
      %v3322 = vadd.f32 %v3102, %v3321
      %3323 = vmatmul.f32.gmra.mxu0 %v2902
      %v3324 = vpop.f32.mrf.mxu0
      %v3325 = vadd.f32 %v3107, %v3324
      %3326 = vmatmul.f32.gmra.mxu0 %v2909
      %v3327 = vpop.f32.mrf.mxu0
      %v3328 = vadd.f32 %v3112, %v3327
      %3329 = vdwg.mxu0
      %3330 = vmatpush.msra.mxu0 %v2468
      %3331 = vmatpush.msra.mxu0 %v2466
      %3332 = vmatpush.msra.mxu0 %v2464
      %3333 = vmatpush.msra.mxu0 %v2462
      %3334 = vmatpush.msra.mxu0 %v2460
      %3335 = vmatpush.msra.mxu0 %v2458
      %3336 = vmatpush.msra.mxu0 %v2456
      %3337 = vmatpush.msra.mxu0 %v2454
      %3338 = vmatpush.msra.mxu0 %v2452
      %3339 = vmatpush.msra.mxu0 %v2450
      %3340 = vmatpush.msra.mxu0 %v2448
      %3341 = vmatpush.msra.mxu0 %v2446
      %3342 = vmatpush.msra.mxu0 %v2424
      %3343 = vmatpush.msra.mxu0 %v2423
      %3344 = vmatpush.msra.mxu0 %v2422
      %3345 = vmatpush.msra.mxu0 %v2421
      %3346 = vmatmul.f32.gmra.mxu0 %v2686
      %v3347 = vpop.f32.mrf.mxu0
      %v3348 = vadd.f32 %v3232, %v3347
      %3349 = vmatmul.f32.gmra.mxu0 %v2693
      %v3350 = vpop.f32.mrf.mxu0
      %v3351 = vadd.f32 %v3235, %v3350
      %3352 = vmatmul.f32.gmra.mxu0 %v2700
      %v3353 = vpop.f32.mrf.mxu0
      %v3354 = vadd.f32 %v3238, %v3353
      %3355 = vmatmul.f32.gmra.mxu0 %v2707
      %v3356 = vpop.f32.mrf.mxu0
      %v3357 = vadd.f32 %v3241, %v3356
      %3358 = vmatmul.f32.gmra.mxu0 %v2714
      %v3359 = vpop.f32.mrf.mxu0
      %v3360 = vadd.f32 %v3244, %v3359
      %3361 = vmatmul.f32.gmra.mxu0 %v2721
      %v3362 = vpop.f32.mrf.mxu0
      %v3363 = vadd.f32 %v3247, %v3362
      %3364 = vmatmul.f32.gmra.mxu0 %v2728
      %v3365 = vpop.f32.mrf.mxu0
      %v3366 = vadd.f32 %v3250, %v3365
      %3367 = vmatmul.f32.gmra.mxu0 %v2735
      %v3368 = vpop.f32.mrf.mxu0
      %v3369 = vadd.f32 %v3253, %v3368
      %3370 = vmatmul.f32.gmra.mxu0 %v2742
      %v3371 = vpop.f32.mrf.mxu0
      %v3372 = vadd.f32 %v3256, %v3371
      %3373 = vmatmul.f32.gmra.mxu0 %v2749
      %v3374 = vpop.f32.mrf.mxu0
      %v3375 = vadd.f32 %v3259, %v3374
      %3376 = vmatmul.f32.gmra.mxu0 %v2756
      %v3377 = vpop.f32.mrf.mxu0
      %v3378 = vadd.f32 %v3262, %v3377
      %3379 = vmatmul.f32.gmra.mxu0 %v2763
      %v3380 = vpop.f32.mrf.mxu0
      %v3381 = vadd.f32 %v3265, %v3380
      %3382 = vmatmul.f32.gmra.mxu0 %v2770
      %v3383 = vpop.f32.mrf.mxu0
      %v3384 = vadd.f32 %v3268, %v3383
      %3385 = vmatmul.f32.gmra.mxu0 %v2777
      %v3386 = vpop.f32.mrf.mxu0
      %v3387 = vadd.f32 %v3271, %v3386
      %3388 = vmatmul.f32.gmra.mxu0 %v2784
      %v3389 = vpop.f32.mrf.mxu0
      %v3390 = vadd.f32 %v3274, %v3389
      %3391 = vmatmul.f32.gmra.mxu0 %v2791
      %v3392 = vpop.f32.mrf.mxu0
      %v3393 = vadd.f32 %v3277, %v3392
      %3394 = vmatmul.f32.gmra.mxu0 %v2798
      %v3395 = vpop.f32.mrf.mxu0
      %v3396 = vadd.f32 %v3280, %v3395
      %3397 = vmatmul.f32.gmra.mxu0 %v2805
      %v3398 = vpop.f32.mrf.mxu0
      %v3399 = vadd.f32 %v3283, %v3398
      %3400 = vmatmul.f32.gmra.mxu0 %v2812
      %v3401 = vpop.f32.mrf.mxu0
      %v3402 = vadd.f32 %v3286, %v3401
      %3403 = vmatmul.f32.gmra.mxu0 %v2819
      %v3404 = vpop.f32.mrf.mxu0
      %v3405 = vadd.f32 %v3289, %v3404
      %3406 = vmatmul.f32.gmra.mxu0 %v2826
      %v3407 = vpop.f32.mrf.mxu0
      %v3408 = vadd.f32 %v3292, %v3407
      %3409 = vmatmul.f32.gmra.mxu0 %v2833
      %v3410 = vpop.f32.mrf.mxu0
      %v3411 = vadd.f32 %v3295, %v3410
      %3412 = vmatmul.f32.gmra.mxu0 %v2840
      %v3413 = vpop.f32.mrf.mxu0
      %v3414 = vadd.f32 %v3298, %v3413
      %3415 = vmatmul.f32.gmra.mxu0 %v2847
      %v3416 = vpop.f32.mrf.mxu0
      %v3417 = vadd.f32 %v3301, %v3416
      %3418 = vmatmul.f32.gmra.mxu0 %v2854
      %v3419 = vpop.f32.mrf.mxu0
      %v3420 = vadd.f32 %v3304, %v3419
      %3421 = vmatmul.f32.gmra.mxu0 %v2861
      %v3422 = vpop.f32.mrf.mxu0
      %v3423 = vadd.f32 %v3307, %v3422
      %3424 = vmatmul.f32.gmra.mxu0 %v2868
      %v3425 = vpop.f32.mrf.mxu0
      %v3426 = vadd.f32 %v3310, %v3425
      %3427 = vmatmul.f32.gmra.mxu0 %v2875
      %v3428 = vpop.f32.mrf.mxu0
      %v3429 = vadd.f32 %v3313, %v3428
      %3430 = vmatmul.f32.gmra.mxu0 %v2882
      %v3431 = vpop.f32.mrf.mxu0
      %v3432 = vadd.f32 %v3316, %v3431
      %3433 = vmatmul.f32.gmra.mxu0 %v2889
      %v3434 = vpop.f32.mrf.mxu0
      %v3435 = vadd.f32 %v3319, %v3434
      %3436 = vmatmul.f32.gmra.mxu0 %v2896
      %v3437 = vpop.f32.mrf.mxu0
      %v3438 = vadd.f32 %v3322, %v3437
      %3439 = vmatmul.f32.gmra.mxu0 %v2903
      %v3440 = vpop.f32.mrf.mxu0
      %v3441 = vadd.f32 %v3325, %v3440
      %3442 = vmatmul.f32.gmra.mxu0 %v2910
      %v3443 = vpop.f32.mrf.mxu0
      %v3444 = vadd.f32 %v3328, %v3443
      %3445 = vdwg.mxu0
      %3446 = vmatpush.msra.mxu0 %v2520
      %3447 = vmatpush.msra.mxu0 %v2518
      %3448 = vmatpush.msra.mxu0 %v2516
      %3449 = vmatpush.msra.mxu0 %v2514
      %3450 = vmatpush.msra.mxu0 %v2512
      %3451 = vmatpush.msra.mxu0 %v2510
      %3452 = vmatpush.msra.mxu0 %v2508
      %3453 = vmatpush.msra.mxu0 %v2506
      %3454 = vmatpush.msra.mxu0 %v2484
      %3455 = vmatpush.msra.mxu0 %v2482
      %3456 = vmatpush.msra.mxu0 %v2480
      %3457 = vmatpush.msra.mxu0 %v2478
      %3458 = vmatpush.msra.mxu0 %v2476
      %3459 = vmatpush.msra.mxu0 %v2474
      %3460 = vmatpush.msra.mxu0 %v2472
      %3461 = vmatpush.msra.mxu0 %v2470
      %3462 = vmatmul.f32.gmra.mxu0 %v2687
      %v3463 = vpop.f32.mrf.mxu0
      %v3464 = vadd.f32 %v3348, %v3463
      %3465 = vmatmul.f32.gmra.mxu0 %v2694
      %v3466 = vpop.f32.mrf.mxu0
      %v3467 = vadd.f32 %v3351, %v3466
      %3468 = vmatmul.f32.gmra.mxu0 %v2701
      %v3469 = vpop.f32.mrf.mxu0
      %v3470 = vadd.f32 %v3354, %v3469
      %3471 = vmatmul.f32.gmra.mxu0 %v2708
      %v3472 = vpop.f32.mrf.mxu0
      %v3473 = vadd.f32 %v3357, %v3472
      %3474 = vmatmul.f32.gmra.mxu0 %v2715
      %v3475 = vpop.f32.mrf.mxu0
      %v3476 = vadd.f32 %v3360, %v3475
      %3477 = vmatmul.f32.gmra.mxu0 %v2722
      %v3478 = vpop.f32.mrf.mxu0
      %v3479 = vadd.f32 %v3363, %v3478
      %3480 = vmatmul.f32.gmra.mxu0 %v2729
      %v3481 = vpop.f32.mrf.mxu0
      %v3482 = vadd.f32 %v3366, %v3481
      %3483 = vmatmul.f32.gmra.mxu0 %v2736
      %v3484 = vpop.f32.mrf.mxu0
      %v3485 = vadd.f32 %v3369, %v3484
      %3486 = vmatmul.f32.gmra.mxu0 %v2743
      %v3487 = vpop.f32.mrf.mxu0
      %v3488 = vadd.f32 %v3372, %v3487
      %3489 = vmatmul.f32.gmra.mxu0 %v2750
      %v3490 = vpop.f32.mrf.mxu0
      %v3491 = vadd.f32 %v3375, %v3490
      %3492 = vmatmul.f32.gmra.mxu0 %v2757
      %v3493 = vpop.f32.mrf.mxu0
      %v3494 = vadd.f32 %v3378, %v3493
      %3495 = vmatmul.f32.gmra.mxu0 %v2764
      %v3496 = vpop.f32.mrf.mxu0
      %v3497 = vadd.f32 %v3381, %v3496
      %3498 = vmatmul.f32.gmra.mxu0 %v2771
      %v3499 = vpop.f32.mrf.mxu0
      %v3500 = vadd.f32 %v3384, %v3499
      %3501 = vmatmul.f32.gmra.mxu0 %v2778
      %v3502 = vpop.f32.mrf.mxu0
      %v3503 = vadd.f32 %v3387, %v3502
      %3504 = vmatmul.f32.gmra.mxu0 %v2785
      %v3505 = vpop.f32.mrf.mxu0
      %v3506 = vadd.f32 %v3390, %v3505
      %3507 = vmatmul.f32.gmra.mxu0 %v2792
      %v3508 = vpop.f32.mrf.mxu0
      %v3509 = vadd.f32 %v3393, %v3508
      %3510 = vmatmul.f32.gmra.mxu0 %v2799
      %v3511 = vpop.f32.mrf.mxu0
      %v3512 = vadd.f32 %v3396, %v3511
      %3513 = vmatmul.f32.gmra.mxu0 %v2806
      %v3514 = vpop.f32.mrf.mxu0
      %v3515 = vadd.f32 %v3399, %v3514
      %3516 = vmatmul.f32.gmra.mxu0 %v2813
      %v3517 = vpop.f32.mrf.mxu0
      %v3518 = vadd.f32 %v3402, %v3517
      %3519 = vmatmul.f32.gmra.mxu0 %v2820
      %v3520 = vpop.f32.mrf.mxu0
      %v3521 = vadd.f32 %v3405, %v3520
      %3522 = vmatmul.f32.gmra.mxu0 %v2827
      %v3523 = vpop.f32.mrf.mxu0
      %v3524 = vadd.f32 %v3408, %v3523
      %3525 = vmatmul.f32.gmra.mxu0 %v2834
      %v3526 = vpop.f32.mrf.mxu0
      %v3527 = vadd.f32 %v3411, %v3526
      %3528 = vmatmul.f32.gmra.mxu0 %v2841
      %v3529 = vpop.f32.mrf.mxu0
      %v3530 = vadd.f32 %v3414, %v3529
      %3531 = vmatmul.f32.gmra.mxu0 %v2848
      %v3532 = vpop.f32.mrf.mxu0
      %v3533 = vadd.f32 %v3417, %v3532
      %3534 = vmatmul.f32.gmra.mxu0 %v2855
      %v3535 = vpop.f32.mrf.mxu0
      %v3536 = vadd.f32 %v3420, %v3535
      %3537 = vmatmul.f32.gmra.mxu0 %v2862
      %v3538 = vpop.f32.mrf.mxu0
      %v3539 = vadd.f32 %v3423, %v3538
      %3540 = vmatmul.f32.gmra.mxu0 %v2869
      %v3541 = vpop.f32.mrf.mxu0
      %v3542 = vadd.f32 %v3426, %v3541
      %3543 = vmatmul.f32.gmra.mxu0 %v2876
      %v3544 = vpop.f32.mrf.mxu0
      %v3545 = vadd.f32 %v3429, %v3544
      %3546 = vmatmul.f32.gmra.mxu0 %v2883
      %v3547 = vpop.f32.mrf.mxu0
      %v3548 = vadd.f32 %v3432, %v3547
      %3549 = vmatmul.f32.gmra.mxu0 %v2890
      %v3550 = vpop.f32.mrf.mxu0
      %v3551 = vadd.f32 %v3435, %v3550
      %3552 = vmatmul.f32.gmra.mxu0 %v2897
      %v3553 = vpop.f32.mrf.mxu0
      %v3554 = vadd.f32 %v3438, %v3553
      %3555 = vmatmul.f32.gmra.mxu0 %v2904
      %v3556 = vpop.f32.mrf.mxu0
      %v3557 = vadd.f32 %v3441, %v3556
      %3558 = vmatmul.f32.gmra.mxu0 %v2911
      %v3559 = vpop.f32.mrf.mxu0
      %v3560 = vadd.f32 %v3444, %v3559
      %3561 = vdwg.mxu0
      %3562 = vmatpush.msra.mxu0 %v2572
      %3563 = vmatpush.msra.mxu0 %v2570
      %3564 = vmatpush.msra.mxu0 %v2568
      %3565 = vmatpush.msra.mxu0 %v2566
      %3566 = vmatpush.msra.mxu0 %v2544
      %3567 = vmatpush.msra.mxu0 %v2542
      %3568 = vmatpush.msra.mxu0 %v2540
      %3569 = vmatpush.msra.mxu0 %v2538
      %3570 = vmatpush.msra.mxu0 %v2536
      %3571 = vmatpush.msra.mxu0 %v2534
      %3572 = vmatpush.msra.mxu0 %v2532
      %3573 = vmatpush.msra.mxu0 %v2530
      %3574 = vmatpush.msra.mxu0 %v2528
      %3575 = vmatpush.msra.mxu0 %v2526
      %3576 = vmatpush.msra.mxu0 %v2524
      %3577 = vmatpush.msra.mxu0 %v2522
      %3578 = vmatmul.f32.gmra.mxu0 %v2688
      %v3579 = vpop.f32.mrf.mxu0
      %v3580 = vadd.f32 %v3464, %v3579
      %3581 = vmatmul.f32.gmra.mxu0 %v2695
      %v3582 = vpop.f32.mrf.mxu0
      %v3583 = vadd.f32 %v3467, %v3582
      %3584 = vmatmul.f32.gmra.mxu0 %v2702
      %v3585 = vpop.f32.mrf.mxu0
      %v3586 = vadd.f32 %v3470, %v3585
      %3587 = vmatmul.f32.gmra.mxu0 %v2709
      %v3588 = vpop.f32.mrf.mxu0
      %v3589 = vadd.f32 %v3473, %v3588
      %3590 = vmatmul.f32.gmra.mxu0 %v2716
      %v3591 = vpop.f32.mrf.mxu0
      %v3592 = vadd.f32 %v3476, %v3591
      %3593 = vmatmul.f32.gmra.mxu0 %v2723
      %v3594 = vpop.f32.mrf.mxu0
      %v3595 = vadd.f32 %v3479, %v3594
      %3596 = vmatmul.f32.gmra.mxu0 %v2730
      %v3597 = vpop.f32.mrf.mxu0
      %v3598 = vadd.f32 %v3482, %v3597
      %3599 = vmatmul.f32.gmra.mxu0 %v2737
      %v3600 = vpop.f32.mrf.mxu0
      %v3601 = vadd.f32 %v3485, %v3600
      %3602 = vmatmul.f32.gmra.mxu0 %v2744
      %v3603 = vpop.f32.mrf.mxu0
      %v3604 = vadd.f32 %v3488, %v3603
      %3605 = vmatmul.f32.gmra.mxu0 %v2751
      %v3606 = vpop.f32.mrf.mxu0
      %v3607 = vadd.f32 %v3491, %v3606
      %3608 = vmatmul.f32.gmra.mxu0 %v2758
      %v3609 = vpop.f32.mrf.mxu0
      %v3610 = vadd.f32 %v3494, %v3609
      %3611 = vmatmul.f32.gmra.mxu0 %v2765
      %v3612 = vpop.f32.mrf.mxu0
      %v3613 = vadd.f32 %v3497, %v3612
      %3614 = vmatmul.f32.gmra.mxu0 %v2772
      %v3615 = vpop.f32.mrf.mxu0
      %v3616 = vadd.f32 %v3500, %v3615
      %3617 = vmatmul.f32.gmra.mxu0 %v2779
      %v3618 = vpop.f32.mrf.mxu0
      %v3619 = vadd.f32 %v3503, %v3618
      %3620 = vmatmul.f32.gmra.mxu0 %v2786
      %v3621 = vpop.f32.mrf.mxu0
      %v3622 = vadd.f32 %v3506, %v3621
      %3623 = vmatmul.f32.gmra.mxu0 %v2793
      %v3624 = vpop.f32.mrf.mxu0
      %v3625 = vadd.f32 %v3509, %v3624
      %3626 = vmatmul.f32.gmra.mxu0 %v2800
      %v3627 = vpop.f32.mrf.mxu0
      %v3628 = vadd.f32 %v3512, %v3627
      %3629 = vmatmul.f32.gmra.mxu0 %v2807
      %v3630 = vpop.f32.mrf.mxu0
      %v3631 = vadd.f32 %v3515, %v3630
      %3632 = vmatmul.f32.gmra.mxu0 %v2814
      %v3633 = vpop.f32.mrf.mxu0
      %v3634 = vadd.f32 %v3518, %v3633
      %3635 = vmatmul.f32.gmra.mxu0 %v2821
      %v3636 = vpop.f32.mrf.mxu0
      %v3637 = vadd.f32 %v3521, %v3636
      %3638 = vmatmul.f32.gmra.mxu0 %v2828
      %v3639 = vpop.f32.mrf.mxu0
      %v3640 = vadd.f32 %v3524, %v3639
      %3641 = vmatmul.f32.gmra.mxu0 %v2835
      %v3642 = vpop.f32.mrf.mxu0
      %v3643 = vadd.f32 %v3527, %v3642
      %3644 = vmatmul.f32.gmra.mxu0 %v2842
      %v3645 = vpop.f32.mrf.mxu0
      %v3646 = vadd.f32 %v3530, %v3645
      %3647 = vmatmul.f32.gmra.mxu0 %v2849
      %v3648 = vpop.f32.mrf.mxu0
      %v3649 = vadd.f32 %v3533, %v3648
      %3650 = vmatmul.f32.gmra.mxu0 %v2856
      %v3651 = vpop.f32.mrf.mxu0
      %v3652 = vadd.f32 %v3536, %v3651
      %3653 = vmatmul.f32.gmra.mxu0 %v2863
      %v3654 = vpop.f32.mrf.mxu0
      %v3655 = vadd.f32 %v3539, %v3654
      %3656 = vmatmul.f32.gmra.mxu0 %v2870
      %v3657 = vpop.f32.mrf.mxu0
      %v3658 = vadd.f32 %v3542, %v3657
      %3659 = vmatmul.f32.gmra.mxu0 %v2877
      %v3660 = vpop.f32.mrf.mxu0
      %v3661 = vadd.f32 %v3545, %v3660
      %3662 = vmatmul.f32.gmra.mxu0 %v2884
      %v3663 = vpop.f32.mrf.mxu0
      %v3664 = vadd.f32 %v3548, %v3663
      %3665 = vmatmul.f32.gmra.mxu0 %v2891
      %v3666 = vpop.f32.mrf.mxu0
      %v3667 = vadd.f32 %v3551, %v3666
      %3668 = vmatmul.f32.gmra.mxu0 %v2898
      %v3669 = vpop.f32.mrf.mxu0
      %v3670 = vadd.f32 %v3554, %v3669
      %3671 = vmatmul.f32.gmra.mxu0 %v2905
      %v3672 = vpop.f32.mrf.mxu0
      %v3673 = vadd.f32 %v3557, %v3672
      %3674 = vmatmul.f32.gmra.mxu0 %v2912
      %v3675 = vpop.f32.mrf.mxu0
      %v3676 = vadd.f32 %v3560, %v3675
      %3677 = vdwg.mxu0
      %3678 = vmatpush.msra.mxu0 %v2604
      %3679 = vmatpush.msra.mxu0 %v2602
      %3680 = vmatpush.msra.mxu0 %v2600
      %3681 = vmatpush.msra.mxu0 %v2598
      %3682 = vmatpush.msra.mxu0 %v2596
      %3683 = vmatpush.msra.mxu0 %v2594
      %3684 = vmatpush.msra.mxu0 %v2592
      %3685 = vmatpush.msra.mxu0 %v2590
      %3686 = vmatpush.msra.mxu0 %v2588
      %3687 = vmatpush.msra.mxu0 %v2586
      %3688 = vmatpush.msra.mxu0 %v2584
      %3689 = vmatpush.msra.mxu0 %v2582
      %3690 = vmatpush.msra.mxu0 %v2580
      %3691 = vmatpush.msra.mxu0 %v2578
      %3692 = vmatpush.msra.mxu0 %v2576
      %3693 = vmatpush.msra.mxu0 %v2574
      %3694 = vmatmul.f32.gmra.mxu0 %v2689
      %v3695 = vpop.f32.mrf.mxu0
      %v3696 = vadd.f32 %v3580, %v3695
      %3697 = vmatmul.f32.gmra.mxu0 %v2696
      %v3698 = vpop.f32.mrf.mxu0
      %v3699 = vadd.f32 %v3583, %v3698
      %3700 = vmatmul.f32.gmra.mxu0 %v2703
      %v3701 = vpop.f32.mrf.mxu0
      %v3702 = vadd.f32 %v3586, %v3701
      %3703 = vmatmul.f32.gmra.mxu0 %v2710
      %v3704 = vpop.f32.mrf.mxu0
      %v3705 = vadd.f32 %v3589, %v3704
      %3706 = vmatmul.f32.gmra.mxu0 %v2717
      %v3707 = vpop.f32.mrf.mxu0
      %v3708 = vadd.f32 %v3592, %v3707
      %3709 = vmatmul.f32.gmra.mxu0 %v2724
      %v3710 = vpop.f32.mrf.mxu0
      %v3711 = vadd.f32 %v3595, %v3710
      %3712 = vmatmul.f32.gmra.mxu0 %v2731
      %v3713 = vpop.f32.mrf.mxu0
      %v3714 = vadd.f32 %v3598, %v3713
      %3715 = vmatmul.f32.gmra.mxu0 %v2738
      %v3716 = vpop.f32.mrf.mxu0
      %v3717 = vadd.f32 %v3601, %v3716
      %3718 = vmatmul.f32.gmra.mxu0 %v2745
      %v3719 = vpop.f32.mrf.mxu0
      %v3720 = vadd.f32 %v3604, %v3719
      %3721 = vmatmul.f32.gmra.mxu0 %v2752
      %v3722 = vpop.f32.mrf.mxu0
      %v3723 = vadd.f32 %v3607, %v3722
      %3724 = vmatmul.f32.gmra.mxu0 %v2759
      %v3725 = vpop.f32.mrf.mxu0
      %v3726 = vadd.f32 %v3610, %v3725
      %3727 = vmatmul.f32.gmra.mxu0 %v2766
      %v3728 = vpop.f32.mrf.mxu0
      %v3729 = vadd.f32 %v3613, %v3728
      %3730 = vmatmul.f32.gmra.mxu0 %v2773
      %v3731 = vpop.f32.mrf.mxu0
      %v3732 = vadd.f32 %v3616, %v3731
      %3733 = vmatmul.f32.gmra.mxu0 %v2780
      %v3734 = vpop.f32.mrf.mxu0
      %v3735 = vadd.f32 %v3619, %v3734
      %3736 = vmatmul.f32.gmra.mxu0 %v2787
      %v3737 = vpop.f32.mrf.mxu0
      %v3738 = vadd.f32 %v3622, %v3737
      %3739 = vmatmul.f32.gmra.mxu0 %v2794
      %v3740 = vpop.f32.mrf.mxu0
      %v3741 = vadd.f32 %v3625, %v3740
      %3742 = vmatmul.f32.gmra.mxu0 %v2801
      %v3743 = vpop.f32.mrf.mxu0
      %v3744 = vadd.f32 %v3628, %v3743
      %3745 = vmatmul.f32.gmra.mxu0 %v2808
      %v3746 = vpop.f32.mrf.mxu0
      %v3747 = vadd.f32 %v3631, %v3746
      %3748 = vmatmul.f32.gmra.mxu0 %v2815
      %v3749 = vpop.f32.mrf.mxu0
      %v3750 = vadd.f32 %v3634, %v3749
      %3751 = vmatmul.f32.gmra.mxu0 %v2822
      %v3752 = vpop.f32.mrf.mxu0
      %v3753 = vadd.f32 %v3637, %v3752
      %3754 = vmatmul.f32.gmra.mxu0 %v2829
      %v3755 = vpop.f32.mrf.mxu0
      %v3756 = vadd.f32 %v3640, %v3755
      %3757 = vmatmul.f32.gmra.mxu0 %v2836
      %v3758 = vpop.f32.mrf.mxu0
      %v3759 = vadd.f32 %v3643, %v3758
      %3760 = vmatmul.f32.gmra.mxu0 %v2843
      %v3761 = vpop.f32.mrf.mxu0
      %v3762 = vadd.f32 %v3646, %v3761
      %3763 = vmatmul.f32.gmra.mxu0 %v2850
      %v3764 = vpop.f32.mrf.mxu0
      %v3765 = vadd.f32 %v3649, %v3764
      %3766 = vmatmul.f32.gmra.mxu0 %v2857
      %v3767 = vpop.f32.mrf.mxu0
      %v3768 = vadd.f32 %v3652, %v3767
      %3769 = vmatmul.f32.gmra.mxu0 %v2864
      %v3770 = vpop.f32.mrf.mxu0
      %v3771 = vadd.f32 %v3655, %v3770
      %3772 = vmatmul.f32.gmra.mxu0 %v2871
      %v3773 = vpop.f32.mrf.mxu0
      %v3774 = vadd.f32 %v3658, %v3773
      %3775 = vmatmul.f32.gmra.mxu0 %v2878
      %v3776 = vpop.f32.mrf.mxu0
      %v3777 = vadd.f32 %v3661, %v3776
      %3778 = vmatmul.f32.gmra.mxu0 %v2885
      %v3779 = vpop.f32.mrf.mxu0
      %v3780 = vadd.f32 %v3664, %v3779
      %3781 = vmatmul.f32.gmra.mxu0 %v2892
      %v3782 = vpop.f32.mrf.mxu0
      %v3783 = vadd.f32 %v3667, %v3782
      %3784 = vmatmul.f32.gmra.mxu0 %v2899
      %v3785 = vpop.f32.mrf.mxu0
      %v3786 = vadd.f32 %v3670, %v3785
      %3787 = vmatmul.f32.gmra.mxu0 %v2906
      %v3788 = vpop.f32.mrf.mxu0
      %v3789 = vadd.f32 %v3673, %v3788
      %3790 = vmatmul.f32.gmra.mxu0 %v2913
      %v3791 = vpop.f32.mrf.mxu0
      %v3792 = vadd.f32 %v3676, %v3791
      %3793 = vdwg.mxu0
      %3794 = vmatpush.msra.mxu0 %v2656
      %3795 = vmatpush.msra.mxu0 %v2654
      %3796 = vmatpush.msra.mxu0 %v2652
      %3797 = vmatpush.msra.mxu0 %v2650
      %3798 = vmatpush.msra.mxu0 %v2648
      %3799 = vmatpush.msra.mxu0 %v2646
      %3800 = vmatpush.msra.mxu0 %v2644
      %3801 = vmatpush.msra.mxu0 %v2642
      %3802 = vmatpush.msra.mxu0 %v2640
      %3803 = vmatpush.msra.mxu0 %v2638
      %3804 = vmatpush.msra.mxu0 %v2636
      %3805 = vmatpush.msra.mxu0 %v2634
      %3806 = vmatpush.msra.mxu0 %v2632
      %3807 = vmatpush.msra.mxu0 %v2630
      %3808 = vmatpush.msra.mxu0 %v2628
      %3809 = vmatpush.msra.mxu0 %v2626
      %3810 = vmatmul.f32.gmra.mxu0 %v2690
      %v3811 = vpop.f32.mrf.mxu0
      %v3812 = vadd.f32 %v3696, %v3811
      %3813 = vmatmul.f32.gmra.mxu0 %v2697
      %v3814 = vpop.f32.mrf.mxu0
      %v3815 = vadd.f32 %v3699, %v3814
      %3816 = vmatmul.f32.gmra.mxu0 %v2704
      %v3817 = vpop.f32.mrf.mxu0
      %v3818 = vadd.f32 %v3702, %v3817
      %3819 = vmatmul.f32.gmra.mxu0 %v2711
      %v3820 = vpop.f32.mrf.mxu0
      %v3821 = vadd.f32 %v3705, %v3820
      %3822 = vmatmul.f32.gmra.mxu0 %v2718
      %v3823 = vpop.f32.mrf.mxu0
      %v3824 = vadd.f32 %v3708, %v3823
      %3825 = vmatmul.f32.gmra.mxu0 %v2725
      %v3826 = vpop.f32.mrf.mxu0
      %v3827 = vadd.f32 %v3711, %v3826
      %3828 = vmatmul.f32.gmra.mxu0 %v2732
      %v3829 = vpop.f32.mrf.mxu0
      %v3830 = vadd.f32 %v3714, %v3829
      %3831 = vmatmul.f32.gmra.mxu0 %v2739
      %v3832 = vpop.f32.mrf.mxu0
      %v3833 = vadd.f32 %v3717, %v3832
      %3834 = vmatmul.f32.gmra.mxu0 %v2746
      %v3835 = vpop.f32.mrf.mxu0
      %v3836 = vadd.f32 %v3720, %v3835
      %3837 = vmatmul.f32.gmra.mxu0 %v2753
      %v3838 = vpop.f32.mrf.mxu0
      %v3839 = vadd.f32 %v3723, %v3838
      %3840 = vmatmul.f32.gmra.mxu0 %v2760
      %v3841 = vpop.f32.mrf.mxu0
      %v3842 = vadd.f32 %v3726, %v3841
      %3843 = vmatmul.f32.gmra.mxu0 %v2767
      %v3844 = vpop.f32.mrf.mxu0
      %v3845 = vadd.f32 %v3729, %v3844
      %3846 = vmatmul.f32.gmra.mxu0 %v2774
      %v3847 = vpop.f32.mrf.mxu0
      %v3848 = vadd.f32 %v3732, %v3847
      %3849 = vmatmul.f32.gmra.mxu0 %v2781
      %v3850 = vpop.f32.mrf.mxu0
      %v3851 = vadd.f32 %v3735, %v3850
      %3852 = vmatmul.f32.gmra.mxu0 %v2788
      %v3853 = vpop.f32.mrf.mxu0
      %v3854 = vadd.f32 %v3738, %v3853
      %3855 = vmatmul.f32.gmra.mxu0 %v2795
      %v3856 = vpop.f32.mrf.mxu0
      %v3857 = vadd.f32 %v3741, %v3856
      %3858 = vmatmul.f32.gmra.mxu0 %v2802
      %v3859 = vpop.f32.mrf.mxu0
      %v3860 = vadd.f32 %v3744, %v3859
      %3861 = vmatmul.f32.gmra.mxu0 %v2809
      %v3862 = vpop.f32.mrf.mxu0
      %v3863 = vadd.f32 %v3747, %v3862
      %3864 = vmatmul.f32.gmra.mxu0 %v2816
      %v3865 = vpop.f32.mrf.mxu0
      %v3866 = vadd.f32 %v3750, %v3865
      %3867 = vmatmul.f32.gmra.mxu0 %v2823
      %v3868 = vpop.f32.mrf.mxu0
      %v3869 = vadd.f32 %v3753, %v3868
      %3870 = vmatmul.f32.gmra.mxu0 %v2830
      %v3871 = vpop.f32.mrf.mxu0
      %v3872 = vadd.f32 %v3756, %v3871
      %3873 = vmatmul.f32.gmra.mxu0 %v2837
      %v3874 = vpop.f32.mrf.mxu0
      %v3875 = vadd.f32 %v3759, %v3874
      %3876 = vmatmul.f32.gmra.mxu0 %v2844
      %v3877 = vpop.f32.mrf.mxu0
      %v3878 = vadd.f32 %v3762, %v3877
      %3879 = vmatmul.f32.gmra.mxu0 %v2851
      %v3880 = vpop.f32.mrf.mxu0
      %v3881 = vadd.f32 %v3765, %v3880
      %3882 = vmatmul.f32.gmra.mxu0 %v2858
      %v3883 = vpop.f32.mrf.mxu0
      %v3884 = vadd.f32 %v3768, %v3883
      %3885 = vmatmul.f32.gmra.mxu0 %v2865
      %v3886 = vpop.f32.mrf.mxu0
      %v3887 = vadd.f32 %v3771, %v3886
      %3888 = vmatmul.f32.gmra.mxu0 %v2872
      %v3889 = vpop.f32.mrf.mxu0
      %v3890 = vadd.f32 %v3774, %v3889
      %3891 = vmatmul.f32.gmra.mxu0 %v2879
      %v3892 = vpop.f32.mrf.mxu0
      %v3893 = vadd.f32 %v3777, %v3892
      %3894 = vmatmul.f32.gmra.mxu0 %v2886
      %v3895 = vpop.f32.mrf.mxu0
      %v3896 = vadd.f32 %v3780, %v3895
      %3897 = vmatmul.f32.gmra.mxu0 %v2893
      %v3898 = vpop.f32.mrf.mxu0
      %v3899 = vadd.f32 %v3783, %v3898
      %3900 = vmatmul.f32.gmra.mxu0 %v2900
      %v3901 = vpop.f32.mrf.mxu0
      %v3902 = vadd.f32 %v3786, %v3901
      %3903 = vmatmul.f32.gmra.mxu0 %v2907
      %v3904 = vpop.f32.mrf.mxu0
      %v3905 = vadd.f32 %v3789, %v3904
      %3906 = vmatmul.f32.gmra.mxu0 %v2914
      %v3907 = vpop.f32.mrf.mxu0
      %v3908 = vadd.f32 %v3792, %v3907
      %3909 = vdwg.mxu0
      %3910 = vmatpush.msra.mxu0 0.0
      %3911 = vmatpush.msra.mxu0 0.0
      %3912 = vmatpush.msra.mxu0 0.0
      %3913 = vmatpush.msra.mxu0 0.0
      %3914 = vmatpush.msra.mxu0 0.0
      %3915 = vmatpush.msra.mxu0 0.0
      %3916 = vmatpush.msra.mxu0 0.0
      %3917 = vmatpush.msra.mxu0 0.0
      %3918 = vmatpush.msra.mxu0 0.0
      %3919 = vmatpush.msra.mxu0 0.0
      %3920 = vmatpush.msra.mxu0 0.0
      %3921 = vmatpush.msra.mxu0 0.0
      %3922 = vmatpush.msra.mxu0 %v2664
      %3923 = vmatpush.msra.mxu0 %v2662
      %3924 = vmatpush.msra.mxu0 %v2660
      %3925 = vmatpush.msra.mxu0 %v2658
      %3926 = vmatmul.f32.gmra.mxu0 %v3116
      %v3927 = vpop.f32.mrf.mxu0
      %v3928 = vadd.f32 %v3812, %v3927
      %3929 = vmatmul.f32.gmra.mxu0 %v3119
      %v3930 = vpop.f32.mrf.mxu0
      %v3931 = vadd.f32 %v3815, %v3930
      %3932 = vmatmul.f32.gmra.mxu0 %v3122
      %v3933 = vpop.f32.mrf.mxu0
      %v3934 = vadd.f32 %v3818, %v3933
      %3935 = vmatmul.f32.gmra.mxu0 %v3125
      %v3936 = vpop.f32.mrf.mxu0
      %v3937 = vadd.f32 %v3821, %v3936
      %3938 = vmatmul.f32.gmra.mxu0 %v3128
      %v3939 = vpop.f32.mrf.mxu0
      %v3940 = vadd.f32 %v3824, %v3939
      %3941 = vmatmul.f32.gmra.mxu0 %v3131
      %v3942 = vpop.f32.mrf.mxu0
      %v3943 = vadd.f32 %v3827, %v3942
      %3944 = vmatmul.f32.gmra.mxu0 %v3134
      %v3945 = vpop.f32.mrf.mxu0
      %v3946 = vadd.f32 %v3830, %v3945
      %3947 = vmatmul.f32.gmra.mxu0 %v3137
      %v3948 = vpop.f32.mrf.mxu0
      %v3949 = vadd.f32 %v3833, %v3948
      %3950 = vmatmul.f32.gmra.mxu0 %v3140
      %v3951 = vpop.f32.mrf.mxu0
      %v3952 = vadd.f32 %v3836, %v3951
      %3953 = vmatmul.f32.gmra.mxu0 %v3143
      %v3954 = vpop.f32.mrf.mxu0
      %v3955 = vadd.f32 %v3839, %v3954
      %3956 = vmatmul.f32.gmra.mxu0 %v3146
      %v3957 = vpop.f32.mrf.mxu0
      %v3958 = vadd.f32 %v3842, %v3957
      %3959 = vmatmul.f32.gmra.mxu0 %v3149
      %v3960 = vpop.f32.mrf.mxu0
      %v3961 = vadd.f32 %v3845, %v3960
      %3962 = vmatmul.f32.gmra.mxu0 %v3152
      %v3963 = vpop.f32.mrf.mxu0
      %v3964 = vadd.f32 %v3848, %v3963
      %3965 = vmatmul.f32.gmra.mxu0 %v3155
      %v3966 = vpop.f32.mrf.mxu0
      %v3967 = vadd.f32 %v3851, %v3966
      %3968 = vmatmul.f32.gmra.mxu0 %v3158
      %v3969 = vpop.f32.mrf.mxu0
      %v3970 = vadd.f32 %v3854, %v3969
      %3971 = vmatmul.f32.gmra.mxu0 %v3161
      %v3972 = vpop.f32.mrf.mxu0
      %v3973 = vadd.f32 %v3857, %v3972
      %3974 = vmatmul.f32.gmra.mxu0 %v3164
      %v3975 = vpop.f32.mrf.mxu0
      %v3976 = vadd.f32 %v3860, %v3975
      %3977 = vmatmul.f32.gmra.mxu0 %v3167
      %v3978 = vpop.f32.mrf.mxu0
      %v3979 = vadd.f32 %v3863, %v3978
      %3980 = vmatmul.f32.gmra.mxu0 %v3170
      %v3981 = vpop.f32.mrf.mxu0
      %v3982 = vadd.f32 %v3866, %v3981
      %3983 = vmatmul.f32.gmra.mxu0 %v3173
      %v3984 = vpop.f32.mrf.mxu0
      %v3985 = vadd.f32 %v3869, %v3984
      %3986 = vmatmul.f32.gmra.mxu0 %v3176
      %v3987 = vpop.f32.mrf.mxu0
      %v3988 = vadd.f32 %v3872, %v3987
      %3989 = vmatmul.f32.gmra.mxu0 %v3179
      %v3990 = vpop.f32.mrf.mxu0
      %v3991 = vadd.f32 %v3875, %v3990
      %3992 = vmatmul.f32.gmra.mxu0 %v3182
      %v3993 = vpop.f32.mrf.mxu0
      %v3994 = vadd.f32 %v3878, %v3993
      %3995 = vmatmul.f32.gmra.mxu0 %v3185
      %v3996 = vpop.f32.mrf.mxu0
      %v3997 = vadd.f32 %v3881, %v3996
      %3998 = vmatmul.f32.gmra.mxu0 %v3188
      %v3999 = vpop.f32.mrf.mxu0
      %v4000 = vadd.f32 %v3884, %v3999
      %4001 = vmatmul.f32.gmra.mxu0 %v3191
      %v4002 = vpop.f32.mrf.mxu0
      %v4003 = vadd.f32 %v3887, %v4002
      %4004 = vmatmul.f32.gmra.mxu0 %v3194
      %v4005 = vpop.f32.mrf.mxu0
      %v4006 = vadd.f32 %v3890, %v4005
      %4007 = vmatmul.f32.gmra.mxu0 %v3197
      %v4008 = vpop.f32.mrf.mxu0
      %v4009 = vadd.f32 %v3893, %v4008
      %4010 = vmatmul.f32.gmra.mxu0 %v3200
      %v4011 = vpop.f32.mrf.mxu0
      %v4012 = vadd.f32 %v3896, %v4011
      %4013 = vmatmul.f32.gmra.mxu0 %v3203
      %v4014 = vpop.f32.mrf.mxu0
      %v4015 = vadd.f32 %v3899, %v4014
      %4016 = vmatmul.f32.gmra.mxu0 %v3206
      %v4017 = vpop.f32.mrf.mxu0
      %v4018 = vadd.f32 %v3902, %v4017
      %4019 = vmatmul.f32.gmra.mxu0 %v3209
      %v4020 = vpop.f32.mrf.mxu0
      %v4021 = vadd.f32 %v3905, %v4020
      %4022 = vmatmul.f32.gmra.mxu0 %v3212
      %v4023 = vpop.f32.mrf.mxu0
      %v4024 = vadd.f32 %v3908, %v4023
      %4025 = vdwg.mxu0
      %v4026 = vmax.f32 %v3928, 0.0
      %v4027 = vmax.f32 %v3931, 0.0
      %v4028 = vmax.f32 %v3934, 0.0
      %v4029 = vmax.f32 %v3937, 0.0
      %v4030 = vmax.f32 %v3940, 0.0
      %v4031 = vmax.f32 %v3943, 0.0
      %v4032 = vmax.f32 %v3946, 0.0
      %v4033 = vmax.f32 %v3949, 0.0
      %v4034 = vmax.f32 %v3952, 0.0
      %v4035 = vmax.f32 %v3955, 0.0
      %v4036 = vmax.f32 %v3958, 0.0
      %v4037 = vmax.f32 %v3961, 0.0
      %v4038 = vmax.f32 %v3964, 0.0
      %v4039 = vmax.f32 %v3967, 0.0
      %v4040 = vmax.f32 %v3970, 0.0
      %v4041 = vmax.f32 %v3973, 0.0
      %v4042 = vmax.f32 %v3976, 0.0
      %v4043 = vmax.f32 %v3979, 0.0
      %v4044 = vmax.f32 %v3982, 0.0
      %v4045 = vmax.f32 %v3985, 0.0
      %v4046 = vmax.f32 %v3988, 0.0
      %v4047 = vmax.f32 %v3991, 0.0
      %v4048 = vmax.f32 %v3994, 0.0
      %v4049 = vmax.f32 %v3997, 0.0
      %v4050 = vmax.f32 %v4000, 0.0
      %v4051 = vmax.f32 %v4003, 0.0
      %v4052 = vmax.f32 %v4006, 0.0
      %v4053 = vmax.f32 %v4009, 0.0
      %v4054 = vmax.f32 %v4012, 0.0
      %v4055 = vmax.f32 %v4015, 0.0
      %v4056 = vmax.f32 %v4018, 0.0
      %v4057 = vmax.f32 %v4021, 0.0
      %v4058 = vmax.f32 %v4024, 0.0
      %v4059 = vld [vmem:[%s9] sm:$0xff]
      %v4060 = vld [vmem:[%s9 + $0x8] sm:$0xff]
      %v4061 = vld [vmem:[%s9 + $0x10] sm:$0xff]
      %v4062 = vld [vmem:[%s9 + $0x18] sm:$0xff]
      %v4063 = vld [vmem:[%s9 + $0x20] sm:$0xff]
      %v4064 = vld [vmem:[%s9 + $0x28] sm:$0xff]
      %v4065 = vld [vmem:[%s9 + $0x30] sm:$0xff]
      %v4066 = vld [vmem:[%s9 + $0x38] sm:$0xff]
      %v4067 = vld [vmem:[%s9 + $0x40] sm:$0xff]
      %v4068 = vld [vmem:[%s9 + $0x48] sm:$0xff]
      %v4069 = vld [vmem:[%s9 + $0x50] sm:$0xff]
      %v4070 = vld [vmem:[%s9 + $0x58] sm:$0xff]
      %v4071 = vld [vmem:[%s9 + $0x60] sm:$0xff]
      %v4072 = vld [vmem:[%s9 + $0x68] sm:$0xff]
      %v4073 = vld [vmem:[%s9 + $0x70] sm:$0xff]
      %v4074 = vld [vmem:[%s9 + $0x78] sm:$0xff]
      %v4075 = vld [vmem:[%s9 + $0x80] sm:$0xff]
      %v4076 = vld [vmem:[%s9 + $0x88] sm:$0xff]
      %v4077 = vld [vmem:[%s9 + $0x90] sm:$0xff]
      %v4078 = vld [vmem:[%s9 + $0x98] sm:$0xff]
      %v4079 = vld [vmem:[%s9 + $0xa0] sm:$0xff]
      %v4080 = vld [vmem:[%s9 + $0xa8] sm:$0xff]
      %v4081 = vld [vmem:[%s9 + $0xb0] sm:$0xff]
      %v4082 = vld [vmem:[%s9 + $0xb8] sm:$0xff]
      %v4083 = vld [vmem:[%s9 + $0xc0] sm:$0xff]
      %v4084 = vld [vmem:[%s9 + $0xc8] sm:$0xff]
      %v4085 = vld [vmem:[%s9 + $0xd0] sm:$0xff]
      %v4086 = vld [vmem:[%s9 + $0xd8] sm:$0xff]
      %v4087 = vld [vmem:[%s9 + $0xe0] sm:$0xff]
      %v4088 = vld [vmem:[%s9 + $0xe8] sm:$0xff]
      %v4089 = vld [vmem:[%s9 + $0xf0] sm:$0xff]
      %v4090 = vld [vmem:[%s9 + $0xf8] sm:$0xff]
      %v4091 = vld [vmem:[%s9 + $0x100] sm:$0xff]
      %v4092 = vld [vmem:[%s9 + $0x108] sm:$0xff]
      %v4093 = vld [vmem:[%s9 + $0x110] sm:$0xff]
      %v4094 = vld [vmem:[%s9 + $0x118] sm:$0xff]
      %v4095 = vld [vmem:[%s9 + $0x120] sm:$0xff]
      %v4096 = vld [vmem:[%s9 + $0x128] sm:$0xff]
      %v4097 = vld [vmem:[%s9 + $0x130] sm:$0xff]
      %v4098 = vld [vmem:[%s9 + $0x138] sm:$0xff]
      %v4099 = vld [vmem:[%s9 + $0x140] sm:$0xff]
      %v4100 = vld [vmem:[%s9 + $0x148] sm:$0xff]
      %v4101 = vld [vmem:[%s9 + $0x150] sm:$0xff]
      %v4102 = vld [vmem:[%s9 + $0x158] sm:$0xff]
      %v4103 = vld [vmem:[%s9 + $0x160] sm:$0xff]
      %v4104 = vld [vmem:[%s9 + $0x168] sm:$0xff]
      %v4105 = vld [vmem:[%s9 + $0x170] sm:$0xff]
      %v4106 = vld [vmem:[%s9 + $0x178] sm:$0xff]
      %v4107 = vld [vmem:[%s9 + $0x180] sm:$0x3]
      %v4108 = vld [vmem:[%s9 + $0x188] sm:$0x3]
      %v4109 = vld [vmem:[%s9 + $0x190] sm:$0x3]
      %vm4110 = vcmask 31744
      %v4112 = vsel %vm4110, %v4061, 0
      %v4115 = vsel %vm4110, %v4064, 0
      %v4118 = vsel %vm4110, %v4067, 0
      %v4121 = vsel %vm4110, %v4070, 0
      %v4124 = vsel %vm4110, %v4073, 0
      %v4127 = vsel %vm4110, %v4076, 0
      %v4130 = vsel %vm4110, %v4079, 0
      %v4133 = vsel %vm4110, %v4082, 0
      %v4136 = vsel %vm4110, %v4085, 0
      %v4139 = vsel %vm4110, %v4088, 0
      %v4142 = vsel %vm4110, %v4091, 0
      %v4145 = vsel %vm4110, %v4094, 0
      %v4148 = vsel %vm4110, %v4097, 0
      %v4151 = vsel %vm4110, %v4100, 0
      %v4154 = vsel %vm4110, %v4103, 0
      %v4157 = vsel %vm4110, %v4106, 0
      %v4160 = vsel %vm4110, %v4109, 0
      %v4163 = vsel %vm1562, %v4058, 0
      %4165 = vmatpush.msra.mxu0 %v4041
      %4166 = vmatpush.msra.mxu0 %v4040
      %4167 = vmatpush.msra.mxu0 %v4039
      %4168 = vmatpush.msra.mxu0 %v4038
      %4169 = vmatpush.msra.mxu0 %v4037
      %4170 = vmatpush.msra.mxu0 %v4036
      %4171 = vmatpush.msra.mxu0 %v4035
      %4172 = vmatpush.msra.mxu0 %v4034
      %4173 = vmatpush.msra.mxu0 %v4033
      %4174 = vmatpush.msra.mxu0 %v4032
      %4175 = vmatpush.msra.mxu0 %v4031
      %4176 = vmatpush.msra.mxu0 %v4030
      %4177 = vmatpush.msra.mxu0 %v4029
      %4178 = vmatpush.msra.mxu0 %v4028
      %4179 = vmatpush.msra.mxu0 %v4027
      %4180 = vmatpush.msra.mxu0 %v4026
      %4181 = vmatmul.f32.gmra.mxu0 %v4059
      %v4182 = vpop.f32.mrf.mxu0
      %v4183 = vadd.f32 0.0, %v4182
      %4184 = vmatmul.f32.gmra.mxu0 %v4062
      %v4185 = vpop.f32.mrf.mxu0
      %v4186 = vadd.f32 0.0, %v4185
      %4187 = vmatmul.f32.gmra.mxu0 %v4065
      %v4188 = vpop.f32.mrf.mxu0
      %v4189 = vadd.f32 0.0, %v4188
      %4190 = vmatmul.f32.gmra.mxu0 %v4068
      %v4191 = vpop.f32.mrf.mxu0
      %v4192 = vadd.f32 0.0, %v4191
      %4193 = vmatmul.f32.gmra.mxu0 %v4071
      %v4194 = vpop.f32.mrf.mxu0
      %v4195 = vadd.f32 0.0, %v4194
      %4196 = vmatmul.f32.gmra.mxu0 %v4074
      %v4197 = vpop.f32.mrf.mxu0
      %v4198 = vadd.f32 0.0, %v4197
      %4199 = vmatmul.f32.gmra.mxu0 %v4077
      %v4200 = vpop.f32.mrf.mxu0
      %v4201 = vadd.f32 0.0, %v4200
      %4202 = vmatmul.f32.gmra.mxu0 %v4080
      %v4203 = vpop.f32.mrf.mxu0
      %v4204 = vadd.f32 0.0, %v4203
      %4205 = vmatmul.f32.gmra.mxu0 %v4083
      %v4206 = vpop.f32.mrf.mxu0
      %v4207 = vadd.f32 0.0, %v4206
      %4208 = vmatmul.f32.gmra.mxu0 %v4086
      %v4209 = vpop.f32.mrf.mxu0
      %v4210 = vadd.f32 0.0, %v4209
      %4211 = vmatmul.f32.gmra.mxu0 %v4089
      %v4212 = vpop.f32.mrf.mxu0
      %v4213 = vadd.f32 0.0, %v4212
      %4214 = vmatmul.f32.gmra.mxu0 %v4092
      %v4215 = vpop.f32.mrf.mxu0
      %v4216 = vadd.f32 0.0, %v4215
      %4217 = vmatmul.f32.gmra.mxu0 %v4095
      %v4218 = vpop.f32.mrf.mxu0
      %v4219 = vadd.f32 0.0, %v4218
      %4220 = vmatmul.f32.gmra.mxu0 %v4098
      %v4221 = vpop.f32.mrf.mxu0
      %v4222 = vadd.f32 0.0, %v4221
      %4223 = vmatmul.f32.gmra.mxu0 %v4101
      %v4224 = vpop.f32.mrf.mxu0
      %v4225 = vadd.f32 0.0, %v4224
      %4226 = vmatmul.f32.gmra.mxu0 %v4104
      %v4227 = vpop.f32.mrf.mxu0
      %v4228 = vadd.f32 0.0, %v4227
      %4229 = vmatmul.f32.gmra.mxu0 %v4107
      %v4230 = vpop.f32.mrf.mxu0
      %v4231 = vadd.f32 0.0, %v4230
      %4232 = vdwg.mxu0
      %4233 = vmatpush.msra.mxu0 %v4057
      %4234 = vmatpush.msra.mxu0 %v4056
      %4235 = vmatpush.msra.mxu0 %v4055
      %4236 = vmatpush.msra.mxu0 %v4054
      %4237 = vmatpush.msra.mxu0 %v4053
      %4238 = vmatpush.msra.mxu0 %v4052
      %4239 = vmatpush.msra.mxu0 %v4051
      %4240 = vmatpush.msra.mxu0 %v4050
      %4241 = vmatpush.msra.mxu0 %v4049
      %4242 = vmatpush.msra.mxu0 %v4048
      %4243 = vmatpush.msra.mxu0 %v4047
      %4244 = vmatpush.msra.mxu0 %v4046
      %4245 = vmatpush.msra.mxu0 %v4045
      %4246 = vmatpush.msra.mxu0 %v4044
      %4247 = vmatpush.msra.mxu0 %v4043
      %4248 = vmatpush.msra.mxu0 %v4042
      %4249 = vmatmul.f32.gmra.mxu0 %v4060
      %v4250 = vpop.f32.mrf.mxu0
      %v4251 = vadd.f32 %v4183, %v4250
      %4252 = vmatmul.f32.gmra.mxu0 %v4063
      %v4253 = vpop.f32.mrf.mxu0
      %v4254 = vadd.f32 %v4186, %v4253
      %4255 = vmatmul.f32.gmra.mxu0 %v4066
      %v4256 = vpop.f32.mrf.mxu0
      %v4257 = vadd.f32 %v4189, %v4256
      %4258 = vmatmul.f32.gmra.mxu0 %v4069
      %v4259 = vpop.f32.mrf.mxu0
      %v4260 = vadd.f32 %v4192, %v4259
      %4261 = vmatmul.f32.gmra.mxu0 %v4072
      %v4262 = vpop.f32.mrf.mxu0
      %v4263 = vadd.f32 %v4195, %v4262
      %4264 = vmatmul.f32.gmra.mxu0 %v4075
      %v4265 = vpop.f32.mrf.mxu0
      %v4266 = vadd.f32 %v4198, %v4265
      %4267 = vmatmul.f32.gmra.mxu0 %v4078
      %v4268 = vpop.f32.mrf.mxu0
      %v4269 = vadd.f32 %v4201, %v4268
      %4270 = vmatmul.f32.gmra.mxu0 %v4081
      %v4271 = vpop.f32.mrf.mxu0
      %v4272 = vadd.f32 %v4204, %v4271
      %4273 = vmatmul.f32.gmra.mxu0 %v4084
      %v4274 = vpop.f32.mrf.mxu0
      %v4275 = vadd.f32 %v4207, %v4274
      %4276 = vmatmul.f32.gmra.mxu0 %v4087
      %v4277 = vpop.f32.mrf.mxu0
      %v4278 = vadd.f32 %v4210, %v4277
      %4279 = vmatmul.f32.gmra.mxu0 %v4090
      %v4280 = vpop.f32.mrf.mxu0
      %v4281 = vadd.f32 %v4213, %v4280
      %4282 = vmatmul.f32.gmra.mxu0 %v4093
      %v4283 = vpop.f32.mrf.mxu0
      %v4284 = vadd.f32 %v4216, %v4283
      %4285 = vmatmul.f32.gmra.mxu0 %v4096
      %v4286 = vpop.f32.mrf.mxu0
      %v4287 = vadd.f32 %v4219, %v4286
      %4288 = vmatmul.f32.gmra.mxu0 %v4099
      %v4289 = vpop.f32.mrf.mxu0
      %v4290 = vadd.f32 %v4222, %v4289
      %4291 = vmatmul.f32.gmra.mxu0 %v4102
      %v4292 = vpop.f32.mrf.mxu0
      %v4293 = vadd.f32 %v4225, %v4292
      %4294 = vmatmul.f32.gmra.mxu0 %v4105
      %v4295 = vpop.f32.mrf.mxu0
      %v4296 = vadd.f32 %v4228, %v4295
      %4297 = vmatmul.f32.gmra.mxu0 %v4108
      %v4298 = vpop.f32.mrf.mxu0
      %v4299 = vadd.f32 %v4231, %v4298
      %4300 = vdwg.mxu0
      %4301 = vmatpush.msra.mxu0 0.0
      %4302 = vmatpush.msra.mxu0 0.0
      %4303 = vmatpush.msra.mxu0 0.0
      %4304 = vmatpush.msra.mxu0 0.0
      %4305 = vmatpush.msra.mxu0 0.0
      %4306 = vmatpush.msra.mxu0 0.0
      %4307 = vmatpush.msra.mxu0 0.0
      %4308 = vmatpush.msra.mxu0 0.0
      %4309 = vmatpush.msra.mxu0 0.0
      %4310 = vmatpush.msra.mxu0 0.0
      %4311 = vmatpush.msra.mxu0 0.0
      %4312 = vmatpush.msra.mxu0 0.0
      %4313 = vmatpush.msra.mxu0 0.0
      %4314 = vmatpush.msra.mxu0 0.0
      %4315 = vmatpush.msra.mxu0 0.0
      %4316 = vmatpush.msra.mxu0 %v4163
      %4317 = vmatmul.f32.gmra.mxu0 %v4112
      %v4318 = vpop.f32.mrf.mxu0
      %v4319 = vadd.f32 %v4251, %v4318
      %4320 = vmatmul.f32.gmra.mxu0 %v4115
      %v4321 = vpop.f32.mrf.mxu0
      %v4322 = vadd.f32 %v4254, %v4321
      %4323 = vmatmul.f32.gmra.mxu0 %v4118
      %v4324 = vpop.f32.mrf.mxu0
      %v4325 = vadd.f32 %v4257, %v4324
      %4326 = vmatmul.f32.gmra.mxu0 %v4121
      %v4327 = vpop.f32.mrf.mxu0
      %v4328 = vadd.f32 %v4260, %v4327
      %4329 = vmatmul.f32.gmra.mxu0 %v4124
      %v4330 = vpop.f32.mrf.mxu0
      %v4331 = vadd.f32 %v4263, %v4330
      %4332 = vmatmul.f32.gmra.mxu0 %v4127
      %v4333 = vpop.f32.mrf.mxu0
      %v4334 = vadd.f32 %v4266, %v4333
      %4335 = vmatmul.f32.gmra.mxu0 %v4130
      %v4336 = vpop.f32.mrf.mxu0
      %v4337 = vadd.f32 %v4269, %v4336
      %4338 = vmatmul.f32.gmra.mxu0 %v4133
      %v4339 = vpop.f32.mrf.mxu0
      %v4340 = vadd.f32 %v4272, %v4339
      %4341 = vmatmul.f32.gmra.mxu0 %v4136
      %v4342 = vpop.f32.mrf.mxu0
      %v4343 = vadd.f32 %v4275, %v4342
      %4344 = vmatmul.f32.gmra.mxu0 %v4139
      %v4345 = vpop.f32.mrf.mxu0
      %v4346 = vadd.f32 %v4278, %v4345
      %4347 = vmatmul.f32.gmra.mxu0 %v4142
      %v4348 = vpop.f32.mrf.mxu0
      %v4349 = vadd.f32 %v4281, %v4348
      %4350 = vmatmul.f32.gmra.mxu0 %v4145
      %v4351 = vpop.f32.mrf.mxu0
      %v4352 = vadd.f32 %v4284, %v4351
      %4353 = vmatmul.f32.gmra.mxu0 %v4148
      %v4354 = vpop.f32.mrf.mxu0
      %v4355 = vadd.f32 %v4287, %v4354
      %4356 = vmatmul.f32.gmra.mxu0 %v4151
      %v4357 = vpop.f32.mrf.mxu0
      %v4358 = vadd.f32 %v4290, %v4357
      %4359 = vmatmul.f32.gmra.mxu0 %v4154
      %v4360 = vpop.f32.mrf.mxu0
      %v4361 = vadd.f32 %v4293, %v4360
      %4362 = vmatmul.f32.gmra.mxu0 %v4157
      %v4363 = vpop.f32.mrf.mxu0
      %v4364 = vadd.f32 %v4296, %v4363
      %4365 = vmatmul.f32.gmra.mxu0 %v4160
      %v4366 = vpop.f32.mrf.mxu0
      %v4367 = vadd.f32 %v4299, %v4366
      %4368 = vdwg.mxu0
      %v4369 = vld [vmem:[%s10] sm:$0xff]
      %v4370 = vld [vmem:[%s10 + $0x8] sm:$0xff]
      %v4371 = vld [vmem:[%s10 + $0x10] sm:$0xff]
      %v4372 = vld [vmem:[%s10 + $0x18] sm:$0xff]
      %v4373 = vld [vmem:[%s10 + $0x20] sm:$0xff]
      %v4374 = vld [vmem:[%s10 + $0x28] sm:$0xff]
      %v4375 = vld [vmem:[%s10 + $0x30] sm:$0xff]
      %v4376 = vld [vmem:[%s10 + $0x38] sm:$0xff]
      %v4377 = vld [vmem:[%s10 + $0x40] sm:$0xff]
      %v4378 = vld [vmem:[%s10 + $0x48] sm:$0xff]
      %v4379 = vld [vmem:[%s10 + $0x50] sm:$0xff]
      %v4380 = vld [vmem:[%s10 + $0x58] sm:$0xff]
      %v4381 = vld [vmem:[%s10 + $0x60] sm:$0xff]
      %v4382 = vld [vmem:[%s10 + $0x68] sm:$0xff]
      %v4383 = vld [vmem:[%s10 + $0x70] sm:$0xff]
      %v4384 = vld [vmem:[%s10 + $0x78] sm:$0xff]
      %v4385 = vld [vmem:[%s10 + $0x80] sm:$0xff]
      %v4386 = vld [vmem:[%s10 + $0x88] sm:$0xff]
      %v4387 = vld [vmem:[%s10 + $0x90] sm:$0xff]
      %v4388 = vld [vmem:[%s10 + $0x98] sm:$0xff]
      %v4389 = vld [vmem:[%s10 + $0xa0] sm:$0xff]
      %v4390 = vld [vmem:[%s10 + $0xa8] sm:$0xff]
      %v4391 = vld [vmem:[%s10 + $0xb0] sm:$0xff]
      %v4392 = vld [vmem:[%s10 + $0xb8] sm:$0xff]
      %v4393 = vld [vmem:[%s10 + $0xc0] sm:$0xff]
      %v4394 = vld [vmem:[%s10 + $0xc8] sm:$0xff]
      %v4395 = vld [vmem:[%s10 + $0xd0] sm:$0xff]
      %v4396 = vld [vmem:[%s10 + $0xd8] sm:$0xff]
      %v4397 = vld [vmem:[%s10 + $0xe0] sm:$0xff]
      %v4398 = vld [vmem:[%s10 + $0xe8] sm:$0xff]
      %v4399 = vld [vmem:[%s10 + $0xf0] sm:$0xff]
      %v4400 = vld [vmem:[%s10 + $0xf8] sm:$0xff]
      %v4401 = vld [vmem:[%s10 + $0x100] sm:$0xff]
      %v4402 = vld [vmem:[%s10 + $0x108] sm:$0xff]
      %v4403 = vld [vmem:[%s10 + $0x110] sm:$0xff]
      %v4404 = vld [vmem:[%s10 + $0x118] sm:$0xff]
      %v4405 = vld [vmem:[%s10 + $0x120] sm:$0xff]
      %v4406 = vld [vmem:[%s10 + $0x128] sm:$0xff]
      %v4407 = vld [vmem:[%s10 + $0x130] sm:$0xff]
      %v4408 = vld [vmem:[%s10 + $0x138] sm:$0xff]
      %v4409 = vld [vmem:[%s10 + $0x140] sm:$0xff]
      %v4410 = vld [vmem:[%s10 + $0x148] sm:$0xff]
      %v4411 = vld [vmem:[%s10 + $0x150] sm:$0xff]
      %v4412 = vld [vmem:[%s10 + $0x158] sm:$0xff]
      %v4413 = vld [vmem:[%s10 + $0x160] sm:$0xff]
      %v4414 = vld [vmem:[%s10 + $0x168] sm:$0xff]
      %v4415 = vld [vmem:[%s10 + $0x170] sm:$0xff]
      %v4416 = vld [vmem:[%s10 + $0x178] sm:$0xff]
      %v4417 = vld [vmem:[%s10 + $0x180] sm:$0x3]
      %v4418 = vld [vmem:[%s10 + $0x188] sm:$0x3]
      %v4419 = vld [vmem:[%s10 + $0x190] sm:$0x3]
      %v4421 = vsel %vm4110, %v4371, 0
      %v4424 = vsel %vm4110, %v4374, 0
      %v4427 = vsel %vm4110, %v4377, 0
      %v4430 = vsel %vm4110, %v4380, 0
      %v4433 = vsel %vm4110, %v4383, 0
      %v4436 = vsel %vm4110, %v4386, 0
      %v4439 = vsel %vm4110, %v4389, 0
      %v4442 = vsel %vm4110, %v4392, 0
      %v4445 = vsel %vm4110, %v4395, 0
      %v4448 = vsel %vm4110, %v4398, 0
      %v4451 = vsel %vm4110, %v4401, 0
      %v4454 = vsel %vm4110, %v4404, 0
      %v4457 = vsel %vm4110, %v4407, 0
      %v4460 = vsel %vm4110, %v4410, 0
      %v4463 = vsel %vm4110, %v4413, 0
      %v4466 = vsel %vm4110, %v4416, 0
      %v4469 = vsel %vm4110, %v4419, 0
      %4471 = vmatpush.msra.mxu0 %v4041
      %4472 = vmatpush.msra.mxu0 %v4040
      %4473 = vmatpush.msra.mxu0 %v4039
      %4474 = vmatpush.msra.mxu0 %v4038
      %4475 = vmatpush.msra.mxu0 %v4037
      %4476 = vmatpush.msra.mxu0 %v4036
      %4477 = vmatpush.msra.mxu0 %v4035
      %4478 = vmatpush.msra.mxu0 %v4034
      %4479 = vmatpush.msra.mxu0 %v4033
      %4480 = vmatpush.msra.mxu0 %v4032
      %4481 = vmatpush.msra.mxu0 %v4031
      %4482 = vmatpush.msra.mxu0 %v4030
      %4483 = vmatpush.msra.mxu0 %v4029
      %4484 = vmatpush.msra.mxu0 %v4028
      %4485 = vmatpush.msra.mxu0 %v4027
      %4486 = vmatpush.msra.mxu0 %v4026
      %4487 = vmatmul.f32.gmra.mxu0 %v4369
      %v4488 = vpop.f32.mrf.mxu0
      %v4489 = vadd.f32 0.0, %v4488
      %4490 = vmatmul.f32.gmra.mxu0 %v4372
      %v4491 = vpop.f32.mrf.mxu0
      %v4492 = vadd.f32 0.0, %v4491
      %4493 = vmatmul.f32.gmra.mxu0 %v4375
      %v4494 = vpop.f32.mrf.mxu0
      %v4495 = vadd.f32 0.0, %v4494
      %4496 = vmatmul.f32.gmra.mxu0 %v4378
      %v4497 = vpop.f32.mrf.mxu0
      %v4498 = vadd.f32 0.0, %v4497
      %4499 = vmatmul.f32.gmra.mxu0 %v4381
      %v4500 = vpop.f32.mrf.mxu0
      %v4501 = vadd.f32 0.0, %v4500
      %4502 = vmatmul.f32.gmra.mxu0 %v4384
      %v4503 = vpop.f32.mrf.mxu0
      %v4504 = vadd.f32 0.0, %v4503
      %4505 = vmatmul.f32.gmra.mxu0 %v4387
      %v4506 = vpop.f32.mrf.mxu0
      %v4507 = vadd.f32 0.0, %v4506
      %4508 = vmatmul.f32.gmra.mxu0 %v4390
      %v4509 = vpop.f32.mrf.mxu0
      %v4510 = vadd.f32 0.0, %v4509
      %4511 = vmatmul.f32.gmra.mxu0 %v4393
      %v4512 = vpop.f32.mrf.mxu0
      %v4513 = vadd.f32 0.0, %v4512
      %4514 = vmatmul.f32.gmra.mxu0 %v4396
      %v4515 = vpop.f32.mrf.mxu0
      %v4516 = vadd.f32 0.0, %v4515
      %4517 = vmatmul.f32.gmra.mxu0 %v4399
      %v4518 = vpop.f32.mrf.mxu0
      %v4519 = vadd.f32 0.0, %v4518
      %4520 = vmatmul.f32.gmra.mxu0 %v4402
      %v4521 = vpop.f32.mrf.mxu0
      %v4522 = vadd.f32 0.0, %v4521
      %4523 = vmatmul.f32.gmra.mxu0 %v4405
      %v4524 = vpop.f32.mrf.mxu0
      %v4525 = vadd.f32 0.0, %v4524
      %4526 = vmatmul.f32.gmra.mxu0 %v4408
      %v4527 = vpop.f32.mrf.mxu0
      %v4528 = vadd.f32 0.0, %v4527
      %4529 = vmatmul.f32.gmra.mxu0 %v4411
      %v4530 = vpop.f32.mrf.mxu0
      %v4531 = vadd.f32 0.0, %v4530
      %4532 = vmatmul.f32.gmra.mxu0 %v4414
      %v4533 = vpop.f32.mrf.mxu0
      %v4534 = vadd.f32 0.0, %v4533
      %4535 = vmatmul.f32.gmra.mxu0 %v4417
      %v4536 = vpop.f32.mrf.mxu0
      %v4537 = vadd.f32 0.0, %v4536
      %4538 = vdwg.mxu0
      %4539 = vmatpush.msra.mxu0 %v4057
      %4540 = vmatpush.msra.mxu0 %v4056
      %4541 = vmatpush.msra.mxu0 %v4055
      %4542 = vmatpush.msra.mxu0 %v4054
      %4543 = vmatpush.msra.mxu0 %v4053
      %4544 = vmatpush.msra.mxu0 %v4052
      %4545 = vmatpush.msra.mxu0 %v4051
      %4546 = vmatpush.msra.mxu0 %v4050
      %4547 = vmatpush.msra.mxu0 %v4049
      %4548 = vmatpush.msra.mxu0 %v4048
      %4549 = vmatpush.msra.mxu0 %v4047
      %4550 = vmatpush.msra.mxu0 %v4046
      %4551 = vmatpush.msra.mxu0 %v4045
      %4552 = vmatpush.msra.mxu0 %v4044
      %4553 = vmatpush.msra.mxu0 %v4043
      %4554 = vmatpush.msra.mxu0 %v4042
      %4555 = vmatmul.f32.gmra.mxu0 %v4370
      %v4556 = vpop.f32.mrf.mxu0
      %v4557 = vadd.f32 %v4489, %v4556
      %4558 = vmatmul.f32.gmra.mxu0 %v4373
      %v4559 = vpop.f32.mrf.mxu0
      %v4560 = vadd.f32 %v4492, %v4559
      %4561 = vmatmul.f32.gmra.mxu0 %v4376
      %v4562 = vpop.f32.mrf.mxu0
      %v4563 = vadd.f32 %v4495, %v4562
      %4564 = vmatmul.f32.gmra.mxu0 %v4379
      %v4565 = vpop.f32.mrf.mxu0
      %v4566 = vadd.f32 %v4498, %v4565
      %4567 = vmatmul.f32.gmra.mxu0 %v4382
      %v4568 = vpop.f32.mrf.mxu0
      %v4569 = vadd.f32 %v4501, %v4568
      %4570 = vmatmul.f32.gmra.mxu0 %v4385
      %v4571 = vpop.f32.mrf.mxu0
      %v4572 = vadd.f32 %v4504, %v4571
      %4573 = vmatmul.f32.gmra.mxu0 %v4388
      %v4574 = vpop.f32.mrf.mxu0
      %v4575 = vadd.f32 %v4507, %v4574
      %4576 = vmatmul.f32.gmra.mxu0 %v4391
      %v4577 = vpop.f32.mrf.mxu0
      %v4578 = vadd.f32 %v4510, %v4577
      %4579 = vmatmul.f32.gmra.mxu0 %v4394
      %v4580 = vpop.f32.mrf.mxu0
      %v4581 = vadd.f32 %v4513, %v4580
      %4582 = vmatmul.f32.gmra.mxu0 %v4397
      %v4583 = vpop.f32.mrf.mxu0
      %v4584 = vadd.f32 %v4516, %v4583
      %4585 = vmatmul.f32.gmra.mxu0 %v4400
      %v4586 = vpop.f32.mrf.mxu0
      %v4587 = vadd.f32 %v4519, %v4586
      %4588 = vmatmul.f32.gmra.mxu0 %v4403
      %v4589 = vpop.f32.mrf.mxu0
      %v4590 = vadd.f32 %v4522, %v4589
      %4591 = vmatmul.f32.gmra.mxu0 %v4406
      %v4592 = vpop.f32.mrf.mxu0
      %v4593 = vadd.f32 %v4525, %v4592
      %4594 = vmatmul.f32.gmra.mxu0 %v4409
      %v4595 = vpop.f32.mrf.mxu0
      %v4596 = vadd.f32 %v4528, %v4595
      %4597 = vmatmul.f32.gmra.mxu0 %v4412
      %v4598 = vpop.f32.mrf.mxu0
      %v4599 = vadd.f32 %v4531, %v4598
      %4600 = vmatmul.f32.gmra.mxu0 %v4415
      %v4601 = vpop.f32.mrf.mxu0
      %v4602 = vadd.f32 %v4534, %v4601
      %4603 = vmatmul.f32.gmra.mxu0 %v4418
      %v4604 = vpop.f32.mrf.mxu0
      %v4605 = vadd.f32 %v4537, %v4604
      %4606 = vdwg.mxu0
      %4607 = vmatpush.msra.mxu0 0.0
      %4608 = vmatpush.msra.mxu0 0.0
      %4609 = vmatpush.msra.mxu0 0.0
      %4610 = vmatpush.msra.mxu0 0.0
      %4611 = vmatpush.msra.mxu0 0.0
      %4612 = vmatpush.msra.mxu0 0.0
      %4613 = vmatpush.msra.mxu0 0.0
      %4614 = vmatpush.msra.mxu0 0.0
      %4615 = vmatpush.msra.mxu0 0.0
      %4616 = vmatpush.msra.mxu0 0.0
      %4617 = vmatpush.msra.mxu0 0.0
      %4618 = vmatpush.msra.mxu0 0.0
      %4619 = vmatpush.msra.mxu0 0.0
      %4620 = vmatpush.msra.mxu0 0.0
      %4621 = vmatpush.msra.mxu0 0.0
      %4622 = vmatpush.msra.mxu0 %v4163
      %4623 = vmatmul.f32.gmra.mxu0 %v4421
      %v4624 = vpop.f32.mrf.mxu0
      %v4625 = vadd.f32 %v4557, %v4624
      %4626 = vmatmul.f32.gmra.mxu0 %v4424
      %v4627 = vpop.f32.mrf.mxu0
      %v4628 = vadd.f32 %v4560, %v4627
      %4629 = vmatmul.f32.gmra.mxu0 %v4427
      %v4630 = vpop.f32.mrf.mxu0
      %v4631 = vadd.f32 %v4563, %v4630
      %4632 = vmatmul.f32.gmra.mxu0 %v4430
      %v4633 = vpop.f32.mrf.mxu0
      %v4634 = vadd.f32 %v4566, %v4633
      %4635 = vmatmul.f32.gmra.mxu0 %v4433
      %v4636 = vpop.f32.mrf.mxu0
      %v4637 = vadd.f32 %v4569, %v4636
      %4638 = vmatmul.f32.gmra.mxu0 %v4436
      %v4639 = vpop.f32.mrf.mxu0
      %v4640 = vadd.f32 %v4572, %v4639
      %4641 = vmatmul.f32.gmra.mxu0 %v4439
      %v4642 = vpop.f32.mrf.mxu0
      %v4643 = vadd.f32 %v4575, %v4642
      %4644 = vmatmul.f32.gmra.mxu0 %v4442
      %v4645 = vpop.f32.mrf.mxu0
      %v4646 = vadd.f32 %v4578, %v4645
      %4647 = vmatmul.f32.gmra.mxu0 %v4445
      %v4648 = vpop.f32.mrf.mxu0
      %v4649 = vadd.f32 %v4581, %v4648
      %4650 = vmatmul.f32.gmra.mxu0 %v4448
      %v4651 = vpop.f32.mrf.mxu0
      %v4652 = vadd.f32 %v4584, %v4651
      %4653 = vmatmul.f32.gmra.mxu0 %v4451
      %v4654 = vpop.f32.mrf.mxu0
      %v4655 = vadd.f32 %v4587, %v4654
      %4656 = vmatmul.f32.gmra.mxu0 %v4454
      %v4657 = vpop.f32.mrf.mxu0
      %v4658 = vadd.f32 %v4590, %v4657
      %4659 = vmatmul.f32.gmra.mxu0 %v4457
      %v4660 = vpop.f32.mrf.mxu0
      %v4661 = vadd.f32 %v4593, %v4660
      %4662 = vmatmul.f32.gmra.mxu0 %v4460
      %v4663 = vpop.f32.mrf.mxu0
      %v4664 = vadd.f32 %v4596, %v4663
      %4665 = vmatmul.f32.gmra.mxu0 %v4463
      %v4666 = vpop.f32.mrf.mxu0
      %v4667 = vadd.f32 %v4599, %v4666
      %4668 = vmatmul.f32.gmra.mxu0 %v4466
      %v4669 = vpop.f32.mrf.mxu0
      %v4670 = vadd.f32 %v4602, %v4669
      %4671 = vmatmul.f32.gmra.mxu0 %v4469
      %v4672 = vpop.f32.mrf.mxu0
      %v4673 = vadd.f32 %v4605, %v4672
      %4674 = vdwg.mxu0
      %v4675 = vmax.f32 %v4319, %v4625
      %v4676 = vmax.f32 %v4322, %v4628
      %v4677 = vmax.f32 %v4325, %v4631
      %v4678 = vmax.f32 %v4328, %v4634
      %v4679 = vmax.f32 %v4331, %v4637
      %v4680 = vmax.f32 %v4334, %v4640
      %v4681 = vmax.f32 %v4337, %v4643
      %v4682 = vmax.f32 %v4340, %v4646
      %v4683 = vmax.f32 %v4343, %v4649
      %v4684 = vmax.f32 %v4346, %v4652
      %v4685 = vmax.f32 %v4349, %v4655
      %v4686 = vmax.f32 %v4352, %v4658
      %v4687 = vmax.f32 %v4355, %v4661
      %v4688 = vmax.f32 %v4358, %v4664
      %v4689 = vmax.f32 %v4361, %v4667
      %v4690 = vmax.f32 %v4364, %v4670
      %v4691 = vmax.f32 %v4367, %v4673
      %v4692 = vld [vmem:[%s11] sm:$0xff]
      %v4693 = vld [vmem:[%s11 + $0x8] sm:$0xff]
      %v4694 = vld [vmem:[%s11 + $0x10] sm:$0xff]
      %v4695 = vld [vmem:[%s11 + $0x18] sm:$0x3]
      %vm4696 = vcmask 211968
      %v4698 = vsel %vm4696, %v4675, 0
      %v4701 = vsel %vm4696, %v4676, 0
      %v4704 = vsel %vm4696, %v4677, 0
      %v4707 = vsel %vm4696, %v4678, 0
      %v4710 = vsel %vm4696, %v4679, 0
      %v4713 = vsel %vm4696, %v4680, 0
      %v4716 = vsel %vm4696, %v4681, 0
      %v4719 = vsel %vm4696, %v4682, 0
      %v4722 = vsel %vm4696, %v4683, 0
      %v4725 = vsel %vm4696, %v4684, 0
      %v4728 = vsel %vm4696, %v4685, 0
      %v4731 = vsel %vm4696, %v4686, 0
      %v4734 = vsel %vm4696, %v4687, 0
      %v4737 = vsel %vm4696, %v4688, 0
      %v4740 = vsel %vm4696, %v4689, 0
      %v4743 = vsel %vm4696, %v4690, 0
      %v4746 = vsel %vm4696, %v4691, 0
      %vm4748 = vcmask 1041408
      %v4750 = vsel %vm4748, %v4695, 0
      %4752 = vmatpush.msra.mxu0 0.0
      %4753 = vmatpush.msra.mxu0 0.0
      %4754 = vmatpush.msra.mxu0 0.0
      %4755 = vmatpush.msra.mxu0 0.0
      %4756 = vmatpush.msra.mxu0 0.0
      %4757 = vmatpush.msra.mxu0 0.0
      %4758 = vmatpush.msra.mxu0 0.0
      %4759 = vmatpush.msra.mxu0 0.0
      %4760 = vmatpush.msra.mxu0 0.0
      %4761 = vmatpush.msra.mxu0 0.0
      %4762 = vmatpush.msra.mxu0 0.0
      %4763 = vmatpush.msra.mxu0 0.0
      %4764 = vmatpush.msra.mxu0 %v4750
      %4765 = vmatpush.msra.mxu0 %v4694
      %4766 = vmatpush.msra.mxu0 %v4693
      %4767 = vmatpush.msra.mxu0 %v4692
      %4768 = vmatmul.f32.gmra.mxu0 %v4698
      %v4769 = vpop.f32.mrf.mxu0
      %v4770 = vadd.f32 0.0, %v4769
      %4771 = vmatmul.f32.gmra.mxu0 %v4701
      %v4772 = vpop.f32.mrf.mxu0
      %v4773 = vadd.f32 0.0, %v4772
      %4774 = vmatmul.f32.gmra.mxu0 %v4704
      %v4775 = vpop.f32.mrf.mxu0
      %v4776 = vadd.f32 0.0, %v4775
      %4777 = vmatmul.f32.gmra.mxu0 %v4707
      %v4778 = vpop.f32.mrf.mxu0
      %v4779 = vadd.f32 0.0, %v4778
      %4780 = vmatmul.f32.gmra.mxu0 %v4710
      %v4781 = vpop.f32.mrf.mxu0
      %v4782 = vadd.f32 0.0, %v4781
      %4783 = vmatmul.f32.gmra.mxu0 %v4713
      %v4784 = vpop.f32.mrf.mxu0
      %v4785 = vadd.f32 0.0, %v4784
      %4786 = vmatmul.f32.gmra.mxu0 %v4716
      %v4787 = vpop.f32.mrf.mxu0
      %v4788 = vadd.f32 0.0, %v4787
      %4789 = vmatmul.f32.gmra.mxu0 %v4719
      %v4790 = vpop.f32.mrf.mxu0
      %v4791 = vadd.f32 0.0, %v4790
      %4792 = vmatmul.f32.gmra.mxu0 %v4722
      %v4793 = vpop.f32.mrf.mxu0
      %v4794 = vadd.f32 0.0, %v4793
      %4795 = vmatmul.f32.gmra.mxu0 %v4725
      %v4796 = vpop.f32.mrf.mxu0
      %v4797 = vadd.f32 0.0, %v4796
      %4798 = vmatmul.f32.gmra.mxu0 %v4728
      %v4799 = vpop.f32.mrf.mxu0
      %v4800 = vadd.f32 0.0, %v4799
      %4801 = vmatmul.f32.gmra.mxu0 %v4731
      %v4802 = vpop.f32.mrf.mxu0
      %v4803 = vadd.f32 0.0, %v4802
      %4804 = vmatmul.f32.gmra.mxu0 %v4734
      %v4805 = vpop.f32.mrf.mxu0
      %v4806 = vadd.f32 0.0, %v4805
      %4807 = vmatmul.f32.gmra.mxu0 %v4737
      %v4808 = vpop.f32.mrf.mxu0
      %v4809 = vadd.f32 0.0, %v4808
      %4810 = vmatmul.f32.gmra.mxu0 %v4740
      %v4811 = vpop.f32.mrf.mxu0
      %v4812 = vadd.f32 0.0, %v4811
      %4813 = vmatmul.f32.gmra.mxu0 %v4743
      %v4814 = vpop.f32.mrf.mxu0
      %v4815 = vadd.f32 0.0, %v4814
      %4816 = vmatmul.f32.gmra.mxu0 %v4746
      %v4817 = vpop.f32.mrf.mxu0
      %v4818 = vadd.f32 0.0, %v4817
      %4819 = vdwg.mxu0
      %v4820 = vld [vmem:[%s12] sm:$0xff]
      %v4821 = vld [vmem:[%s12 + $0x8] sm:$0xff]
      %v4822 = vld [vmem:[%s12 + $0x10] sm:$0xff]
      %v4823 = vld [vmem:[%s12 + $0x18] sm:$0x3]
      %v4825 = vsel %vm4748, %v4823, 0
      %4827 = vmatpush.msra.mxu0 0.0
      %4828 = vmatpush.msra.mxu0 0.0
      %4829 = vmatpush.msra.mxu0 0.0
      %4830 = vmatpush.msra.mxu0 0.0
      %4831 = vmatpush.msra.mxu0 0.0
      %4832 = vmatpush.msra.mxu0 0.0
      %4833 = vmatpush.msra.mxu0 0.0
      %4834 = vmatpush.msra.mxu0 0.0
      %4835 = vmatpush.msra.mxu0 0.0
      %4836 = vmatpush.msra.mxu0 0.0
      %4837 = vmatpush.msra.mxu0 0.0
      %4838 = vmatpush.msra.mxu0 0.0
      %4839 = vmatpush.msra.mxu0 %v4825
      %4840 = vmatpush.msra.mxu0 %v4822
      %4841 = vmatpush.msra.mxu0 %v4821
      %4842 = vmatpush.msra.mxu0 %v4820
      %4843 = vmatmul.f32.gmra.mxu0 %v4698
      %v4844 = vpop.f32.mrf.mxu0
      %v4845 = vadd.f32 0.0, %v4844
      %4846 = vmatmul.f32.gmra.mxu0 %v4701
      %v4847 = vpop.f32.mrf.mxu0
      %v4848 = vadd.f32 0.0, %v4847
      %4849 = vmatmul.f32.gmra.mxu0 %v4704
      %v4850 = vpop.f32.mrf.mxu0
      %v4851 = vadd.f32 0.0, %v4850
      %4852 = vmatmul.f32.gmra.mxu0 %v4707
      %v4853 = vpop.f32.mrf.mxu0
      %v4854 = vadd.f32 0.0, %v4853
      %4855 = vmatmul.f32.gmra.mxu0 %v4710
      %v4856 = vpop.f32.mrf.mxu0
      %v4857 = vadd.f32 0.0, %v4856
      %4858 = vmatmul.f32.gmra.mxu0 %v4713
      %v4859 = vpop.f32.mrf.mxu0
      %v4860 = vadd.f32 0.0, %v4859
      %4861 = vmatmul.f32.gmra.mxu0 %v4716
      %v4862 = vpop.f32.mrf.mxu0
      %v4863 = vadd.f32 0.0, %v4862
      %4864 = vmatmul.f32.gmra.mxu0 %v4719
      %v4865 = vpop.f32.mrf.mxu0
      %v4866 = vadd.f32 0.0, %v4865
      %4867 = vmatmul.f32.gmra.mxu0 %v4722
      %v4868 = vpop.f32.mrf.mxu0
      %v4869 = vadd.f32 0.0, %v4868
      %4870 = vmatmul.f32.gmra.mxu0 %v4725
      %v4871 = vpop.f32.mrf.mxu0
      %v4872 = vadd.f32 0.0, %v4871
      %4873 = vmatmul.f32.gmra.mxu0 %v4728
      %v4874 = vpop.f32.mrf.mxu0
      %v4875 = vadd.f32 0.0, %v4874
      %4876 = vmatmul.f32.gmra.mxu0 %v4731
      %v4877 = vpop.f32.mrf.mxu0
      %v4878 = vadd.f32 0.0, %v4877
      %4879 = vmatmul.f32.gmra.mxu0 %v4734
      %v4880 = vpop.f32.mrf.mxu0
      %v4881 = vadd.f32 0.0, %v4880
      %4882 = vmatmul.f32.gmra.mxu0 %v4737
      %v4883 = vpop.f32.mrf.mxu0
      %v4884 = vadd.f32 0.0, %v4883
      %4885 = vmatmul.f32.gmra.mxu0 %v4740
      %v4886 = vpop.f32.mrf.mxu0
      %v4887 = vadd.f32 0.0, %v4886
      %4888 = vmatmul.f32.gmra.mxu0 %v4743
      %v4889 = vpop.f32.mrf.mxu0
      %v4890 = vadd.f32 0.0, %v4889
      %4891 = vmatmul.f32.gmra.mxu0 %v4746
      %v4892 = vpop.f32.mrf.mxu0
      %v4893 = vadd.f32 0.0, %v4892
      %4894 = vdwg.mxu0
      %v4895 = vmax.f32 %v4770, %v4845
      %v4896 = vmax.f32 %v4773, %v4848
      %v4897 = vmax.f32 %v4776, %v4851
      %v4898 = vmax.f32 %v4779, %v4854
      %v4899 = vmax.f32 %v4782, %v4857
      %v4900 = vmax.f32 %v4785, %v4860
      %v4901 = vmax.f32 %v4788, %v4863
      %v4902 = vmax.f32 %v4791, %v4866
      %v4903 = vmax.f32 %v4794, %v4869
      %v4904 = vmax.f32 %v4797, %v4872
      %v4905 = vmax.f32 %v4800, %v4875
      %v4906 = vmax.f32 %v4803, %v4878
      %v4907 = vmax.f32 %v4806, %v4881
      %v4908 = vmax.f32 %v4809, %v4884
      %v4909 = vmax.f32 %v4812, %v4887
      %v4910 = vmax.f32 %v4815, %v4890
      %v4911 = vmax.f32 %v4818, %v4893
      %vm4912 = vcmask 105472
      %4913 = vst.msk [vmem:[%s440] sm:$0xff] %vm4912, %v4895
      %4914 = vst.msk [vmem:[%s440 + $0x8] sm:$0xff] %vm4912, %v4896
      %4915 = vst.msk [vmem:[%s440 + $0x10] sm:$0xff] %vm4912, %v4897
      %4916 = vst.msk [vmem:[%s440 + $0x18] sm:$0xff] %vm4912, %v4898
      %4917 = vst.msk [vmem:[%s440 + $0x20] sm:$0xff] %vm4912, %v4899
      %4918 = vst.msk [vmem:[%s440 + $0x28] sm:$0xff] %vm4912, %v4900
      %4919 = vst.msk [vmem:[%s440 + $0x30] sm:$0xff] %vm4912, %v4901
      %4920 = vst.msk [vmem:[%s440 + $0x38] sm:$0xff] %vm4912, %v4902
      %4921 = vst.msk [vmem:[%s440 + $0x40] sm:$0xff] %vm4912, %v4903
      %4922 = vst.msk [vmem:[%s440 + $0x48] sm:$0xff] %vm4912, %v4904
      %4923 = vst.msk [vmem:[%s440 + $0x50] sm:$0xff] %vm4912, %v4905
      %4924 = vst.msk [vmem:[%s440 + $0x58] sm:$0xff] %vm4912, %v4906
      %4925 = vst.msk [vmem:[%s440 + $0x60] sm:$0xff] %vm4912, %v4907
      %4926 = vst.msk [vmem:[%s440 + $0x68] sm:$0xff] %vm4912, %v4908
      %4927 = vst.msk [vmem:[%s440 + $0x70] sm:$0xff] %vm4912, %v4909
      %4928 = vst.msk [vmem:[%s440 + $0x78] sm:$0xff] %vm4912, %v4910
      %vm4929 = vcmask 99328
      %4930 = vst.msk [vmem:[%s440 + $0x80] sm:$0x3] %vm4929, %v4911
      %p4931 = scmp.lt.s32.totalorder %s24, 1
      %s4932 = scalar_select %p4931, %s24, 1
      %s4933 = smul.addr %s4932, 17
      %s4934 = smul.addr %s4933, 8
      %s4935 = scalar_lea.vmem %s13, %s4934
      // Predicated region
      $region73: #{cnn_weight_forward.2} parent=71 // pred_check
        %p4936 = pneg %p320
      $region74: #{cnn_weight_forward.2} parent=71 // pred_check_branch
        %4938 = sbr.rel (%p4936) target = $region76
      $region75: #{cnn_weight_forward.2} parent=71 // pred_region
        _
      $region76: #{cnn_weight_forward.2} parent=71 // pred_fallthru
        _
    $region72: #{cnn_weight_forward.2} parent=5 // pred_fallthru
      _
    %p4939 = scmp.le.s32.totalorder 2, %s19
    // Predicated region
    $region77: #{cnn_weight_forward.2} parent=5 // pred_check
      %p4940 = pneg %p4939
    $region78: #{cnn_weight_forward.2} parent=5 // pred_check_branch
      %4942 = sbr.rel (%p4940) target = $region80
    $region79: #{cnn_weight_forward.2} parent=5 // pred_region
      %s4943 = ssub.s32 %s19, 2
      // Predicated region
      $region81: #{cnn_weight_forward.2} parent=79 // pred_check
        %p4944 = pneg %p326
      $region82: #{cnn_weight_forward.2} parent=79 // pred_check_branch
        %4946 = sbr.rel (%p4944) target = $region84
      $region83: #{cnn_weight_forward.2} parent=79 // pred_region
        %p4947 = scmp.lt.s32.totalorder %s25, 1
        %s4948 = scalar_select %p4947, %s25, 1
        %s4949 = smul.addr %s4948, 17
        %s4950 = smul.addr %s4949, 8
        %s4951 = scalar_lea.vmem %s13, %s4950
      $region84: #{cnn_weight_forward.2} parent=79 // pred_fallthru
        _
    $region80: #{cnn_weight_forward.2} parent=5 // pred_fallthru
      _
  $region6: #{cnn_weight_forward.2} parent=0 // loop_footer
    %s23 = sadd.s32 1, %s19
  $region7: #{cnn_weight_forward.2} parent=0 // loop_footer_branch
    %18 = sbr.rel target = $region3
  $region8: #{cnn_weight_forward.2} parent=0 // loop_exit
    _

// kernel: cnn_weight_forward.3
$region0: #{cnn_weight_forward.3}
  #allocation0 [shape = 'u32[]', space=smem, size = 0x4, offset = 0x4, fixed_abs, tag = 'smem constant byte address 0x4 - core index']
  #allocation1 [shape = 'u32[72,128]{1,0:T(1,128)}', space=vmem, size = 0x9000, scoped, tag = 'internal scratch']
  %s0 = inlined_call_operand.vmem [shape: f32[2,1690], index: 0, kind: input, shape index: {}]
  %s1 = inlined_call_operand.vmem [shape: f32[2,3], index: 1, kind: input, shape index: {}]
  %s2 = inlined_call_operand.vmem [shape: f32[1690,512], index: 2, kind: input, shape index: {}]
  %s3 = inlined_call_operand.vmem [shape: f32[3,512], index: 3, kind: input, shape index: {}]
  %s4 = inlined_call_operand.vmem [shape: f32[1,512], index: 4, kind: input, shape index: {}]
  %s5 = inlined_call_operand.vmem [shape: f32[512,256], index: 5, kind: input, shape index: {}]
  %s6 = inlined_call_operand.vmem [shape: f32[1,256], index: 6, kind: input, shape index: {}]
  %s7 = inlined_call_operand.vmem [shape: f32[256,128], index: 7, kind: input, shape index: {}]
  %s8 = inlined_call_operand.vmem [shape: f32[1,128], index: 8, kind: input, shape index: {}]
  %s9 = inlined_call_operand.vmem [shape: f32[128,64], index: 9, kind: input, shape index: {}]
  %s10 = inlined_call_operand.vmem [shape: f32[1,64], index: 10, kind: input, shape index: {}]
  %s11 = inlined_call_operand.vmem [shape: f32[64,8], index: 11, kind: input, shape index: {}]
  %s12 = inlined_call_operand.vmem [shape: f32[1,8], index: 12, kind: input, shape index: {}]
  %s13 = inlined_call_operand.hbm [shape: f32[2,8], index: 13, kind: output, shape index: {}]
  %s14 = sld [smem:[#allocation0]]
  $region62: #{cnn_weight_forward.3} parent=0
    _
  %s16 = ssub.s32 1, %s14
  %s17 = scalar_select 0, %s16, %s14
  $region1: #{cnn_weight_forward.3} parent=0
    #allocation2 [shape = 'u8[1024]{0}', space=vmem, size = 0x400, scoped, tag = 'output window, operand 0, single buffered']
    #allocation3 [shape = 's32[1]{0}', space=sflag, size = 0x4, scoped, tag = 'scoped memory for cnn_weight_forward.3']
    %18 = vsyncpa [#allocation3], 0
    // Predicated region
    $region2: #{cnn_weight_forward.3} parent=1 // pred_check
      _
    $region3: #{cnn_weight_forward.3} parent=1 // pred_check_branch
      %20 = sbr.rel (0) target = $region5
    $region4: #{cnn_weight_forward.3} parent=1 // pred_region
      _
    $region5: #{cnn_weight_forward.3} parent=1 // pred_fallthru
      _
    // Predicated region
    $region6: #{cnn_weight_forward.3} parent=1 // pred_check
      _
    $region7: #{cnn_weight_forward.3} parent=1 // pred_check_branch
      %22 = sbr.rel (0) target = $region9
    $region8: #{cnn_weight_forward.3} parent=1 // pred_region
      _
    $region9: #{cnn_weight_forward.3} parent=1 // pred_fallthru
      _
    // Predicated region
    $region10: #{cnn_weight_forward.3} parent=1 // pred_check
      _
    $region11: #{cnn_weight_forward.3} parent=1 // pred_check_branch
      %24 = sbr.rel (0) target = $region13
    $region12: #{cnn_weight_forward.3} parent=1 // pred_region
      _
    $region13: #{cnn_weight_forward.3} parent=1 // pred_fallthru
      _
    // Predicated region
    $region14: #{cnn_weight_forward.3} parent=1 // pred_check
      _
    $region15: #{cnn_weight_forward.3} parent=1 // pred_check_branch
      %26 = sbr.rel (0) target = $region17
    $region16: #{cnn_weight_forward.3} parent=1 // pred_region
      _
    $region17: #{cnn_weight_forward.3} parent=1 // pred_fallthru
      _
    // Predicated region
    $region18: #{cnn_weight_forward.3} parent=1 // pred_check
      _
    $region19: #{cnn_weight_forward.3} parent=1 // pred_check_branch
      %28 = sbr.rel (0) target = $region21
    $region20: #{cnn_weight_forward.3} parent=1 // pred_region
      _
    $region21: #{cnn_weight_forward.3} parent=1 // pred_fallthru
      _
    // Predicated region
    $region22: #{cnn_weight_forward.3} parent=1 // pred_check
      _
    $region23: #{cnn_weight_forward.3} parent=1 // pred_check_branch
      %30 = sbr.rel (0) target = $region25
    $region24: #{cnn_weight_forward.3} parent=1 // pred_region
      _
    $region25: #{cnn_weight_forward.3} parent=1 // pred_fallthru
      _
    // Predicated region
    $region26: #{cnn_weight_forward.3} parent=1 // pred_check
      _
    $region27: #{cnn_weight_forward.3} parent=1 // pred_check_branch
      %32 = sbr.rel (0) target = $region29
    $region28: #{cnn_weight_forward.3} parent=1 // pred_region
      _
    $region29: #{cnn_weight_forward.3} parent=1 // pred_fallthru
      _
    // Predicated region
    $region30: #{cnn_weight_forward.3} parent=1 // pred_check
      _
    $region31: #{cnn_weight_forward.3} parent=1 // pred_check_branch
      %34 = sbr.rel (0) target = $region33
    $region32: #{cnn_weight_forward.3} parent=1 // pred_region
      _
    $region33: #{cnn_weight_forward.3} parent=1 // pred_fallthru
      _
    // Predicated region
    $region34: #{cnn_weight_forward.3} parent=1 // pred_check
      _
    $region35: #{cnn_weight_forward.3} parent=1 // pred_check_branch
      %36 = sbr.rel (0) target = $region37
    $region36: #{cnn_weight_forward.3} parent=1 // pred_region
      _
    $region37: #{cnn_weight_forward.3} parent=1 // pred_fallthru
      _
    // Predicated region
    $region38: #{cnn_weight_forward.3} parent=1 // pred_check
      _
    $region39: #{cnn_weight_forward.3} parent=1 // pred_check_branch
      %38 = sbr.rel (0) target = $region41
    $region40: #{cnn_weight_forward.3} parent=1 // pred_region
      _
    $region41: #{cnn_weight_forward.3} parent=1 // pred_fallthru
      _
    // Predicated region
    $region42: #{cnn_weight_forward.3} parent=1 // pred_check
      _
    $region43: #{cnn_weight_forward.3} parent=1 // pred_check_branch
      %40 = sbr.rel (0) target = $region45
    $region44: #{cnn_weight_forward.3} parent=1 // pred_region
      _
    $region45: #{cnn_weight_forward.3} parent=1 // pred_fallthru
      _
    // Predicated region
    $region46: #{cnn_weight_forward.3} parent=1 // pred_check
      _
    $region47: #{cnn_weight_forward.3} parent=1 // pred_check_branch
      %42 = sbr.rel (0) target = $region49
    $region48: #{cnn_weight_forward.3} parent=1 // pred_region
      _
    $region49: #{cnn_weight_forward.3} parent=1 // pred_fallthru
      _
    // Predicated region
    $region50: #{cnn_weight_forward.3} parent=1 // pred_check
      _
    $region51: #{cnn_weight_forward.3} parent=1 // pred_check_branch
      %44 = sbr.rel (0) target = $region53
    $region52: #{cnn_weight_forward.3} parent=1 // pred_region
      _
    $region53: #{cnn_weight_forward.3} parent=1 // pred_fallthru
      _
    %v45 = vld [vmem:[%s0] sm:$0xff]
    %v46 = vld [vmem:[%s0 + $0x8] sm:$0xff]
    %v47 = vld [vmem:[%s0 + $0x10] sm:$0xff]
    %v48 = vld [vmem:[%s0 + $0x18] sm:$0xf]
    %v49 = vld [vmem:[%s2] sm:$0xff]
    %v50 = vld [vmem:[%s2 + $0x8] sm:$0xff]
    %v51 = vld [vmem:[%s2 + $0x10] sm:$0xff]
    %v52 = vld [vmem:[%s2 + $0x18] sm:$0xff]
    %v53 = vld [vmem:[%s2 + $0x20] sm:$0xff]
    %v54 = vld [vmem:[%s2 + $0x28] sm:$0xff]
    %v55 = vld [vmem:[%s2 + $0x30] sm:$0xff]
    %v56 = vld [vmem:[%s2 + $0x38] sm:$0xff]
    %v57 = vld [vmem:[%s2 + $0x40] sm:$0xff]
    %v58 = vld [vmem:[%s2 + $0x48] sm:$0xff]
    %v59 = vld [vmem:[%s2 + $0x50] sm:$0xff]
    %v60 = vld [vmem:[%s2 + $0x58] sm:$0xff]
    %v61 = vld [vmem:[%s2 + $0x60] sm:$0xff]
    %v62 = vld [vmem:[%s2 + $0x68] sm:$0xff]
    %v63 = vld [vmem:[%s2 + $0x70] sm:$0xff]
    %v64 = vld [vmem:[%s2 + $0x78] sm:$0xff]
    %v65 = vld [vmem:[%s2 + $0x80] sm:$0xff]
    %v66 = vld [vmem:[%s2 + $0x88] sm:$0xff]
    %v67 = vld [vmem:[%s2 + $0x90] sm:$0xff]
    %v68 = vld [vmem:[%s2 + $0x98] sm:$0xff]
    %v69 = vld [vmem:[%s2 + $0xa0] sm:$0xff]
    %v70 = vld [vmem:[%s2 + $0xa8] sm:$0xff]
    %v71 = vld [vmem:[%s2 + $0xb0] sm:$0xff]
    %v72 = vld [vmem:[%s2 + $0xb8] sm:$0xff]
    %v73 = vld [vmem:[%s2 + $0xc0] sm:$0xff]
    %v74 = vld [vmem:[%s2 + $0xc8] sm:$0xff]
    %v75 = vld [vmem:[%s2 + $0xd0] sm:$0xff]
    %v76 = vld [vmem:[%s2 + $0xd8] sm:$0xff]
    %v77 = vld [vmem:[%s2 + $0xe0] sm:$0xff]
    %v78 = vld [vmem:[%s2 + $0xe8] sm:$0xff]
    %v79 = vld [vmem:[%s2 + $0xf0] sm:$0xff]
    %v80 = vld [vmem:[%s2 + $0xf8] sm:$0xff]
    %v81 = vld [vmem:[%s2 + $0x100] sm:$0xff]
    %v82 = vld [vmem:[%s2 + $0x108] sm:$0xff]
    %v83 = vld [vmem:[%s2 + $0x110] sm:$0xff]
    %v84 = vld [vmem:[%s2 + $0x118] sm:$0xff]
    %v85 = vld [vmem:[%s2 + $0x120] sm:$0xff]
    %v86 = vld [vmem:[%s2 + $0x128] sm:$0xff]
    %v87 = vld [vmem:[%s2 + $0x130] sm:$0xff]
    %v88 = vld [vmem:[%s2 + $0x138] sm:$0xff]
    %v89 = vld [vmem:[%s2 + $0x140] sm:$0xff]
    %v90 = vld [vmem:[%s2 + $0x148] sm:$0xff]
    %v91 = vld [vmem:[%s2 + $0x150] sm:$0xff]
    %v92 = vld [vmem:[%s2 + $0x158] sm:$0xff]
    %v93 = vld [vmem:[%s2 + $0x160] sm:$0xff]
    %v94 = vld [vmem:[%s2 + $0x168] sm:$0xff]
    %v95 = vld [vmem:[%s2 + $0x170] sm:$0xff]
    %v96 = vld [vmem:[%s2 + $0x178] sm:$0xff]
    %v97 = vld [vmem:[%s2 + $0x180] sm:$0xff]
    %v98 = vld [vmem:[%s2 + $0x188] sm:$0xff]
    %v99 = vld [vmem:[%s2 + $0x190] sm:$0xff]
    %v100 = vld [vmem:[%s2 + $0x198] sm:$0xff]
    %v101 = vld [vmem:[%s2 + $0x1a0] sm:$0xff]
    %v102 = vld [vmem:[%s2 + $0x1a8] sm:$0xff]
    %v103 = vld [vmem:[%s2 + $0x1b0] sm:$0xff]
    %v104 = vld [vmem:[%s2 + $0x1b8] sm:$0xff]
    %v105 = vld [vmem:[%s2 + $0x1c0] sm:$0xff]
    %v106 = vld [vmem:[%s2 + $0x1c8] sm:$0xff]
    %v107 = vld [vmem:[%s2 + $0x1d0] sm:$0xff]
    %v108 = vld [vmem:[%s2 + $0x1d8] sm:$0xff]
    %v109 = vld [vmem:[%s2 + $0x1e0] sm:$0xff]
    %v110 = vld [vmem:[%s2 + $0x1e8] sm:$0xff]
    %v111 = vld [vmem:[%s2 + $0x1f0] sm:$0xff]
    %v112 = vld [vmem:[%s2 + $0x1f8] sm:$0xff]
    %v113 = vld [vmem:[%s2 + $0x200] sm:$0xff]
    %v114 = vld [vmem:[%s2 + $0x208] sm:$0xff]
    %v115 = vld [vmem:[%s2 + $0x210] sm:$0xff]
    %v116 = vld [vmem:[%s2 + $0x218] sm:$0xff]
    %v117 = vld [vmem:[%s2 + $0x220] sm:$0xff]
    %v118 = vld [vmem:[%s2 + $0x228] sm:$0xff]
    %v119 = vld [vmem:[%s2 + $0x230] sm:$0xff]
    %v120 = vld [vmem:[%s2 + $0x238] sm:$0xff]
    %v121 = vld [vmem:[%s2 + $0x240] sm:$0xff]
    %v122 = vld [vmem:[%s2 + $0x248] sm:$0xff]
    %v123 = vld [vmem:[%s2 + $0x250] sm:$0xff]
    %v124 = vld [vmem:[%s2 + $0x258] sm:$0xff]
    %v125 = vld [vmem:[%s2 + $0x260] sm:$0xff]
    %v126 = vld [vmem:[%s2 + $0x268] sm:$0xff]
    %v127 = vld [vmem:[%s2 + $0x270] sm:$0xff]
    %v128 = vld [vmem:[%s2 + $0x278] sm:$0xff]
    %v129 = vld [vmem:[%s2 + $0x280] sm:$0xff]
    %v130 = vld [vmem:[%s2 + $0x288] sm:$0xff]
    %v131 = vld [vmem:[%s2 + $0x290] sm:$0xff]
    %v132 = vld [vmem:[%s2 + $0x298] sm:$0xff]
    %v133 = vld [vmem:[%s2 + $0x2a0] sm:$0xff]
    %v134 = vld [vmem:[%s2 + $0x2a8] sm:$0xff]
    %v135 = vld [vmem:[%s2 + $0x2b0] sm:$0xff]
    %v136 = vld [vmem:[%s2 + $0x2b8] sm:$0xff]
    %v137 = vld [vmem:[%s2 + $0x2c0] sm:$0xff]
    %v138 = vld [vmem:[%s2 + $0x2c8] sm:$0xff]
    %v139 = vld [vmem:[%s2 + $0x2d0] sm:$0xff]
    %v140 = vld [vmem:[%s2 + $0x2d8] sm:$0xff]
    %v141 = vld [vmem:[%s2 + $0x2e0] sm:$0xff]
    %v142 = vld [vmem:[%s2 + $0x2e8] sm:$0xff]
    %v143 = vld [vmem:[%s2 + $0x2f0] sm:$0xff]
    %v144 = vld [vmem:[%s2 + $0x2f8] sm:$0xff]
    %v145 = vld [vmem:[%s2 + $0x300] sm:$0xff]
    %v146 = vld [vmem:[%s2 + $0x308] sm:$0xff]
    %v147 = vld [vmem:[%s2 + $0x310] sm:$0xff]
    %v148 = vld [vmem:[%s2 + $0x318] sm:$0xff]
    %v149 = vld [vmem:[%s2 + $0x320] sm:$0xff]
    %v150 = vld [vmem:[%s2 + $0x328] sm:$0xff]
    %v151 = vld [vmem:[%s2 + $0x330] sm:$0xff]
    %v152 = vld [vmem:[%s2 + $0x338] sm:$0xff]
    %v153 = vld [vmem:[%s2 + $0x340] sm:$0xff]
    %v154 = vld [vmem:[%s2 + $0x348] sm:$0xff]
    %v155 = vld [vmem:[%s2 + $0x350] sm:$0xff]
    %v156 = vld [vmem:[%s2 + $0x358] sm:$0xff]
    %v157 = vld [vmem:[%s2 + $0x360] sm:$0xff]
    %v158 = vld [vmem:[%s2 + $0x368] sm:$0xff]
    %v159 = vld [vmem:[%s2 + $0x370] sm:$0xff]
    %v160 = vld [vmem:[%s2 + $0x378] sm:$0xff]
    %v161 = vld [vmem:[%s2 + $0x380] sm:$0xff]
    %v162 = vld [vmem:[%s2 + $0x388] sm:$0xff]
    %v163 = vld [vmem:[%s2 + $0x390] sm:$0xff]
    %v164 = vld [vmem:[%s2 + $0x398] sm:$0xff]
    %v165 = vld [vmem:[%s2 + $0x3a0] sm:$0xff]
    %v166 = vld [vmem:[%s2 + $0x3a8] sm:$0xff]
    %v167 = vld [vmem:[%s2 + $0x3b0] sm:$0xff]
    %v168 = vld [vmem:[%s2 + $0x3b8] sm:$0xff]
    %v169 = vld [vmem:[%s2 + $0x3c0] sm:$0xff]
    %v170 = vld [vmem:[%s2 + $0x3c8] sm:$0xff]
    %v171 = vld [vmem:[%s2 + $0x3d0] sm:$0xff]
    %v172 = vld [vmem:[%s2 + $0x3d8] sm:$0xff]
    %v173 = vld [vmem:[%s2 + $0x3e0] sm:$0xff]
    %v174 = vld [vmem:[%s2 + $0x3e8] sm:$0xff]
    %v175 = vld [vmem:[%s2 + $0x3f0] sm:$0xff]
    %v176 = vld [vmem:[%s2 + $0x3f8] sm:$0xff]
    %v177 = vld [vmem:[%s2 + $0x400] sm:$0xff]
    %v178 = vld [vmem:[%s2 + $0x408] sm:$0xff]
    %v179 = vld [vmem:[%s2 + $0x410] sm:$0xff]
    %v180 = vld [vmem:[%s2 + $0x418] sm:$0xff]
    %v181 = vld [vmem:[%s2 + $0x420] sm:$0xff]
    %v182 = vld [vmem:[%s2 + $0x428] sm:$0xff]
    %v183 = vld [vmem:[%s2 + $0x430] sm:$0xff]
    %v184 = vld [vmem:[%s2 + $0x438] sm:$0xff]
    %v185 = vld [vmem:[%s2 + $0x440] sm:$0xff]
    %v186 = vld [vmem:[%s2 + $0x448] sm:$0xff]
    %v187 = vld [vmem:[%s2 + $0x450] sm:$0xff]
    %v188 = vld [vmem:[%s2 + $0x458] sm:$0xff]
    %v189 = vld [vmem:[%s2 + $0x460] sm:$0xff]
    %v190 = vld [vmem:[%s2 + $0x468] sm:$0xff]
    %v191 = vld [vmem:[%s2 + $0x470] sm:$0xff]
    %v192 = vld [vmem:[%s2 + $0x478] sm:$0xff]
    %v193 = vld [vmem:[%s2 + $0x480] sm:$0xff]
    %v194 = vld [vmem:[%s2 + $0x488] sm:$0xff]
    %v195 = vld [vmem:[%s2 + $0x490] sm:$0xff]
    %v196 = vld [vmem:[%s2 + $0x498] sm:$0xff]
    %v197 = vld [vmem:[%s2 + $0x4a0] sm:$0xff]
    %v198 = vld [vmem:[%s2 + $0x4a8] sm:$0xff]
    %v199 = vld [vmem:[%s2 + $0x4b0] sm:$0xff]
    %v200 = vld [vmem:[%s2 + $0x4b8] sm:$0xff]
    %v201 = vld [vmem:[%s2 + $0x4c0] sm:$0xff]
    %v202 = vld [vmem:[%s2 + $0x4c8] sm:$0xff]
    %v203 = vld [vmem:[%s2 + $0x4d0] sm:$0xff]
    %v204 = vld [vmem:[%s2 + $0x4d8] sm:$0xff]
    %v205 = vld [vmem:[%s2 + $0x4e0] sm:$0xff]
    %v206 = vld [vmem:[%s2 + $0x4e8] sm:$0xff]
    %v207 = vld [vmem:[%s2 + $0x4f0] sm:$0xff]
    %v208 = vld [vmem:[%s2 + $0x4f8] sm:$0xff]
    %v209 = vld [vmem:[%s2 + $0x500] sm:$0xff]
    %v210 = vld [vmem:[%s2 + $0x508] sm:$0xff]
    %v211 = vld [vmem:[%s2 + $0x510] sm:$0xff]
    %v212 = vld [vmem:[%s2 + $0x518] sm:$0xff]
    %v213 = vld [vmem:[%s2 + $0x520] sm:$0xff]
    %v214 = vld [vmem:[%s2 + $0x528] sm:$0xff]
    %v215 = vld [vmem:[%s2 + $0x530] sm:$0xff]
    %v216 = vld [vmem:[%s2 + $0x538] sm:$0xff]
    %v217 = vld [vmem:[%s2 + $0x540] sm:$0xff]
    %v218 = vld [vmem:[%s2 + $0x548] sm:$0xff]
    %v219 = vld [vmem:[%s2 + $0x550] sm:$0xff]
    %v220 = vld [vmem:[%s2 + $0x558] sm:$0xff]
    %v221 = vld [vmem:[%s2 + $0x560] sm:$0xff]
    %v222 = vld [vmem:[%s2 + $0x568] sm:$0xff]
    %v223 = vld [vmem:[%s2 + $0x570] sm:$0xff]
    %v224 = vld [vmem:[%s2 + $0x578] sm:$0xff]
    %v225 = vld [vmem:[%s2 + $0x580] sm:$0xff]
    %v226 = vld [vmem:[%s2 + $0x588] sm:$0xff]
    %v227 = vld [vmem:[%s2 + $0x590] sm:$0xff]
    %v228 = vld [vmem:[%s2 + $0x598] sm:$0xff]
    %v229 = vld [vmem:[%s2 + $0x5a0] sm:$0xff]
    %v230 = vld [vmem:[%s2 + $0x5a8] sm:$0xff]
    %v231 = vld [vmem:[%s2 + $0x5b0] sm:$0xff]
    %v232 = vld [vmem:[%s2 + $0x5b8] sm:$0xff]
    %v233 = vld [vmem:[%s2 + $0x5c0] sm:$0xff]
    %v234 = vld [vmem:[%s2 + $0x5c8] sm:$0xff]
    %v235 = vld [vmem:[%s2 + $0x5d0] sm:$0xff]
    %v236 = vld [vmem:[%s2 + $0x5d8] sm:$0xff]
    %v237 = vld [vmem:[%s2 + $0x5e0] sm:$0xff]
    %v238 = vld [vmem:[%s2 + $0x5e8] sm:$0xff]
    %v239 = vld [vmem:[%s2 + $0x5f0] sm:$0xff]
    %v240 = vld [vmem:[%s2 + $0x5f8] sm:$0xff]
    %v241 = vld [vmem:[%s2 + $0x600] sm:$0xff]
    %v242 = vld [vmem:[%s2 + $0x608] sm:$0xff]
    %v243 = vld [vmem:[%s2 + $0x610] sm:$0xff]
    %v244 = vld [vmem:[%s2 + $0x618] sm:$0xff]
    %v245 = vld [vmem:[%s2 + $0x620] sm:$0xff]
    %v246 = vld [vmem:[%s2 + $0x628] sm:$0xff]
    %v247 = vld [vmem:[%s2 + $0x630] sm:$0xff]
    %v248 = vld [vmem:[%s2 + $0x638] sm:$0xff]
    %v249 = vld [vmem:[%s2 + $0x640] sm:$0xff]
    %v250 = vld [vmem:[%s2 + $0x648] sm:$0xff]
    %v251 = vld [vmem:[%s2 + $0x650] sm:$0xff]
    %v252 = vld [vmem:[%s2 + $0x658] sm:$0xff]
    %v253 = vld [vmem:[%s2 + $0x660] sm:$0xff]
    %v254 = vld [vmem:[%s2 + $0x668] sm:$0xff]
    %v255 = vld [vmem:[%s2 + $0x670] sm:$0xff]
    %v256 = vld [vmem:[%s2 + $0x678] sm:$0xff]
    %v257 = vld [vmem:[%s2 + $0x680] sm:$0xff]
    %v258 = vld [vmem:[%s2 + $0x688] sm:$0xff]
    %v259 = vld [vmem:[%s2 + $0x690] sm:$0xff]
    %v260 = vld [vmem:[%s2 + $0x698] sm:$0xff]
    %v261 = vld [vmem:[%s2 + $0x6a0] sm:$0xff]
    %v262 = vld [vmem:[%s2 + $0x6a8] sm:$0xff]
    %v263 = vld [vmem:[%s2 + $0x6b0] sm:$0xff]
    %v264 = vld [vmem:[%s2 + $0x6b8] sm:$0xff]
    %v265 = vld [vmem:[%s2 + $0x6c0] sm:$0xff]
    %v266 = vld [vmem:[%s2 + $0x6c8] sm:$0xff]
    %v267 = vld [vmem:[%s2 + $0x6d0] sm:$0xff]
    %v268 = vld [vmem:[%s2 + $0x6d8] sm:$0xff]
    %v269 = vld [vmem:[%s2 + $0x6e0] sm:$0xff]
    %v270 = vld [vmem:[%s2 + $0x6e8] sm:$0xff]
    %v271 = vld [vmem:[%s2 + $0x6f0] sm:$0xff]
    %v272 = vld [vmem:[%s2 + $0x6f8] sm:$0xff]
    %v273 = vld [vmem:[%s2 + $0x700] sm:$0xff]
    %v274 = vld [vmem:[%s2 + $0x708] sm:$0xff]
    %v275 = vld [vmem:[%s2 + $0x710] sm:$0xff]
    %v276 = vld [vmem:[%s2 + $0x718] sm:$0xff]
    %v277 = vld [vmem:[%s2 + $0x720] sm:$0xff]
    %v278 = vld [vmem:[%s2 + $0x728] sm:$0xff]
    %v279 = vld [vmem:[%s2 + $0x730] sm:$0xff]
    %v280 = vld [vmem:[%s2 + $0x738] sm:$0xff]
    %v281 = vld [vmem:[%s2 + $0x740] sm:$0xff]
    %v282 = vld [vmem:[%s2 + $0x748] sm:$0xff]
    %v283 = vld [vmem:[%s2 + $0x750] sm:$0xff]
    %v284 = vld [vmem:[%s2 + $0x758] sm:$0xff]
    %v285 = vld [vmem:[%s2 + $0x760] sm:$0xff]
    %v286 = vld [vmem:[%s2 + $0x768] sm:$0xff]
    %v287 = vld [vmem:[%s2 + $0x770] sm:$0xff]
    %v288 = vld [vmem:[%s2 + $0x778] sm:$0xff]
    %v289 = vld [vmem:[%s2 + $0x780] sm:$0xff]
    %v290 = vld [vmem:[%s2 + $0x788] sm:$0xff]
    %v291 = vld [vmem:[%s2 + $0x790] sm:$0xff]
    %v292 = vld [vmem:[%s2 + $0x798] sm:$0xff]
    %v293 = vld [vmem:[%s2 + $0x7a0] sm:$0xff]
    %v294 = vld [vmem:[%s2 + $0x7a8] sm:$0xff]
    %v295 = vld [vmem:[%s2 + $0x7b0] sm:$0xff]
    %v296 = vld [vmem:[%s2 + $0x7b8] sm:$0xff]
    %v297 = vld [vmem:[%s2 + $0x7c0] sm:$0xff]
    %v298 = vld [vmem:[%s2 + $0x7c8] sm:$0xff]
    %v299 = vld [vmem:[%s2 + $0x7d0] sm:$0xff]
    %v300 = vld [vmem:[%s2 + $0x7d8] sm:$0xff]
    %v301 = vld [vmem:[%s2 + $0x7e0] sm:$0xff]
    %v302 = vld [vmem:[%s2 + $0x7e8] sm:$0xff]
    %v303 = vld [vmem:[%s2 + $0x7f0] sm:$0xff]
    %v304 = vld [vmem:[%s2 + $0x7f8] sm:$0xff]
    %v305 = vld [vmem:[%s2 + $0x800] sm:$0xff]
    %v306 = vld [vmem:[%s2 + $0x808] sm:$0xff]
    %v307 = vld [vmem:[%s2 + $0x810] sm:$0xff]
    %v308 = vld [vmem:[%s2 + $0x818] sm:$0xff]
    %v309 = vld [vmem:[%s2 + $0x820] sm:$0xff]
    %v310 = vld [vmem:[%s2 + $0x828] sm:$0xff]
    %v311 = vld [vmem:[%s2 + $0x830] sm:$0xff]
    %v312 = vld [vmem:[%s2 + $0x838] sm:$0xff]
    %v313 = vld [vmem:[%s2 + $0x840] sm:$0xff]
    %v314 = vld [vmem:[%s2 + $0x848] sm:$0xff]
    %v315 = vld [vmem:[%s2 + $0x850] sm:$0xff]
    %v316 = vld [vmem:[%s2 + $0x858] sm:$0xff]
    %v317 = vld [vmem:[%s2 + $0x860] sm:$0xff]
    %v318 = vld [vmem:[%s2 + $0x868] sm:$0xff]
    %v319 = vld [vmem:[%s2 + $0x870] sm:$0xff]
    %v320 = vld [vmem:[%s2 + $0x878] sm:$0xff]
    %v321 = vld [vmem:[%s2 + $0x880] sm:$0xff]
    %v322 = vld [vmem:[%s2 + $0x888] sm:$0xff]
    %v323 = vld [vmem:[%s2 + $0x890] sm:$0xff]
    %v324 = vld [vmem:[%s2 + $0x898] sm:$0xff]
    %v325 = vld [vmem:[%s2 + $0x8a0] sm:$0xff]
    %v326 = vld [vmem:[%s2 + $0x8a8] sm:$0xff]
    %v327 = vld [vmem:[%s2 + $0x8b0] sm:$0xff]
    %v328 = vld [vmem:[%s2 + $0x8b8] sm:$0xff]
    %v329 = vld [vmem:[%s2 + $0x8c0] sm:$0xff]
    %v330 = vld [vmem:[%s2 + $0x8c8] sm:$0xff]
    %v331 = vld [vmem:[%s2 + $0x8d0] sm:$0xff]
    %v332 = vld [vmem:[%s2 + $0x8d8] sm:$0xff]
    %v333 = vld [vmem:[%s2 + $0x8e0] sm:$0xff]
    %v334 = vld [vmem:[%s2 + $0x8e8] sm:$0xff]
    %v335 = vld [vmem:[%s2 + $0x8f0] sm:$0xff]
    %v336 = vld [vmem:[%s2 + $0x8f8] sm:$0xff]
    %v337 = vld [vmem:[%s2 + $0x900] sm:$0xff]
    %v338 = vld [vmem:[%s2 + $0x908] sm:$0xff]
    %v339 = vld [vmem:[%s2 + $0x910] sm:$0xff]
    %v340 = vld [vmem:[%s2 + $0x918] sm:$0xff]
    %v341 = vld [vmem:[%s2 + $0x920] sm:$0xff]
    %v342 = vld [vmem:[%s2 + $0x928] sm:$0xff]
    %v343 = vld [vmem:[%s2 + $0x930] sm:$0xff]
    %v344 = vld [vmem:[%s2 + $0x938] sm:$0xff]
    %v345 = vld [vmem:[%s2 + $0x940] sm:$0xff]
    %v346 = vld [vmem:[%s2 + $0x948] sm:$0xff]
    %v347 = vld [vmem:[%s2 + $0x950] sm:$0xff]
    %v348 = vld [vmem:[%s2 + $0x958] sm:$0xff]
    %v349 = vld [vmem:[%s2 + $0x960] sm:$0xff]
    %v350 = vld [vmem:[%s2 + $0x968] sm:$0xff]
    %v351 = vld [vmem:[%s2 + $0x970] sm:$0xff]
    %v352 = vld [vmem:[%s2 + $0x978] sm:$0xff]
    %v353 = vld [vmem:[%s2 + $0x980] sm:$0xff]
    %v354 = vld [vmem:[%s2 + $0x988] sm:$0xff]
    %v355 = vld [vmem:[%s2 + $0x990] sm:$0xff]
    %v356 = vld [vmem:[%s2 + $0x998] sm:$0xff]
    %v357 = vld [vmem:[%s2 + $0x9a0] sm:$0xff]
    %v358 = vld [vmem:[%s2 + $0x9a8] sm:$0xff]
    %v359 = vld [vmem:[%s2 + $0x9b0] sm:$0xff]
    %v360 = vld [vmem:[%s2 + $0x9b8] sm:$0xff]
    %v361 = vld [vmem:[%s2 + $0x9c0] sm:$0xff]
    %v362 = vld [vmem:[%s2 + $0x9c8] sm:$0xff]
    %v363 = vld [vmem:[%s2 + $0x9d0] sm:$0xff]
    %v364 = vld [vmem:[%s2 + $0x9d8] sm:$0xff]
    %v365 = vld [vmem:[%s2 + $0x9e0] sm:$0xff]
    %v366 = vld [vmem:[%s2 + $0x9e8] sm:$0xff]
    %v367 = vld [vmem:[%s2 + $0x9f0] sm:$0xff]
    %v368 = vld [vmem:[%s2 + $0x9f8] sm:$0xff]
    %v369 = vld [vmem:[%s2 + $0xa00] sm:$0xff]
    %v370 = vld [vmem:[%s2 + $0xa08] sm:$0xff]
    %v371 = vld [vmem:[%s2 + $0xa10] sm:$0xff]
    %v372 = vld [vmem:[%s2 + $0xa18] sm:$0xff]
    %v373 = vld [vmem:[%s2 + $0xa20] sm:$0xff]
    %v374 = vld [vmem:[%s2 + $0xa28] sm:$0xff]
    %v375 = vld [vmem:[%s2 + $0xa30] sm:$0xff]
    %v376 = vld [vmem:[%s2 + $0xa38] sm:$0xff]
    %v377 = vld [vmem:[%s2 + $0xa40] sm:$0xff]
    %v378 = vld [vmem:[%s2 + $0xa48] sm:$0xff]
    %v379 = vld [vmem:[%s2 + $0xa50] sm:$0xff]
    %v380 = vld [vmem:[%s2 + $0xa58] sm:$0xff]
    %v381 = vld [vmem:[%s2 + $0xa60] sm:$0xff]
    %v382 = vld [vmem:[%s2 + $0xa68] sm:$0xff]
    %v383 = vld [vmem:[%s2 + $0xa70] sm:$0xff]
    %v384 = vld [vmem:[%s2 + $0xa78] sm:$0xff]
    %v385 = vld [vmem:[%s2 + $0xa80] sm:$0xff]
    %v386 = vld [vmem:[%s2 + $0xa88] sm:$0xff]
    %v387 = vld [vmem:[%s2 + $0xa90] sm:$0xff]
    %v388 = vld [vmem:[%s2 + $0xa98] sm:$0xff]
    %v389 = vld [vmem:[%s2 + $0xaa0] sm:$0xff]
    %v390 = vld [vmem:[%s2 + $0xaa8] sm:$0xff]
    %v391 = vld [vmem:[%s2 + $0xab0] sm:$0xff]
    %v392 = vld [vmem:[%s2 + $0xab8] sm:$0xff]
    %v393 = vld [vmem:[%s2 + $0xac0] sm:$0xff]
    %v394 = vld [vmem:[%s2 + $0xac8] sm:$0xff]
    %v395 = vld [vmem:[%s2 + $0xad0] sm:$0xff]
    %v396 = vld [vmem:[%s2 + $0xad8] sm:$0xff]
    %v397 = vld [vmem:[%s2 + $0xae0] sm:$0xff]
    %v398 = vld [vmem:[%s2 + $0xae8] sm:$0xff]
    %v399 = vld [vmem:[%s2 + $0xaf0] sm:$0xff]
    %v400 = vld [vmem:[%s2 + $0xaf8] sm:$0xff]
    %v401 = vld [vmem:[%s2 + $0xb00] sm:$0xff]
    %v402 = vld [vmem:[%s2 + $0xb08] sm:$0xff]
    %v403 = vld [vmem:[%s2 + $0xb10] sm:$0xff]
    %v404 = vld [vmem:[%s2 + $0xb18] sm:$0xff]
    %v405 = vld [vmem:[%s2 + $0xb20] sm:$0xff]
    %v406 = vld [vmem:[%s2 + $0xb28] sm:$0xff]
    %v407 = vld [vmem:[%s2 + $0xb30] sm:$0xff]
    %v408 = vld [vmem:[%s2 + $0xb38] sm:$0xff]
    %v409 = vld [vmem:[%s2 + $0xb40] sm:$0xff]
    %v410 = vld [vmem:[%s2 + $0xb48] sm:$0xff]
    %v411 = vld [vmem:[%s2 + $0xb50] sm:$0xff]
    %v412 = vld [vmem:[%s2 + $0xb58] sm:$0xff]
    %v413 = vld [vmem:[%s2 + $0xb60] sm:$0xff]
    %v414 = vld [vmem:[%s2 + $0xb68] sm:$0xff]
    %v415 = vld [vmem:[%s2 + $0xb70] sm:$0xff]
    %v416 = vld [vmem:[%s2 + $0xb78] sm:$0xff]
    %v417 = vld [vmem:[%s2 + $0xb80] sm:$0xff]
    %v418 = vld [vmem:[%s2 + $0xb88] sm:$0xff]
    %v419 = vld [vmem:[%s2 + $0xb90] sm:$0xff]
    %v420 = vld [vmem:[%s2 + $0xb98] sm:$0xff]
    %v421 = vld [vmem:[%s2 + $0xba0] sm:$0xff]
    %v422 = vld [vmem:[%s2 + $0xba8] sm:$0xff]
    %v423 = vld [vmem:[%s2 + $0xbb0] sm:$0xff]
    %v424 = vld [vmem:[%s2 + $0xbb8] sm:$0xff]
    %v425 = vld [vmem:[%s2 + $0xbc0] sm:$0xff]
    %v426 = vld [vmem:[%s2 + $0xbc8] sm:$0xff]
    %v427 = vld [vmem:[%s2 + $0xbd0] sm:$0xff]
    %v428 = vld [vmem:[%s2 + $0xbd8] sm:$0xff]
    %v429 = vld [vmem:[%s2 + $0xbe0] sm:$0xff]
    %v430 = vld [vmem:[%s2 + $0xbe8] sm:$0xff]
    %v431 = vld [vmem:[%s2 + $0xbf0] sm:$0xff]
    %v432 = vld [vmem:[%s2 + $0xbf8] sm:$0xff]
    %v433 = vld [vmem:[%s2 + $0xc00] sm:$0xff]
    %v434 = vld [vmem:[%s2 + $0xc08] sm:$0xff]
    %v435 = vld [vmem:[%s2 + $0xc10] sm:$0xff]
    %v436 = vld [vmem:[%s2 + $0xc18] sm:$0xff]
    %v437 = vld [vmem:[%s2 + $0xc20] sm:$0xff]
    %v438 = vld [vmem:[%s2 + $0xc28] sm:$0xff]
    %v439 = vld [vmem:[%s2 + $0xc30] sm:$0xff]
    %v440 = vld [vmem:[%s2 + $0xc38] sm:$0xff]
    %v441 = vld [vmem:[%s2 + $0xc40] sm:$0xff]
    %v442 = vld [vmem:[%s2 + $0xc48] sm:$0xff]
    %v443 = vld [vmem:[%s2 + $0xc50] sm:$0xff]
    %v444 = vld [vmem:[%s2 + $0xc58] sm:$0xff]
    %v445 = vld [vmem:[%s2 + $0xc60] sm:$0xff]
    %v446 = vld [vmem:[%s2 + $0xc68] sm:$0xff]
    %v447 = vld [vmem:[%s2 + $0xc70] sm:$0xff]
    %v448 = vld [vmem:[%s2 + $0xc78] sm:$0xff]
    %v449 = vld [vmem:[%s2 + $0xc80] sm:$0xff]
    %v450 = vld [vmem:[%s2 + $0xc88] sm:$0xff]
    %v451 = vld [vmem:[%s2 + $0xc90] sm:$0xff]
    %v452 = vld [vmem:[%s2 + $0xc98] sm:$0xff]
    %v453 = vld [vmem:[%s2 + $0xca0] sm:$0xff]
    %v454 = vld [vmem:[%s2 + $0xca8] sm:$0xff]
    %v455 = vld [vmem:[%s2 + $0xcb0] sm:$0xff]
    %v456 = vld [vmem:[%s2 + $0xcb8] sm:$0xff]
    %v457 = vld [vmem:[%s2 + $0xcc0] sm:$0xff]
    %v458 = vld [vmem:[%s2 + $0xcc8] sm:$0xff]
    %v459 = vld [vmem:[%s2 + $0xcd0] sm:$0xff]
    %v460 = vld [vmem:[%s2 + $0xcd8] sm:$0xff]
    %v461 = vld [vmem:[%s2 + $0xce0] sm:$0xff]
    %v462 = vld [vmem:[%s2 + $0xce8] sm:$0xff]
    %v463 = vld [vmem:[%s2 + $0xcf0] sm:$0xff]
    %v464 = vld [vmem:[%s2 + $0xcf8] sm:$0xff]
    %v465 = vld [vmem:[%s2 + $0xd00] sm:$0xff]
    %v466 = vld [vmem:[%s2 + $0xd08] sm:$0xff]
    %v467 = vld [vmem:[%s2 + $0xd10] sm:$0xff]
    %v468 = vld [vmem:[%s2 + $0xd18] sm:$0xff]
    %v469 = vld [vmem:[%s2 + $0xd20] sm:$0xff]
    %v470 = vld [vmem:[%s2 + $0xd28] sm:$0xff]
    %v471 = vld [vmem:[%s2 + $0xd30] sm:$0xff]
    %v472 = vld [vmem:[%s2 + $0xd38] sm:$0xff]
    %v473 = vld [vmem:[%s2 + $0xd40] sm:$0xff]
    %v474 = vld [vmem:[%s2 + $0xd48] sm:$0xff]
    %v475 = vld [vmem:[%s2 + $0xd50] sm:$0xff]
    %v476 = vld [vmem:[%s2 + $0xd58] sm:$0xff]
    %v477 = vld [vmem:[%s2 + $0xd60] sm:$0xff]
    %v478 = vld [vmem:[%s2 + $0xd68] sm:$0xff]
    %v479 = vld [vmem:[%s2 + $0xd70] sm:$0xff]
    %v480 = vld [vmem:[%s2 + $0xd78] sm:$0xff]
    %v481 = vld [vmem:[%s2 + $0xd80] sm:$0xff]
    %v482 = vld [vmem:[%s2 + $0xd88] sm:$0xff]
    %v483 = vld [vmem:[%s2 + $0xd90] sm:$0xff]
    %v484 = vld [vmem:[%s2 + $0xd98] sm:$0xff]
    %v485 = vld [vmem:[%s2 + $0xda0] sm:$0xff]
    %v486 = vld [vmem:[%s2 + $0xda8] sm:$0xff]
    %v487 = vld [vmem:[%s2 + $0xdb0] sm:$0xff]
    %v488 = vld [vmem:[%s2 + $0xdb8] sm:$0xff]
    %v489 = vld [vmem:[%s2 + $0xdc0] sm:$0xff]
    %v490 = vld [vmem:[%s2 + $0xdc8] sm:$0xff]
    %v491 = vld [vmem:[%s2 + $0xdd0] sm:$0xff]
    %v492 = vld [vmem:[%s2 + $0xdd8] sm:$0xff]
    %v493 = vld [vmem:[%s2 + $0xde0] sm:$0xff]
    %v494 = vld [vmem:[%s2 + $0xde8] sm:$0xff]
    %v495 = vld [vmem:[%s2 + $0xdf0] sm:$0xff]
    %v496 = vld [vmem:[%s2 + $0xdf8] sm:$0xff]
    %v497 = vld [vmem:[%s2 + $0xe00] sm:$0xff]
    %v498 = vld [vmem:[%s2 + $0xe08] sm:$0xff]
    %v499 = vld [vmem:[%s2 + $0xe10] sm:$0xff]
    %v500 = vld [vmem:[%s2 + $0xe18] sm:$0xff]
    %v501 = vld [vmem:[%s2 + $0xe20] sm:$0xff]
    %v502 = vld [vmem:[%s2 + $0xe28] sm:$0xff]
    %v503 = vld [vmem:[%s2 + $0xe30] sm:$0xff]
    %v504 = vld [vmem:[%s2 + $0xe38] sm:$0xff]
    %v505 = vld [vmem:[%s2 + $0xe40] sm:$0xff]
    %v506 = vld [vmem:[%s2 + $0xe48] sm:$0xff]
    %v507 = vld [vmem:[%s2 + $0xe50] sm:$0xff]
    %v508 = vld [vmem:[%s2 + $0xe58] sm:$0xff]
    %v509 = vld [vmem:[%s2 + $0xe60] sm:$0xff]
    %v510 = vld [vmem:[%s2 + $0xe68] sm:$0xff]
    %v511 = vld [vmem:[%s2 + $0xe70] sm:$0xff]
    %v512 = vld [vmem:[%s2 + $0xe78] sm:$0xff]
    %v513 = vld [vmem:[%s2 + $0xe80] sm:$0xff]
    %v514 = vld [vmem:[%s2 + $0xe88] sm:$0xff]
    %v515 = vld [vmem:[%s2 + $0xe90] sm:$0xff]
    %v516 = vld [vmem:[%s2 + $0xe98] sm:$0xff]
    %v517 = vld [vmem:[%s2 + $0xea0] sm:$0xff]
    %v518 = vld [vmem:[%s2 + $0xea8] sm:$0xff]
    %v519 = vld [vmem:[%s2 + $0xeb0] sm:$0xff]
    %v520 = vld [vmem:[%s2 + $0xeb8] sm:$0xff]
    %v521 = vld [vmem:[%s2 + $0xec0] sm:$0xff]
    %v522 = vld [vmem:[%s2 + $0xec8] sm:$0xff]
    %v523 = vld [vmem:[%s2 + $0xed0] sm:$0xff]
    %v524 = vld [vmem:[%s2 + $0xed8] sm:$0xff]
    %v525 = vld [vmem:[%s2 + $0xee0] sm:$0xff]
    %v526 = vld [vmem:[%s2 + $0xee8] sm:$0xff]
    %v527 = vld [vmem:[%s2 + $0xef0] sm:$0xff]
    %v528 = vld [vmem:[%s2 + $0xef8] sm:$0xff]
    %v529 = vld [vmem:[%s2 + $0xf00] sm:$0xff]
    %v530 = vld [vmem:[%s2 + $0xf08] sm:$0xff]
    %v531 = vld [vmem:[%s2 + $0xf10] sm:$0xff]
    %v532 = vld [vmem:[%s2 + $0xf18] sm:$0xff]
    %v533 = vld [vmem:[%s2 + $0xf20] sm:$0xff]
    %v534 = vld [vmem:[%s2 + $0xf28] sm:$0xff]
    %v535 = vld [vmem:[%s2 + $0xf30] sm:$0xff]
    %v536 = vld [vmem:[%s2 + $0xf38] sm:$0xff]
    %v537 = vld [vmem:[%s2 + $0xf40] sm:$0xff]
    %v538 = vld [vmem:[%s2 + $0xf48] sm:$0xff]
    %v539 = vld [vmem:[%s2 + $0xf50] sm:$0xff]
    %v540 = vld [vmem:[%s2 + $0xf58] sm:$0xff]
    %v541 = vld [vmem:[%s2 + $0xf60] sm:$0xff]
    %v542 = vld [vmem:[%s2 + $0xf68] sm:$0xff]
    %v543 = vld [vmem:[%s2 + $0xf70] sm:$0xff]
    %v544 = vld [vmem:[%s2 + $0xf78] sm:$0xff]
    %v545 = vld [vmem:[%s2 + $0xf80] sm:$0xff]
    %v546 = vld [vmem:[%s2 + $0xf88] sm:$0xff]
    %v547 = vld [vmem:[%s2 + $0xf90] sm:$0xff]
    %v548 = vld [vmem:[%s2 + $0xf98] sm:$0xff]
    %v549 = vld [vmem:[%s2 + $0xfa0] sm:$0xff]
    %v550 = vld [vmem:[%s2 + $0xfa8] sm:$0xff]
    %v551 = vld [vmem:[%s2 + $0xfb0] sm:$0xff]
    %v552 = vld [vmem:[%s2 + $0xfb8] sm:$0xff]
    %v553 = vld [vmem:[%s2 + $0xfc0] sm:$0xff]
    %v554 = vld [vmem:[%s2 + $0xfc8] sm:$0xff]
    %v555 = vld [vmem:[%s2 + $0xfd0] sm:$0xff]
    %v556 = vld [vmem:[%s2 + $0xfd8] sm:$0xff]
    %v557 = vld [vmem:[%s2 + $0xfe0] sm:$0xff]
    %v558 = vld [vmem:[%s2 + $0xfe8] sm:$0xff]
    %v559 = vld [vmem:[%s2 + $0xff0] sm:$0xff]
    %v560 = vld [vmem:[%s2 + $0xff8] sm:$0xff]
    %v561 = vld [vmem:[%s2 + $0x1000] sm:$0xff]
    %v562 = vld [vmem:[%s2 + $0x1008] sm:$0xff]
    %v563 = vld [vmem:[%s2 + $0x1010] sm:$0xff]
    %v564 = vld [vmem:[%s2 + $0x1018] sm:$0xff]
    %v565 = vld [vmem:[%s2 + $0x1020] sm:$0xff]
    %v566 = vld [vmem:[%s2 + $0x1028] sm:$0xff]
    %v567 = vld [vmem:[%s2 + $0x1030] sm:$0xff]
    %v568 = vld [vmem:[%s2 + $0x1038] sm:$0xff]
    %v569 = vld [vmem:[%s2 + $0x1040] sm:$0xff]
    %v570 = vld [vmem:[%s2 + $0x1048] sm:$0xff]
    %v571 = vld [vmem:[%s2 + $0x1050] sm:$0xff]
    %v572 = vld [vmem:[%s2 + $0x1058] sm:$0xff]
    %v573 = vld [vmem:[%s2 + $0x1060] sm:$0xff]
    %v574 = vld [vmem:[%s2 + $0x1068] sm:$0xff]
    %v575 = vld [vmem:[%s2 + $0x1070] sm:$0xff]
    %v576 = vld [vmem:[%s2 + $0x1078] sm:$0xff]
    %v577 = vld [vmem:[%s2 + $0x1080] sm:$0xff]
    %v578 = vld [vmem:[%s2 + $0x1088] sm:$0xff]
    %v579 = vld [vmem:[%s2 + $0x1090] sm:$0xff]
    %v580 = vld [vmem:[%s2 + $0x1098] sm:$0xff]
    %v581 = vld [vmem:[%s2 + $0x10a0] sm:$0xff]
    %v582 = vld [vmem:[%s2 + $0x10a8] sm:$0xff]
    %v583 = vld [vmem:[%s2 + $0x10b0] sm:$0xff]
    %v584 = vld [vmem:[%s2 + $0x10b8] sm:$0xff]
    %v585 = vld [vmem:[%s2 + $0x10c0] sm:$0xff]
    %v586 = vld [vmem:[%s2 + $0x10c8] sm:$0xff]
    %v587 = vld [vmem:[%s2 + $0x10d0] sm:$0xff]
    %v588 = vld [vmem:[%s2 + $0x10d8] sm:$0xff]
    %v589 = vld [vmem:[%s2 + $0x10e0] sm:$0xff]
    %v590 = vld [vmem:[%s2 + $0x10e8] sm:$0xff]
    %v591 = vld [vmem:[%s2 + $0x10f0] sm:$0xff]
    %v592 = vld [vmem:[%s2 + $0x10f8] sm:$0xff]
    %v593 = vld [vmem:[%s2 + $0x1100] sm:$0xff]
    %v594 = vld [vmem:[%s2 + $0x1108] sm:$0xff]
    %v595 = vld [vmem:[%s2 + $0x1110] sm:$0xff]
    %v596 = vld [vmem:[%s2 + $0x1118] sm:$0xff]
    %v597 = vld [vmem:[%s2 + $0x1120] sm:$0xff]
    %v598 = vld [vmem:[%s2 + $0x1128] sm:$0xff]
    %v599 = vld [vmem:[%s2 + $0x1130] sm:$0xff]
    %v600 = vld [vmem:[%s2 + $0x1138] sm:$0xff]
    %v601 = vld [vmem:[%s2 + $0x1140] sm:$0xff]
    %v602 = vld [vmem:[%s2 + $0x1148] sm:$0xff]
    %v603 = vld [vmem:[%s2 + $0x1150] sm:$0xff]
    %v604 = vld [vmem:[%s2 + $0x1158] sm:$0xff]
    %v605 = vld [vmem:[%s2 + $0x1160] sm:$0xff]
    %v606 = vld [vmem:[%s2 + $0x1168] sm:$0xff]
    %v607 = vld [vmem:[%s2 + $0x1170] sm:$0xff]
    %v608 = vld [vmem:[%s2 + $0x1178] sm:$0xff]
    %v609 = vld [vmem:[%s2 + $0x1180] sm:$0xff]
    %v610 = vld [vmem:[%s2 + $0x1188] sm:$0xff]
    %v611 = vld [vmem:[%s2 + $0x1190] sm:$0xff]
    %v612 = vld [vmem:[%s2 + $0x1198] sm:$0xff]
    %v613 = vld [vmem:[%s2 + $0x11a0] sm:$0xff]
    %v614 = vld [vmem:[%s2 + $0x11a8] sm:$0xff]
    %v615 = vld [vmem:[%s2 + $0x11b0] sm:$0xff]
    %v616 = vld [vmem:[%s2 + $0x11b8] sm:$0xff]
    %v617 = vld [vmem:[%s2 + $0x11c0] sm:$0xff]
    %v618 = vld [vmem:[%s2 + $0x11c8] sm:$0xff]
    %v619 = vld [vmem:[%s2 + $0x11d0] sm:$0xff]
    %v620 = vld [vmem:[%s2 + $0x11d8] sm:$0xff]
    %v621 = vld [vmem:[%s2 + $0x11e0] sm:$0xff]
    %v622 = vld [vmem:[%s2 + $0x11e8] sm:$0xff]
    %v623 = vld [vmem:[%s2 + $0x11f0] sm:$0xff]
    %v624 = vld [vmem:[%s2 + $0x11f8] sm:$0xff]
    %v625 = vld [vmem:[%s2 + $0x1200] sm:$0xff]
    %v626 = vld [vmem:[%s2 + $0x1208] sm:$0xff]
    %v627 = vld [vmem:[%s2 + $0x1210] sm:$0xff]
    %v628 = vld [vmem:[%s2 + $0x1218] sm:$0xff]
    %v629 = vld [vmem:[%s2 + $0x1220] sm:$0xff]
    %v630 = vld [vmem:[%s2 + $0x1228] sm:$0xff]
    %v631 = vld [vmem:[%s2 + $0x1230] sm:$0xff]
    %v632 = vld [vmem:[%s2 + $0x1238] sm:$0xff]
    %v633 = vld [vmem:[%s2 + $0x1240] sm:$0xff]
    %v634 = vld [vmem:[%s2 + $0x1248] sm:$0xff]
    %v635 = vld [vmem:[%s2 + $0x1250] sm:$0xff]
    %v636 = vld [vmem:[%s2 + $0x1258] sm:$0xff]
    %v637 = vld [vmem:[%s2 + $0x1260] sm:$0xff]
    %v638 = vld [vmem:[%s2 + $0x1268] sm:$0xff]
    %v639 = vld [vmem:[%s2 + $0x1270] sm:$0xff]
    %v640 = vld [vmem:[%s2 + $0x1278] sm:$0xff]
    %v641 = vld [vmem:[%s2 + $0x1280] sm:$0xff]
    %v642 = vld [vmem:[%s2 + $0x1288] sm:$0xff]
    %v643 = vld [vmem:[%s2 + $0x1290] sm:$0xff]
    %v644 = vld [vmem:[%s2 + $0x1298] sm:$0xff]
    %v645 = vld [vmem:[%s2 + $0x12a0] sm:$0xff]
    %v646 = vld [vmem:[%s2 + $0x12a8] sm:$0xff]
    %v647 = vld [vmem:[%s2 + $0x12b0] sm:$0xff]
    %v648 = vld [vmem:[%s2 + $0x12b8] sm:$0xff]
    %v649 = vld [vmem:[%s2 + $0x12c0] sm:$0xff]
    %v650 = vld [vmem:[%s2 + $0x12c8] sm:$0xff]
    %v651 = vld [vmem:[%s2 + $0x12d0] sm:$0xff]
    %v652 = vld [vmem:[%s2 + $0x12d8] sm:$0xff]
    %v653 = vld [vmem:[%s2 + $0x12e0] sm:$0xff]
    %v654 = vld [vmem:[%s2 + $0x12e8] sm:$0xff]
    %v655 = vld [vmem:[%s2 + $0x12f0] sm:$0xff]
    %v656 = vld [vmem:[%s2 + $0x12f8] sm:$0xff]
    %v657 = vld [vmem:[%s2 + $0x1300] sm:$0xff]
    %v658 = vld [vmem:[%s2 + $0x1308] sm:$0xff]
    %v659 = vld [vmem:[%s2 + $0x1310] sm:$0xff]
    %v660 = vld [vmem:[%s2 + $0x1318] sm:$0xff]
    %v661 = vld [vmem:[%s2 + $0x1320] sm:$0xff]
    %v662 = vld [vmem:[%s2 + $0x1328] sm:$0xff]
    %v663 = vld [vmem:[%s2 + $0x1330] sm:$0xff]
    %v664 = vld [vmem:[%s2 + $0x1338] sm:$0xff]
    %v665 = vld [vmem:[%s2 + $0x1340] sm:$0xff]
    %v666 = vld [vmem:[%s2 + $0x1348] sm:$0xff]
    %v667 = vld [vmem:[%s2 + $0x1350] sm:$0xff]
    %v668 = vld [vmem:[%s2 + $0x1358] sm:$0xff]
    %v669 = vld [vmem:[%s2 + $0x1360] sm:$0xff]
    %v670 = vld [vmem:[%s2 + $0x1368] sm:$0xff]
    %v671 = vld [vmem:[%s2 + $0x1370] sm:$0xff]
    %v672 = vld [vmem:[%s2 + $0x1378] sm:$0xff]
    %v673 = vld [vmem:[%s2 + $0x1380] sm:$0xff]
    %v674 = vld [vmem:[%s2 + $0x1388] sm:$0xff]
    %v675 = vld [vmem:[%s2 + $0x1390] sm:$0xff]
    %v676 = vld [vmem:[%s2 + $0x1398] sm:$0xff]
    %v677 = vld [vmem:[%s2 + $0x13a0] sm:$0xff]
    %v678 = vld [vmem:[%s2 + $0x13a8] sm:$0xff]
    %v679 = vld [vmem:[%s2 + $0x13b0] sm:$0xff]
    %v680 = vld [vmem:[%s2 + $0x13b8] sm:$0xff]
    %v681 = vld [vmem:[%s2 + $0x13c0] sm:$0xff]
    %v682 = vld [vmem:[%s2 + $0x13c8] sm:$0xff]
    %v683 = vld [vmem:[%s2 + $0x13d0] sm:$0xff]
    %v684 = vld [vmem:[%s2 + $0x13d8] sm:$0xff]
    %v685 = vld [vmem:[%s2 + $0x13e0] sm:$0xff]
    %v686 = vld [vmem:[%s2 + $0x13e8] sm:$0xff]
    %v687 = vld [vmem:[%s2 + $0x13f0] sm:$0xff]
    %v688 = vld [vmem:[%s2 + $0x13f8] sm:$0xff]
    %v689 = vld [vmem:[%s2 + $0x1400] sm:$0xff]
    %v690 = vld [vmem:[%s2 + $0x1408] sm:$0xff]
    %v691 = vld [vmem:[%s2 + $0x1410] sm:$0xff]
    %v692 = vld [vmem:[%s2 + $0x1418] sm:$0xff]
    %v693 = vld [vmem:[%s2 + $0x1420] sm:$0xff]
    %v694 = vld [vmem:[%s2 + $0x1428] sm:$0xff]
    %v695 = vld [vmem:[%s2 + $0x1430] sm:$0xff]
    %v696 = vld [vmem:[%s2 + $0x1438] sm:$0xff]
    %v697 = vld [vmem:[%s2 + $0x1440] sm:$0xff]
    %v698 = vld [vmem:[%s2 + $0x1448] sm:$0xff]
    %v699 = vld [vmem:[%s2 + $0x1450] sm:$0xff]
    %v700 = vld [vmem:[%s2 + $0x1458] sm:$0xff]
    %v701 = vld [vmem:[%s2 + $0x1460] sm:$0xff]
    %v702 = vld [vmem:[%s2 + $0x1468] sm:$0xff]
    %v703 = vld [vmem:[%s2 + $0x1470] sm:$0xff]
    %v704 = vld [vmem:[%s2 + $0x1478] sm:$0xff]
    %v705 = vld [vmem:[%s2 + $0x1480] sm:$0xff]
    %v706 = vld [vmem:[%s2 + $0x1488] sm:$0xff]
    %v707 = vld [vmem:[%s2 + $0x1490] sm:$0xff]
    %v708 = vld [vmem:[%s2 + $0x1498] sm:$0xff]
    %v709 = vld [vmem:[%s2 + $0x14a0] sm:$0xff]
    %v710 = vld [vmem:[%s2 + $0x14a8] sm:$0xff]
    %v711 = vld [vmem:[%s2 + $0x14b0] sm:$0xff]
    %v712 = vld [vmem:[%s2 + $0x14b8] sm:$0xff]
    %v713 = vld [vmem:[%s2 + $0x14c0] sm:$0xff]
    %v714 = vld [vmem:[%s2 + $0x14c8] sm:$0xff]
    %v715 = vld [vmem:[%s2 + $0x14d0] sm:$0xff]
    %v716 = vld [vmem:[%s2 + $0x14d8] sm:$0xff]
    %v717 = vld [vmem:[%s2 + $0x14e0] sm:$0xff]
    %v718 = vld [vmem:[%s2 + $0x14e8] sm:$0xff]
    %v719 = vld [vmem:[%s2 + $0x14f0] sm:$0xff]
    %v720 = vld [vmem:[%s2 + $0x14f8] sm:$0xff]
    %v721 = vld [vmem:[%s2 + $0x1500] sm:$0xff]
    %v722 = vld [vmem:[%s2 + $0x1508] sm:$0xff]
    %v723 = vld [vmem:[%s2 + $0x1510] sm:$0xff]
    %v724 = vld [vmem:[%s2 + $0x1518] sm:$0xff]
    %v725 = vld [vmem:[%s2 + $0x1520] sm:$0xff]
    %v726 = vld [vmem:[%s2 + $0x1528] sm:$0xff]
    %v727 = vld [vmem:[%s2 + $0x1530] sm:$0xff]
    %v728 = vld [vmem:[%s2 + $0x1538] sm:$0xff]
    %v729 = vld [vmem:[%s2 + $0x1540] sm:$0xff]
    %v730 = vld [vmem:[%s2 + $0x1548] sm:$0xff]
    %v731 = vld [vmem:[%s2 + $0x1550] sm:$0xff]
    %v732 = vld [vmem:[%s2 + $0x1558] sm:$0xff]
    %v733 = vld [vmem:[%s2 + $0x1560] sm:$0xff]
    %v734 = vld [vmem:[%s2 + $0x1568] sm:$0xff]
    %v735 = vld [vmem:[%s2 + $0x1570] sm:$0xff]
    %v736 = vld [vmem:[%s2 + $0x1578] sm:$0xff]
    %v737 = vld [vmem:[%s2 + $0x1580] sm:$0xff]
    %v738 = vld [vmem:[%s2 + $0x1588] sm:$0xff]
    %v739 = vld [vmem:[%s2 + $0x1590] sm:$0xff]
    %v740 = vld [vmem:[%s2 + $0x1598] sm:$0xff]
    %v741 = vld [vmem:[%s2 + $0x15a0] sm:$0xff]
    %v742 = vld [vmem:[%s2 + $0x15a8] sm:$0xff]
    %v743 = vld [vmem:[%s2 + $0x15b0] sm:$0xff]
    %v744 = vld [vmem:[%s2 + $0x15b8] sm:$0xff]
    %v745 = vld [vmem:[%s2 + $0x15c0] sm:$0xff]
    %v746 = vld [vmem:[%s2 + $0x15c8] sm:$0xff]
    %v747 = vld [vmem:[%s2 + $0x15d0] sm:$0xff]
    %v748 = vld [vmem:[%s2 + $0x15d8] sm:$0xff]
    %v749 = vld [vmem:[%s2 + $0x15e0] sm:$0xff]
    %v750 = vld [vmem:[%s2 + $0x15e8] sm:$0xff]
    %v751 = vld [vmem:[%s2 + $0x15f0] sm:$0xff]
    %v752 = vld [vmem:[%s2 + $0x15f8] sm:$0xff]
    %v753 = vld [vmem:[%s2 + $0x1600] sm:$0xff]
    %v754 = vld [vmem:[%s2 + $0x1608] sm:$0xff]
    %v755 = vld [vmem:[%s2 + $0x1610] sm:$0xff]
    %v756 = vld [vmem:[%s2 + $0x1618] sm:$0xff]
    %v757 = vld [vmem:[%s2 + $0x1620] sm:$0xff]
    %v758 = vld [vmem:[%s2 + $0x1628] sm:$0xff]
    %v759 = vld [vmem:[%s2 + $0x1630] sm:$0xff]
    %v760 = vld [vmem:[%s2 + $0x1638] sm:$0xff]
    %v761 = vld [vmem:[%s2 + $0x1640] sm:$0xff]
    %v762 = vld [vmem:[%s2 + $0x1648] sm:$0xff]
    %v763 = vld [vmem:[%s2 + $0x1650] sm:$0xff]
    %v764 = vld [vmem:[%s2 + $0x1658] sm:$0xff]
    %v765 = vld [vmem:[%s2 + $0x1660] sm:$0xff]
    %v766 = vld [vmem:[%s2 + $0x1668] sm:$0xff]
    %v767 = vld [vmem:[%s2 + $0x1670] sm:$0xff]
    %v768 = vld [vmem:[%s2 + $0x1678] sm:$0xff]
    %v769 = vld [vmem:[%s2 + $0x1680] sm:$0xff]
    %v770 = vld [vmem:[%s2 + $0x1688] sm:$0xff]
    %v771 = vld [vmem:[%s2 + $0x1690] sm:$0xff]
    %v772 = vld [vmem:[%s2 + $0x1698] sm:$0xff]
    %v773 = vld [vmem:[%s2 + $0x16a0] sm:$0xff]
    %v774 = vld [vmem:[%s2 + $0x16a8] sm:$0xff]
    %v775 = vld [vmem:[%s2 + $0x16b0] sm:$0xff]
    %v776 = vld [vmem:[%s2 + $0x16b8] sm:$0xff]
    %v777 = vld [vmem:[%s2 + $0x16c0] sm:$0xff]
    %v778 = vld [vmem:[%s2 + $0x16c8] sm:$0xff]
    %v779 = vld [vmem:[%s2 + $0x16d0] sm:$0xff]
    %v780 = vld [vmem:[%s2 + $0x16d8] sm:$0xff]
    %v781 = vld [vmem:[%s2 + $0x16e0] sm:$0xff]
    %v782 = vld [vmem:[%s2 + $0x16e8] sm:$0xff]
    %v783 = vld [vmem:[%s2 + $0x16f0] sm:$0xff]
    %v784 = vld [vmem:[%s2 + $0x16f8] sm:$0xff]
    %v785 = vld [vmem:[%s2 + $0x1700] sm:$0xff]
    %v786 = vld [vmem:[%s2 + $0x1708] sm:$0xff]
    %v787 = vld [vmem:[%s2 + $0x1710] sm:$0xff]
    %v788 = vld [vmem:[%s2 + $0x1718] sm:$0xff]
    %v789 = vld [vmem:[%s2 + $0x1720] sm:$0xff]
    %v790 = vld [vmem:[%s2 + $0x1728] sm:$0xff]
    %v791 = vld [vmem:[%s2 + $0x1730] sm:$0xff]
    %v792 = vld [vmem:[%s2 + $0x1738] sm:$0xff]
    %v793 = vld [vmem:[%s2 + $0x1740] sm:$0xff]
    %v794 = vld [vmem:[%s2 + $0x1748] sm:$0xff]
    %v795 = vld [vmem:[%s2 + $0x1750] sm:$0xff]
    %v796 = vld [vmem:[%s2 + $0x1758] sm:$0xff]
    %v797 = vld [vmem:[%s2 + $0x1760] sm:$0xff]
    %v798 = vld [vmem:[%s2 + $0x1768] sm:$0xff]
    %v799 = vld [vmem:[%s2 + $0x1770] sm:$0xff]
    %v800 = vld [vmem:[%s2 + $0x1778] sm:$0xff]
    %v801 = vld [vmem:[%s2 + $0x1780] sm:$0xff]
    %v802 = vld [vmem:[%s2 + $0x1788] sm:$0xff]
    %v803 = vld [vmem:[%s2 + $0x1790] sm:$0xff]
    %v804 = vld [vmem:[%s2 + $0x1798] sm:$0xff]
    %v805 = vld [vmem:[%s2 + $0x17a0] sm:$0xff]
    %v806 = vld [vmem:[%s2 + $0x17a8] sm:$0xff]
    %v807 = vld [vmem:[%s2 + $0x17b0] sm:$0xff]
    %v808 = vld [vmem:[%s2 + $0x17b8] sm:$0xff]
    %v809 = vld [vmem:[%s2 + $0x17c0] sm:$0xff]
    %v810 = vld [vmem:[%s2 + $0x17c8] sm:$0xff]
    %v811 = vld [vmem:[%s2 + $0x17d0] sm:$0xff]
    %v812 = vld [vmem:[%s2 + $0x17d8] sm:$0xff]
    %v813 = vld [vmem:[%s2 + $0x17e0] sm:$0xff]
    %v814 = vld [vmem:[%s2 + $0x17e8] sm:$0xff]
    %v815 = vld [vmem:[%s2 + $0x17f0] sm:$0xff]
    %v816 = vld [vmem:[%s2 + $0x17f8] sm:$0xff]
    %v817 = vld [vmem:[%s2 + $0x1800] sm:$0xff]
    %v818 = vld [vmem:[%s2 + $0x1808] sm:$0xff]
    %v819 = vld [vmem:[%s2 + $0x1810] sm:$0xff]
    %v820 = vld [vmem:[%s2 + $0x1818] sm:$0xff]
    %v821 = vld [vmem:[%s2 + $0x1820] sm:$0xff]
    %v822 = vld [vmem:[%s2 + $0x1828] sm:$0xff]
    %v823 = vld [vmem:[%s2 + $0x1830] sm:$0xff]
    %v824 = vld [vmem:[%s2 + $0x1838] sm:$0xff]
    %v825 = vld [vmem:[%s2 + $0x1840] sm:$0xff]
    %v826 = vld [vmem:[%s2 + $0x1848] sm:$0xff]
    %v827 = vld [vmem:[%s2 + $0x1850] sm:$0xff]
    %v828 = vld [vmem:[%s2 + $0x1858] sm:$0xff]
    %v829 = vld [vmem:[%s2 + $0x1860] sm:$0xff]
    %v830 = vld [vmem:[%s2 + $0x1868] sm:$0xff]
    %v831 = vld [vmem:[%s2 + $0x1870] sm:$0xff]
    %v832 = vld [vmem:[%s2 + $0x1878] sm:$0xff]
    %v833 = vld [vmem:[%s2 + $0x1880] sm:$0xff]
    %v834 = vld [vmem:[%s2 + $0x1888] sm:$0xff]
    %v835 = vld [vmem:[%s2 + $0x1890] sm:$0xff]
    %v836 = vld [vmem:[%s2 + $0x1898] sm:$0xff]
    %v837 = vld [vmem:[%s2 + $0x18a0] sm:$0xff]
    %v838 = vld [vmem:[%s2 + $0x18a8] sm:$0xff]
    %v839 = vld [vmem:[%s2 + $0x18b0] sm:$0xff]
    %v840 = vld [vmem:[%s2 + $0x18b8] sm:$0xff]
    %v841 = vld [vmem:[%s2 + $0x18c0] sm:$0xff]
    %v842 = vld [vmem:[%s2 + $0x18c8] sm:$0xff]
    %v843 = vld [vmem:[%s2 + $0x18d0] sm:$0xff]
    %v844 = vld [vmem:[%s2 + $0x18d8] sm:$0xff]
    %v845 = vld [vmem:[%s2 + $0x18e0] sm:$0xff]
    %v846 = vld [vmem:[%s2 + $0x18e8] sm:$0xff]
    %v847 = vld [vmem:[%s2 + $0x18f0] sm:$0xff]
    %v848 = vld [vmem:[%s2 + $0x18f8] sm:$0xff]
    %v849 = vld [vmem:[%s2 + $0x1900] sm:$0xff]
    %v850 = vld [vmem:[%s2 + $0x1908] sm:$0xff]
    %v851 = vld [vmem:[%s2 + $0x1910] sm:$0xff]
    %v852 = vld [vmem:[%s2 + $0x1918] sm:$0xff]
    %v853 = vld [vmem:[%s2 + $0x1920] sm:$0xff]
    %v854 = vld [vmem:[%s2 + $0x1928] sm:$0xff]
    %v855 = vld [vmem:[%s2 + $0x1930] sm:$0xff]
    %v856 = vld [vmem:[%s2 + $0x1938] sm:$0xff]
    %v857 = vld [vmem:[%s2 + $0x1940] sm:$0xff]
    %v858 = vld [vmem:[%s2 + $0x1948] sm:$0xff]
    %v859 = vld [vmem:[%s2 + $0x1950] sm:$0xff]
    %v860 = vld [vmem:[%s2 + $0x1958] sm:$0xff]
    %v861 = vld [vmem:[%s2 + $0x1960] sm:$0xff]
    %v862 = vld [vmem:[%s2 + $0x1968] sm:$0xff]
    %v863 = vld [vmem:[%s2 + $0x1970] sm:$0xff]
    %v864 = vld [vmem:[%s2 + $0x1978] sm:$0xff]
    %v865 = vld [vmem:[%s2 + $0x1980] sm:$0xff]
    %v866 = vld [vmem:[%s2 + $0x1988] sm:$0xff]
    %v867 = vld [vmem:[%s2 + $0x1990] sm:$0xff]
    %v868 = vld [vmem:[%s2 + $0x1998] sm:$0xff]
    %v869 = vld [vmem:[%s2 + $0x19a0] sm:$0xff]
    %v870 = vld [vmem:[%s2 + $0x19a8] sm:$0xff]
    %v871 = vld [vmem:[%s2 + $0x19b0] sm:$0xff]
    %v872 = vld [vmem:[%s2 + $0x19b8] sm:$0xff]
    %v873 = vld [vmem:[%s2 + $0x19c0] sm:$0xff]
    %v874 = vld [vmem:[%s2 + $0x19c8] sm:$0xff]
    %v875 = vld [vmem:[%s2 + $0x19d0] sm:$0xff]
    %v876 = vld [vmem:[%s2 + $0x19d8] sm:$0xff]
    %v877 = vld [vmem:[%s2 + $0x19e0] sm:$0xff]
    %v878 = vld [vmem:[%s2 + $0x19e8] sm:$0xff]
    %v879 = vld [vmem:[%s2 + $0x19f0] sm:$0xff]
    %v880 = vld [vmem:[%s2 + $0x19f8] sm:$0xff]
    %v881 = vld [vmem:[%s2 + $0x1a00] sm:$0xff]
    %v882 = vld [vmem:[%s2 + $0x1a08] sm:$0xff]
    %v883 = vld [vmem:[%s2 + $0x1a10] sm:$0xff]
    %v884 = vld [vmem:[%s2 + $0x1a18] sm:$0xff]
    %v885 = vld [vmem:[%s2 + $0x1a20] sm:$0xff]
    %v886 = vld [vmem:[%s2 + $0x1a28] sm:$0xff]
    %v887 = vld [vmem:[%s2 + $0x1a30] sm:$0xff]
    %v888 = vld [vmem:[%s2 + $0x1a38] sm:$0xff]
    %v889 = vld [vmem:[%s2 + $0x1a40] sm:$0xff]
    %v890 = vld [vmem:[%s2 + $0x1a48] sm:$0xff]
    %v891 = vld [vmem:[%s2 + $0x1a50] sm:$0xff]
    %v892 = vld [vmem:[%s2 + $0x1a58] sm:$0xff]
    %v893 = vld [vmem:[%s2 + $0x1a60] sm:$0x3]
    %v894 = vld [vmem:[%s2 + $0x1a68] sm:$0x3]
    %v895 = vld [vmem:[%s2 + $0x1a70] sm:$0x3]
    %v896 = vld [vmem:[%s2 + $0x1a78] sm:$0x3]
    %v897 = vld [vmem:[%s1] sm:$0x3]
    %v898 = vld [vmem:[%s3] sm:$0x77]
    %v899 = vld [vmem:[%s3 + $0x8] sm:$0x77]
    %902 = vst [vmem:[#allocation1] ss:$2 sm:$0xff] %v898
    %s903 = scalar_lea.vmem [#allocation1], 16
    %904 = vst [vmem:[%s903] ss:$2 sm:$0xff] %v899
    %v905 = vld.sshfl [vmem:[#allocation1] sm:$0xff pattern:$0x75316420]
    %v906 = vld.sshfl [vmem:[#allocation1 + $0x8] sm:$0xff pattern:$0x75316420]
    %v907 = vld.sshfl [vmem:[#allocation1 + $0x10] sm:$0xff pattern:$0x75316420]
    %v908 = vld.sshfl [vmem:[#allocation1 + $0x18] sm:$0xff pattern:$0x75316420]
    %vm909 = vcmask 23552
    %v911 = vsel %vm909, %v897, 0
    %vm913 = vcmask 1042432
    %v914 = vsel %vm913, %v905, 0
    %v916 = vsel %vm913, %v906, 0
    %v918 = vsel %vm913, %v907, 0
    %v920 = vsel %vm913, %v908, 0
    %922 = vmatpush.msra.mxu0 0.0
    %923 = vmatpush.msra.mxu0 0.0
    %924 = vmatpush.msra.mxu0 0.0
    %925 = vmatpush.msra.mxu0 0.0
    %926 = vmatpush.msra.mxu0 0.0
    %927 = vmatpush.msra.mxu0 0.0
    %928 = vmatpush.msra.mxu0 0.0
    %929 = vmatpush.msra.mxu0 0.0
    %930 = vmatpush.msra.mxu0 0.0
    %931 = vmatpush.msra.mxu0 0.0
    %932 = vmatpush.msra.mxu0 0.0
    %933 = vmatpush.msra.mxu0 0.0
    %934 = vmatpush.msra.mxu0 0.0
    %935 = vmatpush.msra.mxu0 0.0
    %936 = vmatpush.msra.mxu0 0.0
    %937 = vmatpush.msra.mxu0 %v914
    %938 = vmatmul.f32.gmra.mxu0 %v911
    %v939 = vpop.f32.mrf.mxu0
    %v940 = vadd.f32 0.0, %v939
    %941 = vdwg.mxu0
    %942 = vmatpush.msra.mxu0 0.0
    %943 = vmatpush.msra.mxu0 0.0
    %944 = vmatpush.msra.mxu0 0.0
    %945 = vmatpush.msra.mxu0 0.0
    %946 = vmatpush.msra.mxu0 0.0
    %947 = vmatpush.msra.mxu0 0.0
    %948 = vmatpush.msra.mxu0 0.0
    %949 = vmatpush.msra.mxu0 0.0
    %950 = vmatpush.msra.mxu0 0.0
    %951 = vmatpush.msra.mxu0 0.0
    %952 = vmatpush.msra.mxu0 0.0
    %953 = vmatpush.msra.mxu0 0.0
    %954 = vmatpush.msra.mxu0 0.0
    %955 = vmatpush.msra.mxu0 0.0
    %956 = vmatpush.msra.mxu0 0.0
    %957 = vmatpush.msra.mxu0 %v916
    %958 = vmatmul.f32.gmra.mxu0 %v911
    %v959 = vpop.f32.mrf.mxu0
    %v960 = vadd.f32 0.0, %v959
    %961 = vdwg.mxu0
    %962 = vmatpush.msra.mxu0 0.0
    %963 = vmatpush.msra.mxu0 0.0
    %964 = vmatpush.msra.mxu0 0.0
    %965 = vmatpush.msra.mxu0 0.0
    %966 = vmatpush.msra.mxu0 0.0
    %967 = vmatpush.msra.mxu0 0.0
    %968 = vmatpush.msra.mxu0 0.0
    %969 = vmatpush.msra.mxu0 0.0
    %970 = vmatpush.msra.mxu0 0.0
    %971 = vmatpush.msra.mxu0 0.0
    %972 = vmatpush.msra.mxu0 0.0
    %973 = vmatpush.msra.mxu0 0.0
    %974 = vmatpush.msra.mxu0 0.0
    %975 = vmatpush.msra.mxu0 0.0
    %976 = vmatpush.msra.mxu0 0.0
    %977 = vmatpush.msra.mxu0 %v918
    %978 = vmatmul.f32.gmra.mxu0 %v911
    %v979 = vpop.f32.mrf.mxu0
    %v980 = vadd.f32 0.0, %v979
    %981 = vdwg.mxu0
    %982 = vmatpush.msra.mxu0 0.0
    %983 = vmatpush.msra.mxu0 0.0
    %984 = vmatpush.msra.mxu0 0.0
    %985 = vmatpush.msra.mxu0 0.0
    %986 = vmatpush.msra.mxu0 0.0
    %987 = vmatpush.msra.mxu0 0.0
    %988 = vmatpush.msra.mxu0 0.0
    %989 = vmatpush.msra.mxu0 0.0
    %990 = vmatpush.msra.mxu0 0.0
    %991 = vmatpush.msra.mxu0 0.0
    %992 = vmatpush.msra.mxu0 0.0
    %993 = vmatpush.msra.mxu0 0.0
    %994 = vmatpush.msra.mxu0 0.0
    %995 = vmatpush.msra.mxu0 0.0
    %996 = vmatpush.msra.mxu0 0.0
    %997 = vmatpush.msra.mxu0 %v920
    %998 = vmatmul.f32.gmra.mxu0 %v911
    %v999 = vpop.f32.mrf.mxu0
    %v1000 = vadd.f32 0.0, %v999
    %1001 = vdwg.mxu0
    %1006 = vst [vmem:[#allocation1] ss:$4 sm:$0xff] %v45
    %s1007 = scalar_lea.vmem [#allocation1], 32
    %1008 = vst [vmem:[%s1007] ss:$4 sm:$0xff] %v46
    %v1009 = vld.sshfl [vmem:[#allocation1] sm:$0xff pattern:$0x73625140]
    %v1010 = vld.sshfl [vmem:[#allocation1 + $0x8] sm:$0xff pattern:$0x73625140]
    %v1011 = vld.sshfl [vmem:[#allocation1 + $0x10] sm:$0xff pattern:$0x73625140]
    %v1012 = vld.sshfl [vmem:[#allocation1 + $0x18] sm:$0xff pattern:$0x73625140]
    %v1013 = vld.sshfl [vmem:[#allocation1 + $0x20] sm:$0xff pattern:$0x73625140]
    %v1014 = vld.sshfl [vmem:[#allocation1 + $0x28] sm:$0xff pattern:$0x73625140]
    %v1015 = vld.sshfl [vmem:[#allocation1 + $0x30] sm:$0xff pattern:$0x73625140]
    %v1016 = vld.sshfl [vmem:[#allocation1 + $0x38] sm:$0xff pattern:$0x73625140]
    %1017 = vst [vmem:[#allocation1] ss:$4 sm:$0xff] %v47
    %1018 = vst [vmem:[%s1007] ss:$4 sm:$0xff] %v48
    %v1019 = vld.sshfl [vmem:[#allocation1] sm:$0xff pattern:$0x73625140]
    %v1020 = vld.sshfl [vmem:[#allocation1 + $0x8] sm:$0xff pattern:$0x73625140]
    %v1021 = vld.sshfl [vmem:[#allocation1 + $0x10] sm:$0xff pattern:$0x73625140]
    %v1022 = vld.sshfl [vmem:[#allocation1 + $0x18] sm:$0xff pattern:$0x73625140]
    %v1023 = vld.sshfl [vmem:[#allocation1 + $0x20] sm:$0xff pattern:$0x73625140]
    %v1024 = vld.sshfl [vmem:[#allocation1 + $0x28] sm:$0xff pattern:$0x73625140]
    %vm1038 = vcmask 211968
    %v1039 = vsel %vm1038, %v1024, 0
    %vm1041 = vcmask 1041408
    %v1043 = vsel %vm1041, %v893, 0
    %v1046 = vsel %vm1041, %v894, 0
    %v1049 = vsel %vm1041, %v895, 0
    %v1052 = vsel %vm1041, %v896, 0
    %1054 = vmatpush.msra.mxu0 %v109
    %1055 = vmatpush.msra.mxu0 %v105
    %1056 = vmatpush.msra.mxu0 %v101
    %1057 = vmatpush.msra.mxu0 %v97
    %1058 = vmatpush.msra.mxu0 %v93
    %1059 = vmatpush.msra.mxu0 %v89
    %1060 = vmatpush.msra.mxu0 %v85
    %1061 = vmatpush.msra.mxu0 %v81
    %1062 = vmatpush.msra.mxu0 %v77
    %1063 = vmatpush.msra.mxu0 %v73
    %1064 = vmatpush.msra.mxu0 %v69
    %1065 = vmatpush.msra.mxu0 %v65
    %1066 = vmatpush.msra.mxu0 %v61
    %1067 = vmatpush.msra.mxu0 %v57
    %1068 = vmatpush.msra.mxu0 %v53
    %1069 = vmatpush.msra.mxu0 %v49
    %1070 = vmatmul.f32.gmra.mxu0 %v1009
    %v1071 = vpop.f32.mrf.mxu0
    %v1072 = vadd.f32 %v940, %v1071
    %1073 = vdwg.mxu0
    %1074 = vmatpush.msra.mxu0 %v173
    %1075 = vmatpush.msra.mxu0 %v169
    %1076 = vmatpush.msra.mxu0 %v165
    %1077 = vmatpush.msra.mxu0 %v161
    %1078 = vmatpush.msra.mxu0 %v157
    %1079 = vmatpush.msra.mxu0 %v153
    %1080 = vmatpush.msra.mxu0 %v149
    %1081 = vmatpush.msra.mxu0 %v145
    %1082 = vmatpush.msra.mxu0 %v141
    %1083 = vmatpush.msra.mxu0 %v137
    %1084 = vmatpush.msra.mxu0 %v133
    %1085 = vmatpush.msra.mxu0 %v129
    %1086 = vmatpush.msra.mxu0 %v125
    %1087 = vmatpush.msra.mxu0 %v121
    %1088 = vmatpush.msra.mxu0 %v117
    %1089 = vmatpush.msra.mxu0 %v113
    %1090 = vmatmul.f32.gmra.mxu0 %v1010
    %v1091 = vpop.f32.mrf.mxu0
    %v1092 = vadd.f32 %v1072, %v1091
    %1093 = vdwg.mxu0
    %1094 = vmatpush.msra.mxu0 %v237
    %1095 = vmatpush.msra.mxu0 %v233
    %1096 = vmatpush.msra.mxu0 %v229
    %1097 = vmatpush.msra.mxu0 %v225
    %1098 = vmatpush.msra.mxu0 %v221
    %1099 = vmatpush.msra.mxu0 %v217
    %1100 = vmatpush.msra.mxu0 %v213
    %1101 = vmatpush.msra.mxu0 %v209
    %1102 = vmatpush.msra.mxu0 %v205
    %1103 = vmatpush.msra.mxu0 %v201
    %1104 = vmatpush.msra.mxu0 %v197
    %1105 = vmatpush.msra.mxu0 %v193
    %1106 = vmatpush.msra.mxu0 %v189
    %1107 = vmatpush.msra.mxu0 %v185
    %1108 = vmatpush.msra.mxu0 %v181
    %1109 = vmatpush.msra.mxu0 %v177
    %1110 = vmatmul.f32.gmra.mxu0 %v1011
    %v1111 = vpop.f32.mrf.mxu0
    %v1112 = vadd.f32 %v1092, %v1111
    %1113 = vdwg.mxu0
    %1114 = vmatpush.msra.mxu0 %v301
    %1115 = vmatpush.msra.mxu0 %v297
    %1116 = vmatpush.msra.mxu0 %v293
    %1117 = vmatpush.msra.mxu0 %v289
    %1118 = vmatpush.msra.mxu0 %v285
    %1119 = vmatpush.msra.mxu0 %v281
    %1120 = vmatpush.msra.mxu0 %v277
    %1121 = vmatpush.msra.mxu0 %v273
    %1122 = vmatpush.msra.mxu0 %v269
    %1123 = vmatpush.msra.mxu0 %v265
    %1124 = vmatpush.msra.mxu0 %v261
    %1125 = vmatpush.msra.mxu0 %v257
    %1126 = vmatpush.msra.mxu0 %v253
    %1127 = vmatpush.msra.mxu0 %v249
    %1128 = vmatpush.msra.mxu0 %v245
    %1129 = vmatpush.msra.mxu0 %v241
    %1130 = vmatmul.f32.gmra.mxu0 %v1012
    %v1131 = vpop.f32.mrf.mxu0
    %v1132 = vadd.f32 %v1112, %v1131
    %1133 = vdwg.mxu0
    %1134 = vmatpush.msra.mxu0 %v365
    %1135 = vmatpush.msra.mxu0 %v361
    %1136 = vmatpush.msra.mxu0 %v357
    %1137 = vmatpush.msra.mxu0 %v353
    %1138 = vmatpush.msra.mxu0 %v349
    %1139 = vmatpush.msra.mxu0 %v345
    %1140 = vmatpush.msra.mxu0 %v341
    %1141 = vmatpush.msra.mxu0 %v337
    %1142 = vmatpush.msra.mxu0 %v333
    %1143 = vmatpush.msra.mxu0 %v329
    %1144 = vmatpush.msra.mxu0 %v325
    %1145 = vmatpush.msra.mxu0 %v321
    %1146 = vmatpush.msra.mxu0 %v317
    %1147 = vmatpush.msra.mxu0 %v313
    %1148 = vmatpush.msra.mxu0 %v309
    %1149 = vmatpush.msra.mxu0 %v305
    %1150 = vmatmul.f32.gmra.mxu0 %v1013
    %v1151 = vpop.f32.mrf.mxu0
    %v1152 = vadd.f32 %v1132, %v1151
    %1153 = vdwg.mxu0
    %1154 = vmatpush.msra.mxu0 %v429
    %1155 = vmatpush.msra.mxu0 %v425
    %1156 = vmatpush.msra.mxu0 %v421
    %1157 = vmatpush.msra.mxu0 %v417
    %1158 = vmatpush.msra.mxu0 %v413
    %1159 = vmatpush.msra.mxu0 %v409
    %1160 = vmatpush.msra.mxu0 %v405
    %1161 = vmatpush.msra.mxu0 %v401
    %1162 = vmatpush.msra.mxu0 %v397
    %1163 = vmatpush.msra.mxu0 %v393
    %1164 = vmatpush.msra.mxu0 %v389
    %1165 = vmatpush.msra.mxu0 %v385
    %1166 = vmatpush.msra.mxu0 %v381
    %1167 = vmatpush.msra.mxu0 %v377
    %1168 = vmatpush.msra.mxu0 %v373
    %1169 = vmatpush.msra.mxu0 %v369
    %1170 = vmatmul.f32.gmra.mxu0 %v1014
    %v1171 = vpop.f32.mrf.mxu0
    %v1172 = vadd.f32 %v1152, %v1171
    %1173 = vdwg.mxu0
    %1174 = vmatpush.msra.mxu0 %v493
    %1175 = vmatpush.msra.mxu0 %v489
    %1176 = vmatpush.msra.mxu0 %v485
    %1177 = vmatpush.msra.mxu0 %v481
    %1178 = vmatpush.msra.mxu0 %v477
    %1179 = vmatpush.msra.mxu0 %v473
    %1180 = vmatpush.msra.mxu0 %v469
    %1181 = vmatpush.msra.mxu0 %v465
    %1182 = vmatpush.msra.mxu0 %v461
    %1183 = vmatpush.msra.mxu0 %v457
    %1184 = vmatpush.msra.mxu0 %v453
    %1185 = vmatpush.msra.mxu0 %v449
    %1186 = vmatpush.msra.mxu0 %v445
    %1187 = vmatpush.msra.mxu0 %v441
    %1188 = vmatpush.msra.mxu0 %v437
    %1189 = vmatpush.msra.mxu0 %v433
    %1190 = vmatmul.f32.gmra.mxu0 %v1015
    %v1191 = vpop.f32.mrf.mxu0
    %v1192 = vadd.f32 %v1172, %v1191
    %1193 = vdwg.mxu0
    %1194 = vmatpush.msra.mxu0 %v557
    %1195 = vmatpush.msra.mxu0 %v553
    %1196 = vmatpush.msra.mxu0 %v549
    %1197 = vmatpush.msra.mxu0 %v545
    %1198 = vmatpush.msra.mxu0 %v541
    %1199 = vmatpush.msra.mxu0 %v537
    %1200 = vmatpush.msra.mxu0 %v533
    %1201 = vmatpush.msra.mxu0 %v529
    %1202 = vmatpush.msra.mxu0 %v525
    %1203 = vmatpush.msra.mxu0 %v521
    %1204 = vmatpush.msra.mxu0 %v517
    %1205 = vmatpush.msra.mxu0 %v513
    %1206 = vmatpush.msra.mxu0 %v509
    %1207 = vmatpush.msra.mxu0 %v505
    %1208 = vmatpush.msra.mxu0 %v501
    %1209 = vmatpush.msra.mxu0 %v497
    %1210 = vmatmul.f32.gmra.mxu0 %v1016
    %v1211 = vpop.f32.mrf.mxu0
    %v1212 = vadd.f32 %v1192, %v1211
    %1213 = vdwg.mxu0
    %1214 = vmatpush.msra.mxu0 %v621
    %1215 = vmatpush.msra.mxu0 %v617
    %1216 = vmatpush.msra.mxu0 %v613
    %1217 = vmatpush.msra.mxu0 %v609
    %1218 = vmatpush.msra.mxu0 %v605
    %1219 = vmatpush.msra.mxu0 %v601
    %1220 = vmatpush.msra.mxu0 %v597
    %1221 = vmatpush.msra.mxu0 %v593
    %1222 = vmatpush.msra.mxu0 %v589
    %1223 = vmatpush.msra.mxu0 %v585
    %1224 = vmatpush.msra.mxu0 %v581
    %1225 = vmatpush.msra.mxu0 %v577
    %1226 = vmatpush.msra.mxu0 %v573
    %1227 = vmatpush.msra.mxu0 %v569
    %1228 = vmatpush.msra.mxu0 %v565
    %1229 = vmatpush.msra.mxu0 %v561
    %1230 = vmatmul.f32.gmra.mxu0 %v1019
    %v1231 = vpop.f32.mrf.mxu0
    %v1232 = vadd.f32 %v1212, %v1231
    %1233 = vdwg.mxu0
    %1234 = vmatpush.msra.mxu0 %v685
    %1235 = vmatpush.msra.mxu0 %v681
    %1236 = vmatpush.msra.mxu0 %v677
    %1237 = vmatpush.msra.mxu0 %v673
    %1238 = vmatpush.msra.mxu0 %v669
    %1239 = vmatpush.msra.mxu0 %v665
    %1240 = vmatpush.msra.mxu0 %v661
    %1241 = vmatpush.msra.mxu0 %v657
    %1242 = vmatpush.msra.mxu0 %v653
    %1243 = vmatpush.msra.mxu0 %v649
    %1244 = vmatpush.msra.mxu0 %v645
    %1245 = vmatpush.msra.mxu0 %v641
    %1246 = vmatpush.msra.mxu0 %v637
    %1247 = vmatpush.msra.mxu0 %v633
    %1248 = vmatpush.msra.mxu0 %v629
    %1249 = vmatpush.msra.mxu0 %v625
    %1250 = vmatmul.f32.gmra.mxu0 %v1020
    %v1251 = vpop.f32.mrf.mxu0
    %v1252 = vadd.f32 %v1232, %v1251
    %1253 = vdwg.mxu0
    %1254 = vmatpush.msra.mxu0 %v749
    %1255 = vmatpush.msra.mxu0 %v745
    %1256 = vmatpush.msra.mxu0 %v741
    %1257 = vmatpush.msra.mxu0 %v737
    %1258 = vmatpush.msra.mxu0 %v733
    %1259 = vmatpush.msra.mxu0 %v729
    %1260 = vmatpush.msra.mxu0 %v725
    %1261 = vmatpush.msra.mxu0 %v721
    %1262 = vmatpush.msra.mxu0 %v717
    %1263 = vmatpush.msra.mxu0 %v713
    %1264 = vmatpush.msra.mxu0 %v709
    %1265 = vmatpush.msra.mxu0 %v705
    %1266 = vmatpush.msra.mxu0 %v701
    %1267 = vmatpush.msra.mxu0 %v697
    %1268 = vmatpush.msra.mxu0 %v693
    %1269 = vmatpush.msra.mxu0 %v689
    %1270 = vmatmul.f32.gmra.mxu0 %v1021
    %v1271 = vpop.f32.mrf.mxu0
    %v1272 = vadd.f32 %v1252, %v1271
    %1273 = vdwg.mxu0
    %1274 = vmatpush.msra.mxu0 %v813
    %1275 = vmatpush.msra.mxu0 %v809
    %1276 = vmatpush.msra.mxu0 %v805
    %1277 = vmatpush.msra.mxu0 %v801
    %1278 = vmatpush.msra.mxu0 %v797
    %1279 = vmatpush.msra.mxu0 %v793
    %1280 = vmatpush.msra.mxu0 %v789
    %1281 = vmatpush.msra.mxu0 %v785
    %1282 = vmatpush.msra.mxu0 %v781
    %1283 = vmatpush.msra.mxu0 %v777
    %1284 = vmatpush.msra.mxu0 %v773
    %1285 = vmatpush.msra.mxu0 %v769
    %1286 = vmatpush.msra.mxu0 %v765
    %1287 = vmatpush.msra.mxu0 %v761
    %1288 = vmatpush.msra.mxu0 %v757
    %1289 = vmatpush.msra.mxu0 %v753
    %1290 = vmatmul.f32.gmra.mxu0 %v1022
    %v1291 = vpop.f32.mrf.mxu0
    %v1292 = vadd.f32 %v1272, %v1291
    %1293 = vdwg.mxu0
    %1294 = vmatpush.msra.mxu0 %v877
    %1295 = vmatpush.msra.mxu0 %v873
    %1296 = vmatpush.msra.mxu0 %v869
    %1297 = vmatpush.msra.mxu0 %v865
    %1298 = vmatpush.msra.mxu0 %v861
    %1299 = vmatpush.msra.mxu0 %v857
    %1300 = vmatpush.msra.mxu0 %v853
    %1301 = vmatpush.msra.mxu0 %v849
    %1302 = vmatpush.msra.mxu0 %v845
    %1303 = vmatpush.msra.mxu0 %v841
    %1304 = vmatpush.msra.mxu0 %v837
    %1305 = vmatpush.msra.mxu0 %v833
    %1306 = vmatpush.msra.mxu0 %v829
    %1307 = vmatpush.msra.mxu0 %v825
    %1308 = vmatpush.msra.mxu0 %v821
    %1309 = vmatpush.msra.mxu0 %v817
    %1310 = vmatmul.f32.gmra.mxu0 %v1023
    %v1311 = vpop.f32.mrf.mxu0
    %v1312 = vadd.f32 %v1292, %v1311
    %1313 = vdwg.mxu0
    %1314 = vmatpush.msra.mxu0 0.0
    %1315 = vmatpush.msra.mxu0 0.0
    %1316 = vmatpush.msra.mxu0 0.0
    %1317 = vmatpush.msra.mxu0 0.0
    %1318 = vmatpush.msra.mxu0 0.0
    %1319 = vmatpush.msra.mxu0 0.0
    %1320 = vmatpush.msra.mxu0 0.0
    %1321 = vmatpush.msra.mxu0 0.0
    %1322 = vmatpush.msra.mxu0 0.0
    %1323 = vmatpush.msra.mxu0 0.0
    %1324 = vmatpush.msra.mxu0 0.0
    %1325 = vmatpush.msra.mxu0 0.0
    %1326 = vmatpush.msra.mxu0 %v1043
    %1327 = vmatpush.msra.mxu0 %v889
    %1328 = vmatpush.msra.mxu0 %v885
    %1329 = vmatpush.msra.mxu0 %v881
    %1330 = vmatmul.f32.gmra.mxu0 %v1039
    %v1331 = vpop.f32.mrf.mxu0
    %v1332 = vadd.f32 %v1312, %v1331
    %1333 = vdwg.mxu0
    %1334 = vmatpush.msra.mxu0 %v110
    %1335 = vmatpush.msra.mxu0 %v106
    %1336 = vmatpush.msra.mxu0 %v102
    %1337 = vmatpush.msra.mxu0 %v98
    %1338 = vmatpush.msra.mxu0 %v94
    %1339 = vmatpush.msra.mxu0 %v90
    %1340 = vmatpush.msra.mxu0 %v86
    %1341 = vmatpush.msra.mxu0 %v82
    %1342 = vmatpush.msra.mxu0 %v78
    %1343 = vmatpush.msra.mxu0 %v74
    %1344 = vmatpush.msra.mxu0 %v70
    %1345 = vmatpush.msra.mxu0 %v66
    %1346 = vmatpush.msra.mxu0 %v62
    %1347 = vmatpush.msra.mxu0 %v58
    %1348 = vmatpush.msra.mxu0 %v54
    %1349 = vmatpush.msra.mxu0 %v50
    %1350 = vmatmul.f32.gmra.mxu0 %v1009
    %v1351 = vpop.f32.mrf.mxu0
    %v1352 = vadd.f32 %v960, %v1351
    %1353 = vdwg.mxu0
    %1354 = vmatpush.msra.mxu0 %v174
    %1355 = vmatpush.msra.mxu0 %v170
    %1356 = vmatpush.msra.mxu0 %v166
    %1357 = vmatpush.msra.mxu0 %v162
    %1358 = vmatpush.msra.mxu0 %v158
    %1359 = vmatpush.msra.mxu0 %v154
    %1360 = vmatpush.msra.mxu0 %v150
    %1361 = vmatpush.msra.mxu0 %v146
    %1362 = vmatpush.msra.mxu0 %v142
    %1363 = vmatpush.msra.mxu0 %v138
    %1364 = vmatpush.msra.mxu0 %v134
    %1365 = vmatpush.msra.mxu0 %v130
    %1366 = vmatpush.msra.mxu0 %v126
    %1367 = vmatpush.msra.mxu0 %v122
    %1368 = vmatpush.msra.mxu0 %v118
    %1369 = vmatpush.msra.mxu0 %v114
    %1370 = vmatmul.f32.gmra.mxu0 %v1010
    %v1371 = vpop.f32.mrf.mxu0
    %v1372 = vadd.f32 %v1352, %v1371
    %1373 = vdwg.mxu0
    %1374 = vmatpush.msra.mxu0 %v238
    %1375 = vmatpush.msra.mxu0 %v234
    %1376 = vmatpush.msra.mxu0 %v230
    %1377 = vmatpush.msra.mxu0 %v226
    %1378 = vmatpush.msra.mxu0 %v222
    %1379 = vmatpush.msra.mxu0 %v218
    %1380 = vmatpush.msra.mxu0 %v214
    %1381 = vmatpush.msra.mxu0 %v210
    %1382 = vmatpush.msra.mxu0 %v206
    %1383 = vmatpush.msra.mxu0 %v202
    %1384 = vmatpush.msra.mxu0 %v198
    %1385 = vmatpush.msra.mxu0 %v194
    %1386 = vmatpush.msra.mxu0 %v190
    %1387 = vmatpush.msra.mxu0 %v186
    %1388 = vmatpush.msra.mxu0 %v182
    %1389 = vmatpush.msra.mxu0 %v178
    %1390 = vmatmul.f32.gmra.mxu0 %v1011
    %v1391 = vpop.f32.mrf.mxu0
    %v1392 = vadd.f32 %v1372, %v1391
    %1393 = vdwg.mxu0
    %1394 = vmatpush.msra.mxu0 %v302
    %1395 = vmatpush.msra.mxu0 %v298
    %1396 = vmatpush.msra.mxu0 %v294
    %1397 = vmatpush.msra.mxu0 %v290
    %1398 = vmatpush.msra.mxu0 %v286
    %1399 = vmatpush.msra.mxu0 %v282
    %1400 = vmatpush.msra.mxu0 %v278
    %1401 = vmatpush.msra.mxu0 %v274
    %1402 = vmatpush.msra.mxu0 %v270
    %1403 = vmatpush.msra.mxu0 %v266
    %1404 = vmatpush.msra.mxu0 %v262
    %1405 = vmatpush.msra.mxu0 %v258
    %1406 = vmatpush.msra.mxu0 %v254
    %1407 = vmatpush.msra.mxu0 %v250
    %1408 = vmatpush.msra.mxu0 %v246
    %1409 = vmatpush.msra.mxu0 %v242
    %1410 = vmatmul.f32.gmra.mxu0 %v1012
    %v1411 = vpop.f32.mrf.mxu0
    %v1412 = vadd.f32 %v1392, %v1411
    %1413 = vdwg.mxu0
    %1414 = vmatpush.msra.mxu0 %v366
    %1415 = vmatpush.msra.mxu0 %v362
    %1416 = vmatpush.msra.mxu0 %v358
    %1417 = vmatpush.msra.mxu0 %v354
    %1418 = vmatpush.msra.mxu0 %v350
    %1419 = vmatpush.msra.mxu0 %v346
    %1420 = vmatpush.msra.mxu0 %v342
    %1421 = vmatpush.msra.mxu0 %v338
    %1422 = vmatpush.msra.mxu0 %v334
    %1423 = vmatpush.msra.mxu0 %v330
    %1424 = vmatpush.msra.mxu0 %v326
    %1425 = vmatpush.msra.mxu0 %v322
    %1426 = vmatpush.msra.mxu0 %v318
    %1427 = vmatpush.msra.mxu0 %v314
    %1428 = vmatpush.msra.mxu0 %v310
    %1429 = vmatpush.msra.mxu0 %v306
    %1430 = vmatmul.f32.gmra.mxu0 %v1013
    %v1431 = vpop.f32.mrf.mxu0
    %v1432 = vadd.f32 %v1412, %v1431
    %1433 = vdwg.mxu0
    %1434 = vmatpush.msra.mxu0 %v430
    %1435 = vmatpush.msra.mxu0 %v426
    %1436 = vmatpush.msra.mxu0 %v422
    %1437 = vmatpush.msra.mxu0 %v418
    %1438 = vmatpush.msra.mxu0 %v414
    %1439 = vmatpush.msra.mxu0 %v410
    %1440 = vmatpush.msra.mxu0 %v406
    %1441 = vmatpush.msra.mxu0 %v402
    %1442 = vmatpush.msra.mxu0 %v398
    %1443 = vmatpush.msra.mxu0 %v394
    %1444 = vmatpush.msra.mxu0 %v390
    %1445 = vmatpush.msra.mxu0 %v386
    %1446 = vmatpush.msra.mxu0 %v382
    %1447 = vmatpush.msra.mxu0 %v378
    %1448 = vmatpush.msra.mxu0 %v374
    %1449 = vmatpush.msra.mxu0 %v370
    %1450 = vmatmul.f32.gmra.mxu0 %v1014
    %v1451 = vpop.f32.mrf.mxu0
    %v1452 = vadd.f32 %v1432, %v1451
    %1453 = vdwg.mxu0
    %1454 = vmatpush.msra.mxu0 %v494
    %1455 = vmatpush.msra.mxu0 %v490
    %1456 = vmatpush.msra.mxu0 %v486
    %1457 = vmatpush.msra.mxu0 %v482
    %1458 = vmatpush.msra.mxu0 %v478
    %1459 = vmatpush.msra.mxu0 %v474
    %1460 = vmatpush.msra.mxu0 %v470
    %1461 = vmatpush.msra.mxu0 %v466
    %1462 = vmatpush.msra.mxu0 %v462
    %1463 = vmatpush.msra.mxu0 %v458
    %1464 = vmatpush.msra.mxu0 %v454
    %1465 = vmatpush.msra.mxu0 %v450
    %1466 = vmatpush.msra.mxu0 %v446
    %1467 = vmatpush.msra.mxu0 %v442
    %1468 = vmatpush.msra.mxu0 %v438
    %1469 = vmatpush.msra.mxu0 %v434
    %1470 = vmatmul.f32.gmra.mxu0 %v1015
    %v1471 = vpop.f32.mrf.mxu0
    %v1472 = vadd.f32 %v1452, %v1471
    %1473 = vdwg.mxu0
    %1474 = vmatpush.msra.mxu0 %v558
    %1475 = vmatpush.msra.mxu0 %v554
    %1476 = vmatpush.msra.mxu0 %v550
    %1477 = vmatpush.msra.mxu0 %v546
    %1478 = vmatpush.msra.mxu0 %v542
    %1479 = vmatpush.msra.mxu0 %v538
    %1480 = vmatpush.msra.mxu0 %v534
    %1481 = vmatpush.msra.mxu0 %v530
    %1482 = vmatpush.msra.mxu0 %v526
    %1483 = vmatpush.msra.mxu0 %v522
    %1484 = vmatpush.msra.mxu0 %v518
    %1485 = vmatpush.msra.mxu0 %v514
    %1486 = vmatpush.msra.mxu0 %v510
    %1487 = vmatpush.msra.mxu0 %v506
    %1488 = vmatpush.msra.mxu0 %v502
    %1489 = vmatpush.msra.mxu0 %v498
    %1490 = vmatmul.f32.gmra.mxu0 %v1016
    %v1491 = vpop.f32.mrf.mxu0
    %v1492 = vadd.f32 %v1472, %v1491
    %1493 = vdwg.mxu0
    %1494 = vmatpush.msra.mxu0 %v622
    %1495 = vmatpush.msra.mxu0 %v618
    %1496 = vmatpush.msra.mxu0 %v614
    %1497 = vmatpush.msra.mxu0 %v610
    %1498 = vmatpush.msra.mxu0 %v606
    %1499 = vmatpush.msra.mxu0 %v602
    %1500 = vmatpush.msra.mxu0 %v598
    %1501 = vmatpush.msra.mxu0 %v594
    %1502 = vmatpush.msra.mxu0 %v590
    %1503 = vmatpush.msra.mxu0 %v586
    %1504 = vmatpush.msra.mxu0 %v582
    %1505 = vmatpush.msra.mxu0 %v578
    %1506 = vmatpush.msra.mxu0 %v574
    %1507 = vmatpush.msra.mxu0 %v570
    %1508 = vmatpush.msra.mxu0 %v566
    %1509 = vmatpush.msra.mxu0 %v562
    %1510 = vmatmul.f32.gmra.mxu0 %v1019
    %v1511 = vpop.f32.mrf.mxu0
    %v1512 = vadd.f32 %v1492, %v1511
    %1513 = vdwg.mxu0
    %1514 = vmatpush.msra.mxu0 %v686
    %1515 = vmatpush.msra.mxu0 %v682
    %1516 = vmatpush.msra.mxu0 %v678
    %1517 = vmatpush.msra.mxu0 %v674
    %1518 = vmatpush.msra.mxu0 %v670
    %1519 = vmatpush.msra.mxu0 %v666
    %1520 = vmatpush.msra.mxu0 %v662
    %1521 = vmatpush.msra.mxu0 %v658
    %1522 = vmatpush.msra.mxu0 %v654
    %1523 = vmatpush.msra.mxu0 %v650
    %1524 = vmatpush.msra.mxu0 %v646
    %1525 = vmatpush.msra.mxu0 %v642
    %1526 = vmatpush.msra.mxu0 %v638
    %1527 = vmatpush.msra.mxu0 %v634
    %1528 = vmatpush.msra.mxu0 %v630
    %1529 = vmatpush.msra.mxu0 %v626
    %1530 = vmatmul.f32.gmra.mxu0 %v1020
    %v1531 = vpop.f32.mrf.mxu0
    %v1532 = vadd.f32 %v1512, %v1531
    %1533 = vdwg.mxu0
    %1534 = vmatpush.msra.mxu0 %v750
    %1535 = vmatpush.msra.mxu0 %v746
    %1536 = vmatpush.msra.mxu0 %v742
    %1537 = vmatpush.msra.mxu0 %v738
    %1538 = vmatpush.msra.mxu0 %v734
    %1539 = vmatpush.msra.mxu0 %v730
    %1540 = vmatpush.msra.mxu0 %v726
    %1541 = vmatpush.msra.mxu0 %v722
    %1542 = vmatpush.msra.mxu0 %v718
    %1543 = vmatpush.msra.mxu0 %v714
    %1544 = vmatpush.msra.mxu0 %v710
    %1545 = vmatpush.msra.mxu0 %v706
    %1546 = vmatpush.msra.mxu0 %v702
    %1547 = vmatpush.msra.mxu0 %v698
    %1548 = vmatpush.msra.mxu0 %v694
    %1549 = vmatpush.msra.mxu0 %v690
    %1550 = vmatmul.f32.gmra.mxu0 %v1021
    %v1551 = vpop.f32.mrf.mxu0
    %v1552 = vadd.f32 %v1532, %v1551
    %1553 = vdwg.mxu0
    %1554 = vmatpush.msra.mxu0 %v814
    %1555 = vmatpush.msra.mxu0 %v810
    %1556 = vmatpush.msra.mxu0 %v806
    %1557 = vmatpush.msra.mxu0 %v802
    %1558 = vmatpush.msra.mxu0 %v798
    %1559 = vmatpush.msra.mxu0 %v794
    %1560 = vmatpush.msra.mxu0 %v790
    %1561 = vmatpush.msra.mxu0 %v786
    %1562 = vmatpush.msra.mxu0 %v782
    %1563 = vmatpush.msra.mxu0 %v778
    %1564 = vmatpush.msra.mxu0 %v774
    %1565 = vmatpush.msra.mxu0 %v770
    %1566 = vmatpush.msra.mxu0 %v766
    %1567 = vmatpush.msra.mxu0 %v762
    %1568 = vmatpush.msra.mxu0 %v758
    %1569 = vmatpush.msra.mxu0 %v754
    %1570 = vmatmul.f32.gmra.mxu0 %v1022
    %v1571 = vpop.f32.mrf.mxu0
    %v1572 = vadd.f32 %v1552, %v1571
    %1573 = vdwg.mxu0
    %1574 = vmatpush.msra.mxu0 %v878
    %1575 = vmatpush.msra.mxu0 %v874
    %1576 = vmatpush.msra.mxu0 %v870
    %1577 = vmatpush.msra.mxu0 %v866
    %1578 = vmatpush.msra.mxu0 %v862
    %1579 = vmatpush.msra.mxu0 %v858
    %1580 = vmatpush.msra.mxu0 %v854
    %1581 = vmatpush.msra.mxu0 %v850
    %1582 = vmatpush.msra.mxu0 %v846
    %1583 = vmatpush.msra.mxu0 %v842
    %1584 = vmatpush.msra.mxu0 %v838
    %1585 = vmatpush.msra.mxu0 %v834
    %1586 = vmatpush.msra.mxu0 %v830
    %1587 = vmatpush.msra.mxu0 %v826
    %1588 = vmatpush.msra.mxu0 %v822
    %1589 = vmatpush.msra.mxu0 %v818
    %1590 = vmatmul.f32.gmra.mxu0 %v1023
    %v1591 = vpop.f32.mrf.mxu0
    %v1592 = vadd.f32 %v1572, %v1591
    %1593 = vdwg.mxu0
    %1594 = vmatpush.msra.mxu0 0.0
    %1595 = vmatpush.msra.mxu0 0.0
    %1596 = vmatpush.msra.mxu0 0.0
    %1597 = vmatpush.msra.mxu0 0.0
    %1598 = vmatpush.msra.mxu0 0.0
    %1599 = vmatpush.msra.mxu0 0.0
    %1600 = vmatpush.msra.mxu0 0.0
    %1601 = vmatpush.msra.mxu0 0.0
    %1602 = vmatpush.msra.mxu0 0.0
    %1603 = vmatpush.msra.mxu0 0.0
    %1604 = vmatpush.msra.mxu0 0.0
    %1605 = vmatpush.msra.mxu0 0.0
    %1606 = vmatpush.msra.mxu0 %v1046
    %1607 = vmatpush.msra.mxu0 %v890
    %1608 = vmatpush.msra.mxu0 %v886
    %1609 = vmatpush.msra.mxu0 %v882
    %1610 = vmatmul.f32.gmra.mxu0 %v1039
    %v1611 = vpop.f32.mrf.mxu0
    %v1612 = vadd.f32 %v1592, %v1611
    %1613 = vdwg.mxu0
    %1614 = vmatpush.msra.mxu0 %v111
    %1615 = vmatpush.msra.mxu0 %v107
    %1616 = vmatpush.msra.mxu0 %v103
    %1617 = vmatpush.msra.mxu0 %v99
    %1618 = vmatpush.msra.mxu0 %v95
    %1619 = vmatpush.msra.mxu0 %v91
    %1620 = vmatpush.msra.mxu0 %v87
    %1621 = vmatpush.msra.mxu0 %v83
    %1622 = vmatpush.msra.mxu0 %v79
    %1623 = vmatpush.msra.mxu0 %v75
    %1624 = vmatpush.msra.mxu0 %v71
    %1625 = vmatpush.msra.mxu0 %v67
    %1626 = vmatpush.msra.mxu0 %v63
    %1627 = vmatpush.msra.mxu0 %v59
    %1628 = vmatpush.msra.mxu0 %v55
    %1629 = vmatpush.msra.mxu0 %v51
    %1630 = vmatmul.f32.gmra.mxu0 %v1009
    %v1631 = vpop.f32.mrf.mxu0
    %v1632 = vadd.f32 %v980, %v1631
    %1633 = vdwg.mxu0
    %1634 = vmatpush.msra.mxu0 %v175
    %1635 = vmatpush.msra.mxu0 %v171
    %1636 = vmatpush.msra.mxu0 %v167
    %1637 = vmatpush.msra.mxu0 %v163
    %1638 = vmatpush.msra.mxu0 %v159
    %1639 = vmatpush.msra.mxu0 %v155
    %1640 = vmatpush.msra.mxu0 %v151
    %1641 = vmatpush.msra.mxu0 %v147
    %1642 = vmatpush.msra.mxu0 %v143
    %1643 = vmatpush.msra.mxu0 %v139
    %1644 = vmatpush.msra.mxu0 %v135
    %1645 = vmatpush.msra.mxu0 %v131
    %1646 = vmatpush.msra.mxu0 %v127
    %1647 = vmatpush.msra.mxu0 %v123
    %1648 = vmatpush.msra.mxu0 %v119
    %1649 = vmatpush.msra.mxu0 %v115
    %1650 = vmatmul.f32.gmra.mxu0 %v1010
    %v1651 = vpop.f32.mrf.mxu0
    %v1652 = vadd.f32 %v1632, %v1651
    %1653 = vdwg.mxu0
    %1654 = vmatpush.msra.mxu0 %v239
    %1655 = vmatpush.msra.mxu0 %v235
    %1656 = vmatpush.msra.mxu0 %v231
    %1657 = vmatpush.msra.mxu0 %v227
    %1658 = vmatpush.msra.mxu0 %v223
    %1659 = vmatpush.msra.mxu0 %v219
    %1660 = vmatpush.msra.mxu0 %v215
    %1661 = vmatpush.msra.mxu0 %v211
    %1662 = vmatpush.msra.mxu0 %v207
    %1663 = vmatpush.msra.mxu0 %v203
    %1664 = vmatpush.msra.mxu0 %v199
    %1665 = vmatpush.msra.mxu0 %v195
    %1666 = vmatpush.msra.mxu0 %v191
    %1667 = vmatpush.msra.mxu0 %v187
    %1668 = vmatpush.msra.mxu0 %v183
    %1669 = vmatpush.msra.mxu0 %v179
    %1670 = vmatmul.f32.gmra.mxu0 %v1011
    %v1671 = vpop.f32.mrf.mxu0
    %v1672 = vadd.f32 %v1652, %v1671
    %1673 = vdwg.mxu0
    %1674 = vmatpush.msra.mxu0 %v303
    %1675 = vmatpush.msra.mxu0 %v299
    %1676 = vmatpush.msra.mxu0 %v295
    %1677 = vmatpush.msra.mxu0 %v291
    %1678 = vmatpush.msra.mxu0 %v287
    %1679 = vmatpush.msra.mxu0 %v283
    %1680 = vmatpush.msra.mxu0 %v279
    %1681 = vmatpush.msra.mxu0 %v275
    %1682 = vmatpush.msra.mxu0 %v271
    %1683 = vmatpush.msra.mxu0 %v267
    %1684 = vmatpush.msra.mxu0 %v263
    %1685 = vmatpush.msra.mxu0 %v259
    %1686 = vmatpush.msra.mxu0 %v255
    %1687 = vmatpush.msra.mxu0 %v251
    %1688 = vmatpush.msra.mxu0 %v247
    %1689 = vmatpush.msra.mxu0 %v243
    %1690 = vmatmul.f32.gmra.mxu0 %v1012
    %v1691 = vpop.f32.mrf.mxu0
    %v1692 = vadd.f32 %v1672, %v1691
    %1693 = vdwg.mxu0
    %1694 = vmatpush.msra.mxu0 %v367
    %1695 = vmatpush.msra.mxu0 %v363
    %1696 = vmatpush.msra.mxu0 %v359
    %1697 = vmatpush.msra.mxu0 %v355
    %1698 = vmatpush.msra.mxu0 %v351
    %1699 = vmatpush.msra.mxu0 %v347
    %1700 = vmatpush.msra.mxu0 %v343
    %1701 = vmatpush.msra.mxu0 %v339
    %1702 = vmatpush.msra.mxu0 %v335
    %1703 = vmatpush.msra.mxu0 %v331
    %1704 = vmatpush.msra.mxu0 %v327
    %1705 = vmatpush.msra.mxu0 %v323
    %1706 = vmatpush.msra.mxu0 %v319
    %1707 = vmatpush.msra.mxu0 %v315
    %1708 = vmatpush.msra.mxu0 %v311
    %1709 = vmatpush.msra.mxu0 %v307
    %1710 = vmatmul.f32.gmra.mxu0 %v1013
    %v1711 = vpop.f32.mrf.mxu0
    %v1712 = vadd.f32 %v1692, %v1711
    %1713 = vdwg.mxu0
    %1714 = vmatpush.msra.mxu0 %v431
    %1715 = vmatpush.msra.mxu0 %v427
    %1716 = vmatpush.msra.mxu0 %v423
    %1717 = vmatpush.msra.mxu0 %v419
    %1718 = vmatpush.msra.mxu0 %v415
    %1719 = vmatpush.msra.mxu0 %v411
    %1720 = vmatpush.msra.mxu0 %v407
    %1721 = vmatpush.msra.mxu0 %v403
    %1722 = vmatpush.msra.mxu0 %v399
    %1723 = vmatpush.msra.mxu0 %v395
    %1724 = vmatpush.msra.mxu0 %v391
    %1725 = vmatpush.msra.mxu0 %v387
    %1726 = vmatpush.msra.mxu0 %v383
    %1727 = vmatpush.msra.mxu0 %v379
    %1728 = vmatpush.msra.mxu0 %v375
    %1729 = vmatpush.msra.mxu0 %v371
    %1730 = vmatmul.f32.gmra.mxu0 %v1014
    %v1731 = vpop.f32.mrf.mxu0
    %v1732 = vadd.f32 %v1712, %v1731
    %1733 = vdwg.mxu0
    %1734 = vmatpush.msra.mxu0 %v495
    %1735 = vmatpush.msra.mxu0 %v491
    %1736 = vmatpush.msra.mxu0 %v487
    %1737 = vmatpush.msra.mxu0 %v483
    %1738 = vmatpush.msra.mxu0 %v479
    %1739 = vmatpush.msra.mxu0 %v475
    %1740 = vmatpush.msra.mxu0 %v471
    %1741 = vmatpush.msra.mxu0 %v467
    %1742 = vmatpush.msra.mxu0 %v463
    %1743 = vmatpush.msra.mxu0 %v459
    %1744 = vmatpush.msra.mxu0 %v455
    %1745 = vmatpush.msra.mxu0 %v451
    %1746 = vmatpush.msra.mxu0 %v447
    %1747 = vmatpush.msra.mxu0 %v443
    %1748 = vmatpush.msra.mxu0 %v439
    %1749 = vmatpush.msra.mxu0 %v435
    %1750 = vmatmul.f32.gmra.mxu0 %v1015
    %v1751 = vpop.f32.mrf.mxu0
    %v1752 = vadd.f32 %v1732, %v1751
    %1753 = vdwg.mxu0
    %1754 = vmatpush.msra.mxu0 %v559
    %1755 = vmatpush.msra.mxu0 %v555
    %1756 = vmatpush.msra.mxu0 %v551
    %1757 = vmatpush.msra.mxu0 %v547
    %1758 = vmatpush.msra.mxu0 %v543
    %1759 = vmatpush.msra.mxu0 %v539
    %1760 = vmatpush.msra.mxu0 %v535
    %1761 = vmatpush.msra.mxu0 %v531
    %1762 = vmatpush.msra.mxu0 %v527
    %1763 = vmatpush.msra.mxu0 %v523
    %1764 = vmatpush.msra.mxu0 %v519
    %1765 = vmatpush.msra.mxu0 %v515
    %1766 = vmatpush.msra.mxu0 %v511
    %1767 = vmatpush.msra.mxu0 %v507
    %1768 = vmatpush.msra.mxu0 %v503
    %1769 = vmatpush.msra.mxu0 %v499
    %1770 = vmatmul.f32.gmra.mxu0 %v1016
    %v1771 = vpop.f32.mrf.mxu0
    %v1772 = vadd.f32 %v1752, %v1771
    %1773 = vdwg.mxu0
    %1774 = vmatpush.msra.mxu0 %v623
    %1775 = vmatpush.msra.mxu0 %v619
    %1776 = vmatpush.msra.mxu0 %v615
    %1777 = vmatpush.msra.mxu0 %v611
    %1778 = vmatpush.msra.mxu0 %v607
    %1779 = vmatpush.msra.mxu0 %v603
    %1780 = vmatpush.msra.mxu0 %v599
    %1781 = vmatpush.msra.mxu0 %v595
    %1782 = vmatpush.msra.mxu0 %v591
    %1783 = vmatpush.msra.mxu0 %v587
    %1784 = vmatpush.msra.mxu0 %v583
    %1785 = vmatpush.msra.mxu0 %v579
    %1786 = vmatpush.msra.mxu0 %v575
    %1787 = vmatpush.msra.mxu0 %v571
    %1788 = vmatpush.msra.mxu0 %v567
    %1789 = vmatpush.msra.mxu0 %v563
    %1790 = vmatmul.f32.gmra.mxu0 %v1019
    %v1791 = vpop.f32.mrf.mxu0
    %v1792 = vadd.f32 %v1772, %v1791
    %1793 = vdwg.mxu0
    %1794 = vmatpush.msra.mxu0 %v687
    %1795 = vmatpush.msra.mxu0 %v683
    %1796 = vmatpush.msra.mxu0 %v679
    %1797 = vmatpush.msra.mxu0 %v675
    %1798 = vmatpush.msra.mxu0 %v671
    %1799 = vmatpush.msra.mxu0 %v667
    %1800 = vmatpush.msra.mxu0 %v663
    %1801 = vmatpush.msra.mxu0 %v659
    %1802 = vmatpush.msra.mxu0 %v655
    %1803 = vmatpush.msra.mxu0 %v651
    %1804 = vmatpush.msra.mxu0 %v647
    %1805 = vmatpush.msra.mxu0 %v643
    %1806 = vmatpush.msra.mxu0 %v639
    %1807 = vmatpush.msra.mxu0 %v635
    %1808 = vmatpush.msra.mxu0 %v631
    %1809 = vmatpush.msra.mxu0 %v627
    %1810 = vmatmul.f32.gmra.mxu0 %v1020
    %v1811 = vpop.f32.mrf.mxu0
    %v1812 = vadd.f32 %v1792, %v1811
    %1813 = vdwg.mxu0
    %1814 = vmatpush.msra.mxu0 %v751
    %1815 = vmatpush.msra.mxu0 %v747
    %1816 = vmatpush.msra.mxu0 %v743
    %1817 = vmatpush.msra.mxu0 %v739
    %1818 = vmatpush.msra.mxu0 %v735
    %1819 = vmatpush.msra.mxu0 %v731
    %1820 = vmatpush.msra.mxu0 %v727
    %1821 = vmatpush.msra.mxu0 %v723
    %1822 = vmatpush.msra.mxu0 %v719
    %1823 = vmatpush.msra.mxu0 %v715
    %1824 = vmatpush.msra.mxu0 %v711
    %1825 = vmatpush.msra.mxu0 %v707
    %1826 = vmatpush.msra.mxu0 %v703
    %1827 = vmatpush.msra.mxu0 %v699
    %1828 = vmatpush.msra.mxu0 %v695
    %1829 = vmatpush.msra.mxu0 %v691
    %1830 = vmatmul.f32.gmra.mxu0 %v1021
    %v1831 = vpop.f32.mrf.mxu0
    %v1832 = vadd.f32 %v1812, %v1831
    %1833 = vdwg.mxu0
    %1834 = vmatpush.msra.mxu0 %v815
    %1835 = vmatpush.msra.mxu0 %v811
    %1836 = vmatpush.msra.mxu0 %v807
    %1837 = vmatpush.msra.mxu0 %v803
    %1838 = vmatpush.msra.mxu0 %v799
    %1839 = vmatpush.msra.mxu0 %v795
    %1840 = vmatpush.msra.mxu0 %v791
    %1841 = vmatpush.msra.mxu0 %v787
    %1842 = vmatpush.msra.mxu0 %v783
    %1843 = vmatpush.msra.mxu0 %v779
    %1844 = vmatpush.msra.mxu0 %v775
    %1845 = vmatpush.msra.mxu0 %v771
    %1846 = vmatpush.msra.mxu0 %v767
    %1847 = vmatpush.msra.mxu0 %v763
    %1848 = vmatpush.msra.mxu0 %v759
    %1849 = vmatpush.msra.mxu0 %v755
    %1850 = vmatmul.f32.gmra.mxu0 %v1022
    %v1851 = vpop.f32.mrf.mxu0
    %v1852 = vadd.f32 %v1832, %v1851
    %1853 = vdwg.mxu0
    %1854 = vmatpush.msra.mxu0 %v879
    %1855 = vmatpush.msra.mxu0 %v875
    %1856 = vmatpush.msra.mxu0 %v871
    %1857 = vmatpush.msra.mxu0 %v867
    %1858 = vmatpush.msra.mxu0 %v863
    %1859 = vmatpush.msra.mxu0 %v859
    %1860 = vmatpush.msra.mxu0 %v855
    %1861 = vmatpush.msra.mxu0 %v851
    %1862 = vmatpush.msra.mxu0 %v847
    %1863 = vmatpush.msra.mxu0 %v843
    %1864 = vmatpush.msra.mxu0 %v839
    %1865 = vmatpush.msra.mxu0 %v835
    %1866 = vmatpush.msra.mxu0 %v831
    %1867 = vmatpush.msra.mxu0 %v827
    %1868 = vmatpush.msra.mxu0 %v823
    %1869 = vmatpush.msra.mxu0 %v819
    %1870 = vmatmul.f32.gmra.mxu0 %v1023
    %v1871 = vpop.f32.mrf.mxu0
    %v1872 = vadd.f32 %v1852, %v1871
    %1873 = vdwg.mxu0
    %1874 = vmatpush.msra.mxu0 0.0
    %1875 = vmatpush.msra.mxu0 0.0
    %1876 = vmatpush.msra.mxu0 0.0
    %1877 = vmatpush.msra.mxu0 0.0
    %1878 = vmatpush.msra.mxu0 0.0
    %1879 = vmatpush.msra.mxu0 0.0
    %1880 = vmatpush.msra.mxu0 0.0
    %1881 = vmatpush.msra.mxu0 0.0
    %1882 = vmatpush.msra.mxu0 0.0
    %1883 = vmatpush.msra.mxu0 0.0
    %1884 = vmatpush.msra.mxu0 0.0
    %1885 = vmatpush.msra.mxu0 0.0
    %1886 = vmatpush.msra.mxu0 %v1049
    %1887 = vmatpush.msra.mxu0 %v891
    %1888 = vmatpush.msra.mxu0 %v887
    %1889 = vmatpush.msra.mxu0 %v883
    %1890 = vmatmul.f32.gmra.mxu0 %v1039
    %v1891 = vpop.f32.mrf.mxu0
    %v1892 = vadd.f32 %v1872, %v1891
    %1893 = vdwg.mxu0
    %1894 = vmatpush.msra.mxu0 %v112
    %1895 = vmatpush.msra.mxu0 %v108
    %1896 = vmatpush.msra.mxu0 %v104
    %1897 = vmatpush.msra.mxu0 %v100
    %1898 = vmatpush.msra.mxu0 %v96
    %1899 = vmatpush.msra.mxu0 %v92
    %1900 = vmatpush.msra.mxu0 %v88
    %1901 = vmatpush.msra.mxu0 %v84
    %1902 = vmatpush.msra.mxu0 %v80
    %1903 = vmatpush.msra.mxu0 %v76
    %1904 = vmatpush.msra.mxu0 %v72
    %1905 = vmatpush.msra.mxu0 %v68
    %1906 = vmatpush.msra.mxu0 %v64
    %1907 = vmatpush.msra.mxu0 %v60
    %1908 = vmatpush.msra.mxu0 %v56
    %1909 = vmatpush.msra.mxu0 %v52
    %1910 = vmatmul.f32.gmra.mxu0 %v1009
    %v1911 = vpop.f32.mrf.mxu0
    %v1912 = vadd.f32 %v1000, %v1911
    %1913 = vdwg.mxu0
    %1914 = vmatpush.msra.mxu0 %v176
    %1915 = vmatpush.msra.mxu0 %v172
    %1916 = vmatpush.msra.mxu0 %v168
    %1917 = vmatpush.msra.mxu0 %v164
    %1918 = vmatpush.msra.mxu0 %v160
    %1919 = vmatpush.msra.mxu0 %v156
    %1920 = vmatpush.msra.mxu0 %v152
    %1921 = vmatpush.msra.mxu0 %v148
    %1922 = vmatpush.msra.mxu0 %v144
    %1923 = vmatpush.msra.mxu0 %v140
    %1924 = vmatpush.msra.mxu0 %v136
    %1925 = vmatpush.msra.mxu0 %v132
    %1926 = vmatpush.msra.mxu0 %v128
    %1927 = vmatpush.msra.mxu0 %v124
    %1928 = vmatpush.msra.mxu0 %v120
    %1929 = vmatpush.msra.mxu0 %v116
    %1930 = vmatmul.f32.gmra.mxu0 %v1010
    %v1931 = vpop.f32.mrf.mxu0
    %v1932 = vadd.f32 %v1912, %v1931
    %1933 = vdwg.mxu0
    %1934 = vmatpush.msra.mxu0 %v240
    %1935 = vmatpush.msra.mxu0 %v236
    %1936 = vmatpush.msra.mxu0 %v232
    %1937 = vmatpush.msra.mxu0 %v228
    %1938 = vmatpush.msra.mxu0 %v224
    %1939 = vmatpush.msra.mxu0 %v220
    %1940 = vmatpush.msra.mxu0 %v216
    %1941 = vmatpush.msra.mxu0 %v212
    %1942 = vmatpush.msra.mxu0 %v208
    %1943 = vmatpush.msra.mxu0 %v204
    %1944 = vmatpush.msra.mxu0 %v200
    %1945 = vmatpush.msra.mxu0 %v196
    %1946 = vmatpush.msra.mxu0 %v192
    %1947 = vmatpush.msra.mxu0 %v188
    %1948 = vmatpush.msra.mxu0 %v184
    %1949 = vmatpush.msra.mxu0 %v180
    %1950 = vmatmul.f32.gmra.mxu0 %v1011
    %v1951 = vpop.f32.mrf.mxu0
    %v1952 = vadd.f32 %v1932, %v1951
    %1953 = vdwg.mxu0
    %1954 = vmatpush.msra.mxu0 %v304
    %1955 = vmatpush.msra.mxu0 %v300
    %1956 = vmatpush.msra.mxu0 %v296
    %1957 = vmatpush.msra.mxu0 %v292
    %1958 = vmatpush.msra.mxu0 %v288
    %1959 = vmatpush.msra.mxu0 %v284
    %1960 = vmatpush.msra.mxu0 %v280
    %1961 = vmatpush.msra.mxu0 %v276
    %1962 = vmatpush.msra.mxu0 %v272
    %1963 = vmatpush.msra.mxu0 %v268
    %1964 = vmatpush.msra.mxu0 %v264
    %1965 = vmatpush.msra.mxu0 %v260
    %1966 = vmatpush.msra.mxu0 %v256
    %1967 = vmatpush.msra.mxu0 %v252
    %1968 = vmatpush.msra.mxu0 %v248
    %1969 = vmatpush.msra.mxu0 %v244
    %1970 = vmatmul.f32.gmra.mxu0 %v1012
    %v1971 = vpop.f32.mrf.mxu0
    %v1972 = vadd.f32 %v1952, %v1971
    %1973 = vdwg.mxu0
    %1974 = vmatpush.msra.mxu0 %v368
    %1975 = vmatpush.msra.mxu0 %v364
    %1976 = vmatpush.msra.mxu0 %v360
    %1977 = vmatpush.msra.mxu0 %v356
    %1978 = vmatpush.msra.mxu0 %v352
    %1979 = vmatpush.msra.mxu0 %v348
    %1980 = vmatpush.msra.mxu0 %v344
    %1981 = vmatpush.msra.mxu0 %v340
    %1982 = vmatpush.msra.mxu0 %v336
    %1983 = vmatpush.msra.mxu0 %v332
    %1984 = vmatpush.msra.mxu0 %v328
    %1985 = vmatpush.msra.mxu0 %v324
    %1986 = vmatpush.msra.mxu0 %v320
    %1987 = vmatpush.msra.mxu0 %v316
    %1988 = vmatpush.msra.mxu0 %v312
    %1989 = vmatpush.msra.mxu0 %v308
    %1990 = vmatmul.f32.gmra.mxu0 %v1013
    %v1991 = vpop.f32.mrf.mxu0
    %v1992 = vadd.f32 %v1972, %v1991
    %1993 = vdwg.mxu0
    %1994 = vmatpush.msra.mxu0 %v432
    %1995 = vmatpush.msra.mxu0 %v428
    %1996 = vmatpush.msra.mxu0 %v424
    %1997 = vmatpush.msra.mxu0 %v420
    %1998 = vmatpush.msra.mxu0 %v416
    %1999 = vmatpush.msra.mxu0 %v412
    %2000 = vmatpush.msra.mxu0 %v408
    %2001 = vmatpush.msra.mxu0 %v404
    %2002 = vmatpush.msra.mxu0 %v400
    %2003 = vmatpush.msra.mxu0 %v396
    %2004 = vmatpush.msra.mxu0 %v392
    %2005 = vmatpush.msra.mxu0 %v388
    %2006 = vmatpush.msra.mxu0 %v384
    %2007 = vmatpush.msra.mxu0 %v380
    %2008 = vmatpush.msra.mxu0 %v376
    %2009 = vmatpush.msra.mxu0 %v372
    %2010 = vmatmul.f32.gmra.mxu0 %v1014
    %v2011 = vpop.f32.mrf.mxu0
    %v2012 = vadd.f32 %v1992, %v2011
    %2013 = vdwg.mxu0
    %2014 = vmatpush.msra.mxu0 %v496
    %2015 = vmatpush.msra.mxu0 %v492
    %2016 = vmatpush.msra.mxu0 %v488
    %2017 = vmatpush.msra.mxu0 %v484
    %2018 = vmatpush.msra.mxu0 %v480
    %2019 = vmatpush.msra.mxu0 %v476
    %2020 = vmatpush.msra.mxu0 %v472
    %2021 = vmatpush.msra.mxu0 %v468
    %2022 = vmatpush.msra.mxu0 %v464
    %2023 = vmatpush.msra.mxu0 %v460
    %2024 = vmatpush.msra.mxu0 %v456
    %2025 = vmatpush.msra.mxu0 %v452
    %2026 = vmatpush.msra.mxu0 %v448
    %2027 = vmatpush.msra.mxu0 %v444
    %2028 = vmatpush.msra.mxu0 %v440
    %2029 = vmatpush.msra.mxu0 %v436
    %2030 = vmatmul.f32.gmra.mxu0 %v1015
    %v2031 = vpop.f32.mrf.mxu0
    %v2032 = vadd.f32 %v2012, %v2031
    %2033 = vdwg.mxu0
    %2034 = vmatpush.msra.mxu0 %v560
    %2035 = vmatpush.msra.mxu0 %v556
    %2036 = vmatpush.msra.mxu0 %v552
    %2037 = vmatpush.msra.mxu0 %v548
    %2038 = vmatpush.msra.mxu0 %v544
    %2039 = vmatpush.msra.mxu0 %v540
    %2040 = vmatpush.msra.mxu0 %v536
    %2041 = vmatpush.msra.mxu0 %v532
    %2042 = vmatpush.msra.mxu0 %v528
    %2043 = vmatpush.msra.mxu0 %v524
    %2044 = vmatpush.msra.mxu0 %v520
    %2045 = vmatpush.msra.mxu0 %v516
    %2046 = vmatpush.msra.mxu0 %v512
    %2047 = vmatpush.msra.mxu0 %v508
    %2048 = vmatpush.msra.mxu0 %v504
    %2049 = vmatpush.msra.mxu0 %v500
    %2050 = vmatmul.f32.gmra.mxu0 %v1016
    %v2051 = vpop.f32.mrf.mxu0
    %v2052 = vadd.f32 %v2032, %v2051
    %2053 = vdwg.mxu0
    %2054 = vmatpush.msra.mxu0 %v624
    %2055 = vmatpush.msra.mxu0 %v620
    %2056 = vmatpush.msra.mxu0 %v616
    %2057 = vmatpush.msra.mxu0 %v612
    %2058 = vmatpush.msra.mxu0 %v608
    %2059 = vmatpush.msra.mxu0 %v604
    %2060 = vmatpush.msra.mxu0 %v600
    %2061 = vmatpush.msra.mxu0 %v596
    %2062 = vmatpush.msra.mxu0 %v592
    %2063 = vmatpush.msra.mxu0 %v588
    %2064 = vmatpush.msra.mxu0 %v584
    %2065 = vmatpush.msra.mxu0 %v580
    %2066 = vmatpush.msra.mxu0 %v576
    %2067 = vmatpush.msra.mxu0 %v572
    %2068 = vmatpush.msra.mxu0 %v568
    %2069 = vmatpush.msra.mxu0 %v564
    %2070 = vmatmul.f32.gmra.mxu0 %v1019
    %v2071 = vpop.f32.mrf.mxu0
    %v2072 = vadd.f32 %v2052, %v2071
    %2073 = vdwg.mxu0
    %2074 = vmatpush.msra.mxu0 %v688
    %2075 = vmatpush.msra.mxu0 %v684
    %2076 = vmatpush.msra.mxu0 %v680
    %2077 = vmatpush.msra.mxu0 %v676
    %2078 = vmatpush.msra.mxu0 %v672
    %2079 = vmatpush.msra.mxu0 %v668
    %2080 = vmatpush.msra.mxu0 %v664
    %2081 = vmatpush.msra.mxu0 %v660
    %2082 = vmatpush.msra.mxu0 %v656
    %2083 = vmatpush.msra.mxu0 %v652
    %2084 = vmatpush.msra.mxu0 %v648
    %2085 = vmatpush.msra.mxu0 %v644
    %2086 = vmatpush.msra.mxu0 %v640
    %2087 = vmatpush.msra.mxu0 %v636
    %2088 = vmatpush.msra.mxu0 %v632
    %2089 = vmatpush.msra.mxu0 %v628
    %2090 = vmatmul.f32.gmra.mxu0 %v1020
    %v2091 = vpop.f32.mrf.mxu0
    %v2092 = vadd.f32 %v2072, %v2091
    %2093 = vdwg.mxu0
    %2094 = vmatpush.msra.mxu0 %v752
    %2095 = vmatpush.msra.mxu0 %v748
    %2096 = vmatpush.msra.mxu0 %v744
    %2097 = vmatpush.msra.mxu0 %v740
    %2098 = vmatpush.msra.mxu0 %v736
    %2099 = vmatpush.msra.mxu0 %v732
    %2100 = vmatpush.msra.mxu0 %v728
    %2101 = vmatpush.msra.mxu0 %v724
    %2102 = vmatpush.msra.mxu0 %v720
    %2103 = vmatpush.msra.mxu0 %v716
    %2104 = vmatpush.msra.mxu0 %v712
    %2105 = vmatpush.msra.mxu0 %v708
    %2106 = vmatpush.msra.mxu0 %v704
    %2107 = vmatpush.msra.mxu0 %v700
    %2108 = vmatpush.msra.mxu0 %v696
    %2109 = vmatpush.msra.mxu0 %v692
    %2110 = vmatmul.f32.gmra.mxu0 %v1021
    %v2111 = vpop.f32.mrf.mxu0
    %v2112 = vadd.f32 %v2092, %v2111
    %2113 = vdwg.mxu0
    %2114 = vmatpush.msra.mxu0 %v816
    %2115 = vmatpush.msra.mxu0 %v812
    %2116 = vmatpush.msra.mxu0 %v808
    %2117 = vmatpush.msra.mxu0 %v804
    %2118 = vmatpush.msra.mxu0 %v800
    %2119 = vmatpush.msra.mxu0 %v796
    %2120 = vmatpush.msra.mxu0 %v792
    %2121 = vmatpush.msra.mxu0 %v788
    %2122 = vmatpush.msra.mxu0 %v784
    %2123 = vmatpush.msra.mxu0 %v780
    %2124 = vmatpush.msra.mxu0 %v776
    %2125 = vmatpush.msra.mxu0 %v772
    %2126 = vmatpush.msra.mxu0 %v768
    %2127 = vmatpush.msra.mxu0 %v764
    %2128 = vmatpush.msra.mxu0 %v760
    %2129 = vmatpush.msra.mxu0 %v756
    %2130 = vmatmul.f32.gmra.mxu0 %v1022
    %v2131 = vpop.f32.mrf.mxu0
    %v2132 = vadd.f32 %v2112, %v2131
    %2133 = vdwg.mxu0
    %2134 = vmatpush.msra.mxu0 %v880
    %2135 = vmatpush.msra.mxu0 %v876
    %2136 = vmatpush.msra.mxu0 %v872
    %2137 = vmatpush.msra.mxu0 %v868
    %2138 = vmatpush.msra.mxu0 %v864
    %2139 = vmatpush.msra.mxu0 %v860
    %2140 = vmatpush.msra.mxu0 %v856
    %2141 = vmatpush.msra.mxu0 %v852
    %2142 = vmatpush.msra.mxu0 %v848
    %2143 = vmatpush.msra.mxu0 %v844
    %2144 = vmatpush.msra.mxu0 %v840
    %2145 = vmatpush.msra.mxu0 %v836
    %2146 = vmatpush.msra.mxu0 %v832
    %2147 = vmatpush.msra.mxu0 %v828
    %2148 = vmatpush.msra.mxu0 %v824
    %2149 = vmatpush.msra.mxu0 %v820
    %2150 = vmatmul.f32.gmra.mxu0 %v1023
    %v2151 = vpop.f32.mrf.mxu0
    %v2152 = vadd.f32 %v2132, %v2151
    %2153 = vdwg.mxu0
    %2154 = vmatpush.msra.mxu0 0.0
    %2155 = vmatpush.msra.mxu0 0.0
    %2156 = vmatpush.msra.mxu0 0.0
    %2157 = vmatpush.msra.mxu0 0.0
    %2158 = vmatpush.msra.mxu0 0.0
    %2159 = vmatpush.msra.mxu0 0.0
    %2160 = vmatpush.msra.mxu0 0.0
    %2161 = vmatpush.msra.mxu0 0.0
    %2162 = vmatpush.msra.mxu0 0.0
    %2163 = vmatpush.msra.mxu0 0.0
    %2164 = vmatpush.msra.mxu0 0.0
    %2165 = vmatpush.msra.mxu0 0.0
    %2166 = vmatpush.msra.mxu0 %v1052
    %2167 = vmatpush.msra.mxu0 %v892
    %2168 = vmatpush.msra.mxu0 %v888
    %2169 = vmatpush.msra.mxu0 %v884
    %2170 = vmatmul.f32.gmra.mxu0 %v1039
    %v2171 = vpop.f32.mrf.mxu0
    %v2172 = vadd.f32 %v2152, %v2171
    %2173 = vdwg.mxu0
    %v2174 = vld [vmem:[%s4] sm:$0xf]
    %v2176 = vperm.slane %v2174, 0
    %v2177 = vperm.slane %v2174, 1
    %v2178 = vperm.slane %v2174, 2
    %v2179 = vperm.slane %v2174, 3
    %v2184 = vadd.f32 %v1332, %v2176
    %v2185 = vadd.f32 %v1612, %v2177
    %v2186 = vadd.f32 %v1892, %v2178
    %v2187 = vadd.f32 %v2172, %v2179
    %v2188 = vmax.f32 %v2184, 0.0
    %v2189 = vmax.f32 %v2185, 0.0
    %v2190 = vmax.f32 %v2186, 0.0
    %v2191 = vmax.f32 %v2187, 0.0
    %v2192 = vld [vmem:[%s5] sm:$0xff]
    %v2193 = vld [vmem:[%s5 + $0x8] sm:$0xff]
    %v2194 = vld [vmem:[%s5 + $0x10] sm:$0xff]
    %v2195 = vld [vmem:[%s5 + $0x18] sm:$0xff]
    %v2196 = vld [vmem:[%s5 + $0x20] sm:$0xff]
    %v2197 = vld [vmem:[%s5 + $0x28] sm:$0xff]
    %v2198 = vld [vmem:[%s5 + $0x30] sm:$0xff]
    %v2199 = vld [vmem:[%s5 + $0x38] sm:$0xff]
    %v2200 = vld [vmem:[%s5 + $0x40] sm:$0xff]
    %v2201 = vld [vmem:[%s5 + $0x48] sm:$0xff]
    %v2202 = vld [vmem:[%s5 + $0x50] sm:$0xff]
    %v2203 = vld [vmem:[%s5 + $0x58] sm:$0xff]
    %v2204 = vld [vmem:[%s5 + $0x60] sm:$0xff]
    %v2205 = vld [vmem:[%s5 + $0x68] sm:$0xff]
    %v2206 = vld [vmem:[%s5 + $0x70] sm:$0xff]
    %v2207 = vld [vmem:[%s5 + $0x78] sm:$0xff]
    %v2208 = vld [vmem:[%s5 + $0x80] sm:$0xff]
    %v2209 = vld [vmem:[%s5 + $0x88] sm:$0xff]
    %v2210 = vld [vmem:[%s5 + $0x90] sm:$0xff]
    %v2211 = vld [vmem:[%s5 + $0x98] sm:$0xff]
    %v2212 = vld [vmem:[%s5 + $0xa0] sm:$0xff]
    %v2213 = vld [vmem:[%s5 + $0xa8] sm:$0xff]
    %v2214 = vld [vmem:[%s5 + $0xb0] sm:$0xff]
    %v2215 = vld [vmem:[%s5 + $0xb8] sm:$0xff]
    %v2216 = vld [vmem:[%s5 + $0xc0] sm:$0xff]
    %v2217 = vld [vmem:[%s5 + $0xc8] sm:$0xff]
    %v2218 = vld [vmem:[%s5 + $0xd0] sm:$0xff]
    %v2219 = vld [vmem:[%s5 + $0xd8] sm:$0xff]
    %v2220 = vld [vmem:[%s5 + $0xe0] sm:$0xff]
    %v2221 = vld [vmem:[%s5 + $0xe8] sm:$0xff]
    %v2222 = vld [vmem:[%s5 + $0xf0] sm:$0xff]
    %v2223 = vld [vmem:[%s5 + $0xf8] sm:$0xff]
    %v2224 = vld [vmem:[%s5 + $0x100] sm:$0xff]
    %v2225 = vld [vmem:[%s5 + $0x108] sm:$0xff]
    %v2226 = vld [vmem:[%s5 + $0x110] sm:$0xff]
    %v2227 = vld [vmem:[%s5 + $0x118] sm:$0xff]
    %v2228 = vld [vmem:[%s5 + $0x120] sm:$0xff]
    %v2229 = vld [vmem:[%s5 + $0x128] sm:$0xff]
    %v2230 = vld [vmem:[%s5 + $0x130] sm:$0xff]
    %v2231 = vld [vmem:[%s5 + $0x138] sm:$0xff]
    %v2232 = vld [vmem:[%s5 + $0x140] sm:$0xff]
    %v2233 = vld [vmem:[%s5 + $0x148] sm:$0xff]
    %v2234 = vld [vmem:[%s5 + $0x150] sm:$0xff]
    %v2235 = vld [vmem:[%s5 + $0x158] sm:$0xff]
    %v2236 = vld [vmem:[%s5 + $0x160] sm:$0xff]
    %v2237 = vld [vmem:[%s5 + $0x168] sm:$0xff]
    %v2238 = vld [vmem:[%s5 + $0x170] sm:$0xff]
    %v2239 = vld [vmem:[%s5 + $0x178] sm:$0xff]
    %v2240 = vld [vmem:[%s5 + $0x180] sm:$0xff]
    %v2241 = vld [vmem:[%s5 + $0x188] sm:$0xff]
    %v2242 = vld [vmem:[%s5 + $0x190] sm:$0xff]
    %v2243 = vld [vmem:[%s5 + $0x198] sm:$0xff]
    %v2244 = vld [vmem:[%s5 + $0x1a0] sm:$0xff]
    %v2245 = vld [vmem:[%s5 + $0x1a8] sm:$0xff]
    %v2246 = vld [vmem:[%s5 + $0x1b0] sm:$0xff]
    %v2247 = vld [vmem:[%s5 + $0x1b8] sm:$0xff]
    %v2248 = vld [vmem:[%s5 + $0x1c0] sm:$0xff]
    %v2249 = vld [vmem:[%s5 + $0x1c8] sm:$0xff]
    %v2250 = vld [vmem:[%s5 + $0x1d0] sm:$0xff]
    %v2251 = vld [vmem:[%s5 + $0x1d8] sm:$0xff]
    %v2252 = vld [vmem:[%s5 + $0x1e0] sm:$0xff]
    %v2253 = vld [vmem:[%s5 + $0x1e8] sm:$0xff]
    %v2254 = vld [vmem:[%s5 + $0x1f0] sm:$0xff]
    %v2255 = vld [vmem:[%s5 + $0x1f8] sm:$0xff]
    %v2256 = vld [vmem:[%s5 + $0x200] sm:$0xff]
    %v2257 = vld [vmem:[%s5 + $0x208] sm:$0xff]
    %v2258 = vld [vmem:[%s5 + $0x210] sm:$0xff]
    %v2259 = vld [vmem:[%s5 + $0x218] sm:$0xff]
    %v2260 = vld [vmem:[%s5 + $0x220] sm:$0xff]
    %v2261 = vld [vmem:[%s5 + $0x228] sm:$0xff]
    %v2262 = vld [vmem:[%s5 + $0x230] sm:$0xff]
    %v2263 = vld [vmem:[%s5 + $0x238] sm:$0xff]
    %v2264 = vld [vmem:[%s5 + $0x240] sm:$0xff]
    %v2265 = vld [vmem:[%s5 + $0x248] sm:$0xff]
    %v2266 = vld [vmem:[%s5 + $0x250] sm:$0xff]
    %v2267 = vld [vmem:[%s5 + $0x258] sm:$0xff]
    %v2268 = vld [vmem:[%s5 + $0x260] sm:$0xff]
    %v2269 = vld [vmem:[%s5 + $0x268] sm:$0xff]
    %v2270 = vld [vmem:[%s5 + $0x270] sm:$0xff]
    %v2271 = vld [vmem:[%s5 + $0x278] sm:$0xff]
    %v2272 = vld [vmem:[%s5 + $0x280] sm:$0xff]
    %v2273 = vld [vmem:[%s5 + $0x288] sm:$0xff]
    %v2274 = vld [vmem:[%s5 + $0x290] sm:$0xff]
    %v2275 = vld [vmem:[%s5 + $0x298] sm:$0xff]
    %v2276 = vld [vmem:[%s5 + $0x2a0] sm:$0xff]
    %v2277 = vld [vmem:[%s5 + $0x2a8] sm:$0xff]
    %v2278 = vld [vmem:[%s5 + $0x2b0] sm:$0xff]
    %v2279 = vld [vmem:[%s5 + $0x2b8] sm:$0xff]
    %v2280 = vld [vmem:[%s5 + $0x2c0] sm:$0xff]
    %v2281 = vld [vmem:[%s5 + $0x2c8] sm:$0xff]
    %v2282 = vld [vmem:[%s5 + $0x2d0] sm:$0xff]
    %v2283 = vld [vmem:[%s5 + $0x2d8] sm:$0xff]
    %v2284 = vld [vmem:[%s5 + $0x2e0] sm:$0xff]
    %v2285 = vld [vmem:[%s5 + $0x2e8] sm:$0xff]
    %v2286 = vld [vmem:[%s5 + $0x2f0] sm:$0xff]
    %v2287 = vld [vmem:[%s5 + $0x2f8] sm:$0xff]
    %v2288 = vld [vmem:[%s5 + $0x300] sm:$0xff]
    %v2289 = vld [vmem:[%s5 + $0x308] sm:$0xff]
    %v2290 = vld [vmem:[%s5 + $0x310] sm:$0xff]
    %v2291 = vld [vmem:[%s5 + $0x318] sm:$0xff]
    %v2292 = vld [vmem:[%s5 + $0x320] sm:$0xff]
    %v2293 = vld [vmem:[%s5 + $0x328] sm:$0xff]
    %v2294 = vld [vmem:[%s5 + $0x330] sm:$0xff]
    %v2295 = vld [vmem:[%s5 + $0x338] sm:$0xff]
    %v2296 = vld [vmem:[%s5 + $0x340] sm:$0xff]
    %v2297 = vld [vmem:[%s5 + $0x348] sm:$0xff]
    %v2298 = vld [vmem:[%s5 + $0x350] sm:$0xff]
    %v2299 = vld [vmem:[%s5 + $0x358] sm:$0xff]
    %v2300 = vld [vmem:[%s5 + $0x360] sm:$0xff]
    %v2301 = vld [vmem:[%s5 + $0x368] sm:$0xff]
    %v2302 = vld [vmem:[%s5 + $0x370] sm:$0xff]
    %v2303 = vld [vmem:[%s5 + $0x378] sm:$0xff]
    %v2304 = vld [vmem:[%s5 + $0x380] sm:$0xff]
    %v2305 = vld [vmem:[%s5 + $0x388] sm:$0xff]
    %v2306 = vld [vmem:[%s5 + $0x390] sm:$0xff]
    %v2307 = vld [vmem:[%s5 + $0x398] sm:$0xff]
    %v2308 = vld [vmem:[%s5 + $0x3a0] sm:$0xff]
    %v2309 = vld [vmem:[%s5 + $0x3a8] sm:$0xff]
    %v2310 = vld [vmem:[%s5 + $0x3b0] sm:$0xff]
    %v2311 = vld [vmem:[%s5 + $0x3b8] sm:$0xff]
    %v2312 = vld [vmem:[%s5 + $0x3c0] sm:$0xff]
    %v2313 = vld [vmem:[%s5 + $0x3c8] sm:$0xff]
    %v2314 = vld [vmem:[%s5 + $0x3d0] sm:$0xff]
    %v2315 = vld [vmem:[%s5 + $0x3d8] sm:$0xff]
    %v2316 = vld [vmem:[%s5 + $0x3e0] sm:$0xff]
    %v2317 = vld [vmem:[%s5 + $0x3e8] sm:$0xff]
    %v2318 = vld [vmem:[%s5 + $0x3f0] sm:$0xff]
    %v2319 = vld [vmem:[%s5 + $0x3f8] sm:$0xff]
    %v2320 = vld [vmem:[%s6] sm:$0x3]
    %v2322 = vperm.slane %v2320, 0
    %v2323 = vperm.slane %v2320, 1
    %2326 = vmatpush.msra.mxu0 %v2222
    %2327 = vmatpush.msra.mxu0 %v2220
    %2328 = vmatpush.msra.mxu0 %v2218
    %2329 = vmatpush.msra.mxu0 %v2216
    %2330 = vmatpush.msra.mxu0 %v2214
    %2331 = vmatpush.msra.mxu0 %v2212
    %2332 = vmatpush.msra.mxu0 %v2210
    %2333 = vmatpush.msra.mxu0 %v2208
    %2334 = vmatpush.msra.mxu0 %v2206
    %2335 = vmatpush.msra.mxu0 %v2204
    %2336 = vmatpush.msra.mxu0 %v2202
    %2337 = vmatpush.msra.mxu0 %v2200
    %2338 = vmatpush.msra.mxu0 %v2198
    %2339 = vmatpush.msra.mxu0 %v2196
    %2340 = vmatpush.msra.mxu0 %v2194
    %2341 = vmatpush.msra.mxu0 %v2192
    %2342 = vmatmul.f32.gmra.mxu0 %v2188
    %v2343 = vpop.f32.mrf.mxu0
    %v2344 = vadd.f32 %v2322, %v2343
    %2345 = vdwg.mxu0
    %2346 = vmatpush.msra.mxu0 %v2254
    %2347 = vmatpush.msra.mxu0 %v2252
    %2348 = vmatpush.msra.mxu0 %v2250
    %2349 = vmatpush.msra.mxu0 %v2248
    %2350 = vmatpush.msra.mxu0 %v2246
    %2351 = vmatpush.msra.mxu0 %v2244
    %2352 = vmatpush.msra.mxu0 %v2242
    %2353 = vmatpush.msra.mxu0 %v2240
    %2354 = vmatpush.msra.mxu0 %v2238
    %2355 = vmatpush.msra.mxu0 %v2236
    %2356 = vmatpush.msra.mxu0 %v2234
    %2357 = vmatpush.msra.mxu0 %v2232
    %2358 = vmatpush.msra.mxu0 %v2230
    %2359 = vmatpush.msra.mxu0 %v2228
    %2360 = vmatpush.msra.mxu0 %v2226
    %2361 = vmatpush.msra.mxu0 %v2224
    %2362 = vmatmul.f32.gmra.mxu0 %v2189
    %v2363 = vpop.f32.mrf.mxu0
    %v2364 = vadd.f32 %v2344, %v2363
    %2365 = vdwg.mxu0
    %2366 = vmatpush.msra.mxu0 %v2286
    %2367 = vmatpush.msra.mxu0 %v2284
    %2368 = vmatpush.msra.mxu0 %v2282
    %2369 = vmatpush.msra.mxu0 %v2280
    %2370 = vmatpush.msra.mxu0 %v2278
    %2371 = vmatpush.msra.mxu0 %v2276
    %2372 = vmatpush.msra.mxu0 %v2274
    %2373 = vmatpush.msra.mxu0 %v2272
    %2374 = vmatpush.msra.mxu0 %v2270
    %2375 = vmatpush.msra.mxu0 %v2268
    %2376 = vmatpush.msra.mxu0 %v2266
    %2377 = vmatpush.msra.mxu0 %v2264
    %2378 = vmatpush.msra.mxu0 %v2262
    %2379 = vmatpush.msra.mxu0 %v2260
    %2380 = vmatpush.msra.mxu0 %v2258
    %2381 = vmatpush.msra.mxu0 %v2256
    %2382 = vmatmul.f32.gmra.mxu0 %v2190
    %v2383 = vpop.f32.mrf.mxu0
    %v2384 = vadd.f32 %v2364, %v2383
    %2385 = vdwg.mxu0
    %2386 = vmatpush.msra.mxu0 %v2318
    %2387 = vmatpush.msra.mxu0 %v2316
    %2388 = vmatpush.msra.mxu0 %v2314
    %2389 = vmatpush.msra.mxu0 %v2312
    %2390 = vmatpush.msra.mxu0 %v2310
    %2391 = vmatpush.msra.mxu0 %v2308
    %2392 = vmatpush.msra.mxu0 %v2306
    %2393 = vmatpush.msra.mxu0 %v2304
    %2394 = vmatpush.msra.mxu0 %v2302
    %2395 = vmatpush.msra.mxu0 %v2300
    %2396 = vmatpush.msra.mxu0 %v2298
    %2397 = vmatpush.msra.mxu0 %v2296
    %2398 = vmatpush.msra.mxu0 %v2294
    %2399 = vmatpush.msra.mxu0 %v2292
    %2400 = vmatpush.msra.mxu0 %v2290
    %2401 = vmatpush.msra.mxu0 %v2288
    %2402 = vmatmul.f32.gmra.mxu0 %v2191
    %v2403 = vpop.f32.mrf.mxu0
    %v2404 = vadd.f32 %v2384, %v2403
    %2405 = vdwg.mxu0
    %2406 = vmatpush.msra.mxu0 %v2223
    %2407 = vmatpush.msra.mxu0 %v2221
    %2408 = vmatpush.msra.mxu0 %v2219
    %2409 = vmatpush.msra.mxu0 %v2217
    %2410 = vmatpush.msra.mxu0 %v2215
    %2411 = vmatpush.msra.mxu0 %v2213
    %2412 = vmatpush.msra.mxu0 %v2211
    %2413 = vmatpush.msra.mxu0 %v2209
    %2414 = vmatpush.msra.mxu0 %v2207
    %2415 = vmatpush.msra.mxu0 %v2205
    %2416 = vmatpush.msra.mxu0 %v2203
    %2417 = vmatpush.msra.mxu0 %v2201
    %2418 = vmatpush.msra.mxu0 %v2199
    %2419 = vmatpush.msra.mxu0 %v2197
    %2420 = vmatpush.msra.mxu0 %v2195
    %2421 = vmatpush.msra.mxu0 %v2193
    %2422 = vmatmul.f32.gmra.mxu0 %v2188
    %v2423 = vpop.f32.mrf.mxu0
    %v2424 = vadd.f32 %v2323, %v2423
    %2425 = vdwg.mxu0
    %2426 = vmatpush.msra.mxu0 %v2255
    %2427 = vmatpush.msra.mxu0 %v2253
    %2428 = vmatpush.msra.mxu0 %v2251
    %2429 = vmatpush.msra.mxu0 %v2249
    %2430 = vmatpush.msra.mxu0 %v2247
    %2431 = vmatpush.msra.mxu0 %v2245
    %2432 = vmatpush.msra.mxu0 %v2243
    %2433 = vmatpush.msra.mxu0 %v2241
    %2434 = vmatpush.msra.mxu0 %v2239
    %2435 = vmatpush.msra.mxu0 %v2237
    %2436 = vmatpush.msra.mxu0 %v2235
    %2437 = vmatpush.msra.mxu0 %v2233
    %2438 = vmatpush.msra.mxu0 %v2231
    %2439 = vmatpush.msra.mxu0 %v2229
    %2440 = vmatpush.msra.mxu0 %v2227
    %2441 = vmatpush.msra.mxu0 %v2225
    %2442 = vmatmul.f32.gmra.mxu0 %v2189
    %v2443 = vpop.f32.mrf.mxu0
    %v2444 = vadd.f32 %v2424, %v2443
    %2445 = vdwg.mxu0
    %2446 = vmatpush.msra.mxu0 %v2287
    %2447 = vmatpush.msra.mxu0 %v2285
    %2448 = vmatpush.msra.mxu0 %v2283
    %2449 = vmatpush.msra.mxu0 %v2281
    %2450 = vmatpush.msra.mxu0 %v2279
    %2451 = vmatpush.msra.mxu0 %v2277
    %2452 = vmatpush.msra.mxu0 %v2275
    %2453 = vmatpush.msra.mxu0 %v2273
    %2454 = vmatpush.msra.mxu0 %v2271
    %2455 = vmatpush.msra.mxu0 %v2269
    %2456 = vmatpush.msra.mxu0 %v2267
    %2457 = vmatpush.msra.mxu0 %v2265
    %2458 = vmatpush.msra.mxu0 %v2263
    %2459 = vmatpush.msra.mxu0 %v2261
    %2460 = vmatpush.msra.mxu0 %v2259
    %2461 = vmatpush.msra.mxu0 %v2257
    %2462 = vmatmul.f32.gmra.mxu0 %v2190
    %v2463 = vpop.f32.mrf.mxu0
    %v2464 = vadd.f32 %v2444, %v2463
    %2465 = vdwg.mxu0
    %2466 = vmatpush.msra.mxu0 %v2319
    %2467 = vmatpush.msra.mxu0 %v2317
    %2468 = vmatpush.msra.mxu0 %v2315
    %2469 = vmatpush.msra.mxu0 %v2313
    %2470 = vmatpush.msra.mxu0 %v2311
    %2471 = vmatpush.msra.mxu0 %v2309
    %2472 = vmatpush.msra.mxu0 %v2307
    %2473 = vmatpush.msra.mxu0 %v2305
    %2474 = vmatpush.msra.mxu0 %v2303
    %2475 = vmatpush.msra.mxu0 %v2301
    %2476 = vmatpush.msra.mxu0 %v2299
    %2477 = vmatpush.msra.mxu0 %v2297
    %2478 = vmatpush.msra.mxu0 %v2295
    %2479 = vmatpush.msra.mxu0 %v2293
    %2480 = vmatpush.msra.mxu0 %v2291
    %2481 = vmatpush.msra.mxu0 %v2289
    %2482 = vmatmul.f32.gmra.mxu0 %v2191
    %v2483 = vpop.f32.mrf.mxu0
    %v2484 = vadd.f32 %v2464, %v2483
    %2485 = vdwg.mxu0
    %v2486 = vmax.f32 %v2404, 0.0
    %v2487 = vmax.f32 %v2484, 0.0
    %v2488 = vld [vmem:[%s7] sm:$0xff]
    %v2489 = vld [vmem:[%s7 + $0x8] sm:$0xff]
    %v2490 = vld [vmem:[%s7 + $0x10] sm:$0xff]
    %v2491 = vld [vmem:[%s7 + $0x18] sm:$0xff]
    %v2492 = vld [vmem:[%s7 + $0x20] sm:$0xff]
    %v2493 = vld [vmem:[%s7 + $0x28] sm:$0xff]
    %v2494 = vld [vmem:[%s7 + $0x30] sm:$0xff]
    %v2495 = vld [vmem:[%s7 + $0x38] sm:$0xff]
    %v2496 = vld [vmem:[%s7 + $0x40] sm:$0xff]
    %v2497 = vld [vmem:[%s7 + $0x48] sm:$0xff]
    %v2498 = vld [vmem:[%s7 + $0x50] sm:$0xff]
    %v2499 = vld [vmem:[%s7 + $0x58] sm:$0xff]
    %v2500 = vld [vmem:[%s7 + $0x60] sm:$0xff]
    %v2501 = vld [vmem:[%s7 + $0x68] sm:$0xff]
    %v2502 = vld [vmem:[%s7 + $0x70] sm:$0xff]
    %v2503 = vld [vmem:[%s7 + $0x78] sm:$0xff]
    %v2504 = vld [vmem:[%s7 + $0x80] sm:$0xff]
    %v2505 = vld [vmem:[%s7 + $0x88] sm:$0xff]
    %v2506 = vld [vmem:[%s7 + $0x90] sm:$0xff]
    %v2507 = vld [vmem:[%s7 + $0x98] sm:$0xff]
    %v2508 = vld [vmem:[%s7 + $0xa0] sm:$0xff]
    %v2509 = vld [vmem:[%s7 + $0xa8] sm:$0xff]
    %v2510 = vld [vmem:[%s7 + $0xb0] sm:$0xff]
    %v2511 = vld [vmem:[%s7 + $0xb8] sm:$0xff]
    %v2512 = vld [vmem:[%s7 + $0xc0] sm:$0xff]
    %v2513 = vld [vmem:[%s7 + $0xc8] sm:$0xff]
    %v2514 = vld [vmem:[%s7 + $0xd0] sm:$0xff]
    %v2515 = vld [vmem:[%s7 + $0xd8] sm:$0xff]
    %v2516 = vld [vmem:[%s7 + $0xe0] sm:$0xff]
    %v2517 = vld [vmem:[%s7 + $0xe8] sm:$0xff]
    %v2518 = vld [vmem:[%s7 + $0xf0] sm:$0xff]
    %v2519 = vld [vmem:[%s7 + $0xf8] sm:$0xff]
    %v2520 = vld [vmem:[%s8] sm:$0x1]
    %v2522 = vperm.slane %v2520, 0
    %2524 = vmatpush.msra.mxu0 %v2503
    %2525 = vmatpush.msra.mxu0 %v2502
    %2526 = vmatpush.msra.mxu0 %v2501
    %2527 = vmatpush.msra.mxu0 %v2500
    %2528 = vmatpush.msra.mxu0 %v2499
    %2529 = vmatpush.msra.mxu0 %v2498
    %2530 = vmatpush.msra.mxu0 %v2497
    %2531 = vmatpush.msra.mxu0 %v2496
    %2532 = vmatpush.msra.mxu0 %v2495
    %2533 = vmatpush.msra.mxu0 %v2494
    %2534 = vmatpush.msra.mxu0 %v2493
    %2535 = vmatpush.msra.mxu0 %v2492
    %2536 = vmatpush.msra.mxu0 %v2491
    %2537 = vmatpush.msra.mxu0 %v2490
    %2538 = vmatpush.msra.mxu0 %v2489
    %2539 = vmatpush.msra.mxu0 %v2488
    %2540 = vmatmul.f32.gmra.mxu0 %v2486
    %v2541 = vpop.f32.mrf.mxu0
    %v2542 = vadd.f32 %v2522, %v2541
    %2543 = vdwg.mxu0
    %2544 = vmatpush.msra.mxu0 %v2519
    %2545 = vmatpush.msra.mxu0 %v2518
    %2546 = vmatpush.msra.mxu0 %v2517
    %2547 = vmatpush.msra.mxu0 %v2516
    %2548 = vmatpush.msra.mxu0 %v2515
    %2549 = vmatpush.msra.mxu0 %v2514
    %2550 = vmatpush.msra.mxu0 %v2513
    %2551 = vmatpush.msra.mxu0 %v2512
    %2552 = vmatpush.msra.mxu0 %v2511
    %2553 = vmatpush.msra.mxu0 %v2510
    %2554 = vmatpush.msra.mxu0 %v2509
    %2555 = vmatpush.msra.mxu0 %v2508
    %2556 = vmatpush.msra.mxu0 %v2507
    %2557 = vmatpush.msra.mxu0 %v2506
    %2558 = vmatpush.msra.mxu0 %v2505
    %2559 = vmatpush.msra.mxu0 %v2504
    %2560 = vmatmul.f32.gmra.mxu0 %v2487
    %v2561 = vpop.f32.mrf.mxu0
    %v2562 = vadd.f32 %v2542, %v2561
    %2563 = vdwg.mxu0
    %v2564 = vmax.f32 %v2562, 0.0
    %v2565 = vld [vmem:[%s9] sm:$0xff]
    %v2566 = vld [vmem:[%s9 + $0x8] sm:$0xff]
    %v2567 = vld [vmem:[%s9 + $0x10] sm:$0xff]
    %v2568 = vld [vmem:[%s9 + $0x18] sm:$0xff]
    %v2569 = vld [vmem:[%s9 + $0x20] sm:$0xff]
    %v2570 = vld [vmem:[%s9 + $0x28] sm:$0xff]
    %v2571 = vld [vmem:[%s9 + $0x30] sm:$0xff]
    %v2572 = vld [vmem:[%s9 + $0x38] sm:$0xff]
    %v2573 = vld [vmem:[%s9 + $0x40] sm:$0xff]
    %v2574 = vld [vmem:[%s9 + $0x48] sm:$0xff]
    %v2575 = vld [vmem:[%s9 + $0x50] sm:$0xff]
    %v2576 = vld [vmem:[%s9 + $0x58] sm:$0xff]
    %v2577 = vld [vmem:[%s9 + $0x60] sm:$0xff]
    %v2578 = vld [vmem:[%s9 + $0x68] sm:$0xff]
    %v2579 = vld [vmem:[%s9 + $0x70] sm:$0xff]
    %v2580 = vld [vmem:[%s9 + $0x78] sm:$0xff]
    %v2581 = vld [vmem:[%s10] sm:$0x1]
    %v2583 = vperm.slane %v2581, 0
    %2585 = vmatpush.msra.mxu0 %v2580
    %2586 = vmatpush.msra.mxu0 %v2579
    %2587 = vmatpush.msra.mxu0 %v2578
    %2588 = vmatpush.msra.mxu0 %v2577
    %2589 = vmatpush.msra.mxu0 %v2576
    %2590 = vmatpush.msra.mxu0 %v2575
    %2591 = vmatpush.msra.mxu0 %v2574
    %2592 = vmatpush.msra.mxu0 %v2573
    %2593 = vmatpush.msra.mxu0 %v2572
    %2594 = vmatpush.msra.mxu0 %v2571
    %2595 = vmatpush.msra.mxu0 %v2570
    %2596 = vmatpush.msra.mxu0 %v2569
    %2597 = vmatpush.msra.mxu0 %v2568
    %2598 = vmatpush.msra.mxu0 %v2567
    %2599 = vmatpush.msra.mxu0 %v2566
    %2600 = vmatpush.msra.mxu0 %v2565
    %2601 = vmatmul.f32.gmra.mxu0 %v2564
    %v2602 = vpop.f32.mrf.mxu0
    %v2603 = vadd.f32 %v2583, %v2602
    %2604 = vdwg.mxu0
    %v2605 = vmax.f32 %v2603, 0.0
    %v2606 = vld [vmem:[%s11] sm:$0xff]
    %v2607 = vld [vmem:[%s11 + $0x8] sm:$0xff]
    %v2608 = vld [vmem:[%s11 + $0x10] sm:$0xff]
    %v2609 = vld [vmem:[%s11 + $0x18] sm:$0xff]
    %v2610 = vld [vmem:[%s11 + $0x20] sm:$0xff]
    %v2611 = vld [vmem:[%s11 + $0x28] sm:$0xff]
    %v2612 = vld [vmem:[%s11 + $0x30] sm:$0xff]
    %v2613 = vld [vmem:[%s11 + $0x38] sm:$0xff]
    %v2614 = vld [vmem:[%s12] sm:$0x1]
    %v2616 = vperm.slane %v2614, 0
    %vm2618 = vcmask 523264
    %v2620 = vsel %vm2618, %v2605, 0
    %2622 = vmatpush.msra.mxu0 0.0
    %2623 = vmatpush.msra.mxu0 0.0
    %2624 = vmatpush.msra.mxu0 0.0
    %2625 = vmatpush.msra.mxu0 0.0
    %2626 = vmatpush.msra.mxu0 0.0
    %2627 = vmatpush.msra.mxu0 0.0
    %2628 = vmatpush.msra.mxu0 0.0
    %2629 = vmatpush.msra.mxu0 0.0
    %2630 = vmatpush.msra.mxu0 %v2613
    %2631 = vmatpush.msra.mxu0 %v2612
    %2632 = vmatpush.msra.mxu0 %v2611
    %2633 = vmatpush.msra.mxu0 %v2610
    %2634 = vmatpush.msra.mxu0 %v2609
    %2635 = vmatpush.msra.mxu0 %v2608
    %2636 = vmatpush.msra.mxu0 %v2607
    %2637 = vmatpush.msra.mxu0 %v2606
    %2638 = vmatmul.f32.gmra.mxu0 %v2620
    %v2639 = vpop.f32.mrf.mxu0
    %v2640 = vadd.f32 %v2616, %v2639
    %2641 = vdwg.mxu0
    %vm2642 = vcmask 58368
    %v2643 = vsel %vm2642, %v2640, -inf
    %2644 = vmax.xlane.f32.xlu0 %v2643
    %v2645 = vpop.xlane.xlu0 %2644
    %v2646 = vsub.f32 %v2640, %v2645
    %v2647 = vmul.f32 %v2646, 1.442695
    %v2648 = vpow.pop %v2647
    %v2649 = vsel %vm2642, %v2648, 0.0
    %2650 = vadd.xlane.f32.xlu0 %v2649
    %v2651 = vpop.xlane.xlu0 %2650
    %v2652 = vrcp.pop %v2651
    %v2653 = vmul.f32 %v2648, %v2652
    %2654 = vst.msk [vmem:[#allocation2] sm:$0x3] %vm2642, %v2653
    // Predicated region
    $region54: #{cnn_weight_forward.3} parent=1 // pred_check
      _
    $region55: #{cnn_weight_forward.3} parent=1 // pred_check_branch
      %2656 = sbr.rel (0) target = $region57
    $region56: #{cnn_weight_forward.3} parent=1 // pred_region
      %2658 = vsyncadd [#allocation3], 0
      %s2660 = sshll.u32 [#allocation2], 4
      %s2661 = int_to_ptr.vmem [resolvable:$true] %s2660
      %s2662 = sshll.u32 %s13, 4
      %s2663 = int_to_ptr.hbm [resolvable:$true] %s2662
      %2665 = dma.vmem_to_hbm [thread:$0]  %s2661, 32, %s2663, [#allocation3]
    $region57: #{cnn_weight_forward.3} parent=1 // pred_fallthru
      _
    // Predicated region
    $region58: #{cnn_weight_forward.3} parent=1 // pred_check
      _
    $region59: #{cnn_weight_forward.3} parent=1 // pred_check_branch
      %2667 = sbr.rel (0) target = $region61
    $region60: #{cnn_weight_forward.3} parent=1 // pred_region
      %2669 = dma.done [#allocation3], 32
    $region61: #{cnn_weight_forward.3} parent=1 // pred_fallthru
      _
    %2670 = vsyncpa [#allocation3], 1

</llo_original>
